<compile_context>
chip_gen: v7x
topology: tpu7x:2x2x1
jax: 0.10.0
libtpu: 0.0.40
codegen_flags: <defaults>
</compile_context>

<pallas_src>
import functools
import math

import jax
import jax.numpy as jnp
from jax.experimental import pallas as pl
from jax.experimental.pallas import tpu as pltpu


_V1_COMPLEX_FILTER = (
    0.00188981, 0.01096042, 0.04301196, 0.11421021, 0.20519858,
    0.24945803, 0.20519858, 0.11421021, 0.04301196, 0.01096042, 0.00188981,
)
_V1_BLUR_SCALE = 1.0205372750866895

_LANES = 128
_SUBLANES = 8
# Per-grid-step budget for (input + H-blurred intermediate + output) bytes.
# With double-buffered in/out plus VALU temporaries the per-core working set
# stays around 10-16 MiB: fits v5e's 16 MiB default scoped VMEM, leaves ample
# headroom inside the explicit 32 MiB limit below on v6e/v7x.
_BLOCK_BYTES_BUDGET = 4 * 1024 * 1024
# Prefer at least this many grid steps so the parallel axis can shard across
# v7x's two TensorCores (harmless on v5e/v6e).
_MIN_GRID_STEPS = 4
# >= every generation's default scoped VMEM, <= every generation's physical VMEM.
_VMEM_LIMIT_BYTES = 32 * 1024 * 1024


def _round_up(n, m):
    return -(-n // m) * m


# -----------------------------------------------------------------------------
# Pallas kernel: fused separable blur (H then T) + scale on one (T, H, S, 128) block.
# -----------------------------------------------------------------------------
def _v1_blur_kernel(x_ref, o_ref, *, taps, taps_t, t_out, h_out):
    # x_ref: (T, H, SB, 128) f32; o_ref: (t_out, h_out, SB, 128) f32.
    # Both conv axes (T, H) are leading dims, so the shifted tap slices below are
    # free re-addressing; the trailing (SB, 128) face is the lane-dense fused
    # N*C*W axis, so every store is a full-width unmasked vst.
    k = len(taps)
    c = k // 2
    x = x_ref[...]

    # Stage 1: 'valid' conv along H (axis 1). Symmetric taps -> 5 pairs + center;
    # two accumulators break the serial add chain for better VALU slot packing.
    acc_a = taps[c] * x[:, c:c + h_out]
    acc_b = taps[0] * (x[:, 0:h_out] + x[:, k - 1:k - 1 + h_out])
    for j in range(1, c):
        term = taps[j] * (x[:, j:j + h_out] + x[:, k - 1 - j:k - 1 - j + h_out])
        if j % 2:
            acc_a = acc_a + term
        else:
            acc_b = acc_b + term
    h_blur = acc_a + acc_b

    # Stage 2: 'valid' conv along T (axis 0); the module's scalar v1Blur scale is
    # pre-folded into taps_t (no epilogue multiply).
    acc_a = taps_t[c] * h_blur[c:c + t_out]
    acc_b = taps_t[0] * (h_blur[0:t_out] + h_blur[k - 1:k - 1 + t_out])
    for j in range(1, c):
        term = taps_t[j] * (h_blur[j:j + t_out] + h_blur[k - 1 - j:k - 1 - j + t_out])
        if j % 2:
            acc_a = acc_a + term
        else:
            acc_b = acc_b + term
    o_ref[...] = (acc_a + acc_b).astype(o_ref.dtype)


def _v1_blur_separable(x3d, taps, taps_t):
    """x3d: (T, H, B) f32 (B = fused N*C*W) -> (T-10, H-10, B) f32 ('valid' blur * scale)."""
    t, h, b = x3d.shape
    k = len(taps)
    t_out, h_out = t - k + 1, h - k + 1
    assert t_out > 0 and h_out > 0, "T and H must be >= filter length (11) for 'valid'"

    s_total = pl.cdiv(b, _LANES)
    # f32 bytes per 128-lane column of (input + H-blurred intermediate + output).
    bytes_per_s = (t * h + t * h_out + t_out * h_out) * _LANES * 4
    s_budget = max(1, _BLOCK_BYTES_BUDGET // bytes_per_s)
    if s_total <= max(s_budget, _SUBLANES):
        s_blk = s_total  # single block: trailing dims equal full array dims (always legal)
    else:
        # Multiple grid steps: the sublane block dim must be a multiple of 8.
        s_blk = max(_SUBLANES, (s_budget // _SUBLANES) * _SUBLANES)
        s_pref = _round_up(pl.cdiv(s_total, _MIN_GRID_STEPS), _SUBLANES)
        s_blk = max(_SUBLANES, min(s_blk, s_pref))
    s_pad = _round_up(s_total, s_blk)
    b_pad = s_pad * _LANES
    if b_pad != b:
        # Zero-pad the fused batch axis; the blur never mixes entries along it,
        # so padded lanes stay zero and are sliced off below.
        x3d = jnp.pad(x3d, ((0, 0), (0, 0), (0, b_pad - b)))
    x4 = x3d.reshape(t, h, s_pad, _LANES)

    # TODO(synk): for extremely large upsampled T*H a rolling T-window (halo tiling
    # along T) would be needed; the S-axis tiling here covers the module's sizes.
    kernel = functools.partial(_v1_blur_kernel, taps=taps, taps_t=taps_t,
                               t_out=t_out, h_out=h_out)
    y4 = pl.pallas_call(
        kernel,
        out_shape=jax.ShapeDtypeStruct((t_out, h_out, s_pad, _LANES), jnp.float32),
        grid_spec=pltpu.PrefetchScalarGridSpec(
            num_scalar_prefetch=0,
            grid=(s_pad // s_blk,),
            in_specs=[pl.BlockSpec((t, h, s_blk, _LANES), lambda i: (0, 0, i, 0))],
            out_specs=pl.BlockSpec((t_out, h_out, s_blk, _LANES),
                                   lambda i: (0, 0, i, 0)),
        ),
        compiler_params=pltpu.CompilerParams(
            dimension_semantics=("parallel",),
            vmem_limit_bytes=_VMEM_LIMIT_BYTES),
    )(x4)
    return y4.reshape(t_out, h_out, b_pad)[:, :, :b]


# -----------------------------------------------------------------------------
# Module wrapper (forward semantics of the PyTorch V1Blur).
# -----------------------------------------------------------------------------
class V1BlurPallas:
    """JAX/Pallas equivalent of the PyTorch V1Blur module."""

    def __init__(self, padding: str = "valid"):
        assert padding in ("valid", "same")
        self.padding = padding
        self.taps = tuple(float(t) for t in _V1_COMPLEX_FILTER)
        self.scale = float(_V1_BLUR_SCALE)
        # Fold the scalar scale factor into the second (temporal) filter taps.
        self.taps_t = tuple(t * self.scale for t in self.taps)
        self._forward_jit = jax.jit(self._forward_one, static_argnames=("scale_index",))

    def _forward_one(self, x, *, scale_index):
        # x: (N, C, T, H, W) float32 — same NCDHW layout as the PyTorch Conv3d input.
        k = len(self.taps)
        if scale_index > 0:
            # TODO(synk): trilinear up/down-sampling for scale_index > 0 is plain-JAX
            # glue (jax.image.resize); not bit-matched against torch F.interpolate.
            sf = 2 ** scale_index
            n, c, t, h, w = x.shape
            x = jax.image.resize(x, (n, c, t * sf, h * sf, w * sf),
                                 method="trilinear", antialias=False)
        if self.padding == "same":
            pad = k // 2  # reflect-pad H and T up front (== torch's per-conv pads)
            x = jnp.pad(x, ((0, 0), (0, 0), (pad, pad), (pad, pad), (0, 0)),
                        mode="reflect")
        n, c, t, h, w = x.shape
        # Lane-dense layout: conv axes (T, H) lead; fused N*C*W trails.
        x3 = jnp.transpose(x, (2, 3, 0, 1, 4)).reshape(t, h, n * c * w)
        y3 = _v1_blur_separable(x3, self.taps, self.taps_t)
        t_out, h_out = t - k + 1, h - k + 1
        y = jnp.transpose(y3.reshape(t_out, h_out, n, c, w), (2, 3, 0, 1, 4))
        if scale_index > 0:
            ds = 0.5 ** scale_index
            out_shape = (n, c, math.floor(t_out * ds), math.floor(h_out * ds),
                         math.floor(w * ds))
            y = jax.image.resize(y, out_shape, method="trilinear", antialias=False)
        return y

    def __call__(self, inputs):
        return [self._forward_jit(x, scale_index=i) for i, x in enumerate(inputs)]


# -----------------------------------------------------------------------------
# Plain-JAX reference (no Pallas) mirroring the module's forward.
# -----------------------------------------------------------------------------
def _blur_ref(x, taps, scale, padding):
    k = len(taps)
    if padding == "same":
        pad = k // 2
        x = jnp.pad(x, ((0, 0), (0, 0), (pad, pad), (pad, pad), (0, 0)), mode="reflect")
    t, h = x.shape[2], x.shape[3]
    t_out, h_out = t - k + 1, h - k + 1
    acc1 = taps[0] * x[:, :, :, 0:h_out, :]
    for i in range(1, k):
        acc1 = acc1 + taps[i] * x[:, :, :, i:i + h_out, :]
    acc2 = taps[0] * acc1[:, :, 0:t_out, :, :]
    for i in range(1, k):
        acc2 = acc2 + taps[i] * acc1[:, :, i:i + t_out, :, :]
    return acc2 * scale


def _forward_ref(x, taps, scale, padding, scale_index):
    if scale_index > 0:
        sf = 2 ** scale_index
        n, c, t, h, w = x.shape
        x = jax.image.resize(x, (n, c, t * sf, h * sf, w * sf),
                             method="trilinear", antialias=False)
    y = _blur_ref(x, taps, scale, padding)
    if scale_index > 0:
        ds = 0.5 ** scale_index
        n, c, t, h, w = y.shape
        y = jax.image.resize(
            y, (n, c, math.floor(t * ds), math.floor(h * ds), math.floor(w * ds)),
            method="trilinear", antialias=False)
    return y


if __name__ == "__main__":
    key = jax.random.PRNGKey(0)
    k1, k2 = jax.random.split(key)

    # Multi-scale input list, each (N, C=28, T, H, W) as produced by the V1 stage.
    x1 = jax.random.normal(k1, (2, 28, 16, 24, 32), dtype=jnp.float32)
    x2 = jax.random.normal(k2, (1, 28, 8, 12, 16), dtype=jnp.float32)
    inputs = [x1, x2]

    model = V1BlurPallas(padding="valid")
    outs = model(inputs)
    outs = [jax.block_until_ready(o) for o in outs]

    for i, (x, o) in enumerate(zip(inputs, outs)):
        ref = jax.block_until_ready(
            _forward_ref(x, model.taps, model.scale, model.padding, i))
        assert o.shape == ref.shape, (o.shape, ref.shape)
        assert bool(jnp.allclose(o, ref, atol=1e-4, rtol=1e-4)), \
            f"Pallas V1Blur output mismatch vs reference at scale {i}"

    print("KERNEL_OK")
</pallas_src>

<mosaic_0001>
module attributes {stable_mosaic.version = 11 : i64} {
  func.func @_v1_blur_kernel(%arg0: i32, %arg1: memref<16x24x8x128xf32, #tpu.memory_space<vmem>>, %arg2: memref<6x14x8x128xf32, #tpu.memory_space<vmem>>) attributes {dimension_semantics = [#tpu.dimension_semantics<parallel>], iteration_bounds = array<i64: 2>, scalar_prefetch = 0 : i64, scratch_operands = 0 : i64, tpu.core_type = #tpu.core_type<tc>, window_params = [{transform_indices = @transform_0, window_bounds = array<i64: 16, 24, 8, 128>}, {transform_indices = @transform_1, window_bounds = array<i64: 6, 14, 8, 128>}]} {
    %c0 = arith.constant 0 : index
    %c0_0 = arith.constant 0 : index
    %c0_1 = arith.constant 0 : index
    %c0_2 = arith.constant 0 : index
    %0 = vector.load %arg1[%c0, %c0_0, %c0_1, %c0_2] : memref<16x24x8x128xf32, #tpu.memory_space<vmem>>, vector<16x24x8x128xf32>
    %1 = vector.extract_strided_slice %0 {offsets = [0, 5, 0, 0], sizes = [16, 14, 8, 128], strides = [1, 1, 1, 1]} : vector<16x24x8x128xf32> to vector<16x14x8x128xf32>
    %cst = arith.constant 0.24945803 : f32
    %2 = vector.broadcast %cst : f32 to vector<16x14x8x128xf32>
    %3 = arith.mulf %2, %1 : vector<16x14x8x128xf32>
    %4 = vector.extract_strided_slice %0 {offsets = [0, 0, 0, 0], sizes = [16, 14, 8, 128], strides = [1, 1, 1, 1]} : vector<16x24x8x128xf32> to vector<16x14x8x128xf32>
    %5 = vector.extract_strided_slice %0 {offsets = [0, 10, 0, 0], sizes = [16, 14, 8, 128], strides = [1, 1, 1, 1]} : vector<16x24x8x128xf32> to vector<16x14x8x128xf32>
    %6 = arith.addf %4, %5 : vector<16x14x8x128xf32>
    %cst_3 = arith.constant 1.889810e-03 : f32
    %7 = vector.broadcast %cst_3 : f32 to vector<16x14x8x128xf32>
    %8 = arith.mulf %7, %6 : vector<16x14x8x128xf32>
    %9 = vector.extract_strided_slice %0 {offsets = [0, 1, 0, 0], sizes = [16, 14, 8, 128], strides = [1, 1, 1, 1]} : vector<16x24x8x128xf32> to vector<16x14x8x128xf32>
    %10 = vector.extract_strided_slice %0 {offsets = [0, 9, 0, 0], sizes = [16, 14, 8, 128], strides = [1, 1, 1, 1]} : vector<16x24x8x128xf32> to vector<16x14x8x128xf32>
    %11 = arith.addf %9, %10 : vector<16x14x8x128xf32>
    %cst_4 = arith.constant 0.0109604197 : f32
    %12 = vector.broadcast %cst_4 : f32 to vector<16x14x8x128xf32>
    %13 = arith.mulf %12, %11 : vector<16x14x8x128xf32>
    %14 = arith.addf %3, %13 : vector<16x14x8x128xf32>
    %15 = vector.extract_strided_slice %0 {offsets = [0, 2, 0, 0], sizes = [16, 14, 8, 128], strides = [1, 1, 1, 1]} : vector<16x24x8x128xf32> to vector<16x14x8x128xf32>
    %16 = vector.extract_strided_slice %0 {offsets = [0, 8, 0, 0], sizes = [16, 14, 8, 128], strides = [1, 1, 1, 1]} : vector<16x24x8x128xf32> to vector<16x14x8x128xf32>
    %17 = arith.addf %15, %16 : vector<16x14x8x128xf32>
    %cst_5 = arith.constant 0.0430119596 : f32
    %18 = vector.broadcast %cst_5 : f32 to vector<16x14x8x128xf32>
    %19 = arith.mulf %18, %17 : vector<16x14x8x128xf32>
    %20 = arith.addf %8, %19 : vector<16x14x8x128xf32>
    %21 = vector.extract_strided_slice %0 {offsets = [0, 3, 0, 0], sizes = [16, 14, 8, 128], strides = [1, 1, 1, 1]} : vector<16x24x8x128xf32> to vector<16x14x8x128xf32>
    %22 = vector.extract_strided_slice %0 {offsets = [0, 7, 0, 0], sizes = [16, 14, 8, 128], strides = [1, 1, 1, 1]} : vector<16x24x8x128xf32> to vector<16x14x8x128xf32>
    %23 = arith.addf %21, %22 : vector<16x14x8x128xf32>
    %cst_6 = arith.constant 0.114210211 : f32
    %24 = vector.broadcast %cst_6 : f32 to vector<16x14x8x128xf32>
    %25 = arith.mulf %24, %23 : vector<16x14x8x128xf32>
    %26 = arith.addf %14, %25 : vector<16x14x8x128xf32>
    %27 = vector.extract_strided_slice %0 {offsets = [0, 4, 0, 0], sizes = [16, 14, 8, 128], strides = [1, 1, 1, 1]} : vector<16x24x8x128xf32> to vector<16x14x8x128xf32>
    %28 = vector.extract_strided_slice %0 {offsets = [0, 6, 0, 0], sizes = [16, 14, 8, 128], strides = [1, 1, 1, 1]} : vector<16x24x8x128xf32> to vector<16x14x8x128xf32>
    %29 = arith.addf %27, %28 : vector<16x14x8x128xf32>
    %cst_7 = arith.constant 0.205198586 : f32
    %30 = vector.broadcast %cst_7 : f32 to vector<16x14x8x128xf32>
    %31 = arith.mulf %30, %29 : vector<16x14x8x128xf32>
    %32 = arith.addf %20, %31 : vector<16x14x8x128xf32>
    %33 = arith.addf %26, %32 : vector<16x14x8x128xf32>
    %34 = vector.extract_strided_slice %33 {offsets = [5, 0, 0, 0], sizes = [6, 14, 8, 128], strides = [1, 1, 1, 1]} : vector<16x14x8x128xf32> to vector<6x14x8x128xf32>
    %cst_8 = arith.constant 0.254581213 : f32
    %35 = vector.broadcast %cst_8 : f32 to vector<6x14x8x128xf32>
    %36 = arith.mulf %35, %34 : vector<6x14x8x128xf32>
    %37 = vector.extract_strided_slice %33 {offsets = [0, 0, 0, 0], sizes = [6, 14, 8, 128], strides = [1, 1, 1, 1]} : vector<16x14x8x128xf32> to vector<6x14x8x128xf32>
    %38 = vector.extract_strided_slice %33 {offsets = [10, 0, 0, 0], sizes = [6, 14, 8, 128], strides = [1, 1, 1, 1]} : vector<16x14x8x128xf32> to vector<6x14x8x128xf32>
    %39 = arith.addf %37, %38 : vector<6x14x8x128xf32>
    %cst_9 = arith.constant 0.00192862155 : f32
    %40 = vector.broadcast %cst_9 : f32 to vector<6x14x8x128xf32>
    %41 = arith.mulf %40, %39 : vector<6x14x8x128xf32>
    %42 = vector.extract_strided_slice %33 {offsets = [1, 0, 0, 0], sizes = [6, 14, 8, 128], strides = [1, 1, 1, 1]} : vector<16x14x8x128xf32> to vector<6x14x8x128xf32>
    %43 = vector.extract_strided_slice %33 {offsets = [9, 0, 0, 0], sizes = [6, 14, 8, 128], strides = [1, 1, 1, 1]} : vector<16x14x8x128xf32> to vector<6x14x8x128xf32>
    %44 = arith.addf %42, %43 : vector<6x14x8x128xf32>
    %cst_10 = arith.constant 0.0111855175 : f32
    %45 = vector.broadcast %cst_10 : f32 to vector<6x14x8x128xf32>
    %46 = arith.mulf %45, %44 : vector<6x14x8x128xf32>
    %47 = arith.addf %36, %46 : vector<6x14x8x128xf32>
    %48 = vector.extract_strided_slice %33 {offsets = [2, 0, 0, 0], sizes = [6, 14, 8, 128], strides = [1, 1, 1, 1]} : vector<16x14x8x128xf32> to vector<6x14x8x128xf32>
    %49 = vector.extract_strided_slice %33 {offsets = [8, 0, 0, 0], sizes = [6, 14, 8, 128], strides = [1, 1, 1, 1]} : vector<16x14x8x128xf32> to vector<6x14x8x128xf32>
    %50 = arith.addf %48, %49 : vector<6x14x8x128xf32>
    %cst_11 = arith.constant 0.0438953079 : f32
    %51 = vector.broadcast %cst_11 : f32 to vector<6x14x8x128xf32>
    %52 = arith.mulf %51, %50 : vector<6x14x8x128xf32>
    %53 = arith.addf %41, %52 : vector<6x14x8x128xf32>
    %54 = vector.extract_strided_slice %33 {offsets = [3, 0, 0, 0], sizes = [6, 14, 8, 128], strides = [1, 1, 1, 1]} : vector<16x14x8x128xf32> to vector<6x14x8x128xf32>
    %55 = vector.extract_strided_slice %33 {offsets = [7, 0, 0, 0], sizes = [6, 14, 8, 128], strides = [1, 1, 1, 1]} : vector<16x14x8x128xf32> to vector<6x14x8x128xf32>
    %56 = arith.addf %54, %55 : vector<6x14x8x128xf32>
    %cst_12 = arith.constant 0.11655578 : f32
    %57 = vector.broadcast %cst_12 : f32 to vector<6x14x8x128xf32>
    %58 = arith.mulf %57, %56 : vector<6x14x8x128xf32>
    %59 = arith.addf %47, %58 : vector<6x14x8x128xf32>
    %60 = vector.extract_strided_slice %33 {offsets = [4, 0, 0, 0], sizes = [6, 14, 8, 128], strides = [1, 1, 1, 1]} : vector<16x14x8x128xf32> to vector<6x14x8x128xf32>
    %61 = vector.extract_strided_slice %33 {offsets = [6, 0, 0, 0], sizes = [6, 14, 8, 128], strides = [1, 1, 1, 1]} : vector<16x14x8x128xf32> to vector<6x14x8x128xf32>
    %62 = arith.addf %60, %61 : vector<6x14x8x128xf32>
    %cst_13 = arith.constant 0.209412798 : f32
    %63 = vector.broadcast %cst_13 : f32 to vector<6x14x8x128xf32>
    %64 = arith.mulf %63, %62 : vector<6x14x8x128xf32>
    %65 = arith.addf %53, %64 : vector<6x14x8x128xf32>
    %66 = arith.addf %59, %65 : vector<6x14x8x128xf32>
    %c0_14 = arith.constant 0 : index
    %c0_15 = arith.constant 0 : index
    %c0_16 = arith.constant 0 : index
    %c0_17 = arith.constant 0 : index
    %67 = vector.load %arg2[%c0_14, %c0_15, %c0_16, %c0_17] : memref<6x14x8x128xf32, #tpu.memory_space<vmem>>, vector<6x14x8x128xf32>
    tpu.vector_store %arg2[%c0_14, %c0_15, %c0_16, %c0_17], %66 {strides = array<i32>} : memref<6x14x8x128xf32, #tpu.memory_space<vmem>>, vector<6x14x8x128xf32>,
    return
  }
  func.func @transform_0(%arg0: i32) -> (i32, i32, i32, i32) {
    %c0_i32 = arith.constant 0 : i32
    %c0_i32_0 = arith.constant 0 : i32
    %c0_i32_1 = arith.constant 0 : i32
    %c0_i32_2 = arith.constant 0 : i32
    return %c0_i32, %c0_i32_0, %arg0, %c0_i32_1 : i32, i32, i32, i32
  }
  func.func @transform_1(%arg0: i32) -> (i32, i32, i32, i32) {
    %c0_i32 = arith.constant 0 : i32
    %c0_i32_0 = arith.constant 0 : i32
    %c0_i32_1 = arith.constant 0 : i32
    %c0_i32_2 = arith.constant 0 : i32
    return %c0_i32, %c0_i32_0, %arg0, %c0_i32_1 : i32, i32, i32, i32
  }
}

</mosaic_0001>

<llo_original>
// kernel: _forward_one.1
$region0: #{_forward_one.1}
  #allocation0 [shape = 'u32[]', space=smem, size = 0x4, offset = 0x4, fixed_abs, tag = 'smem constant byte address 0x4 - core index']
  #allocation1 [shape = 'u32[144,128]{1,0:T(1,128)}', space=vmem, size = 0x12000, scoped, tag = 'internal scratch']
  %s0 = inlined_call_operand.vmem [shape: f32[16,24,16,128], index: 0, kind: input, shape index: {}]
  %s1 = inlined_call_operand.vmem [shape: f32[6,14,16,128], index: 1, kind: output, shape index: {}]
  %s2 = sld [smem:[#allocation0]]
  $region109: #{_forward_one.1} parent=0
    _
  %s4 = ssub.s32 1, %s2
  %s5 = scalar_select 0, %s4, %s2
  $region1: #{_forward_one.1} parent=0
    #allocation2 [shape = 'u8[3145728]{0}', space=vmem, size = 0x300000, scoped, tag = 'input window, operand 0']
    #allocation3 [shape = 'u8[688128]{0}', space=vmem, size = 0xa8000, scoped, tag = 'output window, operand 0']
    loop: start=0, step=1, limit=4
    $region2: #{_forward_one.1} parent=1 // loop_pre_header
      _
    $region3: #{_forward_one.1} parent=1 // loop_header
      %s7 = sphi 0, %s11
      %p8 = scmp.ge.s32.totalorder %s7, 4
      %s17 = sphi 0, %s19
      %s20 = sphi 0, %s17
      %s21 = sphi 0, %s20
      %s37 = sphi 0, %s21
      %s43 = sphi 0, %s45
      %s46 = sphi 0, %s43
      %s47 = sphi 0, %s46
      %s63 = sphi 0, %s47
    $region4: #{_forward_one.1} parent=1 // loop_header_branch
      %10 = sbr.rel (%p8) target = $region8
    $region5: #{_forward_one.1} parent=1 // loop_body
      %s12 = ssub.s32 %s7, 1
      %s13 = ssub.s32 %s7, 2
      %s14 = sadd.s32 %s7, 1
      %s15 = ssub.s32 %s7, %s14
      %p16 = scmp.eq.s32.totalorder %s15, 0
      %s18 = sadd.s32 %s17, 1
      %s19 = scalar_select %p16, %s17, %s18
      %p22 = pneg %p16
      %p23 = scmp.eq.s32.totalorder %s7, 1
      %p24 = por %p22, %p23
      %p25 = scmp.ne.s32.totalorder %s17, %s20
      %p26 = scmp.eq.s32.totalorder %s7, 0
      %p27 = por %p25, %p26
      %p28 = scmp.ne.s32.totalorder %s17, %s20
      %p29 = scmp.eq.s32.totalorder %s12, 1
      %p30 = por %p28, %p29
      %p31 = scmp.ne.s32.totalorder %s20, %s21
      %p32 = scmp.eq.s32.totalorder %s12, 0
      %p33 = por %p31, %p32
      %p34 = scmp.ne.s32.totalorder %s20, %s21
      %p35 = scmp.eq.s32.totalorder %s13, 1
      %p36 = por %p34, %p35
      %p38 = scmp.ne.s32.totalorder %s21, %s37
      %p39 = scmp.eq.s32.totalorder %s13, 0
      %p40 = por %p38, %p39
      %s41 = ssub.s32 %s7, %s14
      %p42 = scmp.eq.s32.totalorder %s41, 0
      %s44 = sadd.s32 %s43, 1
      %s45 = scalar_select %p42, %s43, %s44
      %p48 = pneg %p42
      %p49 = scmp.eq.s32.totalorder %s7, 1
      %p50 = por %p48, %p49
      %p51 = scmp.ne.s32.totalorder %s43, %s46
      %p52 = scmp.eq.s32.totalorder %s7, 0
      %p53 = por %p51, %p52
      %p54 = scmp.ne.s32.totalorder %s43, %s46
      %p55 = scmp.eq.s32.totalorder %s12, 1
      %p56 = por %p54, %p55
      %p57 = scmp.ne.s32.totalorder %s46, %s47
      %p58 = scmp.eq.s32.totalorder %s12, 0
      %p59 = por %p57, %p58
      %p60 = scmp.ne.s32.totalorder %s46, %s47
      %p61 = scmp.eq.s32.totalorder %s13, 1
      %p62 = por %p60, %p61
      %p64 = scmp.ne.s32.totalorder %s47, %s63
      %p65 = scmp.eq.s32.totalorder %s13, 0
      %p66 = por %p64, %p65
      %p67 = scmp.le.s32.totalorder 1, %s7
      %p68 = scmp.lt.s32.totalorder %s7, 3
      %p69 = pnand %p67, %p68
      %p70 = pneg %p69
      // Predicated region
      $region9: #{_forward_one.1} parent=5 // pred_check
        _
      $region10: #{_forward_one.1} parent=5 // pred_check_branch
        %72 = sbr.rel (%p69) target = $region12
      $region11: #{_forward_one.1} parent=5 // pred_region
        %s73 = ssub.s32 %s7, 1
      $region12: #{_forward_one.1} parent=5 // pred_fallthru
        _
      %p74 = scmp.lt.s32.totalorder %s7, 2
      // Predicated region
      $region13: #{_forward_one.1} parent=5 // pred_check
        %p75 = pneg %p74
      $region14: #{_forward_one.1} parent=5 // pred_check_branch
        %77 = sbr.rel (%p75) target = $region16
      $region15: #{_forward_one.1} parent=5 // pred_region
        // Predicated region
        $region17: #{_forward_one.1} parent=15 // pred_check
          %p78 = pneg %p27
        $region18: #{_forward_one.1} parent=15 // pred_check_branch
          %80 = sbr.rel (%p78) target = $region20
        $region19: #{_forward_one.1} parent=15 // pred_region
          %s81 = sand.u32 %s17, 1
          %s82 = sand.u32 %s17, 1
          %s83 = smul.addr %s82, 3072
          %s84 = scalar_lea.vmem [#allocation2], %s83
          %s85 = smul.addr %s7, 8
          %s86 = scalar_lea.vmem %s0, %s85
          // Predicated region
          $region21: #{_forward_one.1} parent=19 // pred_check
            _
          $region22: #{_forward_one.1} parent=19 // pred_check_branch
            %88 = sbr.rel (0) target = $region24
          $region23: #{_forward_one.1} parent=19 // pred_region
            // Predicated region
            $region25: #{_forward_one.1} parent=23 // pred_check
              _
            $region26: #{_forward_one.1} parent=23 // pred_check_branch
              %90 = sbr.rel (0) target = $region28
            $region27: #{_forward_one.1} parent=23 // pred_region
              // Predicated region
              $region40: #{_forward_one.1} parent=27 // pred_check
                _
              $region41: #{_forward_one.1} parent=27 // pred_check_branch
                %871 = sbr.rel (0) target = $region43
              $region42: #{_forward_one.1} parent=27 // pred_region
                loop: start=0, step=1, limit=1
                $region44: #{_forward_one.1} parent=42 // loop_pre_header
                  _
                $region45: #{_forward_one.1} parent=42 // loop_header
                  %s873 = sphi 0, %s877
                  %p874 = scmp.ge.s32.totalorder %s873, 1
                  %s878 = sphi %s86, %s86
                  %s879 = sphi %s84, %s84
                $region46: #{_forward_one.1} parent=42 // loop_header_branch
                  %876 = sbr.rel (%p874) target = $region50
                $region47: #{_forward_one.1} parent=42 // loop_body
                  %v880 = vld [vmem:[%s878] sm:$0xff]
                  %881 = vst [vmem:[%s879] sm:$0xff] %v880
                  %v882 = vld [vmem:[%s878 + $0x10] sm:$0xff]
                  %883 = vst [vmem:[%s879 + $0x8] sm:$0xff] %v882
                  %v884 = vld [vmem:[%s878 + $0x20] sm:$0xff]
                  %885 = vst [vmem:[%s879 + $0x10] sm:$0xff] %v884
                  %v886 = vld [vmem:[%s878 + $0x30] sm:$0xff]
                  %887 = vst [vmem:[%s879 + $0x18] sm:$0xff] %v886
                  %v888 = vld [vmem:[%s878 + $0x40] sm:$0xff]
                  %889 = vst [vmem:[%s879 + $0x20] sm:$0xff] %v888
                  %v890 = vld [vmem:[%s878 + $0x50] sm:$0xff]
                  %891 = vst [vmem:[%s879 + $0x28] sm:$0xff] %v890
                  %v892 = vld [vmem:[%s878 + $0x60] sm:$0xff]
                  %893 = vst [vmem:[%s879 + $0x30] sm:$0xff] %v892
                  %v894 = vld [vmem:[%s878 + $0x70] sm:$0xff]
                  %895 = vst [vmem:[%s879 + $0x38] sm:$0xff] %v894
                  %v896 = vld [vmem:[%s878 + $0x80] sm:$0xff]
                  %897 = vst [vmem:[%s879 + $0x40] sm:$0xff] %v896
                  %v898 = vld [vmem:[%s878 + $0x90] sm:$0xff]
                  %899 = vst [vmem:[%s879 + $0x48] sm:$0xff] %v898
                  %v900 = vld [vmem:[%s878 + $0xa0] sm:$0xff]
                  %901 = vst [vmem:[%s879 + $0x50] sm:$0xff] %v900
                  %v902 = vld [vmem:[%s878 + $0xb0] sm:$0xff]
                  %903 = vst [vmem:[%s879 + $0x58] sm:$0xff] %v902
                  %v904 = vld [vmem:[%s878 + $0xc0] sm:$0xff]
                  %905 = vst [vmem:[%s879 + $0x60] sm:$0xff] %v904
                  %v906 = vld [vmem:[%s878 + $0xd0] sm:$0xff]
                  %907 = vst [vmem:[%s879 + $0x68] sm:$0xff] %v906
                  %v908 = vld [vmem:[%s878 + $0xe0] sm:$0xff]
                  %909 = vst [vmem:[%s879 + $0x70] sm:$0xff] %v908
                  %v910 = vld [vmem:[%s878 + $0xf0] sm:$0xff]
                  %911 = vst [vmem:[%s879 + $0x78] sm:$0xff] %v910
                  %v912 = vld [vmem:[%s878 + $0x100] sm:$0xff]
                  %913 = vst [vmem:[%s879 + $0x80] sm:$0xff] %v912
                  %v914 = vld [vmem:[%s878 + $0x110] sm:$0xff]
                  %915 = vst [vmem:[%s879 + $0x88] sm:$0xff] %v914
                  %v916 = vld [vmem:[%s878 + $0x120] sm:$0xff]
                  %917 = vst [vmem:[%s879 + $0x90] sm:$0xff] %v916
                  %v918 = vld [vmem:[%s878 + $0x130] sm:$0xff]
                  %919 = vst [vmem:[%s879 + $0x98] sm:$0xff] %v918
                  %v920 = vld [vmem:[%s878 + $0x140] sm:$0xff]
                  %921 = vst [vmem:[%s879 + $0xa0] sm:$0xff] %v920
                  %v922 = vld [vmem:[%s878 + $0x150] sm:$0xff]
                  %923 = vst [vmem:[%s879 + $0xa8] sm:$0xff] %v922
                  %v924 = vld [vmem:[%s878 + $0x160] sm:$0xff]
                  %925 = vst [vmem:[%s879 + $0xb0] sm:$0xff] %v924
                  %v926 = vld [vmem:[%s878 + $0x170] sm:$0xff]
                  %927 = vst [vmem:[%s879 + $0xb8] sm:$0xff] %v926
                  %v928 = vld [vmem:[%s878 + $0x180] sm:$0xff]
                  %929 = vst [vmem:[%s879 + $0xc0] sm:$0xff] %v928
                  %v930 = vld [vmem:[%s878 + $0x190] sm:$0xff]
                  %931 = vst [vmem:[%s879 + $0xc8] sm:$0xff] %v930
                  %v932 = vld [vmem:[%s878 + $0x1a0] sm:$0xff]
                  %933 = vst [vmem:[%s879 + $0xd0] sm:$0xff] %v932
                  %v934 = vld [vmem:[%s878 + $0x1b0] sm:$0xff]
                  %935 = vst [vmem:[%s879 + $0xd8] sm:$0xff] %v934
                  %v936 = vld [vmem:[%s878 + $0x1c0] sm:$0xff]
                  %937 = vst [vmem:[%s879 + $0xe0] sm:$0xff] %v936
                  %v938 = vld [vmem:[%s878 + $0x1d0] sm:$0xff]
                  %939 = vst [vmem:[%s879 + $0xe8] sm:$0xff] %v938
                  %v940 = vld [vmem:[%s878 + $0x1e0] sm:$0xff]
                  %941 = vst [vmem:[%s879 + $0xf0] sm:$0xff] %v940
                  %v942 = vld [vmem:[%s878 + $0x1f0] sm:$0xff]
                  %943 = vst [vmem:[%s879 + $0xf8] sm:$0xff] %v942
                  %v944 = vld [vmem:[%s878 + $0x200] sm:$0xff]
                  %945 = vst [vmem:[%s879 + $0x100] sm:$0xff] %v944
                  %v946 = vld [vmem:[%s878 + $0x210] sm:$0xff]
                  %947 = vst [vmem:[%s879 + $0x108] sm:$0xff] %v946
                  %v948 = vld [vmem:[%s878 + $0x220] sm:$0xff]
                  %949 = vst [vmem:[%s879 + $0x110] sm:$0xff] %v948
                  %v950 = vld [vmem:[%s878 + $0x230] sm:$0xff]
                  %951 = vst [vmem:[%s879 + $0x118] sm:$0xff] %v950
                  %v952 = vld [vmem:[%s878 + $0x240] sm:$0xff]
                  %953 = vst [vmem:[%s879 + $0x120] sm:$0xff] %v952
                  %v954 = vld [vmem:[%s878 + $0x250] sm:$0xff]
                  %955 = vst [vmem:[%s879 + $0x128] sm:$0xff] %v954
                  %v956 = vld [vmem:[%s878 + $0x260] sm:$0xff]
                  %957 = vst [vmem:[%s879 + $0x130] sm:$0xff] %v956
                  %v958 = vld [vmem:[%s878 + $0x270] sm:$0xff]
                  %959 = vst [vmem:[%s879 + $0x138] sm:$0xff] %v958
                  %v960 = vld [vmem:[%s878 + $0x280] sm:$0xff]
                  %961 = vst [vmem:[%s879 + $0x140] sm:$0xff] %v960
                  %v962 = vld [vmem:[%s878 + $0x290] sm:$0xff]
                  %963 = vst [vmem:[%s879 + $0x148] sm:$0xff] %v962
                  %v964 = vld [vmem:[%s878 + $0x2a0] sm:$0xff]
                  %965 = vst [vmem:[%s879 + $0x150] sm:$0xff] %v964
                  %v966 = vld [vmem:[%s878 + $0x2b0] sm:$0xff]
                  %967 = vst [vmem:[%s879 + $0x158] sm:$0xff] %v966
                  %v968 = vld [vmem:[%s878 + $0x2c0] sm:$0xff]
                  %969 = vst [vmem:[%s879 + $0x160] sm:$0xff] %v968
                  %v970 = vld [vmem:[%s878 + $0x2d0] sm:$0xff]
                  %971 = vst [vmem:[%s879 + $0x168] sm:$0xff] %v970
                  %v972 = vld [vmem:[%s878 + $0x2e0] sm:$0xff]
                  %973 = vst [vmem:[%s879 + $0x170] sm:$0xff] %v972
                  %v974 = vld [vmem:[%s878 + $0x2f0] sm:$0xff]
                  %975 = vst [vmem:[%s879 + $0x178] sm:$0xff] %v974
                  %v976 = vld [vmem:[%s878 + $0x300] sm:$0xff]
                  %977 = vst [vmem:[%s879 + $0x180] sm:$0xff] %v976
                  %v978 = vld [vmem:[%s878 + $0x310] sm:$0xff]
                  %979 = vst [vmem:[%s879 + $0x188] sm:$0xff] %v978
                  %v980 = vld [vmem:[%s878 + $0x320] sm:$0xff]
                  %981 = vst [vmem:[%s879 + $0x190] sm:$0xff] %v980
                  %v982 = vld [vmem:[%s878 + $0x330] sm:$0xff]
                  %983 = vst [vmem:[%s879 + $0x198] sm:$0xff] %v982
                  %v984 = vld [vmem:[%s878 + $0x340] sm:$0xff]
                  %985 = vst [vmem:[%s879 + $0x1a0] sm:$0xff] %v984
                  %v986 = vld [vmem:[%s878 + $0x350] sm:$0xff]
                  %987 = vst [vmem:[%s879 + $0x1a8] sm:$0xff] %v986
                  %v988 = vld [vmem:[%s878 + $0x360] sm:$0xff]
                  %989 = vst [vmem:[%s879 + $0x1b0] sm:$0xff] %v988
                  %v990 = vld [vmem:[%s878 + $0x370] sm:$0xff]
                  %991 = vst [vmem:[%s879 + $0x1b8] sm:$0xff] %v990
                  %v992 = vld [vmem:[%s878 + $0x380] sm:$0xff]
                  %993 = vst [vmem:[%s879 + $0x1c0] sm:$0xff] %v992
                  %v994 = vld [vmem:[%s878 + $0x390] sm:$0xff]
                  %995 = vst [vmem:[%s879 + $0x1c8] sm:$0xff] %v994
                  %v996 = vld [vmem:[%s878 + $0x3a0] sm:$0xff]
                  %997 = vst [vmem:[%s879 + $0x1d0] sm:$0xff] %v996
                  %v998 = vld [vmem:[%s878 + $0x3b0] sm:$0xff]
                  %999 = vst [vmem:[%s879 + $0x1d8] sm:$0xff] %v998
                  %v1000 = vld [vmem:[%s878 + $0x3c0] sm:$0xff]
                  %1001 = vst [vmem:[%s879 + $0x1e0] sm:$0xff] %v1000
                  %v1002 = vld [vmem:[%s878 + $0x3d0] sm:$0xff]
                  %1003 = vst [vmem:[%s879 + $0x1e8] sm:$0xff] %v1002
                  %v1004 = vld [vmem:[%s878 + $0x3e0] sm:$0xff]
                  %1005 = vst [vmem:[%s879 + $0x1f0] sm:$0xff] %v1004
                  %v1006 = vld [vmem:[%s878 + $0x3f0] sm:$0xff]
                  %1007 = vst [vmem:[%s879 + $0x1f8] sm:$0xff] %v1006
                  %v1008 = vld [vmem:[%s878 + $0x400] sm:$0xff]
                  %1009 = vst [vmem:[%s879 + $0x200] sm:$0xff] %v1008
                  %v1010 = vld [vmem:[%s878 + $0x410] sm:$0xff]
                  %1011 = vst [vmem:[%s879 + $0x208] sm:$0xff] %v1010
                  %v1012 = vld [vmem:[%s878 + $0x420] sm:$0xff]
                  %1013 = vst [vmem:[%s879 + $0x210] sm:$0xff] %v1012
                  %v1014 = vld [vmem:[%s878 + $0x430] sm:$0xff]
                  %1015 = vst [vmem:[%s879 + $0x218] sm:$0xff] %v1014
                  %v1016 = vld [vmem:[%s878 + $0x440] sm:$0xff]
                  %1017 = vst [vmem:[%s879 + $0x220] sm:$0xff] %v1016
                  %v1018 = vld [vmem:[%s878 + $0x450] sm:$0xff]
                  %1019 = vst [vmem:[%s879 + $0x228] sm:$0xff] %v1018
                  %v1020 = vld [vmem:[%s878 + $0x460] sm:$0xff]
                  %1021 = vst [vmem:[%s879 + $0x230] sm:$0xff] %v1020
                  %v1022 = vld [vmem:[%s878 + $0x470] sm:$0xff]
                  %1023 = vst [vmem:[%s879 + $0x238] sm:$0xff] %v1022
                  %v1024 = vld [vmem:[%s878 + $0x480] sm:$0xff]
                  %1025 = vst [vmem:[%s879 + $0x240] sm:$0xff] %v1024
                  %v1026 = vld [vmem:[%s878 + $0x490] sm:$0xff]
                  %1027 = vst [vmem:[%s879 + $0x248] sm:$0xff] %v1026
                  %v1028 = vld [vmem:[%s878 + $0x4a0] sm:$0xff]
                  %1029 = vst [vmem:[%s879 + $0x250] sm:$0xff] %v1028
                  %v1030 = vld [vmem:[%s878 + $0x4b0] sm:$0xff]
                  %1031 = vst [vmem:[%s879 + $0x258] sm:$0xff] %v1030
                  %v1032 = vld [vmem:[%s878 + $0x4c0] sm:$0xff]
                  %1033 = vst [vmem:[%s879 + $0x260] sm:$0xff] %v1032
                  %v1034 = vld [vmem:[%s878 + $0x4d0] sm:$0xff]
                  %1035 = vst [vmem:[%s879 + $0x268] sm:$0xff] %v1034
                  %v1036 = vld [vmem:[%s878 + $0x4e0] sm:$0xff]
                  %1037 = vst [vmem:[%s879 + $0x270] sm:$0xff] %v1036
                  %v1038 = vld [vmem:[%s878 + $0x4f0] sm:$0xff]
                  %1039 = vst [vmem:[%s879 + $0x278] sm:$0xff] %v1038
                  %v1040 = vld [vmem:[%s878 + $0x500] sm:$0xff]
                  %1041 = vst [vmem:[%s879 + $0x280] sm:$0xff] %v1040
                  %v1042 = vld [vmem:[%s878 + $0x510] sm:$0xff]
                  %1043 = vst [vmem:[%s879 + $0x288] sm:$0xff] %v1042
                  %v1044 = vld [vmem:[%s878 + $0x520] sm:$0xff]
                  %1045 = vst [vmem:[%s879 + $0x290] sm:$0xff] %v1044
                  %v1046 = vld [vmem:[%s878 + $0x530] sm:$0xff]
                  %1047 = vst [vmem:[%s879 + $0x298] sm:$0xff] %v1046
                  %v1048 = vld [vmem:[%s878 + $0x540] sm:$0xff]
                  %1049 = vst [vmem:[%s879 + $0x2a0] sm:$0xff] %v1048
                  %v1050 = vld [vmem:[%s878 + $0x550] sm:$0xff]
                  %1051 = vst [vmem:[%s879 + $0x2a8] sm:$0xff] %v1050
                  %v1052 = vld [vmem:[%s878 + $0x560] sm:$0xff]
                  %1053 = vst [vmem:[%s879 + $0x2b0] sm:$0xff] %v1052
                  %v1054 = vld [vmem:[%s878 + $0x570] sm:$0xff]
                  %1055 = vst [vmem:[%s879 + $0x2b8] sm:$0xff] %v1054
                  %v1056 = vld [vmem:[%s878 + $0x580] sm:$0xff]
                  %1057 = vst [vmem:[%s879 + $0x2c0] sm:$0xff] %v1056
                  %v1058 = vld [vmem:[%s878 + $0x590] sm:$0xff]
                  %1059 = vst [vmem:[%s879 + $0x2c8] sm:$0xff] %v1058
                  %v1060 = vld [vmem:[%s878 + $0x5a0] sm:$0xff]
                  %1061 = vst [vmem:[%s879 + $0x2d0] sm:$0xff] %v1060
                  %v1062 = vld [vmem:[%s878 + $0x5b0] sm:$0xff]
                  %1063 = vst [vmem:[%s879 + $0x2d8] sm:$0xff] %v1062
                  %v1064 = vld [vmem:[%s878 + $0x5c0] sm:$0xff]
                  %1065 = vst [vmem:[%s879 + $0x2e0] sm:$0xff] %v1064
                  %v1066 = vld [vmem:[%s878 + $0x5d0] sm:$0xff]
                  %1067 = vst [vmem:[%s879 + $0x2e8] sm:$0xff] %v1066
                  %v1068 = vld [vmem:[%s878 + $0x5e0] sm:$0xff]
                  %1069 = vst [vmem:[%s879 + $0x2f0] sm:$0xff] %v1068
                  %v1070 = vld [vmem:[%s878 + $0x5f0] sm:$0xff]
                  %1071 = vst [vmem:[%s879 + $0x2f8] sm:$0xff] %v1070
                  %v1072 = vld [vmem:[%s878 + $0x600] sm:$0xff]
                  %1073 = vst [vmem:[%s879 + $0x300] sm:$0xff] %v1072
                  %v1074 = vld [vmem:[%s878 + $0x610] sm:$0xff]
                  %1075 = vst [vmem:[%s879 + $0x308] sm:$0xff] %v1074
                  %v1076 = vld [vmem:[%s878 + $0x620] sm:$0xff]
                  %1077 = vst [vmem:[%s879 + $0x310] sm:$0xff] %v1076
                  %v1078 = vld [vmem:[%s878 + $0x630] sm:$0xff]
                  %1079 = vst [vmem:[%s879 + $0x318] sm:$0xff] %v1078
                  %v1080 = vld [vmem:[%s878 + $0x640] sm:$0xff]
                  %1081 = vst [vmem:[%s879 + $0x320] sm:$0xff] %v1080
                  %v1082 = vld [vmem:[%s878 + $0x650] sm:$0xff]
                  %1083 = vst [vmem:[%s879 + $0x328] sm:$0xff] %v1082
                  %v1084 = vld [vmem:[%s878 + $0x660] sm:$0xff]
                  %1085 = vst [vmem:[%s879 + $0x330] sm:$0xff] %v1084
                  %v1086 = vld [vmem:[%s878 + $0x670] sm:$0xff]
                  %1087 = vst [vmem:[%s879 + $0x338] sm:$0xff] %v1086
                  %v1088 = vld [vmem:[%s878 + $0x680] sm:$0xff]
                  %1089 = vst [vmem:[%s879 + $0x340] sm:$0xff] %v1088
                  %v1090 = vld [vmem:[%s878 + $0x690] sm:$0xff]
                  %1091 = vst [vmem:[%s879 + $0x348] sm:$0xff] %v1090
                  %v1092 = vld [vmem:[%s878 + $0x6a0] sm:$0xff]
                  %1093 = vst [vmem:[%s879 + $0x350] sm:$0xff] %v1092
                  %v1094 = vld [vmem:[%s878 + $0x6b0] sm:$0xff]
                  %1095 = vst [vmem:[%s879 + $0x358] sm:$0xff] %v1094
                  %v1096 = vld [vmem:[%s878 + $0x6c0] sm:$0xff]
                  %1097 = vst [vmem:[%s879 + $0x360] sm:$0xff] %v1096
                  %v1098 = vld [vmem:[%s878 + $0x6d0] sm:$0xff]
                  %1099 = vst [vmem:[%s879 + $0x368] sm:$0xff] %v1098
                  %v1100 = vld [vmem:[%s878 + $0x6e0] sm:$0xff]
                  %1101 = vst [vmem:[%s879 + $0x370] sm:$0xff] %v1100
                  %v1102 = vld [vmem:[%s878 + $0x6f0] sm:$0xff]
                  %1103 = vst [vmem:[%s879 + $0x378] sm:$0xff] %v1102
                  %v1104 = vld [vmem:[%s878 + $0x700] sm:$0xff]
                  %1105 = vst [vmem:[%s879 + $0x380] sm:$0xff] %v1104
                  %v1106 = vld [vmem:[%s878 + $0x710] sm:$0xff]
                  %1107 = vst [vmem:[%s879 + $0x388] sm:$0xff] %v1106
                  %v1108 = vld [vmem:[%s878 + $0x720] sm:$0xff]
                  %1109 = vst [vmem:[%s879 + $0x390] sm:$0xff] %v1108
                  %v1110 = vld [vmem:[%s878 + $0x730] sm:$0xff]
                  %1111 = vst [vmem:[%s879 + $0x398] sm:$0xff] %v1110
                  %v1112 = vld [vmem:[%s878 + $0x740] sm:$0xff]
                  %1113 = vst [vmem:[%s879 + $0x3a0] sm:$0xff] %v1112
                  %v1114 = vld [vmem:[%s878 + $0x750] sm:$0xff]
                  %1115 = vst [vmem:[%s879 + $0x3a8] sm:$0xff] %v1114
                  %v1116 = vld [vmem:[%s878 + $0x760] sm:$0xff]
                  %1117 = vst [vmem:[%s879 + $0x3b0] sm:$0xff] %v1116
                  %v1118 = vld [vmem:[%s878 + $0x770] sm:$0xff]
                  %1119 = vst [vmem:[%s879 + $0x3b8] sm:$0xff] %v1118
                  %v1120 = vld [vmem:[%s878 + $0x780] sm:$0xff]
                  %1121 = vst [vmem:[%s879 + $0x3c0] sm:$0xff] %v1120
                  %v1122 = vld [vmem:[%s878 + $0x790] sm:$0xff]
                  %1123 = vst [vmem:[%s879 + $0x3c8] sm:$0xff] %v1122
                  %v1124 = vld [vmem:[%s878 + $0x7a0] sm:$0xff]
                  %1125 = vst [vmem:[%s879 + $0x3d0] sm:$0xff] %v1124
                  %v1126 = vld [vmem:[%s878 + $0x7b0] sm:$0xff]
                  %1127 = vst [vmem:[%s879 + $0x3d8] sm:$0xff] %v1126
                  %v1128 = vld [vmem:[%s878 + $0x7c0] sm:$0xff]
                  %1129 = vst [vmem:[%s879 + $0x3e0] sm:$0xff] %v1128
                  %v1130 = vld [vmem:[%s878 + $0x7d0] sm:$0xff]
                  %1131 = vst [vmem:[%s879 + $0x3e8] sm:$0xff] %v1130
                  %v1132 = vld [vmem:[%s878 + $0x7e0] sm:$0xff]
                  %1133 = vst [vmem:[%s879 + $0x3f0] sm:$0xff] %v1132
                  %v1134 = vld [vmem:[%s878 + $0x7f0] sm:$0xff]
                  %1135 = vst [vmem:[%s879 + $0x3f8] sm:$0xff] %v1134
                  %v1136 = vld [vmem:[%s878 + $0x800] sm:$0xff]
                  %1137 = vst [vmem:[%s879 + $0x400] sm:$0xff] %v1136
                  %v1138 = vld [vmem:[%s878 + $0x810] sm:$0xff]
                  %1139 = vst [vmem:[%s879 + $0x408] sm:$0xff] %v1138
                  %v1140 = vld [vmem:[%s878 + $0x820] sm:$0xff]
                  %1141 = vst [vmem:[%s879 + $0x410] sm:$0xff] %v1140
                  %v1142 = vld [vmem:[%s878 + $0x830] sm:$0xff]
                  %1143 = vst [vmem:[%s879 + $0x418] sm:$0xff] %v1142
                  %v1144 = vld [vmem:[%s878 + $0x840] sm:$0xff]
                  %1145 = vst [vmem:[%s879 + $0x420] sm:$0xff] %v1144
                  %v1146 = vld [vmem:[%s878 + $0x850] sm:$0xff]
                  %1147 = vst [vmem:[%s879 + $0x428] sm:$0xff] %v1146
                  %v1148 = vld [vmem:[%s878 + $0x860] sm:$0xff]
                  %1149 = vst [vmem:[%s879 + $0x430] sm:$0xff] %v1148
                  %v1150 = vld [vmem:[%s878 + $0x870] sm:$0xff]
                  %1151 = vst [vmem:[%s879 + $0x438] sm:$0xff] %v1150
                  %v1152 = vld [vmem:[%s878 + $0x880] sm:$0xff]
                  %1153 = vst [vmem:[%s879 + $0x440] sm:$0xff] %v1152
                  %v1154 = vld [vmem:[%s878 + $0x890] sm:$0xff]
                  %1155 = vst [vmem:[%s879 + $0x448] sm:$0xff] %v1154
                  %v1156 = vld [vmem:[%s878 + $0x8a0] sm:$0xff]
                  %1157 = vst [vmem:[%s879 + $0x450] sm:$0xff] %v1156
                  %v1158 = vld [vmem:[%s878 + $0x8b0] sm:$0xff]
                  %1159 = vst [vmem:[%s879 + $0x458] sm:$0xff] %v1158
                  %v1160 = vld [vmem:[%s878 + $0x8c0] sm:$0xff]
                  %1161 = vst [vmem:[%s879 + $0x460] sm:$0xff] %v1160
                  %v1162 = vld [vmem:[%s878 + $0x8d0] sm:$0xff]
                  %1163 = vst [vmem:[%s879 + $0x468] sm:$0xff] %v1162
                  %v1164 = vld [vmem:[%s878 + $0x8e0] sm:$0xff]
                  %1165 = vst [vmem:[%s879 + $0x470] sm:$0xff] %v1164
                  %v1166 = vld [vmem:[%s878 + $0x8f0] sm:$0xff]
                  %1167 = vst [vmem:[%s879 + $0x478] sm:$0xff] %v1166
                  %v1168 = vld [vmem:[%s878 + $0x900] sm:$0xff]
                  %1169 = vst [vmem:[%s879 + $0x480] sm:$0xff] %v1168
                  %v1170 = vld [vmem:[%s878 + $0x910] sm:$0xff]
                  %1171 = vst [vmem:[%s879 + $0x488] sm:$0xff] %v1170
                  %v1172 = vld [vmem:[%s878 + $0x920] sm:$0xff]
                  %1173 = vst [vmem:[%s879 + $0x490] sm:$0xff] %v1172
                  %v1174 = vld [vmem:[%s878 + $0x930] sm:$0xff]
                  %1175 = vst [vmem:[%s879 + $0x498] sm:$0xff] %v1174
                  %v1176 = vld [vmem:[%s878 + $0x940] sm:$0xff]
                  %1177 = vst [vmem:[%s879 + $0x4a0] sm:$0xff] %v1176
                  %v1178 = vld [vmem:[%s878 + $0x950] sm:$0xff]
                  %1179 = vst [vmem:[%s879 + $0x4a8] sm:$0xff] %v1178
                  %v1180 = vld [vmem:[%s878 + $0x960] sm:$0xff]
                  %1181 = vst [vmem:[%s879 + $0x4b0] sm:$0xff] %v1180
                  %v1182 = vld [vmem:[%s878 + $0x970] sm:$0xff]
                  %1183 = vst [vmem:[%s879 + $0x4b8] sm:$0xff] %v1182
                  %v1184 = vld [vmem:[%s878 + $0x980] sm:$0xff]
                  %1185 = vst [vmem:[%s879 + $0x4c0] sm:$0xff] %v1184
                  %v1186 = vld [vmem:[%s878 + $0x990] sm:$0xff]
                  %1187 = vst [vmem:[%s879 + $0x4c8] sm:$0xff] %v1186
                  %v1188 = vld [vmem:[%s878 + $0x9a0] sm:$0xff]
                  %1189 = vst [vmem:[%s879 + $0x4d0] sm:$0xff] %v1188
                  %v1190 = vld [vmem:[%s878 + $0x9b0] sm:$0xff]
                  %1191 = vst [vmem:[%s879 + $0x4d8] sm:$0xff] %v1190
                  %v1192 = vld [vmem:[%s878 + $0x9c0] sm:$0xff]
                  %1193 = vst [vmem:[%s879 + $0x4e0] sm:$0xff] %v1192
                  %v1194 = vld [vmem:[%s878 + $0x9d0] sm:$0xff]
                  %1195 = vst [vmem:[%s879 + $0x4e8] sm:$0xff] %v1194
                  %v1196 = vld [vmem:[%s878 + $0x9e0] sm:$0xff]
                  %1197 = vst [vmem:[%s879 + $0x4f0] sm:$0xff] %v1196
                  %v1198 = vld [vmem:[%s878 + $0x9f0] sm:$0xff]
                  %1199 = vst [vmem:[%s879 + $0x4f8] sm:$0xff] %v1198
                  %v1200 = vld [vmem:[%s878 + $0xa00] sm:$0xff]
                  %1201 = vst [vmem:[%s879 + $0x500] sm:$0xff] %v1200
                  %v1202 = vld [vmem:[%s878 + $0xa10] sm:$0xff]
                  %1203 = vst [vmem:[%s879 + $0x508] sm:$0xff] %v1202
                  %v1204 = vld [vmem:[%s878 + $0xa20] sm:$0xff]
                  %1205 = vst [vmem:[%s879 + $0x510] sm:$0xff] %v1204
                  %v1206 = vld [vmem:[%s878 + $0xa30] sm:$0xff]
                  %1207 = vst [vmem:[%s879 + $0x518] sm:$0xff] %v1206
                  %v1208 = vld [vmem:[%s878 + $0xa40] sm:$0xff]
                  %1209 = vst [vmem:[%s879 + $0x520] sm:$0xff] %v1208
                  %v1210 = vld [vmem:[%s878 + $0xa50] sm:$0xff]
                  %1211 = vst [vmem:[%s879 + $0x528] sm:$0xff] %v1210
                  %v1212 = vld [vmem:[%s878 + $0xa60] sm:$0xff]
                  %1213 = vst [vmem:[%s879 + $0x530] sm:$0xff] %v1212
                  %v1214 = vld [vmem:[%s878 + $0xa70] sm:$0xff]
                  %1215 = vst [vmem:[%s879 + $0x538] sm:$0xff] %v1214
                  %v1216 = vld [vmem:[%s878 + $0xa80] sm:$0xff]
                  %1217 = vst [vmem:[%s879 + $0x540] sm:$0xff] %v1216
                  %v1218 = vld [vmem:[%s878 + $0xa90] sm:$0xff]
                  %1219 = vst [vmem:[%s879 + $0x548] sm:$0xff] %v1218
                  %v1220 = vld [vmem:[%s878 + $0xaa0] sm:$0xff]
                  %1221 = vst [vmem:[%s879 + $0x550] sm:$0xff] %v1220
                  %v1222 = vld [vmem:[%s878 + $0xab0] sm:$0xff]
                  %1223 = vst [vmem:[%s879 + $0x558] sm:$0xff] %v1222
                  %v1224 = vld [vmem:[%s878 + $0xac0] sm:$0xff]
                  %1225 = vst [vmem:[%s879 + $0x560] sm:$0xff] %v1224
                  %v1226 = vld [vmem:[%s878 + $0xad0] sm:$0xff]
                  %1227 = vst [vmem:[%s879 + $0x568] sm:$0xff] %v1226
                  %v1228 = vld [vmem:[%s878 + $0xae0] sm:$0xff]
                  %1229 = vst [vmem:[%s879 + $0x570] sm:$0xff] %v1228
                  %v1230 = vld [vmem:[%s878 + $0xaf0] sm:$0xff]
                  %1231 = vst [vmem:[%s879 + $0x578] sm:$0xff] %v1230
                  %v1232 = vld [vmem:[%s878 + $0xb00] sm:$0xff]
                  %1233 = vst [vmem:[%s879 + $0x580] sm:$0xff] %v1232
                  %v1234 = vld [vmem:[%s878 + $0xb10] sm:$0xff]
                  %1235 = vst [vmem:[%s879 + $0x588] sm:$0xff] %v1234
                  %v1236 = vld [vmem:[%s878 + $0xb20] sm:$0xff]
                  %1237 = vst [vmem:[%s879 + $0x590] sm:$0xff] %v1236
                  %v1238 = vld [vmem:[%s878 + $0xb30] sm:$0xff]
                  %1239 = vst [vmem:[%s879 + $0x598] sm:$0xff] %v1238
                  %v1240 = vld [vmem:[%s878 + $0xb40] sm:$0xff]
                  %1241 = vst [vmem:[%s879 + $0x5a0] sm:$0xff] %v1240
                  %v1242 = vld [vmem:[%s878 + $0xb50] sm:$0xff]
                  %1243 = vst [vmem:[%s879 + $0x5a8] sm:$0xff] %v1242
                  %v1244 = vld [vmem:[%s878 + $0xb60] sm:$0xff]
                  %1245 = vst [vmem:[%s879 + $0x5b0] sm:$0xff] %v1244
                  %v1246 = vld [vmem:[%s878 + $0xb70] sm:$0xff]
                  %1247 = vst [vmem:[%s879 + $0x5b8] sm:$0xff] %v1246
                  %v1248 = vld [vmem:[%s878 + $0xb80] sm:$0xff]
                  %1249 = vst [vmem:[%s879 + $0x5c0] sm:$0xff] %v1248
                  %v1250 = vld [vmem:[%s878 + $0xb90] sm:$0xff]
                  %1251 = vst [vmem:[%s879 + $0x5c8] sm:$0xff] %v1250
                  %v1252 = vld [vmem:[%s878 + $0xba0] sm:$0xff]
                  %1253 = vst [vmem:[%s879 + $0x5d0] sm:$0xff] %v1252
                  %v1254 = vld [vmem:[%s878 + $0xbb0] sm:$0xff]
                  %1255 = vst [vmem:[%s879 + $0x5d8] sm:$0xff] %v1254
                  %v1256 = vld [vmem:[%s878 + $0xbc0] sm:$0xff]
                  %1257 = vst [vmem:[%s879 + $0x5e0] sm:$0xff] %v1256
                  %v1258 = vld [vmem:[%s878 + $0xbd0] sm:$0xff]
                  %1259 = vst [vmem:[%s879 + $0x5e8] sm:$0xff] %v1258
                  %v1260 = vld [vmem:[%s878 + $0xbe0] sm:$0xff]
                  %1261 = vst [vmem:[%s879 + $0x5f0] sm:$0xff] %v1260
                  %v1262 = vld [vmem:[%s878 + $0xbf0] sm:$0xff]
                  %1263 = vst [vmem:[%s879 + $0x5f8] sm:$0xff] %v1262
                  %v1264 = vld [vmem:[%s878 + $0xc00] sm:$0xff]
                  %1265 = vst [vmem:[%s879 + $0x600] sm:$0xff] %v1264
                  %v1266 = vld [vmem:[%s878 + $0xc10] sm:$0xff]
                  %1267 = vst [vmem:[%s879 + $0x608] sm:$0xff] %v1266
                  %v1268 = vld [vmem:[%s878 + $0xc20] sm:$0xff]
                  %1269 = vst [vmem:[%s879 + $0x610] sm:$0xff] %v1268
                  %v1270 = vld [vmem:[%s878 + $0xc30] sm:$0xff]
                  %1271 = vst [vmem:[%s879 + $0x618] sm:$0xff] %v1270
                  %v1272 = vld [vmem:[%s878 + $0xc40] sm:$0xff]
                  %1273 = vst [vmem:[%s879 + $0x620] sm:$0xff] %v1272
                  %v1274 = vld [vmem:[%s878 + $0xc50] sm:$0xff]
                  %1275 = vst [vmem:[%s879 + $0x628] sm:$0xff] %v1274
                  %v1276 = vld [vmem:[%s878 + $0xc60] sm:$0xff]
                  %1277 = vst [vmem:[%s879 + $0x630] sm:$0xff] %v1276
                  %v1278 = vld [vmem:[%s878 + $0xc70] sm:$0xff]
                  %1279 = vst [vmem:[%s879 + $0x638] sm:$0xff] %v1278
                  %v1280 = vld [vmem:[%s878 + $0xc80] sm:$0xff]
                  %1281 = vst [vmem:[%s879 + $0x640] sm:$0xff] %v1280
                  %v1282 = vld [vmem:[%s878 + $0xc90] sm:$0xff]
                  %1283 = vst [vmem:[%s879 + $0x648] sm:$0xff] %v1282
                  %v1284 = vld [vmem:[%s878 + $0xca0] sm:$0xff]
                  %1285 = vst [vmem:[%s879 + $0x650] sm:$0xff] %v1284
                  %v1286 = vld [vmem:[%s878 + $0xcb0] sm:$0xff]
                  %1287 = vst [vmem:[%s879 + $0x658] sm:$0xff] %v1286
                  %v1288 = vld [vmem:[%s878 + $0xcc0] sm:$0xff]
                  %1289 = vst [vmem:[%s879 + $0x660] sm:$0xff] %v1288
                  %v1290 = vld [vmem:[%s878 + $0xcd0] sm:$0xff]
                  %1291 = vst [vmem:[%s879 + $0x668] sm:$0xff] %v1290
                  %v1292 = vld [vmem:[%s878 + $0xce0] sm:$0xff]
                  %1293 = vst [vmem:[%s879 + $0x670] sm:$0xff] %v1292
                  %v1294 = vld [vmem:[%s878 + $0xcf0] sm:$0xff]
                  %1295 = vst [vmem:[%s879 + $0x678] sm:$0xff] %v1294
                  %v1296 = vld [vmem:[%s878 + $0xd00] sm:$0xff]
                  %1297 = vst [vmem:[%s879 + $0x680] sm:$0xff] %v1296
                  %v1298 = vld [vmem:[%s878 + $0xd10] sm:$0xff]
                  %1299 = vst [vmem:[%s879 + $0x688] sm:$0xff] %v1298
                  %v1300 = vld [vmem:[%s878 + $0xd20] sm:$0xff]
                  %1301 = vst [vmem:[%s879 + $0x690] sm:$0xff] %v1300
                  %v1302 = vld [vmem:[%s878 + $0xd30] sm:$0xff]
                  %1303 = vst [vmem:[%s879 + $0x698] sm:$0xff] %v1302
                  %v1304 = vld [vmem:[%s878 + $0xd40] sm:$0xff]
                  %1305 = vst [vmem:[%s879 + $0x6a0] sm:$0xff] %v1304
                  %v1306 = vld [vmem:[%s878 + $0xd50] sm:$0xff]
                  %1307 = vst [vmem:[%s879 + $0x6a8] sm:$0xff] %v1306
                  %v1308 = vld [vmem:[%s878 + $0xd60] sm:$0xff]
                  %1309 = vst [vmem:[%s879 + $0x6b0] sm:$0xff] %v1308
                  %v1310 = vld [vmem:[%s878 + $0xd70] sm:$0xff]
                  %1311 = vst [vmem:[%s879 + $0x6b8] sm:$0xff] %v1310
                  %v1312 = vld [vmem:[%s878 + $0xd80] sm:$0xff]
                  %1313 = vst [vmem:[%s879 + $0x6c0] sm:$0xff] %v1312
                  %v1314 = vld [vmem:[%s878 + $0xd90] sm:$0xff]
                  %1315 = vst [vmem:[%s879 + $0x6c8] sm:$0xff] %v1314
                  %v1316 = vld [vmem:[%s878 + $0xda0] sm:$0xff]
                  %1317 = vst [vmem:[%s879 + $0x6d0] sm:$0xff] %v1316
                  %v1318 = vld [vmem:[%s878 + $0xdb0] sm:$0xff]
                  %1319 = vst [vmem:[%s879 + $0x6d8] sm:$0xff] %v1318
                  %v1320 = vld [vmem:[%s878 + $0xdc0] sm:$0xff]
                  %1321 = vst [vmem:[%s879 + $0x6e0] sm:$0xff] %v1320
                  %v1322 = vld [vmem:[%s878 + $0xdd0] sm:$0xff]
                  %1323 = vst [vmem:[%s879 + $0x6e8] sm:$0xff] %v1322
                  %v1324 = vld [vmem:[%s878 + $0xde0] sm:$0xff]
                  %1325 = vst [vmem:[%s879 + $0x6f0] sm:$0xff] %v1324
                  %v1326 = vld [vmem:[%s878 + $0xdf0] sm:$0xff]
                  %1327 = vst [vmem:[%s879 + $0x6f8] sm:$0xff] %v1326
                  %v1328 = vld [vmem:[%s878 + $0xe00] sm:$0xff]
                  %1329 = vst [vmem:[%s879 + $0x700] sm:$0xff] %v1328
                  %v1330 = vld [vmem:[%s878 + $0xe10] sm:$0xff]
                  %1331 = vst [vmem:[%s879 + $0x708] sm:$0xff] %v1330
                  %v1332 = vld [vmem:[%s878 + $0xe20] sm:$0xff]
                  %1333 = vst [vmem:[%s879 + $0x710] sm:$0xff] %v1332
                  %v1334 = vld [vmem:[%s878 + $0xe30] sm:$0xff]
                  %1335 = vst [vmem:[%s879 + $0x718] sm:$0xff] %v1334
                  %v1336 = vld [vmem:[%s878 + $0xe40] sm:$0xff]
                  %1337 = vst [vmem:[%s879 + $0x720] sm:$0xff] %v1336
                  %v1338 = vld [vmem:[%s878 + $0xe50] sm:$0xff]
                  %1339 = vst [vmem:[%s879 + $0x728] sm:$0xff] %v1338
                  %v1340 = vld [vmem:[%s878 + $0xe60] sm:$0xff]
                  %1341 = vst [vmem:[%s879 + $0x730] sm:$0xff] %v1340
                  %v1342 = vld [vmem:[%s878 + $0xe70] sm:$0xff]
                  %1343 = vst [vmem:[%s879 + $0x738] sm:$0xff] %v1342
                  %v1344 = vld [vmem:[%s878 + $0xe80] sm:$0xff]
                  %1345 = vst [vmem:[%s879 + $0x740] sm:$0xff] %v1344
                  %v1346 = vld [vmem:[%s878 + $0xe90] sm:$0xff]
                  %1347 = vst [vmem:[%s879 + $0x748] sm:$0xff] %v1346
                  %v1348 = vld [vmem:[%s878 + $0xea0] sm:$0xff]
                  %1349 = vst [vmem:[%s879 + $0x750] sm:$0xff] %v1348
                  %v1350 = vld [vmem:[%s878 + $0xeb0] sm:$0xff]
                  %1351 = vst [vmem:[%s879 + $0x758] sm:$0xff] %v1350
                  %v1352 = vld [vmem:[%s878 + $0xec0] sm:$0xff]
                  %1353 = vst [vmem:[%s879 + $0x760] sm:$0xff] %v1352
                  %v1354 = vld [vmem:[%s878 + $0xed0] sm:$0xff]
                  %1355 = vst [vmem:[%s879 + $0x768] sm:$0xff] %v1354
                  %v1356 = vld [vmem:[%s878 + $0xee0] sm:$0xff]
                  %1357 = vst [vmem:[%s879 + $0x770] sm:$0xff] %v1356
                  %v1358 = vld [vmem:[%s878 + $0xef0] sm:$0xff]
                  %1359 = vst [vmem:[%s879 + $0x778] sm:$0xff] %v1358
                  %v1360 = vld [vmem:[%s878 + $0xf00] sm:$0xff]
                  %1361 = vst [vmem:[%s879 + $0x780] sm:$0xff] %v1360
                  %v1362 = vld [vmem:[%s878 + $0xf10] sm:$0xff]
                  %1363 = vst [vmem:[%s879 + $0x788] sm:$0xff] %v1362
                  %v1364 = vld [vmem:[%s878 + $0xf20] sm:$0xff]
                  %1365 = vst [vmem:[%s879 + $0x790] sm:$0xff] %v1364
                  %v1366 = vld [vmem:[%s878 + $0xf30] sm:$0xff]
                  %1367 = vst [vmem:[%s879 + $0x798] sm:$0xff] %v1366
                  %v1368 = vld [vmem:[%s878 + $0xf40] sm:$0xff]
                  %1369 = vst [vmem:[%s879 + $0x7a0] sm:$0xff] %v1368
                  %v1370 = vld [vmem:[%s878 + $0xf50] sm:$0xff]
                  %1371 = vst [vmem:[%s879 + $0x7a8] sm:$0xff] %v1370
                  %v1372 = vld [vmem:[%s878 + $0xf60] sm:$0xff]
                  %1373 = vst [vmem:[%s879 + $0x7b0] sm:$0xff] %v1372
                  %v1374 = vld [vmem:[%s878 + $0xf70] sm:$0xff]
                  %1375 = vst [vmem:[%s879 + $0x7b8] sm:$0xff] %v1374
                  %v1376 = vld [vmem:[%s878 + $0xf80] sm:$0xff]
                  %1377 = vst [vmem:[%s879 + $0x7c0] sm:$0xff] %v1376
                  %v1378 = vld [vmem:[%s878 + $0xf90] sm:$0xff]
                  %1379 = vst [vmem:[%s879 + $0x7c8] sm:$0xff] %v1378
                  %v1380 = vld [vmem:[%s878 + $0xfa0] sm:$0xff]
                  %1381 = vst [vmem:[%s879 + $0x7d0] sm:$0xff] %v1380
                  %v1382 = vld [vmem:[%s878 + $0xfb0] sm:$0xff]
                  %1383 = vst [vmem:[%s879 + $0x7d8] sm:$0xff] %v1382
                  %v1384 = vld [vmem:[%s878 + $0xfc0] sm:$0xff]
                  %1385 = vst [vmem:[%s879 + $0x7e0] sm:$0xff] %v1384
                  %v1386 = vld [vmem:[%s878 + $0xfd0] sm:$0xff]
                  %1387 = vst [vmem:[%s879 + $0x7e8] sm:$0xff] %v1386
                  %v1388 = vld [vmem:[%s878 + $0xfe0] sm:$0xff]
                  %1389 = vst [vmem:[%s879 + $0x7f0] sm:$0xff] %v1388
                  %v1390 = vld [vmem:[%s878 + $0xff0] sm:$0xff]
                  %1391 = vst [vmem:[%s879 + $0x7f8] sm:$0xff] %v1390
                  %v1392 = vld [vmem:[%s878 + $0x1000] sm:$0xff]
                  %1393 = vst [vmem:[%s879 + $0x800] sm:$0xff] %v1392
                  %v1394 = vld [vmem:[%s878 + $0x1010] sm:$0xff]
                  %1395 = vst [vmem:[%s879 + $0x808] sm:$0xff] %v1394
                  %v1396 = vld [vmem:[%s878 + $0x1020] sm:$0xff]
                  %1397 = vst [vmem:[%s879 + $0x810] sm:$0xff] %v1396
                  %v1398 = vld [vmem:[%s878 + $0x1030] sm:$0xff]
                  %1399 = vst [vmem:[%s879 + $0x818] sm:$0xff] %v1398
                  %v1400 = vld [vmem:[%s878 + $0x1040] sm:$0xff]
                  %1401 = vst [vmem:[%s879 + $0x820] sm:$0xff] %v1400
                  %v1402 = vld [vmem:[%s878 + $0x1050] sm:$0xff]
                  %1403 = vst [vmem:[%s879 + $0x828] sm:$0xff] %v1402
                  %v1404 = vld [vmem:[%s878 + $0x1060] sm:$0xff]
                  %1405 = vst [vmem:[%s879 + $0x830] sm:$0xff] %v1404
                  %v1406 = vld [vmem:[%s878 + $0x1070] sm:$0xff]
                  %1407 = vst [vmem:[%s879 + $0x838] sm:$0xff] %v1406
                  %v1408 = vld [vmem:[%s878 + $0x1080] sm:$0xff]
                  %1409 = vst [vmem:[%s879 + $0x840] sm:$0xff] %v1408
                  %v1410 = vld [vmem:[%s878 + $0x1090] sm:$0xff]
                  %1411 = vst [vmem:[%s879 + $0x848] sm:$0xff] %v1410
                  %v1412 = vld [vmem:[%s878 + $0x10a0] sm:$0xff]
                  %1413 = vst [vmem:[%s879 + $0x850] sm:$0xff] %v1412
                  %v1414 = vld [vmem:[%s878 + $0x10b0] sm:$0xff]
                  %1415 = vst [vmem:[%s879 + $0x858] sm:$0xff] %v1414
                  %v1416 = vld [vmem:[%s878 + $0x10c0] sm:$0xff]
                  %1417 = vst [vmem:[%s879 + $0x860] sm:$0xff] %v1416
                  %v1418 = vld [vmem:[%s878 + $0x10d0] sm:$0xff]
                  %1419 = vst [vmem:[%s879 + $0x868] sm:$0xff] %v1418
                  %v1420 = vld [vmem:[%s878 + $0x10e0] sm:$0xff]
                  %1421 = vst [vmem:[%s879 + $0x870] sm:$0xff] %v1420
                  %v1422 = vld [vmem:[%s878 + $0x10f0] sm:$0xff]
                  %1423 = vst [vmem:[%s879 + $0x878] sm:$0xff] %v1422
                  %v1424 = vld [vmem:[%s878 + $0x1100] sm:$0xff]
                  %1425 = vst [vmem:[%s879 + $0x880] sm:$0xff] %v1424
                  %v1426 = vld [vmem:[%s878 + $0x1110] sm:$0xff]
                  %1427 = vst [vmem:[%s879 + $0x888] sm:$0xff] %v1426
                  %v1428 = vld [vmem:[%s878 + $0x1120] sm:$0xff]
                  %1429 = vst [vmem:[%s879 + $0x890] sm:$0xff] %v1428
                  %v1430 = vld [vmem:[%s878 + $0x1130] sm:$0xff]
                  %1431 = vst [vmem:[%s879 + $0x898] sm:$0xff] %v1430
                  %v1432 = vld [vmem:[%s878 + $0x1140] sm:$0xff]
                  %1433 = vst [vmem:[%s879 + $0x8a0] sm:$0xff] %v1432
                  %v1434 = vld [vmem:[%s878 + $0x1150] sm:$0xff]
                  %1435 = vst [vmem:[%s879 + $0x8a8] sm:$0xff] %v1434
                  %v1436 = vld [vmem:[%s878 + $0x1160] sm:$0xff]
                  %1437 = vst [vmem:[%s879 + $0x8b0] sm:$0xff] %v1436
                  %v1438 = vld [vmem:[%s878 + $0x1170] sm:$0xff]
                  %1439 = vst [vmem:[%s879 + $0x8b8] sm:$0xff] %v1438
                  %v1440 = vld [vmem:[%s878 + $0x1180] sm:$0xff]
                  %1441 = vst [vmem:[%s879 + $0x8c0] sm:$0xff] %v1440
                  %v1442 = vld [vmem:[%s878 + $0x1190] sm:$0xff]
                  %1443 = vst [vmem:[%s879 + $0x8c8] sm:$0xff] %v1442
                  %v1444 = vld [vmem:[%s878 + $0x11a0] sm:$0xff]
                  %1445 = vst [vmem:[%s879 + $0x8d0] sm:$0xff] %v1444
                  %v1446 = vld [vmem:[%s878 + $0x11b0] sm:$0xff]
                  %1447 = vst [vmem:[%s879 + $0x8d8] sm:$0xff] %v1446
                  %v1448 = vld [vmem:[%s878 + $0x11c0] sm:$0xff]
                  %1449 = vst [vmem:[%s879 + $0x8e0] sm:$0xff] %v1448
                  %v1450 = vld [vmem:[%s878 + $0x11d0] sm:$0xff]
                  %1451 = vst [vmem:[%s879 + $0x8e8] sm:$0xff] %v1450
                  %v1452 = vld [vmem:[%s878 + $0x11e0] sm:$0xff]
                  %1453 = vst [vmem:[%s879 + $0x8f0] sm:$0xff] %v1452
                  %v1454 = vld [vmem:[%s878 + $0x11f0] sm:$0xff]
                  %1455 = vst [vmem:[%s879 + $0x8f8] sm:$0xff] %v1454
                  %v1456 = vld [vmem:[%s878 + $0x1200] sm:$0xff]
                  %1457 = vst [vmem:[%s879 + $0x900] sm:$0xff] %v1456
                  %v1458 = vld [vmem:[%s878 + $0x1210] sm:$0xff]
                  %1459 = vst [vmem:[%s879 + $0x908] sm:$0xff] %v1458
                  %v1460 = vld [vmem:[%s878 + $0x1220] sm:$0xff]
                  %1461 = vst [vmem:[%s879 + $0x910] sm:$0xff] %v1460
                  %v1462 = vld [vmem:[%s878 + $0x1230] sm:$0xff]
                  %1463 = vst [vmem:[%s879 + $0x918] sm:$0xff] %v1462
                  %v1464 = vld [vmem:[%s878 + $0x1240] sm:$0xff]
                  %1465 = vst [vmem:[%s879 + $0x920] sm:$0xff] %v1464
                  %v1466 = vld [vmem:[%s878 + $0x1250] sm:$0xff]
                  %1467 = vst [vmem:[%s879 + $0x928] sm:$0xff] %v1466
                  %v1468 = vld [vmem:[%s878 + $0x1260] sm:$0xff]
                  %1469 = vst [vmem:[%s879 + $0x930] sm:$0xff] %v1468
                  %v1470 = vld [vmem:[%s878 + $0x1270] sm:$0xff]
                  %1471 = vst [vmem:[%s879 + $0x938] sm:$0xff] %v1470
                  %v1472 = vld [vmem:[%s878 + $0x1280] sm:$0xff]
                  %1473 = vst [vmem:[%s879 + $0x940] sm:$0xff] %v1472
                  %v1474 = vld [vmem:[%s878 + $0x1290] sm:$0xff]
                  %1475 = vst [vmem:[%s879 + $0x948] sm:$0xff] %v1474
                  %v1476 = vld [vmem:[%s878 + $0x12a0] sm:$0xff]
                  %1477 = vst [vmem:[%s879 + $0x950] sm:$0xff] %v1476
                  %v1478 = vld [vmem:[%s878 + $0x12b0] sm:$0xff]
                  %1479 = vst [vmem:[%s879 + $0x958] sm:$0xff] %v1478
                  %v1480 = vld [vmem:[%s878 + $0x12c0] sm:$0xff]
                  %1481 = vst [vmem:[%s879 + $0x960] sm:$0xff] %v1480
                  %v1482 = vld [vmem:[%s878 + $0x12d0] sm:$0xff]
                  %1483 = vst [vmem:[%s879 + $0x968] sm:$0xff] %v1482
                  %v1484 = vld [vmem:[%s878 + $0x12e0] sm:$0xff]
                  %1485 = vst [vmem:[%s879 + $0x970] sm:$0xff] %v1484
                  %v1486 = vld [vmem:[%s878 + $0x12f0] sm:$0xff]
                  %1487 = vst [vmem:[%s879 + $0x978] sm:$0xff] %v1486
                  %v1488 = vld [vmem:[%s878 + $0x1300] sm:$0xff]
                  %1489 = vst [vmem:[%s879 + $0x980] sm:$0xff] %v1488
                  %v1490 = vld [vmem:[%s878 + $0x1310] sm:$0xff]
                  %1491 = vst [vmem:[%s879 + $0x988] sm:$0xff] %v1490
                  %v1492 = vld [vmem:[%s878 + $0x1320] sm:$0xff]
                  %1493 = vst [vmem:[%s879 + $0x990] sm:$0xff] %v1492
                  %v1494 = vld [vmem:[%s878 + $0x1330] sm:$0xff]
                  %1495 = vst [vmem:[%s879 + $0x998] sm:$0xff] %v1494
                  %v1496 = vld [vmem:[%s878 + $0x1340] sm:$0xff]
                  %1497 = vst [vmem:[%s879 + $0x9a0] sm:$0xff] %v1496
                  %v1498 = vld [vmem:[%s878 + $0x1350] sm:$0xff]
                  %1499 = vst [vmem:[%s879 + $0x9a8] sm:$0xff] %v1498
                  %v1500 = vld [vmem:[%s878 + $0x1360] sm:$0xff]
                  %1501 = vst [vmem:[%s879 + $0x9b0] sm:$0xff] %v1500
                  %v1502 = vld [vmem:[%s878 + $0x1370] sm:$0xff]
                  %1503 = vst [vmem:[%s879 + $0x9b8] sm:$0xff] %v1502
                  %v1504 = vld [vmem:[%s878 + $0x1380] sm:$0xff]
                  %1505 = vst [vmem:[%s879 + $0x9c0] sm:$0xff] %v1504
                  %v1506 = vld [vmem:[%s878 + $0x1390] sm:$0xff]
                  %1507 = vst [vmem:[%s879 + $0x9c8] sm:$0xff] %v1506
                  %v1508 = vld [vmem:[%s878 + $0x13a0] sm:$0xff]
                  %1509 = vst [vmem:[%s879 + $0x9d0] sm:$0xff] %v1508
                  %v1510 = vld [vmem:[%s878 + $0x13b0] sm:$0xff]
                  %1511 = vst [vmem:[%s879 + $0x9d8] sm:$0xff] %v1510
                  %v1512 = vld [vmem:[%s878 + $0x13c0] sm:$0xff]
                  %1513 = vst [vmem:[%s879 + $0x9e0] sm:$0xff] %v1512
                  %v1514 = vld [vmem:[%s878 + $0x13d0] sm:$0xff]
                  %1515 = vst [vmem:[%s879 + $0x9e8] sm:$0xff] %v1514
                  %v1516 = vld [vmem:[%s878 + $0x13e0] sm:$0xff]
                  %1517 = vst [vmem:[%s879 + $0x9f0] sm:$0xff] %v1516
                  %v1518 = vld [vmem:[%s878 + $0x13f0] sm:$0xff]
                  %1519 = vst [vmem:[%s879 + $0x9f8] sm:$0xff] %v1518
                  %v1520 = vld [vmem:[%s878 + $0x1400] sm:$0xff]
                  %1521 = vst [vmem:[%s879 + $0xa00] sm:$0xff] %v1520
                  %v1522 = vld [vmem:[%s878 + $0x1410] sm:$0xff]
                  %1523 = vst [vmem:[%s879 + $0xa08] sm:$0xff] %v1522
                  %v1524 = vld [vmem:[%s878 + $0x1420] sm:$0xff]
                  %1525 = vst [vmem:[%s879 + $0xa10] sm:$0xff] %v1524
                  %v1526 = vld [vmem:[%s878 + $0x1430] sm:$0xff]
                  %1527 = vst [vmem:[%s879 + $0xa18] sm:$0xff] %v1526
                  %v1528 = vld [vmem:[%s878 + $0x1440] sm:$0xff]
                  %1529 = vst [vmem:[%s879 + $0xa20] sm:$0xff] %v1528
                  %v1530 = vld [vmem:[%s878 + $0x1450] sm:$0xff]
                  %1531 = vst [vmem:[%s879 + $0xa28] sm:$0xff] %v1530
                  %v1532 = vld [vmem:[%s878 + $0x1460] sm:$0xff]
                  %1533 = vst [vmem:[%s879 + $0xa30] sm:$0xff] %v1532
                  %v1534 = vld [vmem:[%s878 + $0x1470] sm:$0xff]
                  %1535 = vst [vmem:[%s879 + $0xa38] sm:$0xff] %v1534
                  %v1536 = vld [vmem:[%s878 + $0x1480] sm:$0xff]
                  %1537 = vst [vmem:[%s879 + $0xa40] sm:$0xff] %v1536
                  %v1538 = vld [vmem:[%s878 + $0x1490] sm:$0xff]
                  %1539 = vst [vmem:[%s879 + $0xa48] sm:$0xff] %v1538
                  %v1540 = vld [vmem:[%s878 + $0x14a0] sm:$0xff]
                  %1541 = vst [vmem:[%s879 + $0xa50] sm:$0xff] %v1540
                  %v1542 = vld [vmem:[%s878 + $0x14b0] sm:$0xff]
                  %1543 = vst [vmem:[%s879 + $0xa58] sm:$0xff] %v1542
                  %v1544 = vld [vmem:[%s878 + $0x14c0] sm:$0xff]
                  %1545 = vst [vmem:[%s879 + $0xa60] sm:$0xff] %v1544
                  %v1546 = vld [vmem:[%s878 + $0x14d0] sm:$0xff]
                  %1547 = vst [vmem:[%s879 + $0xa68] sm:$0xff] %v1546
                  %v1548 = vld [vmem:[%s878 + $0x14e0] sm:$0xff]
                  %1549 = vst [vmem:[%s879 + $0xa70] sm:$0xff] %v1548
                  %v1550 = vld [vmem:[%s878 + $0x14f0] sm:$0xff]
                  %1551 = vst [vmem:[%s879 + $0xa78] sm:$0xff] %v1550
                  %v1552 = vld [vmem:[%s878 + $0x1500] sm:$0xff]
                  %1553 = vst [vmem:[%s879 + $0xa80] sm:$0xff] %v1552
                  %v1554 = vld [vmem:[%s878 + $0x1510] sm:$0xff]
                  %1555 = vst [vmem:[%s879 + $0xa88] sm:$0xff] %v1554
                  %v1556 = vld [vmem:[%s878 + $0x1520] sm:$0xff]
                  %1557 = vst [vmem:[%s879 + $0xa90] sm:$0xff] %v1556
                  %v1558 = vld [vmem:[%s878 + $0x1530] sm:$0xff]
                  %1559 = vst [vmem:[%s879 + $0xa98] sm:$0xff] %v1558
                  %v1560 = vld [vmem:[%s878 + $0x1540] sm:$0xff]
                  %1561 = vst [vmem:[%s879 + $0xaa0] sm:$0xff] %v1560
                  %v1562 = vld [vmem:[%s878 + $0x1550] sm:$0xff]
                  %1563 = vst [vmem:[%s879 + $0xaa8] sm:$0xff] %v1562
                  %v1564 = vld [vmem:[%s878 + $0x1560] sm:$0xff]
                  %1565 = vst [vmem:[%s879 + $0xab0] sm:$0xff] %v1564
                  %v1566 = vld [vmem:[%s878 + $0x1570] sm:$0xff]
                  %1567 = vst [vmem:[%s879 + $0xab8] sm:$0xff] %v1566
                  %v1568 = vld [vmem:[%s878 + $0x1580] sm:$0xff]
                  %1569 = vst [vmem:[%s879 + $0xac0] sm:$0xff] %v1568
                  %v1570 = vld [vmem:[%s878 + $0x1590] sm:$0xff]
                  %1571 = vst [vmem:[%s879 + $0xac8] sm:$0xff] %v1570
                  %v1572 = vld [vmem:[%s878 + $0x15a0] sm:$0xff]
                  %1573 = vst [vmem:[%s879 + $0xad0] sm:$0xff] %v1572
                  %v1574 = vld [vmem:[%s878 + $0x15b0] sm:$0xff]
                  %1575 = vst [vmem:[%s879 + $0xad8] sm:$0xff] %v1574
                  %v1576 = vld [vmem:[%s878 + $0x15c0] sm:$0xff]
                  %1577 = vst [vmem:[%s879 + $0xae0] sm:$0xff] %v1576
                  %v1578 = vld [vmem:[%s878 + $0x15d0] sm:$0xff]
                  %1579 = vst [vmem:[%s879 + $0xae8] sm:$0xff] %v1578
                  %v1580 = vld [vmem:[%s878 + $0x15e0] sm:$0xff]
                  %1581 = vst [vmem:[%s879 + $0xaf0] sm:$0xff] %v1580
                  %v1582 = vld [vmem:[%s878 + $0x15f0] sm:$0xff]
                  %1583 = vst [vmem:[%s879 + $0xaf8] sm:$0xff] %v1582
                  %v1584 = vld [vmem:[%s878 + $0x1600] sm:$0xff]
                  %1585 = vst [vmem:[%s879 + $0xb00] sm:$0xff] %v1584
                  %v1586 = vld [vmem:[%s878 + $0x1610] sm:$0xff]
                  %1587 = vst [vmem:[%s879 + $0xb08] sm:$0xff] %v1586
                  %v1588 = vld [vmem:[%s878 + $0x1620] sm:$0xff]
                  %1589 = vst [vmem:[%s879 + $0xb10] sm:$0xff] %v1588
                  %v1590 = vld [vmem:[%s878 + $0x1630] sm:$0xff]
                  %1591 = vst [vmem:[%s879 + $0xb18] sm:$0xff] %v1590
                  %v1592 = vld [vmem:[%s878 + $0x1640] sm:$0xff]
                  %1593 = vst [vmem:[%s879 + $0xb20] sm:$0xff] %v1592
                  %v1594 = vld [vmem:[%s878 + $0x1650] sm:$0xff]
                  %1595 = vst [vmem:[%s879 + $0xb28] sm:$0xff] %v1594
                  %v1596 = vld [vmem:[%s878 + $0x1660] sm:$0xff]
                  %1597 = vst [vmem:[%s879 + $0xb30] sm:$0xff] %v1596
                  %v1598 = vld [vmem:[%s878 + $0x1670] sm:$0xff]
                  %1599 = vst [vmem:[%s879 + $0xb38] sm:$0xff] %v1598
                  %v1600 = vld [vmem:[%s878 + $0x1680] sm:$0xff]
                  %1601 = vst [vmem:[%s879 + $0xb40] sm:$0xff] %v1600
                  %v1602 = vld [vmem:[%s878 + $0x1690] sm:$0xff]
                  %1603 = vst [vmem:[%s879 + $0xb48] sm:$0xff] %v1602
                  %v1604 = vld [vmem:[%s878 + $0x16a0] sm:$0xff]
                  %1605 = vst [vmem:[%s879 + $0xb50] sm:$0xff] %v1604
                  %v1606 = vld [vmem:[%s878 + $0x16b0] sm:$0xff]
                  %1607 = vst [vmem:[%s879 + $0xb58] sm:$0xff] %v1606
                  %v1608 = vld [vmem:[%s878 + $0x16c0] sm:$0xff]
                  %1609 = vst [vmem:[%s879 + $0xb60] sm:$0xff] %v1608
                  %v1610 = vld [vmem:[%s878 + $0x16d0] sm:$0xff]
                  %1611 = vst [vmem:[%s879 + $0xb68] sm:$0xff] %v1610
                  %v1612 = vld [vmem:[%s878 + $0x16e0] sm:$0xff]
                  %1613 = vst [vmem:[%s879 + $0xb70] sm:$0xff] %v1612
                  %v1614 = vld [vmem:[%s878 + $0x16f0] sm:$0xff]
                  %1615 = vst [vmem:[%s879 + $0xb78] sm:$0xff] %v1614
                  %v1616 = vld [vmem:[%s878 + $0x1700] sm:$0xff]
                  %1617 = vst [vmem:[%s879 + $0xb80] sm:$0xff] %v1616
                  %v1618 = vld [vmem:[%s878 + $0x1710] sm:$0xff]
                  %1619 = vst [vmem:[%s879 + $0xb88] sm:$0xff] %v1618
                  %v1620 = vld [vmem:[%s878 + $0x1720] sm:$0xff]
                  %1621 = vst [vmem:[%s879 + $0xb90] sm:$0xff] %v1620
                  %v1622 = vld [vmem:[%s878 + $0x1730] sm:$0xff]
                  %1623 = vst [vmem:[%s879 + $0xb98] sm:$0xff] %v1622
                  %v1624 = vld [vmem:[%s878 + $0x1740] sm:$0xff]
                  %1625 = vst [vmem:[%s879 + $0xba0] sm:$0xff] %v1624
                  %v1626 = vld [vmem:[%s878 + $0x1750] sm:$0xff]
                  %1627 = vst [vmem:[%s879 + $0xba8] sm:$0xff] %v1626
                  %v1628 = vld [vmem:[%s878 + $0x1760] sm:$0xff]
                  %1629 = vst [vmem:[%s879 + $0xbb0] sm:$0xff] %v1628
                  %v1630 = vld [vmem:[%s878 + $0x1770] sm:$0xff]
                  %1631 = vst [vmem:[%s879 + $0xbb8] sm:$0xff] %v1630
                  %v1632 = vld [vmem:[%s878 + $0x1780] sm:$0xff]
                  %1633 = vst [vmem:[%s879 + $0xbc0] sm:$0xff] %v1632
                  %v1634 = vld [vmem:[%s878 + $0x1790] sm:$0xff]
                  %1635 = vst [vmem:[%s879 + $0xbc8] sm:$0xff] %v1634
                  %v1636 = vld [vmem:[%s878 + $0x17a0] sm:$0xff]
                  %1637 = vst [vmem:[%s879 + $0xbd0] sm:$0xff] %v1636
                  %v1638 = vld [vmem:[%s878 + $0x17b0] sm:$0xff]
                  %1639 = vst [vmem:[%s879 + $0xbd8] sm:$0xff] %v1638
                  %v1640 = vld [vmem:[%s878 + $0x17c0] sm:$0xff]
                  %1641 = vst [vmem:[%s879 + $0xbe0] sm:$0xff] %v1640
                  %v1642 = vld [vmem:[%s878 + $0x17d0] sm:$0xff]
                  %1643 = vst [vmem:[%s879 + $0xbe8] sm:$0xff] %v1642
                  %v1644 = vld [vmem:[%s878 + $0x17e0] sm:$0xff]
                  %1645 = vst [vmem:[%s879 + $0xbf0] sm:$0xff] %v1644
                  %v1646 = vld [vmem:[%s878 + $0x17f0] sm:$0xff]
                  %1647 = vst [vmem:[%s879 + $0xbf8] sm:$0xff] %v1646
                $region48: #{_forward_one.1} parent=42 // loop_footer
                  %s877 = sadd.s32 1, %s873
                $region49: #{_forward_one.1} parent=42 // loop_footer_branch
                  %872 = sbr.rel target = $region45
                $region50: #{_forward_one.1} parent=42 // loop_exit
                  _
              $region43: #{_forward_one.1} parent=27 // pred_fallthru
                _
              // Predicated region
              $region51: #{_forward_one.1} parent=27 // pred_check
                _
              $region52: #{_forward_one.1} parent=27 // pred_check_branch
                %1649 = sbr.rel target = $region54
              $region53: #{_forward_one.1} parent=27 // pred_region
                _
              $region54: #{_forward_one.1} parent=27 // pred_fallthru
                _
            $region28: #{_forward_one.1} parent=23 // pred_fallthru
              _
            // Predicated region
            $region29: #{_forward_one.1} parent=23 // pred_check
              _
            $region30: #{_forward_one.1} parent=23 // pred_check_branch
              %92 = sbr.rel target = $region32
            $region31: #{_forward_one.1} parent=23 // pred_region
              loop: start=0, step=1, limit=1
              $region33: #{_forward_one.1} parent=31 // loop_pre_header
                _
              $region34: #{_forward_one.1} parent=31 // loop_header
                %s95 = sphi 0, %s99
                %p96 = scmp.ge.s32.totalorder %s95, 1
                %s100 = sphi %s86, %s86
                %s101 = sphi %s84, %s84
              $region35: #{_forward_one.1} parent=31 // loop_header_branch
                %98 = sbr.rel (%p96) target = $region39
              $region36: #{_forward_one.1} parent=31 // loop_body
                %v102 = vld [vmem:[%s100] sm:$0xff]
                %103 = vst [vmem:[%s101] sm:$0xff] %v102
                %v104 = vld [vmem:[%s100 + $0x10] sm:$0xff]
                %105 = vst [vmem:[%s101 + $0x8] sm:$0xff] %v104
                %v106 = vld [vmem:[%s100 + $0x20] sm:$0xff]
                %107 = vst [vmem:[%s101 + $0x10] sm:$0xff] %v106
                %v108 = vld [vmem:[%s100 + $0x30] sm:$0xff]
                %109 = vst [vmem:[%s101 + $0x18] sm:$0xff] %v108
                %v110 = vld [vmem:[%s100 + $0x40] sm:$0xff]
                %111 = vst [vmem:[%s101 + $0x20] sm:$0xff] %v110
                %v112 = vld [vmem:[%s100 + $0x50] sm:$0xff]
                %113 = vst [vmem:[%s101 + $0x28] sm:$0xff] %v112
                %v114 = vld [vmem:[%s100 + $0x60] sm:$0xff]
                %115 = vst [vmem:[%s101 + $0x30] sm:$0xff] %v114
                %v116 = vld [vmem:[%s100 + $0x70] sm:$0xff]
                %117 = vst [vmem:[%s101 + $0x38] sm:$0xff] %v116
                %v118 = vld [vmem:[%s100 + $0x80] sm:$0xff]
                %119 = vst [vmem:[%s101 + $0x40] sm:$0xff] %v118
                %v120 = vld [vmem:[%s100 + $0x90] sm:$0xff]
                %121 = vst [vmem:[%s101 + $0x48] sm:$0xff] %v120
                %v122 = vld [vmem:[%s100 + $0xa0] sm:$0xff]
                %123 = vst [vmem:[%s101 + $0x50] sm:$0xff] %v122
                %v124 = vld [vmem:[%s100 + $0xb0] sm:$0xff]
                %125 = vst [vmem:[%s101 + $0x58] sm:$0xff] %v124
                %v126 = vld [vmem:[%s100 + $0xc0] sm:$0xff]
                %127 = vst [vmem:[%s101 + $0x60] sm:$0xff] %v126
                %v128 = vld [vmem:[%s100 + $0xd0] sm:$0xff]
                %129 = vst [vmem:[%s101 + $0x68] sm:$0xff] %v128
                %v130 = vld [vmem:[%s100 + $0xe0] sm:$0xff]
                %131 = vst [vmem:[%s101 + $0x70] sm:$0xff] %v130
                %v132 = vld [vmem:[%s100 + $0xf0] sm:$0xff]
                %133 = vst [vmem:[%s101 + $0x78] sm:$0xff] %v132
                %v134 = vld [vmem:[%s100 + $0x100] sm:$0xff]
                %135 = vst [vmem:[%s101 + $0x80] sm:$0xff] %v134
                %v136 = vld [vmem:[%s100 + $0x110] sm:$0xff]
                %137 = vst [vmem:[%s101 + $0x88] sm:$0xff] %v136
                %v138 = vld [vmem:[%s100 + $0x120] sm:$0xff]
                %139 = vst [vmem:[%s101 + $0x90] sm:$0xff] %v138
                %v140 = vld [vmem:[%s100 + $0x130] sm:$0xff]
                %141 = vst [vmem:[%s101 + $0x98] sm:$0xff] %v140
                %v142 = vld [vmem:[%s100 + $0x140] sm:$0xff]
                %143 = vst [vmem:[%s101 + $0xa0] sm:$0xff] %v142
                %v144 = vld [vmem:[%s100 + $0x150] sm:$0xff]
                %145 = vst [vmem:[%s101 + $0xa8] sm:$0xff] %v144
                %v146 = vld [vmem:[%s100 + $0x160] sm:$0xff]
                %147 = vst [vmem:[%s101 + $0xb0] sm:$0xff] %v146
                %v148 = vld [vmem:[%s100 + $0x170] sm:$0xff]
                %149 = vst [vmem:[%s101 + $0xb8] sm:$0xff] %v148
                %v150 = vld [vmem:[%s100 + $0x180] sm:$0xff]
                %151 = vst [vmem:[%s101 + $0xc0] sm:$0xff] %v150
                %v152 = vld [vmem:[%s100 + $0x190] sm:$0xff]
                %153 = vst [vmem:[%s101 + $0xc8] sm:$0xff] %v152
                %v154 = vld [vmem:[%s100 + $0x1a0] sm:$0xff]
                %155 = vst [vmem:[%s101 + $0xd0] sm:$0xff] %v154
                %v156 = vld [vmem:[%s100 + $0x1b0] sm:$0xff]
                %157 = vst [vmem:[%s101 + $0xd8] sm:$0xff] %v156
                %v158 = vld [vmem:[%s100 + $0x1c0] sm:$0xff]
                %159 = vst [vmem:[%s101 + $0xe0] sm:$0xff] %v158
                %v160 = vld [vmem:[%s100 + $0x1d0] sm:$0xff]
                %161 = vst [vmem:[%s101 + $0xe8] sm:$0xff] %v160
                %v162 = vld [vmem:[%s100 + $0x1e0] sm:$0xff]
                %163 = vst [vmem:[%s101 + $0xf0] sm:$0xff] %v162
                %v164 = vld [vmem:[%s100 + $0x1f0] sm:$0xff]
                %165 = vst [vmem:[%s101 + $0xf8] sm:$0xff] %v164
                %v166 = vld [vmem:[%s100 + $0x200] sm:$0xff]
                %167 = vst [vmem:[%s101 + $0x100] sm:$0xff] %v166
                %v168 = vld [vmem:[%s100 + $0x210] sm:$0xff]
                %169 = vst [vmem:[%s101 + $0x108] sm:$0xff] %v168
                %v170 = vld [vmem:[%s100 + $0x220] sm:$0xff]
                %171 = vst [vmem:[%s101 + $0x110] sm:$0xff] %v170
                %v172 = vld [vmem:[%s100 + $0x230] sm:$0xff]
                %173 = vst [vmem:[%s101 + $0x118] sm:$0xff] %v172
                %v174 = vld [vmem:[%s100 + $0x240] sm:$0xff]
                %175 = vst [vmem:[%s101 + $0x120] sm:$0xff] %v174
                %v176 = vld [vmem:[%s100 + $0x250] sm:$0xff]
                %177 = vst [vmem:[%s101 + $0x128] sm:$0xff] %v176
                %v178 = vld [vmem:[%s100 + $0x260] sm:$0xff]
                %179 = vst [vmem:[%s101 + $0x130] sm:$0xff] %v178
                %v180 = vld [vmem:[%s100 + $0x270] sm:$0xff]
                %181 = vst [vmem:[%s101 + $0x138] sm:$0xff] %v180
                %v182 = vld [vmem:[%s100 + $0x280] sm:$0xff]
                %183 = vst [vmem:[%s101 + $0x140] sm:$0xff] %v182
                %v184 = vld [vmem:[%s100 + $0x290] sm:$0xff]
                %185 = vst [vmem:[%s101 + $0x148] sm:$0xff] %v184
                %v186 = vld [vmem:[%s100 + $0x2a0] sm:$0xff]
                %187 = vst [vmem:[%s101 + $0x150] sm:$0xff] %v186
                %v188 = vld [vmem:[%s100 + $0x2b0] sm:$0xff]
                %189 = vst [vmem:[%s101 + $0x158] sm:$0xff] %v188
                %v190 = vld [vmem:[%s100 + $0x2c0] sm:$0xff]
                %191 = vst [vmem:[%s101 + $0x160] sm:$0xff] %v190
                %v192 = vld [vmem:[%s100 + $0x2d0] sm:$0xff]
                %193 = vst [vmem:[%s101 + $0x168] sm:$0xff] %v192
                %v194 = vld [vmem:[%s100 + $0x2e0] sm:$0xff]
                %195 = vst [vmem:[%s101 + $0x170] sm:$0xff] %v194
                %v196 = vld [vmem:[%s100 + $0x2f0] sm:$0xff]
                %197 = vst [vmem:[%s101 + $0x178] sm:$0xff] %v196
                %v198 = vld [vmem:[%s100 + $0x300] sm:$0xff]
                %199 = vst [vmem:[%s101 + $0x180] sm:$0xff] %v198
                %v200 = vld [vmem:[%s100 + $0x310] sm:$0xff]
                %201 = vst [vmem:[%s101 + $0x188] sm:$0xff] %v200
                %v202 = vld [vmem:[%s100 + $0x320] sm:$0xff]
                %203 = vst [vmem:[%s101 + $0x190] sm:$0xff] %v202
                %v204 = vld [vmem:[%s100 + $0x330] sm:$0xff]
                %205 = vst [vmem:[%s101 + $0x198] sm:$0xff] %v204
                %v206 = vld [vmem:[%s100 + $0x340] sm:$0xff]
                %207 = vst [vmem:[%s101 + $0x1a0] sm:$0xff] %v206
                %v208 = vld [vmem:[%s100 + $0x350] sm:$0xff]
                %209 = vst [vmem:[%s101 + $0x1a8] sm:$0xff] %v208
                %v210 = vld [vmem:[%s100 + $0x360] sm:$0xff]
                %211 = vst [vmem:[%s101 + $0x1b0] sm:$0xff] %v210
                %v212 = vld [vmem:[%s100 + $0x370] sm:$0xff]
                %213 = vst [vmem:[%s101 + $0x1b8] sm:$0xff] %v212
                %v214 = vld [vmem:[%s100 + $0x380] sm:$0xff]
                %215 = vst [vmem:[%s101 + $0x1c0] sm:$0xff] %v214
                %v216 = vld [vmem:[%s100 + $0x390] sm:$0xff]
                %217 = vst [vmem:[%s101 + $0x1c8] sm:$0xff] %v216
                %v218 = vld [vmem:[%s100 + $0x3a0] sm:$0xff]
                %219 = vst [vmem:[%s101 + $0x1d0] sm:$0xff] %v218
                %v220 = vld [vmem:[%s100 + $0x3b0] sm:$0xff]
                %221 = vst [vmem:[%s101 + $0x1d8] sm:$0xff] %v220
                %v222 = vld [vmem:[%s100 + $0x3c0] sm:$0xff]
                %223 = vst [vmem:[%s101 + $0x1e0] sm:$0xff] %v222
                %v224 = vld [vmem:[%s100 + $0x3d0] sm:$0xff]
                %225 = vst [vmem:[%s101 + $0x1e8] sm:$0xff] %v224
                %v226 = vld [vmem:[%s100 + $0x3e0] sm:$0xff]
                %227 = vst [vmem:[%s101 + $0x1f0] sm:$0xff] %v226
                %v228 = vld [vmem:[%s100 + $0x3f0] sm:$0xff]
                %229 = vst [vmem:[%s101 + $0x1f8] sm:$0xff] %v228
                %v230 = vld [vmem:[%s100 + $0x400] sm:$0xff]
                %231 = vst [vmem:[%s101 + $0x200] sm:$0xff] %v230
                %v232 = vld [vmem:[%s100 + $0x410] sm:$0xff]
                %233 = vst [vmem:[%s101 + $0x208] sm:$0xff] %v232
                %v234 = vld [vmem:[%s100 + $0x420] sm:$0xff]
                %235 = vst [vmem:[%s101 + $0x210] sm:$0xff] %v234
                %v236 = vld [vmem:[%s100 + $0x430] sm:$0xff]
                %237 = vst [vmem:[%s101 + $0x218] sm:$0xff] %v236
                %v238 = vld [vmem:[%s100 + $0x440] sm:$0xff]
                %239 = vst [vmem:[%s101 + $0x220] sm:$0xff] %v238
                %v240 = vld [vmem:[%s100 + $0x450] sm:$0xff]
                %241 = vst [vmem:[%s101 + $0x228] sm:$0xff] %v240
                %v242 = vld [vmem:[%s100 + $0x460] sm:$0xff]
                %243 = vst [vmem:[%s101 + $0x230] sm:$0xff] %v242
                %v244 = vld [vmem:[%s100 + $0x470] sm:$0xff]
                %245 = vst [vmem:[%s101 + $0x238] sm:$0xff] %v244
                %v246 = vld [vmem:[%s100 + $0x480] sm:$0xff]
                %247 = vst [vmem:[%s101 + $0x240] sm:$0xff] %v246
                %v248 = vld [vmem:[%s100 + $0x490] sm:$0xff]
                %249 = vst [vmem:[%s101 + $0x248] sm:$0xff] %v248
                %v250 = vld [vmem:[%s100 + $0x4a0] sm:$0xff]
                %251 = vst [vmem:[%s101 + $0x250] sm:$0xff] %v250
                %v252 = vld [vmem:[%s100 + $0x4b0] sm:$0xff]
                %253 = vst [vmem:[%s101 + $0x258] sm:$0xff] %v252
                %v254 = vld [vmem:[%s100 + $0x4c0] sm:$0xff]
                %255 = vst [vmem:[%s101 + $0x260] sm:$0xff] %v254
                %v256 = vld [vmem:[%s100 + $0x4d0] sm:$0xff]
                %257 = vst [vmem:[%s101 + $0x268] sm:$0xff] %v256
                %v258 = vld [vmem:[%s100 + $0x4e0] sm:$0xff]
                %259 = vst [vmem:[%s101 + $0x270] sm:$0xff] %v258
                %v260 = vld [vmem:[%s100 + $0x4f0] sm:$0xff]
                %261 = vst [vmem:[%s101 + $0x278] sm:$0xff] %v260
                %v262 = vld [vmem:[%s100 + $0x500] sm:$0xff]
                %263 = vst [vmem:[%s101 + $0x280] sm:$0xff] %v262
                %v264 = vld [vmem:[%s100 + $0x510] sm:$0xff]
                %265 = vst [vmem:[%s101 + $0x288] sm:$0xff] %v264
                %v266 = vld [vmem:[%s100 + $0x520] sm:$0xff]
                %267 = vst [vmem:[%s101 + $0x290] sm:$0xff] %v266
                %v268 = vld [vmem:[%s100 + $0x530] sm:$0xff]
                %269 = vst [vmem:[%s101 + $0x298] sm:$0xff] %v268
                %v270 = vld [vmem:[%s100 + $0x540] sm:$0xff]
                %271 = vst [vmem:[%s101 + $0x2a0] sm:$0xff] %v270
                %v272 = vld [vmem:[%s100 + $0x550] sm:$0xff]
                %273 = vst [vmem:[%s101 + $0x2a8] sm:$0xff] %v272
                %v274 = vld [vmem:[%s100 + $0x560] sm:$0xff]
                %275 = vst [vmem:[%s101 + $0x2b0] sm:$0xff] %v274
                %v276 = vld [vmem:[%s100 + $0x570] sm:$0xff]
                %277 = vst [vmem:[%s101 + $0x2b8] sm:$0xff] %v276
                %v278 = vld [vmem:[%s100 + $0x580] sm:$0xff]
                %279 = vst [vmem:[%s101 + $0x2c0] sm:$0xff] %v278
                %v280 = vld [vmem:[%s100 + $0x590] sm:$0xff]
                %281 = vst [vmem:[%s101 + $0x2c8] sm:$0xff] %v280
                %v282 = vld [vmem:[%s100 + $0x5a0] sm:$0xff]
                %283 = vst [vmem:[%s101 + $0x2d0] sm:$0xff] %v282
                %v284 = vld [vmem:[%s100 + $0x5b0] sm:$0xff]
                %285 = vst [vmem:[%s101 + $0x2d8] sm:$0xff] %v284
                %v286 = vld [vmem:[%s100 + $0x5c0] sm:$0xff]
                %287 = vst [vmem:[%s101 + $0x2e0] sm:$0xff] %v286
                %v288 = vld [vmem:[%s100 + $0x5d0] sm:$0xff]
                %289 = vst [vmem:[%s101 + $0x2e8] sm:$0xff] %v288
                %v290 = vld [vmem:[%s100 + $0x5e0] sm:$0xff]
                %291 = vst [vmem:[%s101 + $0x2f0] sm:$0xff] %v290
                %v292 = vld [vmem:[%s100 + $0x5f0] sm:$0xff]
                %293 = vst [vmem:[%s101 + $0x2f8] sm:$0xff] %v292
                %v294 = vld [vmem:[%s100 + $0x600] sm:$0xff]
                %295 = vst [vmem:[%s101 + $0x300] sm:$0xff] %v294
                %v296 = vld [vmem:[%s100 + $0x610] sm:$0xff]
                %297 = vst [vmem:[%s101 + $0x308] sm:$0xff] %v296
                %v298 = vld [vmem:[%s100 + $0x620] sm:$0xff]
                %299 = vst [vmem:[%s101 + $0x310] sm:$0xff] %v298
                %v300 = vld [vmem:[%s100 + $0x630] sm:$0xff]
                %301 = vst [vmem:[%s101 + $0x318] sm:$0xff] %v300
                %v302 = vld [vmem:[%s100 + $0x640] sm:$0xff]
                %303 = vst [vmem:[%s101 + $0x320] sm:$0xff] %v302
                %v304 = vld [vmem:[%s100 + $0x650] sm:$0xff]
                %305 = vst [vmem:[%s101 + $0x328] sm:$0xff] %v304
                %v306 = vld [vmem:[%s100 + $0x660] sm:$0xff]
                %307 = vst [vmem:[%s101 + $0x330] sm:$0xff] %v306
                %v308 = vld [vmem:[%s100 + $0x670] sm:$0xff]
                %309 = vst [vmem:[%s101 + $0x338] sm:$0xff] %v308
                %v310 = vld [vmem:[%s100 + $0x680] sm:$0xff]
                %311 = vst [vmem:[%s101 + $0x340] sm:$0xff] %v310
                %v312 = vld [vmem:[%s100 + $0x690] sm:$0xff]
                %313 = vst [vmem:[%s101 + $0x348] sm:$0xff] %v312
                %v314 = vld [vmem:[%s100 + $0x6a0] sm:$0xff]
                %315 = vst [vmem:[%s101 + $0x350] sm:$0xff] %v314
                %v316 = vld [vmem:[%s100 + $0x6b0] sm:$0xff]
                %317 = vst [vmem:[%s101 + $0x358] sm:$0xff] %v316
                %v318 = vld [vmem:[%s100 + $0x6c0] sm:$0xff]
                %319 = vst [vmem:[%s101 + $0x360] sm:$0xff] %v318
                %v320 = vld [vmem:[%s100 + $0x6d0] sm:$0xff]
                %321 = vst [vmem:[%s101 + $0x368] sm:$0xff] %v320
                %v322 = vld [vmem:[%s100 + $0x6e0] sm:$0xff]
                %323 = vst [vmem:[%s101 + $0x370] sm:$0xff] %v322
                %v324 = vld [vmem:[%s100 + $0x6f0] sm:$0xff]
                %325 = vst [vmem:[%s101 + $0x378] sm:$0xff] %v324
                %v326 = vld [vmem:[%s100 + $0x700] sm:$0xff]
                %327 = vst [vmem:[%s101 + $0x380] sm:$0xff] %v326
                %v328 = vld [vmem:[%s100 + $0x710] sm:$0xff]
                %329 = vst [vmem:[%s101 + $0x388] sm:$0xff] %v328
                %v330 = vld [vmem:[%s100 + $0x720] sm:$0xff]
                %331 = vst [vmem:[%s101 + $0x390] sm:$0xff] %v330
                %v332 = vld [vmem:[%s100 + $0x730] sm:$0xff]
                %333 = vst [vmem:[%s101 + $0x398] sm:$0xff] %v332
                %v334 = vld [vmem:[%s100 + $0x740] sm:$0xff]
                %335 = vst [vmem:[%s101 + $0x3a0] sm:$0xff] %v334
                %v336 = vld [vmem:[%s100 + $0x750] sm:$0xff]
                %337 = vst [vmem:[%s101 + $0x3a8] sm:$0xff] %v336
                %v338 = vld [vmem:[%s100 + $0x760] sm:$0xff]
                %339 = vst [vmem:[%s101 + $0x3b0] sm:$0xff] %v338
                %v340 = vld [vmem:[%s100 + $0x770] sm:$0xff]
                %341 = vst [vmem:[%s101 + $0x3b8] sm:$0xff] %v340
                %v342 = vld [vmem:[%s100 + $0x780] sm:$0xff]
                %343 = vst [vmem:[%s101 + $0x3c0] sm:$0xff] %v342
                %v344 = vld [vmem:[%s100 + $0x790] sm:$0xff]
                %345 = vst [vmem:[%s101 + $0x3c8] sm:$0xff] %v344
                %v346 = vld [vmem:[%s100 + $0x7a0] sm:$0xff]
                %347 = vst [vmem:[%s101 + $0x3d0] sm:$0xff] %v346
                %v348 = vld [vmem:[%s100 + $0x7b0] sm:$0xff]
                %349 = vst [vmem:[%s101 + $0x3d8] sm:$0xff] %v348
                %v350 = vld [vmem:[%s100 + $0x7c0] sm:$0xff]
                %351 = vst [vmem:[%s101 + $0x3e0] sm:$0xff] %v350
                %v352 = vld [vmem:[%s100 + $0x7d0] sm:$0xff]
                %353 = vst [vmem:[%s101 + $0x3e8] sm:$0xff] %v352
                %v354 = vld [vmem:[%s100 + $0x7e0] sm:$0xff]
                %355 = vst [vmem:[%s101 + $0x3f0] sm:$0xff] %v354
                %v356 = vld [vmem:[%s100 + $0x7f0] sm:$0xff]
                %357 = vst [vmem:[%s101 + $0x3f8] sm:$0xff] %v356
                %v358 = vld [vmem:[%s100 + $0x800] sm:$0xff]
                %359 = vst [vmem:[%s101 + $0x400] sm:$0xff] %v358
                %v360 = vld [vmem:[%s100 + $0x810] sm:$0xff]
                %361 = vst [vmem:[%s101 + $0x408] sm:$0xff] %v360
                %v362 = vld [vmem:[%s100 + $0x820] sm:$0xff]
                %363 = vst [vmem:[%s101 + $0x410] sm:$0xff] %v362
                %v364 = vld [vmem:[%s100 + $0x830] sm:$0xff]
                %365 = vst [vmem:[%s101 + $0x418] sm:$0xff] %v364
                %v366 = vld [vmem:[%s100 + $0x840] sm:$0xff]
                %367 = vst [vmem:[%s101 + $0x420] sm:$0xff] %v366
                %v368 = vld [vmem:[%s100 + $0x850] sm:$0xff]
                %369 = vst [vmem:[%s101 + $0x428] sm:$0xff] %v368
                %v370 = vld [vmem:[%s100 + $0x860] sm:$0xff]
                %371 = vst [vmem:[%s101 + $0x430] sm:$0xff] %v370
                %v372 = vld [vmem:[%s100 + $0x870] sm:$0xff]
                %373 = vst [vmem:[%s101 + $0x438] sm:$0xff] %v372
                %v374 = vld [vmem:[%s100 + $0x880] sm:$0xff]
                %375 = vst [vmem:[%s101 + $0x440] sm:$0xff] %v374
                %v376 = vld [vmem:[%s100 + $0x890] sm:$0xff]
                %377 = vst [vmem:[%s101 + $0x448] sm:$0xff] %v376
                %v378 = vld [vmem:[%s100 + $0x8a0] sm:$0xff]
                %379 = vst [vmem:[%s101 + $0x450] sm:$0xff] %v378
                %v380 = vld [vmem:[%s100 + $0x8b0] sm:$0xff]
                %381 = vst [vmem:[%s101 + $0x458] sm:$0xff] %v380
                %v382 = vld [vmem:[%s100 + $0x8c0] sm:$0xff]
                %383 = vst [vmem:[%s101 + $0x460] sm:$0xff] %v382
                %v384 = vld [vmem:[%s100 + $0x8d0] sm:$0xff]
                %385 = vst [vmem:[%s101 + $0x468] sm:$0xff] %v384
                %v386 = vld [vmem:[%s100 + $0x8e0] sm:$0xff]
                %387 = vst [vmem:[%s101 + $0x470] sm:$0xff] %v386
                %v388 = vld [vmem:[%s100 + $0x8f0] sm:$0xff]
                %389 = vst [vmem:[%s101 + $0x478] sm:$0xff] %v388
                %v390 = vld [vmem:[%s100 + $0x900] sm:$0xff]
                %391 = vst [vmem:[%s101 + $0x480] sm:$0xff] %v390
                %v392 = vld [vmem:[%s100 + $0x910] sm:$0xff]
                %393 = vst [vmem:[%s101 + $0x488] sm:$0xff] %v392
                %v394 = vld [vmem:[%s100 + $0x920] sm:$0xff]
                %395 = vst [vmem:[%s101 + $0x490] sm:$0xff] %v394
                %v396 = vld [vmem:[%s100 + $0x930] sm:$0xff]
                %397 = vst [vmem:[%s101 + $0x498] sm:$0xff] %v396
                %v398 = vld [vmem:[%s100 + $0x940] sm:$0xff]
                %399 = vst [vmem:[%s101 + $0x4a0] sm:$0xff] %v398
                %v400 = vld [vmem:[%s100 + $0x950] sm:$0xff]
                %401 = vst [vmem:[%s101 + $0x4a8] sm:$0xff] %v400
                %v402 = vld [vmem:[%s100 + $0x960] sm:$0xff]
                %403 = vst [vmem:[%s101 + $0x4b0] sm:$0xff] %v402
                %v404 = vld [vmem:[%s100 + $0x970] sm:$0xff]
                %405 = vst [vmem:[%s101 + $0x4b8] sm:$0xff] %v404
                %v406 = vld [vmem:[%s100 + $0x980] sm:$0xff]
                %407 = vst [vmem:[%s101 + $0x4c0] sm:$0xff] %v406
                %v408 = vld [vmem:[%s100 + $0x990] sm:$0xff]
                %409 = vst [vmem:[%s101 + $0x4c8] sm:$0xff] %v408
                %v410 = vld [vmem:[%s100 + $0x9a0] sm:$0xff]
                %411 = vst [vmem:[%s101 + $0x4d0] sm:$0xff] %v410
                %v412 = vld [vmem:[%s100 + $0x9b0] sm:$0xff]
                %413 = vst [vmem:[%s101 + $0x4d8] sm:$0xff] %v412
                %v414 = vld [vmem:[%s100 + $0x9c0] sm:$0xff]
                %415 = vst [vmem:[%s101 + $0x4e0] sm:$0xff] %v414
                %v416 = vld [vmem:[%s100 + $0x9d0] sm:$0xff]
                %417 = vst [vmem:[%s101 + $0x4e8] sm:$0xff] %v416
                %v418 = vld [vmem:[%s100 + $0x9e0] sm:$0xff]
                %419 = vst [vmem:[%s101 + $0x4f0] sm:$0xff] %v418
                %v420 = vld [vmem:[%s100 + $0x9f0] sm:$0xff]
                %421 = vst [vmem:[%s101 + $0x4f8] sm:$0xff] %v420
                %v422 = vld [vmem:[%s100 + $0xa00] sm:$0xff]
                %423 = vst [vmem:[%s101 + $0x500] sm:$0xff] %v422
                %v424 = vld [vmem:[%s100 + $0xa10] sm:$0xff]
                %425 = vst [vmem:[%s101 + $0x508] sm:$0xff] %v424
                %v426 = vld [vmem:[%s100 + $0xa20] sm:$0xff]
                %427 = vst [vmem:[%s101 + $0x510] sm:$0xff] %v426
                %v428 = vld [vmem:[%s100 + $0xa30] sm:$0xff]
                %429 = vst [vmem:[%s101 + $0x518] sm:$0xff] %v428
                %v430 = vld [vmem:[%s100 + $0xa40] sm:$0xff]
                %431 = vst [vmem:[%s101 + $0x520] sm:$0xff] %v430
                %v432 = vld [vmem:[%s100 + $0xa50] sm:$0xff]
                %433 = vst [vmem:[%s101 + $0x528] sm:$0xff] %v432
                %v434 = vld [vmem:[%s100 + $0xa60] sm:$0xff]
                %435 = vst [vmem:[%s101 + $0x530] sm:$0xff] %v434
                %v436 = vld [vmem:[%s100 + $0xa70] sm:$0xff]
                %437 = vst [vmem:[%s101 + $0x538] sm:$0xff] %v436
                %v438 = vld [vmem:[%s100 + $0xa80] sm:$0xff]
                %439 = vst [vmem:[%s101 + $0x540] sm:$0xff] %v438
                %v440 = vld [vmem:[%s100 + $0xa90] sm:$0xff]
                %441 = vst [vmem:[%s101 + $0x548] sm:$0xff] %v440
                %v442 = vld [vmem:[%s100 + $0xaa0] sm:$0xff]
                %443 = vst [vmem:[%s101 + $0x550] sm:$0xff] %v442
                %v444 = vld [vmem:[%s100 + $0xab0] sm:$0xff]
                %445 = vst [vmem:[%s101 + $0x558] sm:$0xff] %v444
                %v446 = vld [vmem:[%s100 + $0xac0] sm:$0xff]
                %447 = vst [vmem:[%s101 + $0x560] sm:$0xff] %v446
                %v448 = vld [vmem:[%s100 + $0xad0] sm:$0xff]
                %449 = vst [vmem:[%s101 + $0x568] sm:$0xff] %v448
                %v450 = vld [vmem:[%s100 + $0xae0] sm:$0xff]
                %451 = vst [vmem:[%s101 + $0x570] sm:$0xff] %v450
                %v452 = vld [vmem:[%s100 + $0xaf0] sm:$0xff]
                %453 = vst [vmem:[%s101 + $0x578] sm:$0xff] %v452
                %v454 = vld [vmem:[%s100 + $0xb00] sm:$0xff]
                %455 = vst [vmem:[%s101 + $0x580] sm:$0xff] %v454
                %v456 = vld [vmem:[%s100 + $0xb10] sm:$0xff]
                %457 = vst [vmem:[%s101 + $0x588] sm:$0xff] %v456
                %v458 = vld [vmem:[%s100 + $0xb20] sm:$0xff]
                %459 = vst [vmem:[%s101 + $0x590] sm:$0xff] %v458
                %v460 = vld [vmem:[%s100 + $0xb30] sm:$0xff]
                %461 = vst [vmem:[%s101 + $0x598] sm:$0xff] %v460
                %v462 = vld [vmem:[%s100 + $0xb40] sm:$0xff]
                %463 = vst [vmem:[%s101 + $0x5a0] sm:$0xff] %v462
                %v464 = vld [vmem:[%s100 + $0xb50] sm:$0xff]
                %465 = vst [vmem:[%s101 + $0x5a8] sm:$0xff] %v464
                %v466 = vld [vmem:[%s100 + $0xb60] sm:$0xff]
                %467 = vst [vmem:[%s101 + $0x5b0] sm:$0xff] %v466
                %v468 = vld [vmem:[%s100 + $0xb70] sm:$0xff]
                %469 = vst [vmem:[%s101 + $0x5b8] sm:$0xff] %v468
                %v470 = vld [vmem:[%s100 + $0xb80] sm:$0xff]
                %471 = vst [vmem:[%s101 + $0x5c0] sm:$0xff] %v470
                %v472 = vld [vmem:[%s100 + $0xb90] sm:$0xff]
                %473 = vst [vmem:[%s101 + $0x5c8] sm:$0xff] %v472
                %v474 = vld [vmem:[%s100 + $0xba0] sm:$0xff]
                %475 = vst [vmem:[%s101 + $0x5d0] sm:$0xff] %v474
                %v476 = vld [vmem:[%s100 + $0xbb0] sm:$0xff]
                %477 = vst [vmem:[%s101 + $0x5d8] sm:$0xff] %v476
                %v478 = vld [vmem:[%s100 + $0xbc0] sm:$0xff]
                %479 = vst [vmem:[%s101 + $0x5e0] sm:$0xff] %v478
                %v480 = vld [vmem:[%s100 + $0xbd0] sm:$0xff]
                %481 = vst [vmem:[%s101 + $0x5e8] sm:$0xff] %v480
                %v482 = vld [vmem:[%s100 + $0xbe0] sm:$0xff]
                %483 = vst [vmem:[%s101 + $0x5f0] sm:$0xff] %v482
                %v484 = vld [vmem:[%s100 + $0xbf0] sm:$0xff]
                %485 = vst [vmem:[%s101 + $0x5f8] sm:$0xff] %v484
                %v486 = vld [vmem:[%s100 + $0xc00] sm:$0xff]
                %487 = vst [vmem:[%s101 + $0x600] sm:$0xff] %v486
                %v488 = vld [vmem:[%s100 + $0xc10] sm:$0xff]
                %489 = vst [vmem:[%s101 + $0x608] sm:$0xff] %v488
                %v490 = vld [vmem:[%s100 + $0xc20] sm:$0xff]
                %491 = vst [vmem:[%s101 + $0x610] sm:$0xff] %v490
                %v492 = vld [vmem:[%s100 + $0xc30] sm:$0xff]
                %493 = vst [vmem:[%s101 + $0x618] sm:$0xff] %v492
                %v494 = vld [vmem:[%s100 + $0xc40] sm:$0xff]
                %495 = vst [vmem:[%s101 + $0x620] sm:$0xff] %v494
                %v496 = vld [vmem:[%s100 + $0xc50] sm:$0xff]
                %497 = vst [vmem:[%s101 + $0x628] sm:$0xff] %v496
                %v498 = vld [vmem:[%s100 + $0xc60] sm:$0xff]
                %499 = vst [vmem:[%s101 + $0x630] sm:$0xff] %v498
                %v500 = vld [vmem:[%s100 + $0xc70] sm:$0xff]
                %501 = vst [vmem:[%s101 + $0x638] sm:$0xff] %v500
                %v502 = vld [vmem:[%s100 + $0xc80] sm:$0xff]
                %503 = vst [vmem:[%s101 + $0x640] sm:$0xff] %v502
                %v504 = vld [vmem:[%s100 + $0xc90] sm:$0xff]
                %505 = vst [vmem:[%s101 + $0x648] sm:$0xff] %v504
                %v506 = vld [vmem:[%s100 + $0xca0] sm:$0xff]
                %507 = vst [vmem:[%s101 + $0x650] sm:$0xff] %v506
                %v508 = vld [vmem:[%s100 + $0xcb0] sm:$0xff]
                %509 = vst [vmem:[%s101 + $0x658] sm:$0xff] %v508
                %v510 = vld [vmem:[%s100 + $0xcc0] sm:$0xff]
                %511 = vst [vmem:[%s101 + $0x660] sm:$0xff] %v510
                %v512 = vld [vmem:[%s100 + $0xcd0] sm:$0xff]
                %513 = vst [vmem:[%s101 + $0x668] sm:$0xff] %v512
                %v514 = vld [vmem:[%s100 + $0xce0] sm:$0xff]
                %515 = vst [vmem:[%s101 + $0x670] sm:$0xff] %v514
                %v516 = vld [vmem:[%s100 + $0xcf0] sm:$0xff]
                %517 = vst [vmem:[%s101 + $0x678] sm:$0xff] %v516
                %v518 = vld [vmem:[%s100 + $0xd00] sm:$0xff]
                %519 = vst [vmem:[%s101 + $0x680] sm:$0xff] %v518
                %v520 = vld [vmem:[%s100 + $0xd10] sm:$0xff]
                %521 = vst [vmem:[%s101 + $0x688] sm:$0xff] %v520
                %v522 = vld [vmem:[%s100 + $0xd20] sm:$0xff]
                %523 = vst [vmem:[%s101 + $0x690] sm:$0xff] %v522
                %v524 = vld [vmem:[%s100 + $0xd30] sm:$0xff]
                %525 = vst [vmem:[%s101 + $0x698] sm:$0xff] %v524
                %v526 = vld [vmem:[%s100 + $0xd40] sm:$0xff]
                %527 = vst [vmem:[%s101 + $0x6a0] sm:$0xff] %v526
                %v528 = vld [vmem:[%s100 + $0xd50] sm:$0xff]
                %529 = vst [vmem:[%s101 + $0x6a8] sm:$0xff] %v528
                %v530 = vld [vmem:[%s100 + $0xd60] sm:$0xff]
                %531 = vst [vmem:[%s101 + $0x6b0] sm:$0xff] %v530
                %v532 = vld [vmem:[%s100 + $0xd70] sm:$0xff]
                %533 = vst [vmem:[%s101 + $0x6b8] sm:$0xff] %v532
                %v534 = vld [vmem:[%s100 + $0xd80] sm:$0xff]
                %535 = vst [vmem:[%s101 + $0x6c0] sm:$0xff] %v534
                %v536 = vld [vmem:[%s100 + $0xd90] sm:$0xff]
                %537 = vst [vmem:[%s101 + $0x6c8] sm:$0xff] %v536
                %v538 = vld [vmem:[%s100 + $0xda0] sm:$0xff]
                %539 = vst [vmem:[%s101 + $0x6d0] sm:$0xff] %v538
                %v540 = vld [vmem:[%s100 + $0xdb0] sm:$0xff]
                %541 = vst [vmem:[%s101 + $0x6d8] sm:$0xff] %v540
                %v542 = vld [vmem:[%s100 + $0xdc0] sm:$0xff]
                %543 = vst [vmem:[%s101 + $0x6e0] sm:$0xff] %v542
                %v544 = vld [vmem:[%s100 + $0xdd0] sm:$0xff]
                %545 = vst [vmem:[%s101 + $0x6e8] sm:$0xff] %v544
                %v546 = vld [vmem:[%s100 + $0xde0] sm:$0xff]
                %547 = vst [vmem:[%s101 + $0x6f0] sm:$0xff] %v546
                %v548 = vld [vmem:[%s100 + $0xdf0] sm:$0xff]
                %549 = vst [vmem:[%s101 + $0x6f8] sm:$0xff] %v548
                %v550 = vld [vmem:[%s100 + $0xe00] sm:$0xff]
                %551 = vst [vmem:[%s101 + $0x700] sm:$0xff] %v550
                %v552 = vld [vmem:[%s100 + $0xe10] sm:$0xff]
                %553 = vst [vmem:[%s101 + $0x708] sm:$0xff] %v552
                %v554 = vld [vmem:[%s100 + $0xe20] sm:$0xff]
                %555 = vst [vmem:[%s101 + $0x710] sm:$0xff] %v554
                %v556 = vld [vmem:[%s100 + $0xe30] sm:$0xff]
                %557 = vst [vmem:[%s101 + $0x718] sm:$0xff] %v556
                %v558 = vld [vmem:[%s100 + $0xe40] sm:$0xff]
                %559 = vst [vmem:[%s101 + $0x720] sm:$0xff] %v558
                %v560 = vld [vmem:[%s100 + $0xe50] sm:$0xff]
                %561 = vst [vmem:[%s101 + $0x728] sm:$0xff] %v560
                %v562 = vld [vmem:[%s100 + $0xe60] sm:$0xff]
                %563 = vst [vmem:[%s101 + $0x730] sm:$0xff] %v562
                %v564 = vld [vmem:[%s100 + $0xe70] sm:$0xff]
                %565 = vst [vmem:[%s101 + $0x738] sm:$0xff] %v564
                %v566 = vld [vmem:[%s100 + $0xe80] sm:$0xff]
                %567 = vst [vmem:[%s101 + $0x740] sm:$0xff] %v566
                %v568 = vld [vmem:[%s100 + $0xe90] sm:$0xff]
                %569 = vst [vmem:[%s101 + $0x748] sm:$0xff] %v568
                %v570 = vld [vmem:[%s100 + $0xea0] sm:$0xff]
                %571 = vst [vmem:[%s101 + $0x750] sm:$0xff] %v570
                %v572 = vld [vmem:[%s100 + $0xeb0] sm:$0xff]
                %573 = vst [vmem:[%s101 + $0x758] sm:$0xff] %v572
                %v574 = vld [vmem:[%s100 + $0xec0] sm:$0xff]
                %575 = vst [vmem:[%s101 + $0x760] sm:$0xff] %v574
                %v576 = vld [vmem:[%s100 + $0xed0] sm:$0xff]
                %577 = vst [vmem:[%s101 + $0x768] sm:$0xff] %v576
                %v578 = vld [vmem:[%s100 + $0xee0] sm:$0xff]
                %579 = vst [vmem:[%s101 + $0x770] sm:$0xff] %v578
                %v580 = vld [vmem:[%s100 + $0xef0] sm:$0xff]
                %581 = vst [vmem:[%s101 + $0x778] sm:$0xff] %v580
                %v582 = vld [vmem:[%s100 + $0xf00] sm:$0xff]
                %583 = vst [vmem:[%s101 + $0x780] sm:$0xff] %v582
                %v584 = vld [vmem:[%s100 + $0xf10] sm:$0xff]
                %585 = vst [vmem:[%s101 + $0x788] sm:$0xff] %v584
                %v586 = vld [vmem:[%s100 + $0xf20] sm:$0xff]
                %587 = vst [vmem:[%s101 + $0x790] sm:$0xff] %v586
                %v588 = vld [vmem:[%s100 + $0xf30] sm:$0xff]
                %589 = vst [vmem:[%s101 + $0x798] sm:$0xff] %v588
                %v590 = vld [vmem:[%s100 + $0xf40] sm:$0xff]
                %591 = vst [vmem:[%s101 + $0x7a0] sm:$0xff] %v590
                %v592 = vld [vmem:[%s100 + $0xf50] sm:$0xff]
                %593 = vst [vmem:[%s101 + $0x7a8] sm:$0xff] %v592
                %v594 = vld [vmem:[%s100 + $0xf60] sm:$0xff]
                %595 = vst [vmem:[%s101 + $0x7b0] sm:$0xff] %v594
                %v596 = vld [vmem:[%s100 + $0xf70] sm:$0xff]
                %597 = vst [vmem:[%s101 + $0x7b8] sm:$0xff] %v596
                %v598 = vld [vmem:[%s100 + $0xf80] sm:$0xff]
                %599 = vst [vmem:[%s101 + $0x7c0] sm:$0xff] %v598
                %v600 = vld [vmem:[%s100 + $0xf90] sm:$0xff]
                %601 = vst [vmem:[%s101 + $0x7c8] sm:$0xff] %v600
                %v602 = vld [vmem:[%s100 + $0xfa0] sm:$0xff]
                %603 = vst [vmem:[%s101 + $0x7d0] sm:$0xff] %v602
                %v604 = vld [vmem:[%s100 + $0xfb0] sm:$0xff]
                %605 = vst [vmem:[%s101 + $0x7d8] sm:$0xff] %v604
                %v606 = vld [vmem:[%s100 + $0xfc0] sm:$0xff]
                %607 = vst [vmem:[%s101 + $0x7e0] sm:$0xff] %v606
                %v608 = vld [vmem:[%s100 + $0xfd0] sm:$0xff]
                %609 = vst [vmem:[%s101 + $0x7e8] sm:$0xff] %v608
                %v610 = vld [vmem:[%s100 + $0xfe0] sm:$0xff]
                %611 = vst [vmem:[%s101 + $0x7f0] sm:$0xff] %v610
                %v612 = vld [vmem:[%s100 + $0xff0] sm:$0xff]
                %613 = vst [vmem:[%s101 + $0x7f8] sm:$0xff] %v612
                %v614 = vld [vmem:[%s100 + $0x1000] sm:$0xff]
                %615 = vst [vmem:[%s101 + $0x800] sm:$0xff] %v614
                %v616 = vld [vmem:[%s100 + $0x1010] sm:$0xff]
                %617 = vst [vmem:[%s101 + $0x808] sm:$0xff] %v616
                %v618 = vld [vmem:[%s100 + $0x1020] sm:$0xff]
                %619 = vst [vmem:[%s101 + $0x810] sm:$0xff] %v618
                %v620 = vld [vmem:[%s100 + $0x1030] sm:$0xff]
                %621 = vst [vmem:[%s101 + $0x818] sm:$0xff] %v620
                %v622 = vld [vmem:[%s100 + $0x1040] sm:$0xff]
                %623 = vst [vmem:[%s101 + $0x820] sm:$0xff] %v622
                %v624 = vld [vmem:[%s100 + $0x1050] sm:$0xff]
                %625 = vst [vmem:[%s101 + $0x828] sm:$0xff] %v624
                %v626 = vld [vmem:[%s100 + $0x1060] sm:$0xff]
                %627 = vst [vmem:[%s101 + $0x830] sm:$0xff] %v626
                %v628 = vld [vmem:[%s100 + $0x1070] sm:$0xff]
                %629 = vst [vmem:[%s101 + $0x838] sm:$0xff] %v628
                %v630 = vld [vmem:[%s100 + $0x1080] sm:$0xff]
                %631 = vst [vmem:[%s101 + $0x840] sm:$0xff] %v630
                %v632 = vld [vmem:[%s100 + $0x1090] sm:$0xff]
                %633 = vst [vmem:[%s101 + $0x848] sm:$0xff] %v632
                %v634 = vld [vmem:[%s100 + $0x10a0] sm:$0xff]
                %635 = vst [vmem:[%s101 + $0x850] sm:$0xff] %v634
                %v636 = vld [vmem:[%s100 + $0x10b0] sm:$0xff]
                %637 = vst [vmem:[%s101 + $0x858] sm:$0xff] %v636
                %v638 = vld [vmem:[%s100 + $0x10c0] sm:$0xff]
                %639 = vst [vmem:[%s101 + $0x860] sm:$0xff] %v638
                %v640 = vld [vmem:[%s100 + $0x10d0] sm:$0xff]
                %641 = vst [vmem:[%s101 + $0x868] sm:$0xff] %v640
                %v642 = vld [vmem:[%s100 + $0x10e0] sm:$0xff]
                %643 = vst [vmem:[%s101 + $0x870] sm:$0xff] %v642
                %v644 = vld [vmem:[%s100 + $0x10f0] sm:$0xff]
                %645 = vst [vmem:[%s101 + $0x878] sm:$0xff] %v644
                %v646 = vld [vmem:[%s100 + $0x1100] sm:$0xff]
                %647 = vst [vmem:[%s101 + $0x880] sm:$0xff] %v646
                %v648 = vld [vmem:[%s100 + $0x1110] sm:$0xff]
                %649 = vst [vmem:[%s101 + $0x888] sm:$0xff] %v648
                %v650 = vld [vmem:[%s100 + $0x1120] sm:$0xff]
                %651 = vst [vmem:[%s101 + $0x890] sm:$0xff] %v650
                %v652 = vld [vmem:[%s100 + $0x1130] sm:$0xff]
                %653 = vst [vmem:[%s101 + $0x898] sm:$0xff] %v652
                %v654 = vld [vmem:[%s100 + $0x1140] sm:$0xff]
                %655 = vst [vmem:[%s101 + $0x8a0] sm:$0xff] %v654
                %v656 = vld [vmem:[%s100 + $0x1150] sm:$0xff]
                %657 = vst [vmem:[%s101 + $0x8a8] sm:$0xff] %v656
                %v658 = vld [vmem:[%s100 + $0x1160] sm:$0xff]
                %659 = vst [vmem:[%s101 + $0x8b0] sm:$0xff] %v658
                %v660 = vld [vmem:[%s100 + $0x1170] sm:$0xff]
                %661 = vst [vmem:[%s101 + $0x8b8] sm:$0xff] %v660
                %v662 = vld [vmem:[%s100 + $0x1180] sm:$0xff]
                %663 = vst [vmem:[%s101 + $0x8c0] sm:$0xff] %v662
                %v664 = vld [vmem:[%s100 + $0x1190] sm:$0xff]
                %665 = vst [vmem:[%s101 + $0x8c8] sm:$0xff] %v664
                %v666 = vld [vmem:[%s100 + $0x11a0] sm:$0xff]
                %667 = vst [vmem:[%s101 + $0x8d0] sm:$0xff] %v666
                %v668 = vld [vmem:[%s100 + $0x11b0] sm:$0xff]
                %669 = vst [vmem:[%s101 + $0x8d8] sm:$0xff] %v668
                %v670 = vld [vmem:[%s100 + $0x11c0] sm:$0xff]
                %671 = vst [vmem:[%s101 + $0x8e0] sm:$0xff] %v670
                %v672 = vld [vmem:[%s100 + $0x11d0] sm:$0xff]
                %673 = vst [vmem:[%s101 + $0x8e8] sm:$0xff] %v672
                %v674 = vld [vmem:[%s100 + $0x11e0] sm:$0xff]
                %675 = vst [vmem:[%s101 + $0x8f0] sm:$0xff] %v674
                %v676 = vld [vmem:[%s100 + $0x11f0] sm:$0xff]
                %677 = vst [vmem:[%s101 + $0x8f8] sm:$0xff] %v676
                %v678 = vld [vmem:[%s100 + $0x1200] sm:$0xff]
                %679 = vst [vmem:[%s101 + $0x900] sm:$0xff] %v678
                %v680 = vld [vmem:[%s100 + $0x1210] sm:$0xff]
                %681 = vst [vmem:[%s101 + $0x908] sm:$0xff] %v680
                %v682 = vld [vmem:[%s100 + $0x1220] sm:$0xff]
                %683 = vst [vmem:[%s101 + $0x910] sm:$0xff] %v682
                %v684 = vld [vmem:[%s100 + $0x1230] sm:$0xff]
                %685 = vst [vmem:[%s101 + $0x918] sm:$0xff] %v684
                %v686 = vld [vmem:[%s100 + $0x1240] sm:$0xff]
                %687 = vst [vmem:[%s101 + $0x920] sm:$0xff] %v686
                %v688 = vld [vmem:[%s100 + $0x1250] sm:$0xff]
                %689 = vst [vmem:[%s101 + $0x928] sm:$0xff] %v688
                %v690 = vld [vmem:[%s100 + $0x1260] sm:$0xff]
                %691 = vst [vmem:[%s101 + $0x930] sm:$0xff] %v690
                %v692 = vld [vmem:[%s100 + $0x1270] sm:$0xff]
                %693 = vst [vmem:[%s101 + $0x938] sm:$0xff] %v692
                %v694 = vld [vmem:[%s100 + $0x1280] sm:$0xff]
                %695 = vst [vmem:[%s101 + $0x940] sm:$0xff] %v694
                %v696 = vld [vmem:[%s100 + $0x1290] sm:$0xff]
                %697 = vst [vmem:[%s101 + $0x948] sm:$0xff] %v696
                %v698 = vld [vmem:[%s100 + $0x12a0] sm:$0xff]
                %699 = vst [vmem:[%s101 + $0x950] sm:$0xff] %v698
                %v700 = vld [vmem:[%s100 + $0x12b0] sm:$0xff]
                %701 = vst [vmem:[%s101 + $0x958] sm:$0xff] %v700
                %v702 = vld [vmem:[%s100 + $0x12c0] sm:$0xff]
                %703 = vst [vmem:[%s101 + $0x960] sm:$0xff] %v702
                %v704 = vld [vmem:[%s100 + $0x12d0] sm:$0xff]
                %705 = vst [vmem:[%s101 + $0x968] sm:$0xff] %v704
                %v706 = vld [vmem:[%s100 + $0x12e0] sm:$0xff]
                %707 = vst [vmem:[%s101 + $0x970] sm:$0xff] %v706
                %v708 = vld [vmem:[%s100 + $0x12f0] sm:$0xff]
                %709 = vst [vmem:[%s101 + $0x978] sm:$0xff] %v708
                %v710 = vld [vmem:[%s100 + $0x1300] sm:$0xff]
                %711 = vst [vmem:[%s101 + $0x980] sm:$0xff] %v710
                %v712 = vld [vmem:[%s100 + $0x1310] sm:$0xff]
                %713 = vst [vmem:[%s101 + $0x988] sm:$0xff] %v712
                %v714 = vld [vmem:[%s100 + $0x1320] sm:$0xff]
                %715 = vst [vmem:[%s101 + $0x990] sm:$0xff] %v714
                %v716 = vld [vmem:[%s100 + $0x1330] sm:$0xff]
                %717 = vst [vmem:[%s101 + $0x998] sm:$0xff] %v716
                %v718 = vld [vmem:[%s100 + $0x1340] sm:$0xff]
                %719 = vst [vmem:[%s101 + $0x9a0] sm:$0xff] %v718
                %v720 = vld [vmem:[%s100 + $0x1350] sm:$0xff]
                %721 = vst [vmem:[%s101 + $0x9a8] sm:$0xff] %v720
                %v722 = vld [vmem:[%s100 + $0x1360] sm:$0xff]
                %723 = vst [vmem:[%s101 + $0x9b0] sm:$0xff] %v722
                %v724 = vld [vmem:[%s100 + $0x1370] sm:$0xff]
                %725 = vst [vmem:[%s101 + $0x9b8] sm:$0xff] %v724
                %v726 = vld [vmem:[%s100 + $0x1380] sm:$0xff]
                %727 = vst [vmem:[%s101 + $0x9c0] sm:$0xff] %v726
                %v728 = vld [vmem:[%s100 + $0x1390] sm:$0xff]
                %729 = vst [vmem:[%s101 + $0x9c8] sm:$0xff] %v728
                %v730 = vld [vmem:[%s100 + $0x13a0] sm:$0xff]
                %731 = vst [vmem:[%s101 + $0x9d0] sm:$0xff] %v730
                %v732 = vld [vmem:[%s100 + $0x13b0] sm:$0xff]
                %733 = vst [vmem:[%s101 + $0x9d8] sm:$0xff] %v732
                %v734 = vld [vmem:[%s100 + $0x13c0] sm:$0xff]
                %735 = vst [vmem:[%s101 + $0x9e0] sm:$0xff] %v734
                %v736 = vld [vmem:[%s100 + $0x13d0] sm:$0xff]
                %737 = vst [vmem:[%s101 + $0x9e8] sm:$0xff] %v736
                %v738 = vld [vmem:[%s100 + $0x13e0] sm:$0xff]
                %739 = vst [vmem:[%s101 + $0x9f0] sm:$0xff] %v738
                %v740 = vld [vmem:[%s100 + $0x13f0] sm:$0xff]
                %741 = vst [vmem:[%s101 + $0x9f8] sm:$0xff] %v740
                %v742 = vld [vmem:[%s100 + $0x1400] sm:$0xff]
                %743 = vst [vmem:[%s101 + $0xa00] sm:$0xff] %v742
                %v744 = vld [vmem:[%s100 + $0x1410] sm:$0xff]
                %745 = vst [vmem:[%s101 + $0xa08] sm:$0xff] %v744
                %v746 = vld [vmem:[%s100 + $0x1420] sm:$0xff]
                %747 = vst [vmem:[%s101 + $0xa10] sm:$0xff] %v746
                %v748 = vld [vmem:[%s100 + $0x1430] sm:$0xff]
                %749 = vst [vmem:[%s101 + $0xa18] sm:$0xff] %v748
                %v750 = vld [vmem:[%s100 + $0x1440] sm:$0xff]
                %751 = vst [vmem:[%s101 + $0xa20] sm:$0xff] %v750
                %v752 = vld [vmem:[%s100 + $0x1450] sm:$0xff]
                %753 = vst [vmem:[%s101 + $0xa28] sm:$0xff] %v752
                %v754 = vld [vmem:[%s100 + $0x1460] sm:$0xff]
                %755 = vst [vmem:[%s101 + $0xa30] sm:$0xff] %v754
                %v756 = vld [vmem:[%s100 + $0x1470] sm:$0xff]
                %757 = vst [vmem:[%s101 + $0xa38] sm:$0xff] %v756
                %v758 = vld [vmem:[%s100 + $0x1480] sm:$0xff]
                %759 = vst [vmem:[%s101 + $0xa40] sm:$0xff] %v758
                %v760 = vld [vmem:[%s100 + $0x1490] sm:$0xff]
                %761 = vst [vmem:[%s101 + $0xa48] sm:$0xff] %v760
                %v762 = vld [vmem:[%s100 + $0x14a0] sm:$0xff]
                %763 = vst [vmem:[%s101 + $0xa50] sm:$0xff] %v762
                %v764 = vld [vmem:[%s100 + $0x14b0] sm:$0xff]
                %765 = vst [vmem:[%s101 + $0xa58] sm:$0xff] %v764
                %v766 = vld [vmem:[%s100 + $0x14c0] sm:$0xff]
                %767 = vst [vmem:[%s101 + $0xa60] sm:$0xff] %v766
                %v768 = vld [vmem:[%s100 + $0x14d0] sm:$0xff]
                %769 = vst [vmem:[%s101 + $0xa68] sm:$0xff] %v768
                %v770 = vld [vmem:[%s100 + $0x14e0] sm:$0xff]
                %771 = vst [vmem:[%s101 + $0xa70] sm:$0xff] %v770
                %v772 = vld [vmem:[%s100 + $0x14f0] sm:$0xff]
                %773 = vst [vmem:[%s101 + $0xa78] sm:$0xff] %v772
                %v774 = vld [vmem:[%s100 + $0x1500] sm:$0xff]
                %775 = vst [vmem:[%s101 + $0xa80] sm:$0xff] %v774
                %v776 = vld [vmem:[%s100 + $0x1510] sm:$0xff]
                %777 = vst [vmem:[%s101 + $0xa88] sm:$0xff] %v776
                %v778 = vld [vmem:[%s100 + $0x1520] sm:$0xff]
                %779 = vst [vmem:[%s101 + $0xa90] sm:$0xff] %v778
                %v780 = vld [vmem:[%s100 + $0x1530] sm:$0xff]
                %781 = vst [vmem:[%s101 + $0xa98] sm:$0xff] %v780
                %v782 = vld [vmem:[%s100 + $0x1540] sm:$0xff]
                %783 = vst [vmem:[%s101 + $0xaa0] sm:$0xff] %v782
                %v784 = vld [vmem:[%s100 + $0x1550] sm:$0xff]
                %785 = vst [vmem:[%s101 + $0xaa8] sm:$0xff] %v784
                %v786 = vld [vmem:[%s100 + $0x1560] sm:$0xff]
                %787 = vst [vmem:[%s101 + $0xab0] sm:$0xff] %v786
                %v788 = vld [vmem:[%s100 + $0x1570] sm:$0xff]
                %789 = vst [vmem:[%s101 + $0xab8] sm:$0xff] %v788
                %v790 = vld [vmem:[%s100 + $0x1580] sm:$0xff]
                %791 = vst [vmem:[%s101 + $0xac0] sm:$0xff] %v790
                %v792 = vld [vmem:[%s100 + $0x1590] sm:$0xff]
                %793 = vst [vmem:[%s101 + $0xac8] sm:$0xff] %v792
                %v794 = vld [vmem:[%s100 + $0x15a0] sm:$0xff]
                %795 = vst [vmem:[%s101 + $0xad0] sm:$0xff] %v794
                %v796 = vld [vmem:[%s100 + $0x15b0] sm:$0xff]
                %797 = vst [vmem:[%s101 + $0xad8] sm:$0xff] %v796
                %v798 = vld [vmem:[%s100 + $0x15c0] sm:$0xff]
                %799 = vst [vmem:[%s101 + $0xae0] sm:$0xff] %v798
                %v800 = vld [vmem:[%s100 + $0x15d0] sm:$0xff]
                %801 = vst [vmem:[%s101 + $0xae8] sm:$0xff] %v800
                %v802 = vld [vmem:[%s100 + $0x15e0] sm:$0xff]
                %803 = vst [vmem:[%s101 + $0xaf0] sm:$0xff] %v802
                %v804 = vld [vmem:[%s100 + $0x15f0] sm:$0xff]
                %805 = vst [vmem:[%s101 + $0xaf8] sm:$0xff] %v804
                %v806 = vld [vmem:[%s100 + $0x1600] sm:$0xff]
                %807 = vst [vmem:[%s101 + $0xb00] sm:$0xff] %v806
                %v808 = vld [vmem:[%s100 + $0x1610] sm:$0xff]
                %809 = vst [vmem:[%s101 + $0xb08] sm:$0xff] %v808
                %v810 = vld [vmem:[%s100 + $0x1620] sm:$0xff]
                %811 = vst [vmem:[%s101 + $0xb10] sm:$0xff] %v810
                %v812 = vld [vmem:[%s100 + $0x1630] sm:$0xff]
                %813 = vst [vmem:[%s101 + $0xb18] sm:$0xff] %v812
                %v814 = vld [vmem:[%s100 + $0x1640] sm:$0xff]
                %815 = vst [vmem:[%s101 + $0xb20] sm:$0xff] %v814
                %v816 = vld [vmem:[%s100 + $0x1650] sm:$0xff]
                %817 = vst [vmem:[%s101 + $0xb28] sm:$0xff] %v816
                %v818 = vld [vmem:[%s100 + $0x1660] sm:$0xff]
                %819 = vst [vmem:[%s101 + $0xb30] sm:$0xff] %v818
                %v820 = vld [vmem:[%s100 + $0x1670] sm:$0xff]
                %821 = vst [vmem:[%s101 + $0xb38] sm:$0xff] %v820
                %v822 = vld [vmem:[%s100 + $0x1680] sm:$0xff]
                %823 = vst [vmem:[%s101 + $0xb40] sm:$0xff] %v822
                %v824 = vld [vmem:[%s100 + $0x1690] sm:$0xff]
                %825 = vst [vmem:[%s101 + $0xb48] sm:$0xff] %v824
                %v826 = vld [vmem:[%s100 + $0x16a0] sm:$0xff]
                %827 = vst [vmem:[%s101 + $0xb50] sm:$0xff] %v826
                %v828 = vld [vmem:[%s100 + $0x16b0] sm:$0xff]
                %829 = vst [vmem:[%s101 + $0xb58] sm:$0xff] %v828
                %v830 = vld [vmem:[%s100 + $0x16c0] sm:$0xff]
                %831 = vst [vmem:[%s101 + $0xb60] sm:$0xff] %v830
                %v832 = vld [vmem:[%s100 + $0x16d0] sm:$0xff]
                %833 = vst [vmem:[%s101 + $0xb68] sm:$0xff] %v832
                %v834 = vld [vmem:[%s100 + $0x16e0] sm:$0xff]
                %835 = vst [vmem:[%s101 + $0xb70] sm:$0xff] %v834
                %v836 = vld [vmem:[%s100 + $0x16f0] sm:$0xff]
                %837 = vst [vmem:[%s101 + $0xb78] sm:$0xff] %v836
                %v838 = vld [vmem:[%s100 + $0x1700] sm:$0xff]
                %839 = vst [vmem:[%s101 + $0xb80] sm:$0xff] %v838
                %v840 = vld [vmem:[%s100 + $0x1710] sm:$0xff]
                %841 = vst [vmem:[%s101 + $0xb88] sm:$0xff] %v840
                %v842 = vld [vmem:[%s100 + $0x1720] sm:$0xff]
                %843 = vst [vmem:[%s101 + $0xb90] sm:$0xff] %v842
                %v844 = vld [vmem:[%s100 + $0x1730] sm:$0xff]
                %845 = vst [vmem:[%s101 + $0xb98] sm:$0xff] %v844
                %v846 = vld [vmem:[%s100 + $0x1740] sm:$0xff]
                %847 = vst [vmem:[%s101 + $0xba0] sm:$0xff] %v846
                %v848 = vld [vmem:[%s100 + $0x1750] sm:$0xff]
                %849 = vst [vmem:[%s101 + $0xba8] sm:$0xff] %v848
                %v850 = vld [vmem:[%s100 + $0x1760] sm:$0xff]
                %851 = vst [vmem:[%s101 + $0xbb0] sm:$0xff] %v850
                %v852 = vld [vmem:[%s100 + $0x1770] sm:$0xff]
                %853 = vst [vmem:[%s101 + $0xbb8] sm:$0xff] %v852
                %v854 = vld [vmem:[%s100 + $0x1780] sm:$0xff]
                %855 = vst [vmem:[%s101 + $0xbc0] sm:$0xff] %v854
                %v856 = vld [vmem:[%s100 + $0x1790] sm:$0xff]
                %857 = vst [vmem:[%s101 + $0xbc8] sm:$0xff] %v856
                %v858 = vld [vmem:[%s100 + $0x17a0] sm:$0xff]
                %859 = vst [vmem:[%s101 + $0xbd0] sm:$0xff] %v858
                %v860 = vld [vmem:[%s100 + $0x17b0] sm:$0xff]
                %861 = vst [vmem:[%s101 + $0xbd8] sm:$0xff] %v860
                %v862 = vld [vmem:[%s100 + $0x17c0] sm:$0xff]
                %863 = vst [vmem:[%s101 + $0xbe0] sm:$0xff] %v862
                %v864 = vld [vmem:[%s100 + $0x17d0] sm:$0xff]
                %865 = vst [vmem:[%s101 + $0xbe8] sm:$0xff] %v864
                %v866 = vld [vmem:[%s100 + $0x17e0] sm:$0xff]
                %867 = vst [vmem:[%s101 + $0xbf0] sm:$0xff] %v866
                %v868 = vld [vmem:[%s100 + $0x17f0] sm:$0xff]
                %869 = vst [vmem:[%s101 + $0xbf8] sm:$0xff] %v868
              $region37: #{_forward_one.1} parent=31 // loop_footer
                %s99 = sadd.s32 1, %s95
              $region38: #{_forward_one.1} parent=31 // loop_footer_branch
                %94 = sbr.rel target = $region34
              $region39: #{_forward_one.1} parent=31 // loop_exit
                _
            $region32: #{_forward_one.1} parent=23 // pred_fallthru
              _
          $region24: #{_forward_one.1} parent=19 // pred_fallthru
            _
          %1650 = vnop
        $region20: #{_forward_one.1} parent=15 // pred_fallthru
          _
      $region16: #{_forward_one.1} parent=5 // pred_fallthru
        _
      %p1651 = scmp.le.s32.totalorder 1, %s7
      %p1652 = scmp.lt.s32.totalorder %s7, 3
      %p1653 = pnand %p1651, %p1652
      %p1654 = pneg %p1653
      // Predicated region
      $region55: #{_forward_one.1} parent=5 // pred_check
        _
      $region56: #{_forward_one.1} parent=5 // pred_check_branch
        %1656 = sbr.rel (%p1653) target = $region58
      $region57: #{_forward_one.1} parent=5 // pred_region
        %s1657 = ssub.s32 %s7, 1
        %s1658 = sand.u32 %s20, 1
        %s1659 = sand.u32 %s20, 1
        %s1660 = smul.addr %s1659, 3072
        %s1661 = scalar_lea.vmem [#allocation2], %s1660
        // Predicated region
        $region59: #{_forward_one.1} parent=57 // pred_check
          %p1662 = pneg %p33
        $region60: #{_forward_one.1} parent=57 // pred_check_branch
          %1664 = sbr.rel (%p1662) target = $region62
        $region61: #{_forward_one.1} parent=57 // pred_region
          _
        $region62: #{_forward_one.1} parent=57 // pred_fallthru
          _
        %s1665 = sand.u32 %s20, 1
        %s1666 = sand.u32 %s20, 1
        %s1667 = smul.addr %s1666, 3072
        %s1668 = scalar_lea.vmem [#allocation2], %s1667
        %p1669 = pneg %p33
        %p1670 = pneg %p30
        %p1671 = pneg %p59
        %p1672 = pneg %p56
        %s1673 = sand.u32 %s46, 1
        %s1674 = sand.u32 %s46, 1
        %s1675 = smul.addr %s1674, 672
        %s1676 = scalar_lea.vmem [#allocation3], %s1675
        %v1677 = vld [vmem:[%s1661] sm:$0xff]
        %v1678 = vld [vmem:[%s1661 + $0x8] sm:$0xff]
        %v1679 = vld [vmem:[%s1661 + $0x10] sm:$0xff]
        %v1680 = vld [vmem:[%s1661 + $0x18] sm:$0xff]
        %v1681 = vld [vmem:[%s1661 + $0x20] sm:$0xff]
        %v1682 = vld [vmem:[%s1661 + $0x28] sm:$0xff]
        %v1683 = vld [vmem:[%s1661 + $0x30] sm:$0xff]
        %v1684 = vld [vmem:[%s1661 + $0x38] sm:$0xff]
        %v1685 = vld [vmem:[%s1661 + $0x40] sm:$0xff]
        %v1686 = vld [vmem:[%s1661 + $0x48] sm:$0xff]
        %v1687 = vld [vmem:[%s1661 + $0x50] sm:$0xff]
        %v1688 = vld [vmem:[%s1661 + $0x58] sm:$0xff]
        %v1689 = vld [vmem:[%s1661 + $0x60] sm:$0xff]
        %v1690 = vld [vmem:[%s1661 + $0x68] sm:$0xff]
        %v1691 = vld [vmem:[%s1661 + $0x70] sm:$0xff]
        %v1692 = vld [vmem:[%s1661 + $0x78] sm:$0xff]
        %v1693 = vld [vmem:[%s1661 + $0x80] sm:$0xff]
        %v1694 = vld [vmem:[%s1661 + $0x88] sm:$0xff]
        %v1695 = vld [vmem:[%s1661 + $0x90] sm:$0xff]
        %v1696 = vld [vmem:[%s1661 + $0x98] sm:$0xff]
        %v1697 = vld [vmem:[%s1661 + $0xa0] sm:$0xff]
        %v1698 = vld [vmem:[%s1661 + $0xa8] sm:$0xff]
        %v1699 = vld [vmem:[%s1661 + $0xb0] sm:$0xff]
        %v1700 = vld [vmem:[%s1661 + $0xb8] sm:$0xff]
        %v1701 = vld [vmem:[%s1661 + $0xc0] sm:$0xff]
        %v1702 = vld [vmem:[%s1661 + $0xc8] sm:$0xff]
        %v1703 = vld [vmem:[%s1661 + $0xd0] sm:$0xff]
        %v1704 = vld [vmem:[%s1661 + $0xd8] sm:$0xff]
        %v1705 = vld [vmem:[%s1661 + $0xe0] sm:$0xff]
        %v1706 = vld [vmem:[%s1661 + $0xe8] sm:$0xff]
        %v1707 = vld [vmem:[%s1661 + $0xf0] sm:$0xff]
        %v1708 = vld [vmem:[%s1661 + $0xf8] sm:$0xff]
        %v1709 = vld [vmem:[%s1661 + $0x100] sm:$0xff]
        %v1710 = vld [vmem:[%s1661 + $0x108] sm:$0xff]
        %v1711 = vld [vmem:[%s1661 + $0x110] sm:$0xff]
        %v1712 = vld [vmem:[%s1661 + $0x118] sm:$0xff]
        %v1713 = vld [vmem:[%s1661 + $0x120] sm:$0xff]
        %v1714 = vld [vmem:[%s1661 + $0x128] sm:$0xff]
        %v1715 = vld [vmem:[%s1661 + $0x130] sm:$0xff]
        %v1716 = vld [vmem:[%s1661 + $0x138] sm:$0xff]
        %v1717 = vld [vmem:[%s1661 + $0x140] sm:$0xff]
        %v1718 = vld [vmem:[%s1661 + $0x148] sm:$0xff]
        %v1719 = vld [vmem:[%s1661 + $0x150] sm:$0xff]
        %v1720 = vld [vmem:[%s1661 + $0x158] sm:$0xff]
        %v1721 = vld [vmem:[%s1661 + $0x160] sm:$0xff]
        %v1722 = vld [vmem:[%s1661 + $0x168] sm:$0xff]
        %v1723 = vld [vmem:[%s1661 + $0x170] sm:$0xff]
        %v1724 = vld [vmem:[%s1661 + $0x178] sm:$0xff]
        %v1725 = vld [vmem:[%s1661 + $0x180] sm:$0xff]
        %v1726 = vld [vmem:[%s1661 + $0x188] sm:$0xff]
        %v1727 = vld [vmem:[%s1661 + $0x190] sm:$0xff]
        %v1728 = vld [vmem:[%s1661 + $0x198] sm:$0xff]
        %v1729 = vld [vmem:[%s1661 + $0x1a0] sm:$0xff]
        %v1730 = vld [vmem:[%s1661 + $0x1a8] sm:$0xff]
        %v1731 = vld [vmem:[%s1661 + $0x1b0] sm:$0xff]
        %v1732 = vld [vmem:[%s1661 + $0x1b8] sm:$0xff]
        %v1733 = vld [vmem:[%s1661 + $0x1c0] sm:$0xff]
        %v1734 = vld [vmem:[%s1661 + $0x1c8] sm:$0xff]
        %v1735 = vld [vmem:[%s1661 + $0x1d0] sm:$0xff]
        %v1736 = vld [vmem:[%s1661 + $0x1d8] sm:$0xff]
        %v1737 = vld [vmem:[%s1661 + $0x1e0] sm:$0xff]
        %v1738 = vld [vmem:[%s1661 + $0x1e8] sm:$0xff]
        %v1739 = vld [vmem:[%s1661 + $0x1f0] sm:$0xff]
        %v1740 = vld [vmem:[%s1661 + $0x1f8] sm:$0xff]
        %v1741 = vld [vmem:[%s1661 + $0x200] sm:$0xff]
        %v1742 = vld [vmem:[%s1661 + $0x208] sm:$0xff]
        %v1743 = vld [vmem:[%s1661 + $0x210] sm:$0xff]
        %v1744 = vld [vmem:[%s1661 + $0x218] sm:$0xff]
        %v1745 = vld [vmem:[%s1661 + $0x220] sm:$0xff]
        %v1746 = vld [vmem:[%s1661 + $0x228] sm:$0xff]
        %v1747 = vld [vmem:[%s1661 + $0x230] sm:$0xff]
        %v1748 = vld [vmem:[%s1661 + $0x238] sm:$0xff]
        %v1749 = vld [vmem:[%s1661 + $0x240] sm:$0xff]
        %v1750 = vld [vmem:[%s1661 + $0x248] sm:$0xff]
        %v1751 = vld [vmem:[%s1661 + $0x250] sm:$0xff]
        %v1752 = vld [vmem:[%s1661 + $0x258] sm:$0xff]
        %v1753 = vld [vmem:[%s1661 + $0x260] sm:$0xff]
        %v1754 = vld [vmem:[%s1661 + $0x268] sm:$0xff]
        %v1755 = vld [vmem:[%s1661 + $0x270] sm:$0xff]
        %v1756 = vld [vmem:[%s1661 + $0x278] sm:$0xff]
        %v1757 = vld [vmem:[%s1661 + $0x280] sm:$0xff]
        %v1758 = vld [vmem:[%s1661 + $0x288] sm:$0xff]
        %v1759 = vld [vmem:[%s1661 + $0x290] sm:$0xff]
        %v1760 = vld [vmem:[%s1661 + $0x298] sm:$0xff]
        %v1761 = vld [vmem:[%s1661 + $0x2a0] sm:$0xff]
        %v1762 = vld [vmem:[%s1661 + $0x2a8] sm:$0xff]
        %v1763 = vld [vmem:[%s1661 + $0x2b0] sm:$0xff]
        %v1764 = vld [vmem:[%s1661 + $0x2b8] sm:$0xff]
        %v1765 = vld [vmem:[%s1661 + $0x2c0] sm:$0xff]
        %v1766 = vld [vmem:[%s1661 + $0x2c8] sm:$0xff]
        %v1767 = vld [vmem:[%s1661 + $0x2d0] sm:$0xff]
        %v1768 = vld [vmem:[%s1661 + $0x2d8] sm:$0xff]
        %v1769 = vld [vmem:[%s1661 + $0x2e0] sm:$0xff]
        %v1770 = vld [vmem:[%s1661 + $0x2e8] sm:$0xff]
        %v1771 = vld [vmem:[%s1661 + $0x2f0] sm:$0xff]
        %v1772 = vld [vmem:[%s1661 + $0x2f8] sm:$0xff]
        %v1773 = vld [vmem:[%s1661 + $0x300] sm:$0xff]
        %v1774 = vld [vmem:[%s1661 + $0x308] sm:$0xff]
        %v1775 = vld [vmem:[%s1661 + $0x310] sm:$0xff]
        %v1776 = vld [vmem:[%s1661 + $0x318] sm:$0xff]
        %v1777 = vld [vmem:[%s1661 + $0x320] sm:$0xff]
        %v1778 = vld [vmem:[%s1661 + $0x328] sm:$0xff]
        %v1779 = vld [vmem:[%s1661 + $0x330] sm:$0xff]
        %v1780 = vld [vmem:[%s1661 + $0x338] sm:$0xff]
        %v1781 = vld [vmem:[%s1661 + $0x340] sm:$0xff]
        %v1782 = vld [vmem:[%s1661 + $0x348] sm:$0xff]
        %v1783 = vld [vmem:[%s1661 + $0x350] sm:$0xff]
        %v1784 = vld [vmem:[%s1661 + $0x358] sm:$0xff]
        %v1785 = vld [vmem:[%s1661 + $0x360] sm:$0xff]
        %v1786 = vld [vmem:[%s1661 + $0x368] sm:$0xff]
        %v1787 = vld [vmem:[%s1661 + $0x370] sm:$0xff]
        %v1788 = vld [vmem:[%s1661 + $0x378] sm:$0xff]
        %v1789 = vld [vmem:[%s1661 + $0x380] sm:$0xff]
        %v1790 = vld [vmem:[%s1661 + $0x388] sm:$0xff]
        %v1791 = vld [vmem:[%s1661 + $0x390] sm:$0xff]
        %v1792 = vld [vmem:[%s1661 + $0x398] sm:$0xff]
        %v1793 = vld [vmem:[%s1661 + $0x3a0] sm:$0xff]
        %v1794 = vld [vmem:[%s1661 + $0x3a8] sm:$0xff]
        %v1795 = vld [vmem:[%s1661 + $0x3b0] sm:$0xff]
        %v1796 = vld [vmem:[%s1661 + $0x3b8] sm:$0xff]
        %v1797 = vld [vmem:[%s1661 + $0x3c0] sm:$0xff]
        %v1798 = vld [vmem:[%s1661 + $0x3c8] sm:$0xff]
        %v1799 = vld [vmem:[%s1661 + $0x3d0] sm:$0xff]
        %v1800 = vld [vmem:[%s1661 + $0x3d8] sm:$0xff]
        %v1801 = vld [vmem:[%s1661 + $0x3e0] sm:$0xff]
        %v1802 = vld [vmem:[%s1661 + $0x3e8] sm:$0xff]
        %v1803 = vld [vmem:[%s1661 + $0x3f0] sm:$0xff]
        %v1804 = vld [vmem:[%s1661 + $0x3f8] sm:$0xff]
        %v1805 = vld [vmem:[%s1661 + $0x400] sm:$0xff]
        %v1806 = vld [vmem:[%s1661 + $0x408] sm:$0xff]
        %v1807 = vld [vmem:[%s1661 + $0x410] sm:$0xff]
        %v1808 = vld [vmem:[%s1661 + $0x418] sm:$0xff]
        %v1809 = vld [vmem:[%s1661 + $0x420] sm:$0xff]
        %v1810 = vld [vmem:[%s1661 + $0x428] sm:$0xff]
        %v1811 = vld [vmem:[%s1661 + $0x430] sm:$0xff]
        %v1812 = vld [vmem:[%s1661 + $0x438] sm:$0xff]
        %v1813 = vld [vmem:[%s1661 + $0x440] sm:$0xff]
        %v1814 = vld [vmem:[%s1661 + $0x448] sm:$0xff]
        %v1815 = vld [vmem:[%s1661 + $0x450] sm:$0xff]
        %v1816 = vld [vmem:[%s1661 + $0x458] sm:$0xff]
        %v1817 = vld [vmem:[%s1661 + $0x460] sm:$0xff]
        %v1818 = vld [vmem:[%s1661 + $0x468] sm:$0xff]
        %v1819 = vld [vmem:[%s1661 + $0x470] sm:$0xff]
        %v1820 = vld [vmem:[%s1661 + $0x478] sm:$0xff]
        %v1821 = vld [vmem:[%s1661 + $0x480] sm:$0xff]
        %v1822 = vld [vmem:[%s1661 + $0x488] sm:$0xff]
        %v1823 = vld [vmem:[%s1661 + $0x490] sm:$0xff]
        %v1824 = vld [vmem:[%s1661 + $0x498] sm:$0xff]
        %v1825 = vld [vmem:[%s1661 + $0x4a0] sm:$0xff]
        %v1826 = vld [vmem:[%s1661 + $0x4a8] sm:$0xff]
        %v1827 = vld [vmem:[%s1661 + $0x4b0] sm:$0xff]
        %v1828 = vld [vmem:[%s1661 + $0x4b8] sm:$0xff]
        %v1829 = vld [vmem:[%s1661 + $0x4c0] sm:$0xff]
        %v1830 = vld [vmem:[%s1661 + $0x4c8] sm:$0xff]
        %v1831 = vld [vmem:[%s1661 + $0x4d0] sm:$0xff]
        %v1832 = vld [vmem:[%s1661 + $0x4d8] sm:$0xff]
        %v1833 = vld [vmem:[%s1661 + $0x4e0] sm:$0xff]
        %v1834 = vld [vmem:[%s1661 + $0x4e8] sm:$0xff]
        %v1835 = vld [vmem:[%s1661 + $0x4f0] sm:$0xff]
        %v1836 = vld [vmem:[%s1661 + $0x4f8] sm:$0xff]
        %v1837 = vld [vmem:[%s1661 + $0x500] sm:$0xff]
        %v1838 = vld [vmem:[%s1661 + $0x508] sm:$0xff]
        %v1839 = vld [vmem:[%s1661 + $0x510] sm:$0xff]
        %v1840 = vld [vmem:[%s1661 + $0x518] sm:$0xff]
        %v1841 = vld [vmem:[%s1661 + $0x520] sm:$0xff]
        %v1842 = vld [vmem:[%s1661 + $0x528] sm:$0xff]
        %v1843 = vld [vmem:[%s1661 + $0x530] sm:$0xff]
        %v1844 = vld [vmem:[%s1661 + $0x538] sm:$0xff]
        %v1845 = vld [vmem:[%s1661 + $0x540] sm:$0xff]
        %v1846 = vld [vmem:[%s1661 + $0x548] sm:$0xff]
        %v1847 = vld [vmem:[%s1661 + $0x550] sm:$0xff]
        %v1848 = vld [vmem:[%s1661 + $0x558] sm:$0xff]
        %v1849 = vld [vmem:[%s1661 + $0x560] sm:$0xff]
        %v1850 = vld [vmem:[%s1661 + $0x568] sm:$0xff]
        %v1851 = vld [vmem:[%s1661 + $0x570] sm:$0xff]
        %v1852 = vld [vmem:[%s1661 + $0x578] sm:$0xff]
        %v1853 = vld [vmem:[%s1661 + $0x580] sm:$0xff]
        %v1854 = vld [vmem:[%s1661 + $0x588] sm:$0xff]
        %v1855 = vld [vmem:[%s1661 + $0x590] sm:$0xff]
        %v1856 = vld [vmem:[%s1661 + $0x598] sm:$0xff]
        %v1857 = vld [vmem:[%s1661 + $0x5a0] sm:$0xff]
        %v1858 = vld [vmem:[%s1661 + $0x5a8] sm:$0xff]
        %v1859 = vld [vmem:[%s1661 + $0x5b0] sm:$0xff]
        %v1860 = vld [vmem:[%s1661 + $0x5b8] sm:$0xff]
        %v1861 = vld [vmem:[%s1661 + $0x5c0] sm:$0xff]
        %v1862 = vld [vmem:[%s1661 + $0x5c8] sm:$0xff]
        %v1863 = vld [vmem:[%s1661 + $0x5d0] sm:$0xff]
        %v1864 = vld [vmem:[%s1661 + $0x5d8] sm:$0xff]
        %v1865 = vld [vmem:[%s1661 + $0x5e0] sm:$0xff]
        %v1866 = vld [vmem:[%s1661 + $0x5e8] sm:$0xff]
        %v1867 = vld [vmem:[%s1661 + $0x5f0] sm:$0xff]
        %v1868 = vld [vmem:[%s1661 + $0x5f8] sm:$0xff]
        %v1869 = vld [vmem:[%s1661 + $0x600] sm:$0xff]
        %v1870 = vld [vmem:[%s1661 + $0x608] sm:$0xff]
        %v1871 = vld [vmem:[%s1661 + $0x610] sm:$0xff]
        %v1872 = vld [vmem:[%s1661 + $0x618] sm:$0xff]
        %v1873 = vld [vmem:[%s1661 + $0x620] sm:$0xff]
        %v1874 = vld [vmem:[%s1661 + $0x628] sm:$0xff]
        %v1875 = vld [vmem:[%s1661 + $0x630] sm:$0xff]
        %v1876 = vld [vmem:[%s1661 + $0x638] sm:$0xff]
        %v1877 = vld [vmem:[%s1661 + $0x640] sm:$0xff]
        %v1878 = vld [vmem:[%s1661 + $0x648] sm:$0xff]
        %v1879 = vld [vmem:[%s1661 + $0x650] sm:$0xff]
        %v1880 = vld [vmem:[%s1661 + $0x658] sm:$0xff]
        %v1881 = vld [vmem:[%s1661 + $0x660] sm:$0xff]
        %v1882 = vld [vmem:[%s1661 + $0x668] sm:$0xff]
        %v1883 = vld [vmem:[%s1661 + $0x670] sm:$0xff]
        %v1884 = vld [vmem:[%s1661 + $0x678] sm:$0xff]
        %v1885 = vld [vmem:[%s1661 + $0x680] sm:$0xff]
        %v1886 = vld [vmem:[%s1661 + $0x688] sm:$0xff]
        %v1887 = vld [vmem:[%s1661 + $0x690] sm:$0xff]
        %v1888 = vld [vmem:[%s1661 + $0x698] sm:$0xff]
        %v1889 = vld [vmem:[%s1661 + $0x6a0] sm:$0xff]
        %v1890 = vld [vmem:[%s1661 + $0x6a8] sm:$0xff]
        %v1891 = vld [vmem:[%s1661 + $0x6b0] sm:$0xff]
        %v1892 = vld [vmem:[%s1661 + $0x6b8] sm:$0xff]
        %v1893 = vld [vmem:[%s1661 + $0x6c0] sm:$0xff]
        %v1894 = vld [vmem:[%s1661 + $0x6c8] sm:$0xff]
        %v1895 = vld [vmem:[%s1661 + $0x6d0] sm:$0xff]
        %v1896 = vld [vmem:[%s1661 + $0x6d8] sm:$0xff]
        %v1897 = vld [vmem:[%s1661 + $0x6e0] sm:$0xff]
        %v1898 = vld [vmem:[%s1661 + $0x6e8] sm:$0xff]
        %v1899 = vld [vmem:[%s1661 + $0x6f0] sm:$0xff]
        %v1900 = vld [vmem:[%s1661 + $0x6f8] sm:$0xff]
        %v1901 = vld [vmem:[%s1661 + $0x700] sm:$0xff]
        %v1902 = vld [vmem:[%s1661 + $0x708] sm:$0xff]
        %v1903 = vld [vmem:[%s1661 + $0x710] sm:$0xff]
        %v1904 = vld [vmem:[%s1661 + $0x718] sm:$0xff]
        %v1905 = vld [vmem:[%s1661 + $0x720] sm:$0xff]
        %v1906 = vld [vmem:[%s1661 + $0x728] sm:$0xff]
        %v1907 = vld [vmem:[%s1661 + $0x730] sm:$0xff]
        %v1908 = vld [vmem:[%s1661 + $0x738] sm:$0xff]
        %v1909 = vld [vmem:[%s1661 + $0x740] sm:$0xff]
        %v1910 = vld [vmem:[%s1661 + $0x748] sm:$0xff]
        %v1911 = vld [vmem:[%s1661 + $0x750] sm:$0xff]
        %v1912 = vld [vmem:[%s1661 + $0x758] sm:$0xff]
        %v1913 = vld [vmem:[%s1661 + $0x760] sm:$0xff]
        %v1914 = vld [vmem:[%s1661 + $0x768] sm:$0xff]
        %v1915 = vld [vmem:[%s1661 + $0x770] sm:$0xff]
        %v1916 = vld [vmem:[%s1661 + $0x778] sm:$0xff]
        %v1917 = vld [vmem:[%s1661 + $0x780] sm:$0xff]
        %v1918 = vld [vmem:[%s1661 + $0x788] sm:$0xff]
        %v1919 = vld [vmem:[%s1661 + $0x790] sm:$0xff]
        %v1920 = vld [vmem:[%s1661 + $0x798] sm:$0xff]
        %v1921 = vld [vmem:[%s1661 + $0x7a0] sm:$0xff]
        %v1922 = vld [vmem:[%s1661 + $0x7a8] sm:$0xff]
        %v1923 = vld [vmem:[%s1661 + $0x7b0] sm:$0xff]
        %v1924 = vld [vmem:[%s1661 + $0x7b8] sm:$0xff]
        %v1925 = vld [vmem:[%s1661 + $0x7c0] sm:$0xff]
        %v1926 = vld [vmem:[%s1661 + $0x7c8] sm:$0xff]
        %v1927 = vld [vmem:[%s1661 + $0x7d0] sm:$0xff]
        %v1928 = vld [vmem:[%s1661 + $0x7d8] sm:$0xff]
        %v1929 = vld [vmem:[%s1661 + $0x7e0] sm:$0xff]
        %v1930 = vld [vmem:[%s1661 + $0x7e8] sm:$0xff]
        %v1931 = vld [vmem:[%s1661 + $0x7f0] sm:$0xff]
        %v1932 = vld [vmem:[%s1661 + $0x7f8] sm:$0xff]
        %v1933 = vld [vmem:[%s1661 + $0x800] sm:$0xff]
        %v1934 = vld [vmem:[%s1661 + $0x808] sm:$0xff]
        %v1935 = vld [vmem:[%s1661 + $0x810] sm:$0xff]
        %v1936 = vld [vmem:[%s1661 + $0x818] sm:$0xff]
        %v1937 = vld [vmem:[%s1661 + $0x820] sm:$0xff]
        %v1938 = vld [vmem:[%s1661 + $0x828] sm:$0xff]
        %v1939 = vld [vmem:[%s1661 + $0x830] sm:$0xff]
        %v1940 = vld [vmem:[%s1661 + $0x838] sm:$0xff]
        %v1941 = vld [vmem:[%s1661 + $0x840] sm:$0xff]
        %v1942 = vld [vmem:[%s1661 + $0x848] sm:$0xff]
        %v1943 = vld [vmem:[%s1661 + $0x850] sm:$0xff]
        %v1944 = vld [vmem:[%s1661 + $0x858] sm:$0xff]
        %v1945 = vld [vmem:[%s1661 + $0x860] sm:$0xff]
        %v1946 = vld [vmem:[%s1661 + $0x868] sm:$0xff]
        %v1947 = vld [vmem:[%s1661 + $0x870] sm:$0xff]
        %v1948 = vld [vmem:[%s1661 + $0x878] sm:$0xff]
        %v1949 = vld [vmem:[%s1661 + $0x880] sm:$0xff]
        %v1950 = vld [vmem:[%s1661 + $0x888] sm:$0xff]
        %v1951 = vld [vmem:[%s1661 + $0x890] sm:$0xff]
        %v1952 = vld [vmem:[%s1661 + $0x898] sm:$0xff]
        %v1953 = vld [vmem:[%s1661 + $0x8a0] sm:$0xff]
        %v1954 = vld [vmem:[%s1661 + $0x8a8] sm:$0xff]
        %v1955 = vld [vmem:[%s1661 + $0x8b0] sm:$0xff]
        %v1956 = vld [vmem:[%s1661 + $0x8b8] sm:$0xff]
        %v1957 = vld [vmem:[%s1661 + $0x8c0] sm:$0xff]
        %v1958 = vld [vmem:[%s1661 + $0x8c8] sm:$0xff]
        %v1959 = vld [vmem:[%s1661 + $0x8d0] sm:$0xff]
        %v1960 = vld [vmem:[%s1661 + $0x8d8] sm:$0xff]
        %v1961 = vld [vmem:[%s1661 + $0x8e0] sm:$0xff]
        %v1962 = vld [vmem:[%s1661 + $0x8e8] sm:$0xff]
        %v1963 = vld [vmem:[%s1661 + $0x8f0] sm:$0xff]
        %v1964 = vld [vmem:[%s1661 + $0x8f8] sm:$0xff]
        %v1965 = vld [vmem:[%s1661 + $0x900] sm:$0xff]
        %v1966 = vld [vmem:[%s1661 + $0x908] sm:$0xff]
        %v1967 = vld [vmem:[%s1661 + $0x910] sm:$0xff]
        %v1968 = vld [vmem:[%s1661 + $0x918] sm:$0xff]
        %v1969 = vld [vmem:[%s1661 + $0x920] sm:$0xff]
        %v1970 = vld [vmem:[%s1661 + $0x928] sm:$0xff]
        %v1971 = vld [vmem:[%s1661 + $0x930] sm:$0xff]
        %v1972 = vld [vmem:[%s1661 + $0x938] sm:$0xff]
        %v1973 = vld [vmem:[%s1661 + $0x940] sm:$0xff]
        %v1974 = vld [vmem:[%s1661 + $0x948] sm:$0xff]
        %v1975 = vld [vmem:[%s1661 + $0x950] sm:$0xff]
        %v1976 = vld [vmem:[%s1661 + $0x958] sm:$0xff]
        %v1977 = vld [vmem:[%s1661 + $0x960] sm:$0xff]
        %v1978 = vld [vmem:[%s1661 + $0x968] sm:$0xff]
        %v1979 = vld [vmem:[%s1661 + $0x970] sm:$0xff]
        %v1980 = vld [vmem:[%s1661 + $0x978] sm:$0xff]
        %v1981 = vld [vmem:[%s1661 + $0x980] sm:$0xff]
        %v1982 = vld [vmem:[%s1661 + $0x988] sm:$0xff]
        %v1983 = vld [vmem:[%s1661 + $0x990] sm:$0xff]
        %v1984 = vld [vmem:[%s1661 + $0x998] sm:$0xff]
        %v1985 = vld [vmem:[%s1661 + $0x9a0] sm:$0xff]
        %v1986 = vld [vmem:[%s1661 + $0x9a8] sm:$0xff]
        %v1987 = vld [vmem:[%s1661 + $0x9b0] sm:$0xff]
        %v1988 = vld [vmem:[%s1661 + $0x9b8] sm:$0xff]
        %v1989 = vld [vmem:[%s1661 + $0x9c0] sm:$0xff]
        %v1990 = vld [vmem:[%s1661 + $0x9c8] sm:$0xff]
        %v1991 = vld [vmem:[%s1661 + $0x9d0] sm:$0xff]
        %v1992 = vld [vmem:[%s1661 + $0x9d8] sm:$0xff]
        %v1993 = vld [vmem:[%s1661 + $0x9e0] sm:$0xff]
        %v1994 = vld [vmem:[%s1661 + $0x9e8] sm:$0xff]
        %v1995 = vld [vmem:[%s1661 + $0x9f0] sm:$0xff]
        %v1996 = vld [vmem:[%s1661 + $0x9f8] sm:$0xff]
        %v1997 = vld [vmem:[%s1661 + $0xa00] sm:$0xff]
        %v1998 = vld [vmem:[%s1661 + $0xa08] sm:$0xff]
        %v1999 = vld [vmem:[%s1661 + $0xa10] sm:$0xff]
        %v2000 = vld [vmem:[%s1661 + $0xa18] sm:$0xff]
        %v2001 = vld [vmem:[%s1661 + $0xa20] sm:$0xff]
        %v2002 = vld [vmem:[%s1661 + $0xa28] sm:$0xff]
        %v2003 = vld [vmem:[%s1661 + $0xa30] sm:$0xff]
        %v2004 = vld [vmem:[%s1661 + $0xa38] sm:$0xff]
        %v2005 = vld [vmem:[%s1661 + $0xa40] sm:$0xff]
        %v2006 = vld [vmem:[%s1661 + $0xa48] sm:$0xff]
        %v2007 = vld [vmem:[%s1661 + $0xa50] sm:$0xff]
        %v2008 = vld [vmem:[%s1661 + $0xa58] sm:$0xff]
        %v2009 = vld [vmem:[%s1661 + $0xa60] sm:$0xff]
        %v2010 = vld [vmem:[%s1661 + $0xa68] sm:$0xff]
        %v2011 = vld [vmem:[%s1661 + $0xa70] sm:$0xff]
        %v2012 = vld [vmem:[%s1661 + $0xa78] sm:$0xff]
        %v2013 = vld [vmem:[%s1661 + $0xa80] sm:$0xff]
        %v2014 = vld [vmem:[%s1661 + $0xa88] sm:$0xff]
        %v2015 = vld [vmem:[%s1661 + $0xa90] sm:$0xff]
        %v2016 = vld [vmem:[%s1661 + $0xa98] sm:$0xff]
        %v2017 = vld [vmem:[%s1661 + $0xaa0] sm:$0xff]
        %v2018 = vld [vmem:[%s1661 + $0xaa8] sm:$0xff]
        %v2019 = vld [vmem:[%s1661 + $0xab0] sm:$0xff]
        %v2020 = vld [vmem:[%s1661 + $0xab8] sm:$0xff]
        %v2021 = vld [vmem:[%s1661 + $0xac0] sm:$0xff]
        %v2022 = vld [vmem:[%s1661 + $0xac8] sm:$0xff]
        %v2023 = vld [vmem:[%s1661 + $0xad0] sm:$0xff]
        %v2024 = vld [vmem:[%s1661 + $0xad8] sm:$0xff]
        %v2025 = vld [vmem:[%s1661 + $0xae0] sm:$0xff]
        %v2026 = vld [vmem:[%s1661 + $0xae8] sm:$0xff]
        %v2027 = vld [vmem:[%s1661 + $0xaf0] sm:$0xff]
        %v2028 = vld [vmem:[%s1661 + $0xaf8] sm:$0xff]
        %v2029 = vld [vmem:[%s1661 + $0xb00] sm:$0xff]
        %v2030 = vld [vmem:[%s1661 + $0xb08] sm:$0xff]
        %v2031 = vld [vmem:[%s1661 + $0xb10] sm:$0xff]
        %v2032 = vld [vmem:[%s1661 + $0xb18] sm:$0xff]
        %v2033 = vld [vmem:[%s1661 + $0xb20] sm:$0xff]
        %v2034 = vld [vmem:[%s1661 + $0xb28] sm:$0xff]
        %v2035 = vld [vmem:[%s1661 + $0xb30] sm:$0xff]
        %v2036 = vld [vmem:[%s1661 + $0xb38] sm:$0xff]
        %v2037 = vld [vmem:[%s1661 + $0xb40] sm:$0xff]
        %v2038 = vld [vmem:[%s1661 + $0xb48] sm:$0xff]
        %v2039 = vld [vmem:[%s1661 + $0xb50] sm:$0xff]
        %v2040 = vld [vmem:[%s1661 + $0xb58] sm:$0xff]
        %v2041 = vld [vmem:[%s1661 + $0xb60] sm:$0xff]
        %v2042 = vld [vmem:[%s1661 + $0xb68] sm:$0xff]
        %v2043 = vld [vmem:[%s1661 + $0xb70] sm:$0xff]
        %v2044 = vld [vmem:[%s1661 + $0xb78] sm:$0xff]
        %v2045 = vld [vmem:[%s1661 + $0xb80] sm:$0xff]
        %v2046 = vld [vmem:[%s1661 + $0xb88] sm:$0xff]
        %v2047 = vld [vmem:[%s1661 + $0xb90] sm:$0xff]
        %v2048 = vld [vmem:[%s1661 + $0xb98] sm:$0xff]
        %v2049 = vld [vmem:[%s1661 + $0xba0] sm:$0xff]
        %v2050 = vld [vmem:[%s1661 + $0xba8] sm:$0xff]
        %v2051 = vld [vmem:[%s1661 + $0xbb0] sm:$0xff]
        %v2052 = vld [vmem:[%s1661 + $0xbb8] sm:$0xff]
        %v2053 = vld [vmem:[%s1661 + $0xbc0] sm:$0xff]
        %v2054 = vld [vmem:[%s1661 + $0xbc8] sm:$0xff]
        %v2055 = vld [vmem:[%s1661 + $0xbd0] sm:$0xff]
        %v2056 = vld [vmem:[%s1661 + $0xbd8] sm:$0xff]
        %v2057 = vld [vmem:[%s1661 + $0xbe0] sm:$0xff]
        %v2058 = vld [vmem:[%s1661 + $0xbe8] sm:$0xff]
        %v2059 = vld [vmem:[%s1661 + $0xbf0] sm:$0xff]
        %v2060 = vld [vmem:[%s1661 + $0xbf8] sm:$0xff]
        %v2061 = vmul.f32 %v1682, 0.24945803
        %v2062 = vmul.f32 %v1683, 0.24945803
        %v2063 = vmul.f32 %v1684, 0.24945803
        %v2064 = vmul.f32 %v1685, 0.24945803
        %v2065 = vmul.f32 %v1686, 0.24945803
        %v2066 = vmul.f32 %v1687, 0.24945803
        %v2067 = vmul.f32 %v1688, 0.24945803
        %v2068 = vmul.f32 %v1689, 0.24945803
        %v2069 = vmul.f32 %v1690, 0.24945803
        %v2070 = vmul.f32 %v1691, 0.24945803
        %v2071 = vmul.f32 %v1692, 0.24945803
        %v2072 = vmul.f32 %v1693, 0.24945803
        %v2073 = vmul.f32 %v1694, 0.24945803
        %v2074 = vmul.f32 %v1695, 0.24945803
        %v2075 = vmul.f32 %v1706, 0.24945803
        %v2076 = vmul.f32 %v1707, 0.24945803
        %v2077 = vmul.f32 %v1708, 0.24945803
        %v2078 = vmul.f32 %v1709, 0.24945803
        %v2079 = vmul.f32 %v1710, 0.24945803
        %v2080 = vmul.f32 %v1711, 0.24945803
        %v2081 = vmul.f32 %v1712, 0.24945803
        %v2082 = vmul.f32 %v1713, 0.24945803
        %v2083 = vmul.f32 %v1714, 0.24945803
        %v2084 = vmul.f32 %v1715, 0.24945803
        %v2085 = vmul.f32 %v1716, 0.24945803
        %v2086 = vmul.f32 %v1717, 0.24945803
        %v2087 = vmul.f32 %v1718, 0.24945803
        %v2088 = vmul.f32 %v1719, 0.24945803
        %v2089 = vmul.f32 %v1730, 0.24945803
        %v2090 = vmul.f32 %v1731, 0.24945803
        %v2091 = vmul.f32 %v1732, 0.24945803
        %v2092 = vmul.f32 %v1733, 0.24945803
        %v2093 = vmul.f32 %v1734, 0.24945803
        %v2094 = vmul.f32 %v1735, 0.24945803
        %v2095 = vmul.f32 %v1736, 0.24945803
        %v2096 = vmul.f32 %v1737, 0.24945803
        %v2097 = vmul.f32 %v1738, 0.24945803
        %v2098 = vmul.f32 %v1739, 0.24945803
        %v2099 = vmul.f32 %v1740, 0.24945803
        %v2100 = vmul.f32 %v1741, 0.24945803
        %v2101 = vmul.f32 %v1742, 0.24945803
        %v2102 = vmul.f32 %v1743, 0.24945803
        %v2103 = vmul.f32 %v1754, 0.24945803
        %v2104 = vmul.f32 %v1755, 0.24945803
        %v2105 = vmul.f32 %v1756, 0.24945803
        %v2106 = vmul.f32 %v1757, 0.24945803
        %v2107 = vmul.f32 %v1758, 0.24945803
        %v2108 = vmul.f32 %v1759, 0.24945803
        %v2109 = vmul.f32 %v1760, 0.24945803
        %v2110 = vmul.f32 %v1761, 0.24945803
        %v2111 = vmul.f32 %v1762, 0.24945803
        %v2112 = vmul.f32 %v1763, 0.24945803
        %v2113 = vmul.f32 %v1764, 0.24945803
        %v2114 = vmul.f32 %v1765, 0.24945803
        %v2115 = vmul.f32 %v1766, 0.24945803
        %v2116 = vmul.f32 %v1767, 0.24945803
        %v2117 = vmul.f32 %v1778, 0.24945803
        %v2118 = vmul.f32 %v1779, 0.24945803
        %v2119 = vmul.f32 %v1780, 0.24945803
        %v2120 = vmul.f32 %v1781, 0.24945803
        %v2121 = vmul.f32 %v1782, 0.24945803
        %v2122 = vmul.f32 %v1783, 0.24945803
        %v2123 = vmul.f32 %v1784, 0.24945803
        %v2124 = vmul.f32 %v1785, 0.24945803
        %v2125 = vmul.f32 %v1786, 0.24945803
        %v2126 = vmul.f32 %v1787, 0.24945803
        %v2127 = vmul.f32 %v1788, 0.24945803
        %v2128 = vmul.f32 %v1789, 0.24945803
        %v2129 = vmul.f32 %v1790, 0.24945803
        %v2130 = vmul.f32 %v1791, 0.24945803
        %v2131 = vmul.f32 %v1802, 0.24945803
        %v2132 = vmul.f32 %v1803, 0.24945803
        %v2133 = vmul.f32 %v1804, 0.24945803
        %v2134 = vmul.f32 %v1805, 0.24945803
        %v2135 = vmul.f32 %v1806, 0.24945803
        %v2136 = vmul.f32 %v1807, 0.24945803
        %v2137 = vmul.f32 %v1808, 0.24945803
        %v2138 = vmul.f32 %v1809, 0.24945803
        %v2139 = vmul.f32 %v1810, 0.24945803
        %v2140 = vmul.f32 %v1811, 0.24945803
        %v2141 = vmul.f32 %v1812, 0.24945803
        %v2142 = vmul.f32 %v1813, 0.24945803
        %v2143 = vmul.f32 %v1814, 0.24945803
        %v2144 = vmul.f32 %v1815, 0.24945803
        %v2145 = vmul.f32 %v1826, 0.24945803
        %v2146 = vmul.f32 %v1827, 0.24945803
        %v2147 = vmul.f32 %v1828, 0.24945803
        %v2148 = vmul.f32 %v1829, 0.24945803
        %v2149 = vmul.f32 %v1830, 0.24945803
        %v2150 = vmul.f32 %v1831, 0.24945803
        %v2151 = vmul.f32 %v1832, 0.24945803
        %v2152 = vmul.f32 %v1833, 0.24945803
        %v2153 = vmul.f32 %v1834, 0.24945803
        %v2154 = vmul.f32 %v1835, 0.24945803
        %v2155 = vmul.f32 %v1836, 0.24945803
        %v2156 = vmul.f32 %v1837, 0.24945803
        %v2157 = vmul.f32 %v1838, 0.24945803
        %v2158 = vmul.f32 %v1839, 0.24945803
        %v2159 = vmul.f32 %v1850, 0.24945803
        %v2160 = vmul.f32 %v1851, 0.24945803
        %v2161 = vmul.f32 %v1852, 0.24945803
        %v2162 = vmul.f32 %v1853, 0.24945803
        %v2163 = vmul.f32 %v1854, 0.24945803
        %v2164 = vmul.f32 %v1855, 0.24945803
        %v2165 = vmul.f32 %v1856, 0.24945803
        %v2166 = vmul.f32 %v1857, 0.24945803
        %v2167 = vmul.f32 %v1858, 0.24945803
        %v2168 = vmul.f32 %v1859, 0.24945803
        %v2169 = vmul.f32 %v1860, 0.24945803
        %v2170 = vmul.f32 %v1861, 0.24945803
        %v2171 = vmul.f32 %v1862, 0.24945803
        %v2172 = vmul.f32 %v1863, 0.24945803
        %v2173 = vmul.f32 %v1874, 0.24945803
        %v2174 = vmul.f32 %v1875, 0.24945803
        %v2175 = vmul.f32 %v1876, 0.24945803
        %v2176 = vmul.f32 %v1877, 0.24945803
        %v2177 = vmul.f32 %v1878, 0.24945803
        %v2178 = vmul.f32 %v1879, 0.24945803
        %v2179 = vmul.f32 %v1880, 0.24945803
        %v2180 = vmul.f32 %v1881, 0.24945803
        %v2181 = vmul.f32 %v1882, 0.24945803
        %v2182 = vmul.f32 %v1883, 0.24945803
        %v2183 = vmul.f32 %v1884, 0.24945803
        %v2184 = vmul.f32 %v1885, 0.24945803
        %v2185 = vmul.f32 %v1886, 0.24945803
        %v2186 = vmul.f32 %v1887, 0.24945803
        %v2187 = vmul.f32 %v1898, 0.24945803
        %v2188 = vmul.f32 %v1899, 0.24945803
        %v2189 = vmul.f32 %v1900, 0.24945803
        %v2190 = vmul.f32 %v1901, 0.24945803
        %v2191 = vmul.f32 %v1902, 0.24945803
        %v2192 = vmul.f32 %v1903, 0.24945803
        %v2193 = vmul.f32 %v1904, 0.24945803
        %v2194 = vmul.f32 %v1905, 0.24945803
        %v2195 = vmul.f32 %v1906, 0.24945803
        %v2196 = vmul.f32 %v1907, 0.24945803
        %v2197 = vmul.f32 %v1908, 0.24945803
        %v2198 = vmul.f32 %v1909, 0.24945803
        %v2199 = vmul.f32 %v1910, 0.24945803
        %v2200 = vmul.f32 %v1911, 0.24945803
        %v2201 = vmul.f32 %v1922, 0.24945803
        %v2202 = vmul.f32 %v1923, 0.24945803
        %v2203 = vmul.f32 %v1924, 0.24945803
        %v2204 = vmul.f32 %v1925, 0.24945803
        %v2205 = vmul.f32 %v1926, 0.24945803
        %v2206 = vmul.f32 %v1927, 0.24945803
        %v2207 = vmul.f32 %v1928, 0.24945803
        %v2208 = vmul.f32 %v1929, 0.24945803
        %v2209 = vmul.f32 %v1930, 0.24945803
        %v2210 = vmul.f32 %v1931, 0.24945803
        %v2211 = vmul.f32 %v1932, 0.24945803
        %v2212 = vmul.f32 %v1933, 0.24945803
        %v2213 = vmul.f32 %v1934, 0.24945803
        %v2214 = vmul.f32 %v1935, 0.24945803
        %v2215 = vmul.f32 %v1946, 0.24945803
        %v2216 = vmul.f32 %v1947, 0.24945803
        %v2217 = vmul.f32 %v1948, 0.24945803
        %v2218 = vmul.f32 %v1949, 0.24945803
        %v2219 = vmul.f32 %v1950, 0.24945803
        %v2220 = vmul.f32 %v1951, 0.24945803
        %v2221 = vmul.f32 %v1952, 0.24945803
        %v2222 = vmul.f32 %v1953, 0.24945803
        %v2223 = vmul.f32 %v1954, 0.24945803
        %v2224 = vmul.f32 %v1955, 0.24945803
        %v2225 = vmul.f32 %v1956, 0.24945803
        %v2226 = vmul.f32 %v1957, 0.24945803
        %v2227 = vmul.f32 %v1958, 0.24945803
        %v2228 = vmul.f32 %v1959, 0.24945803
        %v2229 = vmul.f32 %v1970, 0.24945803
        %v2230 = vmul.f32 %v1971, 0.24945803
        %v2231 = vmul.f32 %v1972, 0.24945803
        %v2232 = vmul.f32 %v1973, 0.24945803
        %v2233 = vmul.f32 %v1974, 0.24945803
        %v2234 = vmul.f32 %v1975, 0.24945803
        %v2235 = vmul.f32 %v1976, 0.24945803
        %v2236 = vmul.f32 %v1977, 0.24945803
        %v2237 = vmul.f32 %v1978, 0.24945803
        %v2238 = vmul.f32 %v1979, 0.24945803
        %v2239 = vmul.f32 %v1980, 0.24945803
        %v2240 = vmul.f32 %v1981, 0.24945803
        %v2241 = vmul.f32 %v1982, 0.24945803
        %v2242 = vmul.f32 %v1983, 0.24945803
        %v2243 = vmul.f32 %v1994, 0.24945803
        %v2244 = vmul.f32 %v1995, 0.24945803
        %v2245 = vmul.f32 %v1996, 0.24945803
        %v2246 = vmul.f32 %v1997, 0.24945803
        %v2247 = vmul.f32 %v1998, 0.24945803
        %v2248 = vmul.f32 %v1999, 0.24945803
        %v2249 = vmul.f32 %v2000, 0.24945803
        %v2250 = vmul.f32 %v2001, 0.24945803
        %v2251 = vmul.f32 %v2002, 0.24945803
        %v2252 = vmul.f32 %v2003, 0.24945803
        %v2253 = vmul.f32 %v2004, 0.24945803
        %v2254 = vmul.f32 %v2005, 0.24945803
        %v2255 = vmul.f32 %v2006, 0.24945803
        %v2256 = vmul.f32 %v2007, 0.24945803
        %v2257 = vmul.f32 %v2018, 0.24945803
        %v2258 = vmul.f32 %v2019, 0.24945803
        %v2259 = vmul.f32 %v2020, 0.24945803
        %v2260 = vmul.f32 %v2021, 0.24945803
        %v2261 = vmul.f32 %v2022, 0.24945803
        %v2262 = vmul.f32 %v2023, 0.24945803
        %v2263 = vmul.f32 %v2024, 0.24945803
        %v2264 = vmul.f32 %v2025, 0.24945803
        %v2265 = vmul.f32 %v2026, 0.24945803
        %v2266 = vmul.f32 %v2027, 0.24945803
        %v2267 = vmul.f32 %v2028, 0.24945803
        %v2268 = vmul.f32 %v2029, 0.24945803
        %v2269 = vmul.f32 %v2030, 0.24945803
        %v2270 = vmul.f32 %v2031, 0.24945803
        %v2271 = vmul.f32 %v2042, 0.24945803
        %v2272 = vmul.f32 %v2043, 0.24945803
        %v2273 = vmul.f32 %v2044, 0.24945803
        %v2274 = vmul.f32 %v2045, 0.24945803
        %v2275 = vmul.f32 %v2046, 0.24945803
        %v2276 = vmul.f32 %v2047, 0.24945803
        %v2277 = vmul.f32 %v2048, 0.24945803
        %v2278 = vmul.f32 %v2049, 0.24945803
        %v2279 = vmul.f32 %v2050, 0.24945803
        %v2280 = vmul.f32 %v2051, 0.24945803
        %v2281 = vmul.f32 %v2052, 0.24945803
        %v2282 = vmul.f32 %v2053, 0.24945803
        %v2283 = vmul.f32 %v2054, 0.24945803
        %v2284 = vmul.f32 %v2055, 0.24945803
        %v2285 = vadd.f32 %v1677, %v1687
        %v2286 = vadd.f32 %v1678, %v1688
        %v2287 = vadd.f32 %v1679, %v1689
        %v2288 = vadd.f32 %v1680, %v1690
        %v2289 = vadd.f32 %v1681, %v1691
        %v2290 = vadd.f32 %v1682, %v1692
        %v2291 = vadd.f32 %v1683, %v1693
        %v2292 = vadd.f32 %v1684, %v1694
        %v2293 = vadd.f32 %v1685, %v1695
        %v2294 = vadd.f32 %v1686, %v1696
        %v2295 = vadd.f32 %v1687, %v1697
        %v2296 = vadd.f32 %v1688, %v1698
        %v2297 = vadd.f32 %v1689, %v1699
        %v2298 = vadd.f32 %v1690, %v1700
        %v2299 = vadd.f32 %v1701, %v1711
        %v2300 = vadd.f32 %v1702, %v1712
        %v2301 = vadd.f32 %v1703, %v1713
        %v2302 = vadd.f32 %v1704, %v1714
        %v2303 = vadd.f32 %v1705, %v1715
        %v2304 = vadd.f32 %v1706, %v1716
        %v2305 = vadd.f32 %v1707, %v1717
        %v2306 = vadd.f32 %v1708, %v1718
        %v2307 = vadd.f32 %v1709, %v1719
        %v2308 = vadd.f32 %v1710, %v1720
        %v2309 = vadd.f32 %v1711, %v1721
        %v2310 = vadd.f32 %v1712, %v1722
        %v2311 = vadd.f32 %v1713, %v1723
        %v2312 = vadd.f32 %v1714, %v1724
        %v2313 = vadd.f32 %v1725, %v1735
        %v2314 = vadd.f32 %v1726, %v1736
        %v2315 = vadd.f32 %v1727, %v1737
        %v2316 = vadd.f32 %v1728, %v1738
        %v2317 = vadd.f32 %v1729, %v1739
        %v2318 = vadd.f32 %v1730, %v1740
        %v2319 = vadd.f32 %v1731, %v1741
        %v2320 = vadd.f32 %v1732, %v1742
        %v2321 = vadd.f32 %v1733, %v1743
        %v2322 = vadd.f32 %v1734, %v1744
        %v2323 = vadd.f32 %v1735, %v1745
        %v2324 = vadd.f32 %v1736, %v1746
        %v2325 = vadd.f32 %v1737, %v1747
        %v2326 = vadd.f32 %v1738, %v1748
        %v2327 = vadd.f32 %v1749, %v1759
        %v2328 = vadd.f32 %v1750, %v1760
        %v2329 = vadd.f32 %v1751, %v1761
        %v2330 = vadd.f32 %v1752, %v1762
        %v2331 = vadd.f32 %v1753, %v1763
        %v2332 = vadd.f32 %v1754, %v1764
        %v2333 = vadd.f32 %v1755, %v1765
        %v2334 = vadd.f32 %v1756, %v1766
        %v2335 = vadd.f32 %v1757, %v1767
        %v2336 = vadd.f32 %v1758, %v1768
        %v2337 = vadd.f32 %v1759, %v1769
        %v2338 = vadd.f32 %v1760, %v1770
        %v2339 = vadd.f32 %v1761, %v1771
        %v2340 = vadd.f32 %v1762, %v1772
        %v2341 = vadd.f32 %v1773, %v1783
        %v2342 = vadd.f32 %v1774, %v1784
        %v2343 = vadd.f32 %v1775, %v1785
        %v2344 = vadd.f32 %v1776, %v1786
        %v2345 = vadd.f32 %v1777, %v1787
        %v2346 = vadd.f32 %v1778, %v1788
        %v2347 = vadd.f32 %v1779, %v1789
        %v2348 = vadd.f32 %v1780, %v1790
        %v2349 = vadd.f32 %v1781, %v1791
        %v2350 = vadd.f32 %v1782, %v1792
        %v2351 = vadd.f32 %v1783, %v1793
        %v2352 = vadd.f32 %v1784, %v1794
        %v2353 = vadd.f32 %v1785, %v1795
        %v2354 = vadd.f32 %v1786, %v1796
        %v2355 = vadd.f32 %v1797, %v1807
        %v2356 = vadd.f32 %v1798, %v1808
        %v2357 = vadd.f32 %v1799, %v1809
        %v2358 = vadd.f32 %v1800, %v1810
        %v2359 = vadd.f32 %v1801, %v1811
        %v2360 = vadd.f32 %v1802, %v1812
        %v2361 = vadd.f32 %v1803, %v1813
        %v2362 = vadd.f32 %v1804, %v1814
        %v2363 = vadd.f32 %v1805, %v1815
        %v2364 = vadd.f32 %v1806, %v1816
        %v2365 = vadd.f32 %v1807, %v1817
        %v2366 = vadd.f32 %v1808, %v1818
        %v2367 = vadd.f32 %v1809, %v1819
        %v2368 = vadd.f32 %v1810, %v1820
        %v2369 = vadd.f32 %v1821, %v1831
        %v2370 = vadd.f32 %v1822, %v1832
        %v2371 = vadd.f32 %v1823, %v1833
        %v2372 = vadd.f32 %v1824, %v1834
        %v2373 = vadd.f32 %v1825, %v1835
        %v2374 = vadd.f32 %v1826, %v1836
        %v2375 = vadd.f32 %v1827, %v1837
        %v2376 = vadd.f32 %v1828, %v1838
        %v2377 = vadd.f32 %v1829, %v1839
        %v2378 = vadd.f32 %v1830, %v1840
        %v2379 = vadd.f32 %v1831, %v1841
        %v2380 = vadd.f32 %v1832, %v1842
        %v2381 = vadd.f32 %v1833, %v1843
        %v2382 = vadd.f32 %v1834, %v1844
        %v2383 = vadd.f32 %v1845, %v1855
        %v2384 = vadd.f32 %v1846, %v1856
        %v2385 = vadd.f32 %v1847, %v1857
        %v2386 = vadd.f32 %v1848, %v1858
        %v2387 = vadd.f32 %v1849, %v1859
        %v2388 = vadd.f32 %v1850, %v1860
        %v2389 = vadd.f32 %v1851, %v1861
        %v2390 = vadd.f32 %v1852, %v1862
        %v2391 = vadd.f32 %v1853, %v1863
        %v2392 = vadd.f32 %v1854, %v1864
        %v2393 = vadd.f32 %v1855, %v1865
        %v2394 = vadd.f32 %v1856, %v1866
        %v2395 = vadd.f32 %v1857, %v1867
        %v2396 = vadd.f32 %v1858, %v1868
        %v2397 = vadd.f32 %v1869, %v1879
        %v2398 = vadd.f32 %v1870, %v1880
        %v2399 = vadd.f32 %v1871, %v1881
        %v2400 = vadd.f32 %v1872, %v1882
        %v2401 = vadd.f32 %v1873, %v1883
        %v2402 = vadd.f32 %v1874, %v1884
        %v2403 = vadd.f32 %v1875, %v1885
        %v2404 = vadd.f32 %v1876, %v1886
        %v2405 = vadd.f32 %v1877, %v1887
        %v2406 = vadd.f32 %v1878, %v1888
        %v2407 = vadd.f32 %v1879, %v1889
        %v2408 = vadd.f32 %v1880, %v1890
        %v2409 = vadd.f32 %v1881, %v1891
        %v2410 = vadd.f32 %v1882, %v1892
        %v2411 = vadd.f32 %v1893, %v1903
        %v2412 = vadd.f32 %v1894, %v1904
        %v2413 = vadd.f32 %v1895, %v1905
        %v2414 = vadd.f32 %v1896, %v1906
        %v2415 = vadd.f32 %v1897, %v1907
        %v2416 = vadd.f32 %v1898, %v1908
        %v2417 = vadd.f32 %v1899, %v1909
        %v2418 = vadd.f32 %v1900, %v1910
        %v2419 = vadd.f32 %v1901, %v1911
        %v2420 = vadd.f32 %v1902, %v1912
        %v2421 = vadd.f32 %v1903, %v1913
        %v2422 = vadd.f32 %v1904, %v1914
        %v2423 = vadd.f32 %v1905, %v1915
        %v2424 = vadd.f32 %v1906, %v1916
        %v2425 = vadd.f32 %v1917, %v1927
        %v2426 = vadd.f32 %v1918, %v1928
        %v2427 = vadd.f32 %v1919, %v1929
        %v2428 = vadd.f32 %v1920, %v1930
        %v2429 = vadd.f32 %v1921, %v1931
        %v2430 = vadd.f32 %v1922, %v1932
        %v2431 = vadd.f32 %v1923, %v1933
        %v2432 = vadd.f32 %v1924, %v1934
        %v2433 = vadd.f32 %v1925, %v1935
        %v2434 = vadd.f32 %v1926, %v1936
        %v2435 = vadd.f32 %v1927, %v1937
        %v2436 = vadd.f32 %v1928, %v1938
        %v2437 = vadd.f32 %v1929, %v1939
        %v2438 = vadd.f32 %v1930, %v1940
        %v2439 = vadd.f32 %v1941, %v1951
        %v2440 = vadd.f32 %v1942, %v1952
        %v2441 = vadd.f32 %v1943, %v1953
        %v2442 = vadd.f32 %v1944, %v1954
        %v2443 = vadd.f32 %v1945, %v1955
        %v2444 = vadd.f32 %v1946, %v1956
        %v2445 = vadd.f32 %v1947, %v1957
        %v2446 = vadd.f32 %v1948, %v1958
        %v2447 = vadd.f32 %v1949, %v1959
        %v2448 = vadd.f32 %v1950, %v1960
        %v2449 = vadd.f32 %v1951, %v1961
        %v2450 = vadd.f32 %v1952, %v1962
        %v2451 = vadd.f32 %v1953, %v1963
        %v2452 = vadd.f32 %v1954, %v1964
        %v2453 = vadd.f32 %v1965, %v1975
        %v2454 = vadd.f32 %v1966, %v1976
        %v2455 = vadd.f32 %v1967, %v1977
        %v2456 = vadd.f32 %v1968, %v1978
        %v2457 = vadd.f32 %v1969, %v1979
        %v2458 = vadd.f32 %v1970, %v1980
        %v2459 = vadd.f32 %v1971, %v1981
        %v2460 = vadd.f32 %v1972, %v1982
        %v2461 = vadd.f32 %v1973, %v1983
        %v2462 = vadd.f32 %v1974, %v1984
        %v2463 = vadd.f32 %v1975, %v1985
        %v2464 = vadd.f32 %v1976, %v1986
        %v2465 = vadd.f32 %v1977, %v1987
        %v2466 = vadd.f32 %v1978, %v1988
        %v2467 = vadd.f32 %v1989, %v1999
        %v2468 = vadd.f32 %v1990, %v2000
        %v2469 = vadd.f32 %v1991, %v2001
        %v2470 = vadd.f32 %v1992, %v2002
        %v2471 = vadd.f32 %v1993, %v2003
        %v2472 = vadd.f32 %v1994, %v2004
        %v2473 = vadd.f32 %v1995, %v2005
        %v2474 = vadd.f32 %v1996, %v2006
        %v2475 = vadd.f32 %v1997, %v2007
        %v2476 = vadd.f32 %v1998, %v2008
        %v2477 = vadd.f32 %v1999, %v2009
        %v2478 = vadd.f32 %v2000, %v2010
        %v2479 = vadd.f32 %v2001, %v2011
        %v2480 = vadd.f32 %v2002, %v2012
        %v2481 = vadd.f32 %v2013, %v2023
        %v2482 = vadd.f32 %v2014, %v2024
        %v2483 = vadd.f32 %v2015, %v2025
        %v2484 = vadd.f32 %v2016, %v2026
        %v2485 = vadd.f32 %v2017, %v2027
        %v2486 = vadd.f32 %v2018, %v2028
        %v2487 = vadd.f32 %v2019, %v2029
        %v2488 = vadd.f32 %v2020, %v2030
        %v2489 = vadd.f32 %v2021, %v2031
        %v2490 = vadd.f32 %v2022, %v2032
        %v2491 = vadd.f32 %v2023, %v2033
        %v2492 = vadd.f32 %v2024, %v2034
        %v2493 = vadd.f32 %v2025, %v2035
        %v2494 = vadd.f32 %v2026, %v2036
        %v2495 = vadd.f32 %v2037, %v2047
        %v2496 = vadd.f32 %v2038, %v2048
        %v2497 = vadd.f32 %v2039, %v2049
        %v2498 = vadd.f32 %v2040, %v2050
        %v2499 = vadd.f32 %v2041, %v2051
        %v2500 = vadd.f32 %v2042, %v2052
        %v2501 = vadd.f32 %v2043, %v2053
        %v2502 = vadd.f32 %v2044, %v2054
        %v2503 = vadd.f32 %v2045, %v2055
        %v2504 = vadd.f32 %v2046, %v2056
        %v2505 = vadd.f32 %v2047, %v2057
        %v2506 = vadd.f32 %v2048, %v2058
        %v2507 = vadd.f32 %v2049, %v2059
        %v2508 = vadd.f32 %v2050, %v2060
        %v2509 = vmul.f32 %v2285, 0.00188981
        %v2510 = vmul.f32 %v2286, 0.00188981
        %v2511 = vmul.f32 %v2287, 0.00188981
        %v2512 = vmul.f32 %v2288, 0.00188981
        %v2513 = vmul.f32 %v2289, 0.00188981
        %v2514 = vmul.f32 %v2290, 0.00188981
        %v2515 = vmul.f32 %v2291, 0.00188981
        %v2516 = vmul.f32 %v2292, 0.00188981
        %v2517 = vmul.f32 %v2293, 0.00188981
        %v2518 = vmul.f32 %v2294, 0.00188981
        %v2519 = vmul.f32 %v2295, 0.00188981
        %v2520 = vmul.f32 %v2296, 0.00188981
        %v2521 = vmul.f32 %v2297, 0.00188981
        %v2522 = vmul.f32 %v2298, 0.00188981
        %v2523 = vmul.f32 %v2299, 0.00188981
        %v2524 = vmul.f32 %v2300, 0.00188981
        %v2525 = vmul.f32 %v2301, 0.00188981
        %v2526 = vmul.f32 %v2302, 0.00188981
        %v2527 = vmul.f32 %v2303, 0.00188981
        %v2528 = vmul.f32 %v2304, 0.00188981
        %v2529 = vmul.f32 %v2305, 0.00188981
        %v2530 = vmul.f32 %v2306, 0.00188981
        %v2531 = vmul.f32 %v2307, 0.00188981
        %v2532 = vmul.f32 %v2308, 0.00188981
        %v2533 = vmul.f32 %v2309, 0.00188981
        %v2534 = vmul.f32 %v2310, 0.00188981
        %v2535 = vmul.f32 %v2311, 0.00188981
        %v2536 = vmul.f32 %v2312, 0.00188981
        %v2537 = vmul.f32 %v2313, 0.00188981
        %v2538 = vmul.f32 %v2314, 0.00188981
        %v2539 = vmul.f32 %v2315, 0.00188981
        %v2540 = vmul.f32 %v2316, 0.00188981
        %v2541 = vmul.f32 %v2317, 0.00188981
        %v2542 = vmul.f32 %v2318, 0.00188981
        %v2543 = vmul.f32 %v2319, 0.00188981
        %v2544 = vmul.f32 %v2320, 0.00188981
        %v2545 = vmul.f32 %v2321, 0.00188981
        %v2546 = vmul.f32 %v2322, 0.00188981
        %v2547 = vmul.f32 %v2323, 0.00188981
        %v2548 = vmul.f32 %v2324, 0.00188981
        %v2549 = vmul.f32 %v2325, 0.00188981
        %v2550 = vmul.f32 %v2326, 0.00188981
        %v2551 = vmul.f32 %v2327, 0.00188981
        %v2552 = vmul.f32 %v2328, 0.00188981
        %v2553 = vmul.f32 %v2329, 0.00188981
        %v2554 = vmul.f32 %v2330, 0.00188981
        %v2555 = vmul.f32 %v2331, 0.00188981
        %v2556 = vmul.f32 %v2332, 0.00188981
        %v2557 = vmul.f32 %v2333, 0.00188981
        %v2558 = vmul.f32 %v2334, 0.00188981
        %v2559 = vmul.f32 %v2335, 0.00188981
        %v2560 = vmul.f32 %v2336, 0.00188981
        %v2561 = vmul.f32 %v2337, 0.00188981
        %v2562 = vmul.f32 %v2338, 0.00188981
        %v2563 = vmul.f32 %v2339, 0.00188981
        %v2564 = vmul.f32 %v2340, 0.00188981
        %v2565 = vmul.f32 %v2341, 0.00188981
        %v2566 = vmul.f32 %v2342, 0.00188981
        %v2567 = vmul.f32 %v2343, 0.00188981
        %v2568 = vmul.f32 %v2344, 0.00188981
        %v2569 = vmul.f32 %v2345, 0.00188981
        %v2570 = vmul.f32 %v2346, 0.00188981
        %v2571 = vmul.f32 %v2347, 0.00188981
        %v2572 = vmul.f32 %v2348, 0.00188981
        %v2573 = vmul.f32 %v2349, 0.00188981
        %v2574 = vmul.f32 %v2350, 0.00188981
        %v2575 = vmul.f32 %v2351, 0.00188981
        %v2576 = vmul.f32 %v2352, 0.00188981
        %v2577 = vmul.f32 %v2353, 0.00188981
        %v2578 = vmul.f32 %v2354, 0.00188981
        %v2579 = vmul.f32 %v2355, 0.00188981
        %v2580 = vmul.f32 %v2356, 0.00188981
        %v2581 = vmul.f32 %v2357, 0.00188981
        %v2582 = vmul.f32 %v2358, 0.00188981
        %v2583 = vmul.f32 %v2359, 0.00188981
        %v2584 = vmul.f32 %v2360, 0.00188981
        %v2585 = vmul.f32 %v2361, 0.00188981
        %v2586 = vmul.f32 %v2362, 0.00188981
        %v2587 = vmul.f32 %v2363, 0.00188981
        %v2588 = vmul.f32 %v2364, 0.00188981
        %v2589 = vmul.f32 %v2365, 0.00188981
        %v2590 = vmul.f32 %v2366, 0.00188981
        %v2591 = vmul.f32 %v2367, 0.00188981
        %v2592 = vmul.f32 %v2368, 0.00188981
        %v2593 = vmul.f32 %v2369, 0.00188981
        %v2594 = vmul.f32 %v2370, 0.00188981
        %v2595 = vmul.f32 %v2371, 0.00188981
        %v2596 = vmul.f32 %v2372, 0.00188981
        %v2597 = vmul.f32 %v2373, 0.00188981
        %v2598 = vmul.f32 %v2374, 0.00188981
        %v2599 = vmul.f32 %v2375, 0.00188981
        %v2600 = vmul.f32 %v2376, 0.00188981
        %v2601 = vmul.f32 %v2377, 0.00188981
        %v2602 = vmul.f32 %v2378, 0.00188981
        %v2603 = vmul.f32 %v2379, 0.00188981
        %v2604 = vmul.f32 %v2380, 0.00188981
        %v2605 = vmul.f32 %v2381, 0.00188981
        %v2606 = vmul.f32 %v2382, 0.00188981
        %v2607 = vmul.f32 %v2383, 0.00188981
        %v2608 = vmul.f32 %v2384, 0.00188981
        %v2609 = vmul.f32 %v2385, 0.00188981
        %v2610 = vmul.f32 %v2386, 0.00188981
        %v2611 = vmul.f32 %v2387, 0.00188981
        %v2612 = vmul.f32 %v2388, 0.00188981
        %v2613 = vmul.f32 %v2389, 0.00188981
        %v2614 = vmul.f32 %v2390, 0.00188981
        %v2615 = vmul.f32 %v2391, 0.00188981
        %v2616 = vmul.f32 %v2392, 0.00188981
        %v2617 = vmul.f32 %v2393, 0.00188981
        %v2618 = vmul.f32 %v2394, 0.00188981
        %v2619 = vmul.f32 %v2395, 0.00188981
        %v2620 = vmul.f32 %v2396, 0.00188981
        %v2621 = vmul.f32 %v2397, 0.00188981
        %v2622 = vmul.f32 %v2398, 0.00188981
        %v2623 = vmul.f32 %v2399, 0.00188981
        %v2624 = vmul.f32 %v2400, 0.00188981
        %v2625 = vmul.f32 %v2401, 0.00188981
        %v2626 = vmul.f32 %v2402, 0.00188981
        %v2627 = vmul.f32 %v2403, 0.00188981
        %v2628 = vmul.f32 %v2404, 0.00188981
        %v2629 = vmul.f32 %v2405, 0.00188981
        %v2630 = vmul.f32 %v2406, 0.00188981
        %v2631 = vmul.f32 %v2407, 0.00188981
        %v2632 = vmul.f32 %v2408, 0.00188981
        %v2633 = vmul.f32 %v2409, 0.00188981
        %v2634 = vmul.f32 %v2410, 0.00188981
        %v2635 = vmul.f32 %v2411, 0.00188981
        %v2636 = vmul.f32 %v2412, 0.00188981
        %v2637 = vmul.f32 %v2413, 0.00188981
        %v2638 = vmul.f32 %v2414, 0.00188981
        %v2639 = vmul.f32 %v2415, 0.00188981
        %v2640 = vmul.f32 %v2416, 0.00188981
        %v2641 = vmul.f32 %v2417, 0.00188981
        %v2642 = vmul.f32 %v2418, 0.00188981
        %v2643 = vmul.f32 %v2419, 0.00188981
        %v2644 = vmul.f32 %v2420, 0.00188981
        %v2645 = vmul.f32 %v2421, 0.00188981
        %v2646 = vmul.f32 %v2422, 0.00188981
        %v2647 = vmul.f32 %v2423, 0.00188981
        %v2648 = vmul.f32 %v2424, 0.00188981
        %v2649 = vmul.f32 %v2425, 0.00188981
        %v2650 = vmul.f32 %v2426, 0.00188981
        %v2651 = vmul.f32 %v2427, 0.00188981
        %v2652 = vmul.f32 %v2428, 0.00188981
        %v2653 = vmul.f32 %v2429, 0.00188981
        %v2654 = vmul.f32 %v2430, 0.00188981
        %v2655 = vmul.f32 %v2431, 0.00188981
        %v2656 = vmul.f32 %v2432, 0.00188981
        %v2657 = vmul.f32 %v2433, 0.00188981
        %v2658 = vmul.f32 %v2434, 0.00188981
        %v2659 = vmul.f32 %v2435, 0.00188981
        %v2660 = vmul.f32 %v2436, 0.00188981
        %v2661 = vmul.f32 %v2437, 0.00188981
        %v2662 = vmul.f32 %v2438, 0.00188981
        %v2663 = vmul.f32 %v2439, 0.00188981
        %v2664 = vmul.f32 %v2440, 0.00188981
        %v2665 = vmul.f32 %v2441, 0.00188981
        %v2666 = vmul.f32 %v2442, 0.00188981
        %v2667 = vmul.f32 %v2443, 0.00188981
        %v2668 = vmul.f32 %v2444, 0.00188981
        %v2669 = vmul.f32 %v2445, 0.00188981
        %v2670 = vmul.f32 %v2446, 0.00188981
        %v2671 = vmul.f32 %v2447, 0.00188981
        %v2672 = vmul.f32 %v2448, 0.00188981
        %v2673 = vmul.f32 %v2449, 0.00188981
        %v2674 = vmul.f32 %v2450, 0.00188981
        %v2675 = vmul.f32 %v2451, 0.00188981
        %v2676 = vmul.f32 %v2452, 0.00188981
        %v2677 = vmul.f32 %v2453, 0.00188981
        %v2678 = vmul.f32 %v2454, 0.00188981
        %v2679 = vmul.f32 %v2455, 0.00188981
        %v2680 = vmul.f32 %v2456, 0.00188981
        %v2681 = vmul.f32 %v2457, 0.00188981
        %v2682 = vmul.f32 %v2458, 0.00188981
        %v2683 = vmul.f32 %v2459, 0.00188981
        %v2684 = vmul.f32 %v2460, 0.00188981
        %v2685 = vmul.f32 %v2461, 0.00188981
        %v2686 = vmul.f32 %v2462, 0.00188981
        %v2687 = vmul.f32 %v2463, 0.00188981
        %v2688 = vmul.f32 %v2464, 0.00188981
        %v2689 = vmul.f32 %v2465, 0.00188981
        %v2690 = vmul.f32 %v2466, 0.00188981
        %v2691 = vmul.f32 %v2467, 0.00188981
        %v2692 = vmul.f32 %v2468, 0.00188981
        %v2693 = vmul.f32 %v2469, 0.00188981
        %v2694 = vmul.f32 %v2470, 0.00188981
        %v2695 = vmul.f32 %v2471, 0.00188981
        %v2696 = vmul.f32 %v2472, 0.00188981
        %v2697 = vmul.f32 %v2473, 0.00188981
        %v2698 = vmul.f32 %v2474, 0.00188981
        %v2699 = vmul.f32 %v2475, 0.00188981
        %v2700 = vmul.f32 %v2476, 0.00188981
        %v2701 = vmul.f32 %v2477, 0.00188981
        %v2702 = vmul.f32 %v2478, 0.00188981
        %v2703 = vmul.f32 %v2479, 0.00188981
        %v2704 = vmul.f32 %v2480, 0.00188981
        %v2705 = vmul.f32 %v2481, 0.00188981
        %v2706 = vmul.f32 %v2482, 0.00188981
        %v2707 = vmul.f32 %v2483, 0.00188981
        %v2708 = vmul.f32 %v2484, 0.00188981
        %v2709 = vmul.f32 %v2485, 0.00188981
        %v2710 = vmul.f32 %v2486, 0.00188981
        %v2711 = vmul.f32 %v2487, 0.00188981
        %v2712 = vmul.f32 %v2488, 0.00188981
        %v2713 = vmul.f32 %v2489, 0.00188981
        %v2714 = vmul.f32 %v2490, 0.00188981
        %v2715 = vmul.f32 %v2491, 0.00188981
        %v2716 = vmul.f32 %v2492, 0.00188981
        %v2717 = vmul.f32 %v2493, 0.00188981
        %v2718 = vmul.f32 %v2494, 0.00188981
        %v2719 = vmul.f32 %v2495, 0.00188981
        %v2720 = vmul.f32 %v2496, 0.00188981
        %v2721 = vmul.f32 %v2497, 0.00188981
        %v2722 = vmul.f32 %v2498, 0.00188981
        %v2723 = vmul.f32 %v2499, 0.00188981
        %v2724 = vmul.f32 %v2500, 0.00188981
        %v2725 = vmul.f32 %v2501, 0.00188981
        %v2726 = vmul.f32 %v2502, 0.00188981
        %v2727 = vmul.f32 %v2503, 0.00188981
        %v2728 = vmul.f32 %v2504, 0.00188981
        %v2729 = vmul.f32 %v2505, 0.00188981
        %v2730 = vmul.f32 %v2506, 0.00188981
        %v2731 = vmul.f32 %v2507, 0.00188981
        %v2732 = vmul.f32 %v2508, 0.00188981
        %v2733 = vadd.f32 %v1678, %v1686
        %v2734 = vadd.f32 %v1679, %v1687
        %v2735 = vadd.f32 %v1680, %v1688
        %v2736 = vadd.f32 %v1681, %v1689
        %v2737 = vadd.f32 %v1682, %v1690
        %v2738 = vadd.f32 %v1683, %v1691
        %v2739 = vadd.f32 %v1684, %v1692
        %v2740 = vadd.f32 %v1685, %v1693
        %v2741 = vadd.f32 %v1686, %v1694
        %v2742 = vadd.f32 %v1687, %v1695
        %v2743 = vadd.f32 %v1688, %v1696
        %v2744 = vadd.f32 %v1689, %v1697
        %v2745 = vadd.f32 %v1690, %v1698
        %v2746 = vadd.f32 %v1691, %v1699
        %v2747 = vadd.f32 %v1702, %v1710
        %v2748 = vadd.f32 %v1703, %v1711
        %v2749 = vadd.f32 %v1704, %v1712
        %v2750 = vadd.f32 %v1705, %v1713
        %v2751 = vadd.f32 %v1706, %v1714
        %v2752 = vadd.f32 %v1707, %v1715
        %v2753 = vadd.f32 %v1708, %v1716
        %v2754 = vadd.f32 %v1709, %v1717
        %v2755 = vadd.f32 %v1710, %v1718
        %v2756 = vadd.f32 %v1711, %v1719
        %v2757 = vadd.f32 %v1712, %v1720
        %v2758 = vadd.f32 %v1713, %v1721
        %v2759 = vadd.f32 %v1714, %v1722
        %v2760 = vadd.f32 %v1715, %v1723
        %v2761 = vadd.f32 %v1726, %v1734
        %v2762 = vadd.f32 %v1727, %v1735
        %v2763 = vadd.f32 %v1728, %v1736
        %v2764 = vadd.f32 %v1729, %v1737
        %v2765 = vadd.f32 %v1730, %v1738
        %v2766 = vadd.f32 %v1731, %v1739
        %v2767 = vadd.f32 %v1732, %v1740
        %v2768 = vadd.f32 %v1733, %v1741
        %v2769 = vadd.f32 %v1734, %v1742
        %v2770 = vadd.f32 %v1735, %v1743
        %v2771 = vadd.f32 %v1736, %v1744
        %v2772 = vadd.f32 %v1737, %v1745
        %v2773 = vadd.f32 %v1738, %v1746
        %v2774 = vadd.f32 %v1739, %v1747
        %v2775 = vadd.f32 %v1750, %v1758
        %v2776 = vadd.f32 %v1751, %v1759
        %v2777 = vadd.f32 %v1752, %v1760
        %v2778 = vadd.f32 %v1753, %v1761
        %v2779 = vadd.f32 %v1754, %v1762
        %v2780 = vadd.f32 %v1755, %v1763
        %v2781 = vadd.f32 %v1756, %v1764
        %v2782 = vadd.f32 %v1757, %v1765
        %v2783 = vadd.f32 %v1758, %v1766
        %v2784 = vadd.f32 %v1759, %v1767
        %v2785 = vadd.f32 %v1760, %v1768
        %v2786 = vadd.f32 %v1761, %v1769
        %v2787 = vadd.f32 %v1762, %v1770
        %v2788 = vadd.f32 %v1763, %v1771
        %v2789 = vadd.f32 %v1774, %v1782
        %v2790 = vadd.f32 %v1775, %v1783
        %v2791 = vadd.f32 %v1776, %v1784
        %v2792 = vadd.f32 %v1777, %v1785
        %v2793 = vadd.f32 %v1778, %v1786
        %v2794 = vadd.f32 %v1779, %v1787
        %v2795 = vadd.f32 %v1780, %v1788
        %v2796 = vadd.f32 %v1781, %v1789
        %v2797 = vadd.f32 %v1782, %v1790
        %v2798 = vadd.f32 %v1783, %v1791
        %v2799 = vadd.f32 %v1784, %v1792
        %v2800 = vadd.f32 %v1785, %v1793
        %v2801 = vadd.f32 %v1786, %v1794
        %v2802 = vadd.f32 %v1787, %v1795
        %v2803 = vadd.f32 %v1798, %v1806
        %v2804 = vadd.f32 %v1799, %v1807
        %v2805 = vadd.f32 %v1800, %v1808
        %v2806 = vadd.f32 %v1801, %v1809
        %v2807 = vadd.f32 %v1802, %v1810
        %v2808 = vadd.f32 %v1803, %v1811
        %v2809 = vadd.f32 %v1804, %v1812
        %v2810 = vadd.f32 %v1805, %v1813
        %v2811 = vadd.f32 %v1806, %v1814
        %v2812 = vadd.f32 %v1807, %v1815
        %v2813 = vadd.f32 %v1808, %v1816
        %v2814 = vadd.f32 %v1809, %v1817
        %v2815 = vadd.f32 %v1810, %v1818
        %v2816 = vadd.f32 %v1811, %v1819
        %v2817 = vadd.f32 %v1822, %v1830
        %v2818 = vadd.f32 %v1823, %v1831
        %v2819 = vadd.f32 %v1824, %v1832
        %v2820 = vadd.f32 %v1825, %v1833
        %v2821 = vadd.f32 %v1826, %v1834
        %v2822 = vadd.f32 %v1827, %v1835
        %v2823 = vadd.f32 %v1828, %v1836
        %v2824 = vadd.f32 %v1829, %v1837
        %v2825 = vadd.f32 %v1830, %v1838
        %v2826 = vadd.f32 %v1831, %v1839
        %v2827 = vadd.f32 %v1832, %v1840
        %v2828 = vadd.f32 %v1833, %v1841
        %v2829 = vadd.f32 %v1834, %v1842
        %v2830 = vadd.f32 %v1835, %v1843
        %v2831 = vadd.f32 %v1846, %v1854
        %v2832 = vadd.f32 %v1847, %v1855
        %v2833 = vadd.f32 %v1848, %v1856
        %v2834 = vadd.f32 %v1849, %v1857
        %v2835 = vadd.f32 %v1850, %v1858
        %v2836 = vadd.f32 %v1851, %v1859
        %v2837 = vadd.f32 %v1852, %v1860
        %v2838 = vadd.f32 %v1853, %v1861
        %v2839 = vadd.f32 %v1854, %v1862
        %v2840 = vadd.f32 %v1855, %v1863
        %v2841 = vadd.f32 %v1856, %v1864
        %v2842 = vadd.f32 %v1857, %v1865
        %v2843 = vadd.f32 %v1858, %v1866
        %v2844 = vadd.f32 %v1859, %v1867
        %v2845 = vadd.f32 %v1870, %v1878
        %v2846 = vadd.f32 %v1871, %v1879
        %v2847 = vadd.f32 %v1872, %v1880
        %v2848 = vadd.f32 %v1873, %v1881
        %v2849 = vadd.f32 %v1874, %v1882
        %v2850 = vadd.f32 %v1875, %v1883
        %v2851 = vadd.f32 %v1876, %v1884
        %v2852 = vadd.f32 %v1877, %v1885
        %v2853 = vadd.f32 %v1878, %v1886
        %v2854 = vadd.f32 %v1879, %v1887
        %v2855 = vadd.f32 %v1880, %v1888
        %v2856 = vadd.f32 %v1881, %v1889
        %v2857 = vadd.f32 %v1882, %v1890
        %v2858 = vadd.f32 %v1883, %v1891
        %v2859 = vadd.f32 %v1894, %v1902
        %v2860 = vadd.f32 %v1895, %v1903
        %v2861 = vadd.f32 %v1896, %v1904
        %v2862 = vadd.f32 %v1897, %v1905
        %v2863 = vadd.f32 %v1898, %v1906
        %v2864 = vadd.f32 %v1899, %v1907
        %v2865 = vadd.f32 %v1900, %v1908
        %v2866 = vadd.f32 %v1901, %v1909
        %v2867 = vadd.f32 %v1902, %v1910
        %v2868 = vadd.f32 %v1903, %v1911
        %v2869 = vadd.f32 %v1904, %v1912
        %v2870 = vadd.f32 %v1905, %v1913
        %v2871 = vadd.f32 %v1906, %v1914
        %v2872 = vadd.f32 %v1907, %v1915
        %v2873 = vadd.f32 %v1918, %v1926
        %v2874 = vadd.f32 %v1919, %v1927
        %v2875 = vadd.f32 %v1920, %v1928
        %v2876 = vadd.f32 %v1921, %v1929
        %v2877 = vadd.f32 %v1922, %v1930
        %v2878 = vadd.f32 %v1923, %v1931
        %v2879 = vadd.f32 %v1924, %v1932
        %v2880 = vadd.f32 %v1925, %v1933
        %v2881 = vadd.f32 %v1926, %v1934
        %v2882 = vadd.f32 %v1927, %v1935
        %v2883 = vadd.f32 %v1928, %v1936
        %v2884 = vadd.f32 %v1929, %v1937
        %v2885 = vadd.f32 %v1930, %v1938
        %v2886 = vadd.f32 %v1931, %v1939
        %v2887 = vadd.f32 %v1942, %v1950
        %v2888 = vadd.f32 %v1943, %v1951
        %v2889 = vadd.f32 %v1944, %v1952
        %v2890 = vadd.f32 %v1945, %v1953
        %v2891 = vadd.f32 %v1946, %v1954
        %v2892 = vadd.f32 %v1947, %v1955
        %v2893 = vadd.f32 %v1948, %v1956
        %v2894 = vadd.f32 %v1949, %v1957
        %v2895 = vadd.f32 %v1950, %v1958
        %v2896 = vadd.f32 %v1951, %v1959
        %v2897 = vadd.f32 %v1952, %v1960
        %v2898 = vadd.f32 %v1953, %v1961
        %v2899 = vadd.f32 %v1954, %v1962
        %v2900 = vadd.f32 %v1955, %v1963
        %v2901 = vadd.f32 %v1966, %v1974
        %v2902 = vadd.f32 %v1967, %v1975
        %v2903 = vadd.f32 %v1968, %v1976
        %v2904 = vadd.f32 %v1969, %v1977
        %v2905 = vadd.f32 %v1970, %v1978
        %v2906 = vadd.f32 %v1971, %v1979
        %v2907 = vadd.f32 %v1972, %v1980
        %v2908 = vadd.f32 %v1973, %v1981
        %v2909 = vadd.f32 %v1974, %v1982
        %v2910 = vadd.f32 %v1975, %v1983
        %v2911 = vadd.f32 %v1976, %v1984
        %v2912 = vadd.f32 %v1977, %v1985
        %v2913 = vadd.f32 %v1978, %v1986
        %v2914 = vadd.f32 %v1979, %v1987
        %v2915 = vadd.f32 %v1990, %v1998
        %v2916 = vadd.f32 %v1991, %v1999
        %v2917 = vadd.f32 %v1992, %v2000
        %v2918 = vadd.f32 %v1993, %v2001
        %v2919 = vadd.f32 %v1994, %v2002
        %v2920 = vadd.f32 %v1995, %v2003
        %v2921 = vadd.f32 %v1996, %v2004
        %v2922 = vadd.f32 %v1997, %v2005
        %v2923 = vadd.f32 %v1998, %v2006
        %v2924 = vadd.f32 %v1999, %v2007
        %v2925 = vadd.f32 %v2000, %v2008
        %v2926 = vadd.f32 %v2001, %v2009
        %v2927 = vadd.f32 %v2002, %v2010
        %v2928 = vadd.f32 %v2003, %v2011
        %v2929 = vadd.f32 %v2014, %v2022
        %v2930 = vadd.f32 %v2015, %v2023
        %v2931 = vadd.f32 %v2016, %v2024
        %v2932 = vadd.f32 %v2017, %v2025
        %v2933 = vadd.f32 %v2018, %v2026
        %v2934 = vadd.f32 %v2019, %v2027
        %v2935 = vadd.f32 %v2020, %v2028
        %v2936 = vadd.f32 %v2021, %v2029
        %v2937 = vadd.f32 %v2022, %v2030
        %v2938 = vadd.f32 %v2023, %v2031
        %v2939 = vadd.f32 %v2024, %v2032
        %v2940 = vadd.f32 %v2025, %v2033
        %v2941 = vadd.f32 %v2026, %v2034
        %v2942 = vadd.f32 %v2027, %v2035
        %v2943 = vadd.f32 %v2038, %v2046
        %v2944 = vadd.f32 %v2039, %v2047
        %v2945 = vadd.f32 %v2040, %v2048
        %v2946 = vadd.f32 %v2041, %v2049
        %v2947 = vadd.f32 %v2042, %v2050
        %v2948 = vadd.f32 %v2043, %v2051
        %v2949 = vadd.f32 %v2044, %v2052
        %v2950 = vadd.f32 %v2045, %v2053
        %v2951 = vadd.f32 %v2046, %v2054
        %v2952 = vadd.f32 %v2047, %v2055
        %v2953 = vadd.f32 %v2048, %v2056
        %v2954 = vadd.f32 %v2049, %v2057
        %v2955 = vadd.f32 %v2050, %v2058
        %v2956 = vadd.f32 %v2051, %v2059
        %v2957 = vmul.f32 %v2733, 0.01096042
        %v2958 = vmul.f32 %v2734, 0.01096042
        %v2959 = vmul.f32 %v2735, 0.01096042
        %v2960 = vmul.f32 %v2736, 0.01096042
        %v2961 = vmul.f32 %v2737, 0.01096042
        %v2962 = vmul.f32 %v2738, 0.01096042
        %v2963 = vmul.f32 %v2739, 0.01096042
        %v2964 = vmul.f32 %v2740, 0.01096042
        %v2965 = vmul.f32 %v2741, 0.01096042
        %v2966 = vmul.f32 %v2742, 0.01096042
        %v2967 = vmul.f32 %v2743, 0.01096042
        %v2968 = vmul.f32 %v2744, 0.01096042
        %v2969 = vmul.f32 %v2745, 0.01096042
        %v2970 = vmul.f32 %v2746, 0.01096042
        %v2971 = vmul.f32 %v2747, 0.01096042
        %v2972 = vmul.f32 %v2748, 0.01096042
        %v2973 = vmul.f32 %v2749, 0.01096042
        %v2974 = vmul.f32 %v2750, 0.01096042
        %v2975 = vmul.f32 %v2751, 0.01096042
        %v2976 = vmul.f32 %v2752, 0.01096042
        %v2977 = vmul.f32 %v2753, 0.01096042
        %v2978 = vmul.f32 %v2754, 0.01096042
        %v2979 = vmul.f32 %v2755, 0.01096042
        %v2980 = vmul.f32 %v2756, 0.01096042
        %v2981 = vmul.f32 %v2757, 0.01096042
        %v2982 = vmul.f32 %v2758, 0.01096042
        %v2983 = vmul.f32 %v2759, 0.01096042
        %v2984 = vmul.f32 %v2760, 0.01096042
        %v2985 = vmul.f32 %v2761, 0.01096042
        %v2986 = vmul.f32 %v2762, 0.01096042
        %v2987 = vmul.f32 %v2763, 0.01096042
        %v2988 = vmul.f32 %v2764, 0.01096042
        %v2989 = vmul.f32 %v2765, 0.01096042
        %v2990 = vmul.f32 %v2766, 0.01096042
        %v2991 = vmul.f32 %v2767, 0.01096042
        %v2992 = vmul.f32 %v2768, 0.01096042
        %v2993 = vmul.f32 %v2769, 0.01096042
        %v2994 = vmul.f32 %v2770, 0.01096042
        %v2995 = vmul.f32 %v2771, 0.01096042
        %v2996 = vmul.f32 %v2772, 0.01096042
        %v2997 = vmul.f32 %v2773, 0.01096042
        %v2998 = vmul.f32 %v2774, 0.01096042
        %v2999 = vmul.f32 %v2775, 0.01096042
        %v3000 = vmul.f32 %v2776, 0.01096042
        %v3001 = vmul.f32 %v2777, 0.01096042
        %v3002 = vmul.f32 %v2778, 0.01096042
        %v3003 = vmul.f32 %v2779, 0.01096042
        %v3004 = vmul.f32 %v2780, 0.01096042
        %v3005 = vmul.f32 %v2781, 0.01096042
        %v3006 = vmul.f32 %v2782, 0.01096042
        %v3007 = vmul.f32 %v2783, 0.01096042
        %v3008 = vmul.f32 %v2784, 0.01096042
        %v3009 = vmul.f32 %v2785, 0.01096042
        %v3010 = vmul.f32 %v2786, 0.01096042
        %v3011 = vmul.f32 %v2787, 0.01096042
        %v3012 = vmul.f32 %v2788, 0.01096042
        %v3013 = vmul.f32 %v2789, 0.01096042
        %v3014 = vmul.f32 %v2790, 0.01096042
        %v3015 = vmul.f32 %v2791, 0.01096042
        %v3016 = vmul.f32 %v2792, 0.01096042
        %v3017 = vmul.f32 %v2793, 0.01096042
        %v3018 = vmul.f32 %v2794, 0.01096042
        %v3019 = vmul.f32 %v2795, 0.01096042
        %v3020 = vmul.f32 %v2796, 0.01096042
        %v3021 = vmul.f32 %v2797, 0.01096042
        %v3022 = vmul.f32 %v2798, 0.01096042
        %v3023 = vmul.f32 %v2799, 0.01096042
        %v3024 = vmul.f32 %v2800, 0.01096042
        %v3025 = vmul.f32 %v2801, 0.01096042
        %v3026 = vmul.f32 %v2802, 0.01096042
        %v3027 = vmul.f32 %v2803, 0.01096042
        %v3028 = vmul.f32 %v2804, 0.01096042
        %v3029 = vmul.f32 %v2805, 0.01096042
        %v3030 = vmul.f32 %v2806, 0.01096042
        %v3031 = vmul.f32 %v2807, 0.01096042
        %v3032 = vmul.f32 %v2808, 0.01096042
        %v3033 = vmul.f32 %v2809, 0.01096042
        %v3034 = vmul.f32 %v2810, 0.01096042
        %v3035 = vmul.f32 %v2811, 0.01096042
        %v3036 = vmul.f32 %v2812, 0.01096042
        %v3037 = vmul.f32 %v2813, 0.01096042
        %v3038 = vmul.f32 %v2814, 0.01096042
        %v3039 = vmul.f32 %v2815, 0.01096042
        %v3040 = vmul.f32 %v2816, 0.01096042
        %v3041 = vmul.f32 %v2817, 0.01096042
        %v3042 = vmul.f32 %v2818, 0.01096042
        %v3043 = vmul.f32 %v2819, 0.01096042
        %v3044 = vmul.f32 %v2820, 0.01096042
        %v3045 = vmul.f32 %v2821, 0.01096042
        %v3046 = vmul.f32 %v2822, 0.01096042
        %v3047 = vmul.f32 %v2823, 0.01096042
        %v3048 = vmul.f32 %v2824, 0.01096042
        %v3049 = vmul.f32 %v2825, 0.01096042
        %v3050 = vmul.f32 %v2826, 0.01096042
        %v3051 = vmul.f32 %v2827, 0.01096042
        %v3052 = vmul.f32 %v2828, 0.01096042
        %v3053 = vmul.f32 %v2829, 0.01096042
        %v3054 = vmul.f32 %v2830, 0.01096042
        %v3055 = vmul.f32 %v2831, 0.01096042
        %v3056 = vmul.f32 %v2832, 0.01096042
        %v3057 = vmul.f32 %v2833, 0.01096042
        %v3058 = vmul.f32 %v2834, 0.01096042
        %v3059 = vmul.f32 %v2835, 0.01096042
        %v3060 = vmul.f32 %v2836, 0.01096042
        %v3061 = vmul.f32 %v2837, 0.01096042
        %v3062 = vmul.f32 %v2838, 0.01096042
        %v3063 = vmul.f32 %v2839, 0.01096042
        %v3064 = vmul.f32 %v2840, 0.01096042
        %v3065 = vmul.f32 %v2841, 0.01096042
        %v3066 = vmul.f32 %v2842, 0.01096042
        %v3067 = vmul.f32 %v2843, 0.01096042
        %v3068 = vmul.f32 %v2844, 0.01096042
        %v3069 = vmul.f32 %v2845, 0.01096042
        %v3070 = vmul.f32 %v2846, 0.01096042
        %v3071 = vmul.f32 %v2847, 0.01096042
        %v3072 = vmul.f32 %v2848, 0.01096042
        %v3073 = vmul.f32 %v2849, 0.01096042
        %v3074 = vmul.f32 %v2850, 0.01096042
        %v3075 = vmul.f32 %v2851, 0.01096042
        %v3076 = vmul.f32 %v2852, 0.01096042
        %v3077 = vmul.f32 %v2853, 0.01096042
        %v3078 = vmul.f32 %v2854, 0.01096042
        %v3079 = vmul.f32 %v2855, 0.01096042
        %v3080 = vmul.f32 %v2856, 0.01096042
        %v3081 = vmul.f32 %v2857, 0.01096042
        %v3082 = vmul.f32 %v2858, 0.01096042
        %v3083 = vmul.f32 %v2859, 0.01096042
        %v3084 = vmul.f32 %v2860, 0.01096042
        %v3085 = vmul.f32 %v2861, 0.01096042
        %v3086 = vmul.f32 %v2862, 0.01096042
        %v3087 = vmul.f32 %v2863, 0.01096042
        %v3088 = vmul.f32 %v2864, 0.01096042
        %v3089 = vmul.f32 %v2865, 0.01096042
        %v3090 = vmul.f32 %v2866, 0.01096042
        %v3091 = vmul.f32 %v2867, 0.01096042
        %v3092 = vmul.f32 %v2868, 0.01096042
        %v3093 = vmul.f32 %v2869, 0.01096042
        %v3094 = vmul.f32 %v2870, 0.01096042
        %v3095 = vmul.f32 %v2871, 0.01096042
        %v3096 = vmul.f32 %v2872, 0.01096042
        %v3097 = vmul.f32 %v2873, 0.01096042
        %v3098 = vmul.f32 %v2874, 0.01096042
        %v3099 = vmul.f32 %v2875, 0.01096042
        %v3100 = vmul.f32 %v2876, 0.01096042
        %v3101 = vmul.f32 %v2877, 0.01096042
        %v3102 = vmul.f32 %v2878, 0.01096042
        %v3103 = vmul.f32 %v2879, 0.01096042
        %v3104 = vmul.f32 %v2880, 0.01096042
        %v3105 = vmul.f32 %v2881, 0.01096042
        %v3106 = vmul.f32 %v2882, 0.01096042
        %v3107 = vmul.f32 %v2883, 0.01096042
        %v3108 = vmul.f32 %v2884, 0.01096042
        %v3109 = vmul.f32 %v2885, 0.01096042
        %v3110 = vmul.f32 %v2886, 0.01096042
        %v3111 = vmul.f32 %v2887, 0.01096042
        %v3112 = vmul.f32 %v2888, 0.01096042
        %v3113 = vmul.f32 %v2889, 0.01096042
        %v3114 = vmul.f32 %v2890, 0.01096042
        %v3115 = vmul.f32 %v2891, 0.01096042
        %v3116 = vmul.f32 %v2892, 0.01096042
        %v3117 = vmul.f32 %v2893, 0.01096042
        %v3118 = vmul.f32 %v2894, 0.01096042
        %v3119 = vmul.f32 %v2895, 0.01096042
        %v3120 = vmul.f32 %v2896, 0.01096042
        %v3121 = vmul.f32 %v2897, 0.01096042
        %v3122 = vmul.f32 %v2898, 0.01096042
        %v3123 = vmul.f32 %v2899, 0.01096042
        %v3124 = vmul.f32 %v2900, 0.01096042
        %v3125 = vmul.f32 %v2901, 0.01096042
        %v3126 = vmul.f32 %v2902, 0.01096042
        %v3127 = vmul.f32 %v2903, 0.01096042
        %v3128 = vmul.f32 %v2904, 0.01096042
        %v3129 = vmul.f32 %v2905, 0.01096042
        %v3130 = vmul.f32 %v2906, 0.01096042
        %v3131 = vmul.f32 %v2907, 0.01096042
        %v3132 = vmul.f32 %v2908, 0.01096042
        %v3133 = vmul.f32 %v2909, 0.01096042
        %v3134 = vmul.f32 %v2910, 0.01096042
        %v3135 = vmul.f32 %v2911, 0.01096042
        %v3136 = vmul.f32 %v2912, 0.01096042
        %v3137 = vmul.f32 %v2913, 0.01096042
        %v3138 = vmul.f32 %v2914, 0.01096042
        %v3139 = vmul.f32 %v2915, 0.01096042
        %v3140 = vmul.f32 %v2916, 0.01096042
        %v3141 = vmul.f32 %v2917, 0.01096042
        %v3142 = vmul.f32 %v2918, 0.01096042
        %v3143 = vmul.f32 %v2919, 0.01096042
        %v3144 = vmul.f32 %v2920, 0.01096042
        %v3145 = vmul.f32 %v2921, 0.01096042
        %v3146 = vmul.f32 %v2922, 0.01096042
        %v3147 = vmul.f32 %v2923, 0.01096042
        %v3148 = vmul.f32 %v2924, 0.01096042
        %v3149 = vmul.f32 %v2925, 0.01096042
        %v3150 = vmul.f32 %v2926, 0.01096042
        %v3151 = vmul.f32 %v2927, 0.01096042
        %v3152 = vmul.f32 %v2928, 0.01096042
        %v3153 = vmul.f32 %v2929, 0.01096042
        %v3154 = vmul.f32 %v2930, 0.01096042
        %v3155 = vmul.f32 %v2931, 0.01096042
        %v3156 = vmul.f32 %v2932, 0.01096042
        %v3157 = vmul.f32 %v2933, 0.01096042
        %v3158 = vmul.f32 %v2934, 0.01096042
        %v3159 = vmul.f32 %v2935, 0.01096042
        %v3160 = vmul.f32 %v2936, 0.01096042
        %v3161 = vmul.f32 %v2937, 0.01096042
        %v3162 = vmul.f32 %v2938, 0.01096042
        %v3163 = vmul.f32 %v2939, 0.01096042
        %v3164 = vmul.f32 %v2940, 0.01096042
        %v3165 = vmul.f32 %v2941, 0.01096042
        %v3166 = vmul.f32 %v2942, 0.01096042
        %v3167 = vmul.f32 %v2943, 0.01096042
        %v3168 = vmul.f32 %v2944, 0.01096042
        %v3169 = vmul.f32 %v2945, 0.01096042
        %v3170 = vmul.f32 %v2946, 0.01096042
        %v3171 = vmul.f32 %v2947, 0.01096042
        %v3172 = vmul.f32 %v2948, 0.01096042
        %v3173 = vmul.f32 %v2949, 0.01096042
        %v3174 = vmul.f32 %v2950, 0.01096042
        %v3175 = vmul.f32 %v2951, 0.01096042
        %v3176 = vmul.f32 %v2952, 0.01096042
        %v3177 = vmul.f32 %v2953, 0.01096042
        %v3178 = vmul.f32 %v2954, 0.01096042
        %v3179 = vmul.f32 %v2955, 0.01096042
        %v3180 = vmul.f32 %v2956, 0.01096042
        %v3181 = vadd.f32 %v2061, %v2957
        %v3182 = vadd.f32 %v2062, %v2958
        %v3183 = vadd.f32 %v2063, %v2959
        %v3184 = vadd.f32 %v2064, %v2960
        %v3185 = vadd.f32 %v2065, %v2961
        %v3186 = vadd.f32 %v2066, %v2962
        %v3187 = vadd.f32 %v2067, %v2963
        %v3188 = vadd.f32 %v2068, %v2964
        %v3189 = vadd.f32 %v2069, %v2965
        %v3190 = vadd.f32 %v2070, %v2966
        %v3191 = vadd.f32 %v2071, %v2967
        %v3192 = vadd.f32 %v2072, %v2968
        %v3193 = vadd.f32 %v2073, %v2969
        %v3194 = vadd.f32 %v2074, %v2970
        %v3195 = vadd.f32 %v2075, %v2971
        %v3196 = vadd.f32 %v2076, %v2972
        %v3197 = vadd.f32 %v2077, %v2973
        %v3198 = vadd.f32 %v2078, %v2974
        %v3199 = vadd.f32 %v2079, %v2975
        %v3200 = vadd.f32 %v2080, %v2976
        %v3201 = vadd.f32 %v2081, %v2977
        %v3202 = vadd.f32 %v2082, %v2978
        %v3203 = vadd.f32 %v2083, %v2979
        %v3204 = vadd.f32 %v2084, %v2980
        %v3205 = vadd.f32 %v2085, %v2981
        %v3206 = vadd.f32 %v2086, %v2982
        %v3207 = vadd.f32 %v2087, %v2983
        %v3208 = vadd.f32 %v2088, %v2984
        %v3209 = vadd.f32 %v2089, %v2985
        %v3210 = vadd.f32 %v2090, %v2986
        %v3211 = vadd.f32 %v2091, %v2987
        %v3212 = vadd.f32 %v2092, %v2988
        %v3213 = vadd.f32 %v2093, %v2989
        %v3214 = vadd.f32 %v2094, %v2990
        %v3215 = vadd.f32 %v2095, %v2991
        %v3216 = vadd.f32 %v2096, %v2992
        %v3217 = vadd.f32 %v2097, %v2993
        %v3218 = vadd.f32 %v2098, %v2994
        %v3219 = vadd.f32 %v2099, %v2995
        %v3220 = vadd.f32 %v2100, %v2996
        %v3221 = vadd.f32 %v2101, %v2997
        %v3222 = vadd.f32 %v2102, %v2998
        %v3223 = vadd.f32 %v2103, %v2999
        %v3224 = vadd.f32 %v2104, %v3000
        %v3225 = vadd.f32 %v2105, %v3001
        %v3226 = vadd.f32 %v2106, %v3002
        %v3227 = vadd.f32 %v2107, %v3003
        %v3228 = vadd.f32 %v2108, %v3004
        %v3229 = vadd.f32 %v2109, %v3005
        %v3230 = vadd.f32 %v2110, %v3006
        %v3231 = vadd.f32 %v2111, %v3007
        %v3232 = vadd.f32 %v2112, %v3008
        %v3233 = vadd.f32 %v2113, %v3009
        %v3234 = vadd.f32 %v2114, %v3010
        %v3235 = vadd.f32 %v2115, %v3011
        %v3236 = vadd.f32 %v2116, %v3012
        %v3237 = vadd.f32 %v2117, %v3013
        %v3238 = vadd.f32 %v2118, %v3014
        %v3239 = vadd.f32 %v2119, %v3015
        %v3240 = vadd.f32 %v2120, %v3016
        %v3241 = vadd.f32 %v2121, %v3017
        %v3242 = vadd.f32 %v2122, %v3018
        %v3243 = vadd.f32 %v2123, %v3019
        %v3244 = vadd.f32 %v2124, %v3020
        %v3245 = vadd.f32 %v2125, %v3021
        %v3246 = vadd.f32 %v2126, %v3022
        %v3247 = vadd.f32 %v2127, %v3023
        %v3248 = vadd.f32 %v2128, %v3024
        %v3249 = vadd.f32 %v2129, %v3025
        %v3250 = vadd.f32 %v2130, %v3026
        %v3251 = vadd.f32 %v2131, %v3027
        %v3252 = vadd.f32 %v2132, %v3028
        %v3253 = vadd.f32 %v2133, %v3029
        %v3254 = vadd.f32 %v2134, %v3030
        %v3255 = vadd.f32 %v2135, %v3031
        %v3256 = vadd.f32 %v2136, %v3032
        %v3257 = vadd.f32 %v2137, %v3033
        %v3258 = vadd.f32 %v2138, %v3034
        %v3259 = vadd.f32 %v2139, %v3035
        %v3260 = vadd.f32 %v2140, %v3036
        %v3261 = vadd.f32 %v2141, %v3037
        %v3262 = vadd.f32 %v2142, %v3038
        %v3263 = vadd.f32 %v2143, %v3039
        %v3264 = vadd.f32 %v2144, %v3040
        %v3265 = vadd.f32 %v2145, %v3041
        %v3266 = vadd.f32 %v2146, %v3042
        %v3267 = vadd.f32 %v2147, %v3043
        %v3268 = vadd.f32 %v2148, %v3044
        %v3269 = vadd.f32 %v2149, %v3045
        %v3270 = vadd.f32 %v2150, %v3046
        %v3271 = vadd.f32 %v2151, %v3047
        %v3272 = vadd.f32 %v2152, %v3048
        %v3273 = vadd.f32 %v2153, %v3049
        %v3274 = vadd.f32 %v2154, %v3050
        %v3275 = vadd.f32 %v2155, %v3051
        %v3276 = vadd.f32 %v2156, %v3052
        %v3277 = vadd.f32 %v2157, %v3053
        %v3278 = vadd.f32 %v2158, %v3054
        %v3279 = vadd.f32 %v2159, %v3055
        %v3280 = vadd.f32 %v2160, %v3056
        %v3281 = vadd.f32 %v2161, %v3057
        %v3282 = vadd.f32 %v2162, %v3058
        %v3283 = vadd.f32 %v2163, %v3059
        %v3284 = vadd.f32 %v2164, %v3060
        %v3285 = vadd.f32 %v2165, %v3061
        %v3286 = vadd.f32 %v2166, %v3062
        %v3287 = vadd.f32 %v2167, %v3063
        %v3288 = vadd.f32 %v2168, %v3064
        %v3289 = vadd.f32 %v2169, %v3065
        %v3290 = vadd.f32 %v2170, %v3066
        %v3291 = vadd.f32 %v2171, %v3067
        %v3292 = vadd.f32 %v2172, %v3068
        %v3293 = vadd.f32 %v2173, %v3069
        %v3294 = vadd.f32 %v2174, %v3070
        %v3295 = vadd.f32 %v2175, %v3071
        %v3296 = vadd.f32 %v2176, %v3072
        %v3297 = vadd.f32 %v2177, %v3073
        %v3298 = vadd.f32 %v2178, %v3074
        %v3299 = vadd.f32 %v2179, %v3075
        %v3300 = vadd.f32 %v2180, %v3076
        %v3301 = vadd.f32 %v2181, %v3077
        %v3302 = vadd.f32 %v2182, %v3078
        %v3303 = vadd.f32 %v2183, %v3079
        %v3304 = vadd.f32 %v2184, %v3080
        %v3305 = vadd.f32 %v2185, %v3081
        %v3306 = vadd.f32 %v2186, %v3082
        %v3307 = vadd.f32 %v2187, %v3083
        %v3308 = vadd.f32 %v2188, %v3084
        %v3309 = vadd.f32 %v2189, %v3085
        %v3310 = vadd.f32 %v2190, %v3086
        %v3311 = vadd.f32 %v2191, %v3087
        %v3312 = vadd.f32 %v2192, %v3088
        %v3313 = vadd.f32 %v2193, %v3089
        %v3314 = vadd.f32 %v2194, %v3090
        %v3315 = vadd.f32 %v2195, %v3091
        %v3316 = vadd.f32 %v2196, %v3092
        %v3317 = vadd.f32 %v2197, %v3093
        %v3318 = vadd.f32 %v2198, %v3094
        %v3319 = vadd.f32 %v2199, %v3095
        %v3320 = vadd.f32 %v2200, %v3096
        %v3321 = vadd.f32 %v2201, %v3097
        %v3322 = vadd.f32 %v2202, %v3098
        %v3323 = vadd.f32 %v2203, %v3099
        %v3324 = vadd.f32 %v2204, %v3100
        %v3325 = vadd.f32 %v2205, %v3101
        %v3326 = vadd.f32 %v2206, %v3102
        %v3327 = vadd.f32 %v2207, %v3103
        %v3328 = vadd.f32 %v2208, %v3104
        %v3329 = vadd.f32 %v2209, %v3105
        %v3330 = vadd.f32 %v2210, %v3106
        %v3331 = vadd.f32 %v2211, %v3107
        %v3332 = vadd.f32 %v2212, %v3108
        %v3333 = vadd.f32 %v2213, %v3109
        %v3334 = vadd.f32 %v2214, %v3110
        %v3335 = vadd.f32 %v2215, %v3111
        %v3336 = vadd.f32 %v2216, %v3112
        %v3337 = vadd.f32 %v2217, %v3113
        %v3338 = vadd.f32 %v2218, %v3114
        %v3339 = vadd.f32 %v2219, %v3115
        %v3340 = vadd.f32 %v2220, %v3116
        %v3341 = vadd.f32 %v2221, %v3117
        %v3342 = vadd.f32 %v2222, %v3118
        %v3343 = vadd.f32 %v2223, %v3119
        %v3344 = vadd.f32 %v2224, %v3120
        %v3345 = vadd.f32 %v2225, %v3121
        %v3346 = vadd.f32 %v2226, %v3122
        %v3347 = vadd.f32 %v2227, %v3123
        %v3348 = vadd.f32 %v2228, %v3124
        %v3349 = vadd.f32 %v2229, %v3125
        %v3350 = vadd.f32 %v2230, %v3126
        %v3351 = vadd.f32 %v2231, %v3127
        %v3352 = vadd.f32 %v2232, %v3128
        %v3353 = vadd.f32 %v2233, %v3129
        %v3354 = vadd.f32 %v2234, %v3130
        %v3355 = vadd.f32 %v2235, %v3131
        %v3356 = vadd.f32 %v2236, %v3132
        %v3357 = vadd.f32 %v2237, %v3133
        %v3358 = vadd.f32 %v2238, %v3134
        %v3359 = vadd.f32 %v2239, %v3135
        %v3360 = vadd.f32 %v2240, %v3136
        %v3361 = vadd.f32 %v2241, %v3137
        %v3362 = vadd.f32 %v2242, %v3138
        %v3363 = vadd.f32 %v2243, %v3139
        %v3364 = vadd.f32 %v2244, %v3140
        %v3365 = vadd.f32 %v2245, %v3141
        %v3366 = vadd.f32 %v2246, %v3142
        %v3367 = vadd.f32 %v2247, %v3143
        %v3368 = vadd.f32 %v2248, %v3144
        %v3369 = vadd.f32 %v2249, %v3145
        %v3370 = vadd.f32 %v2250, %v3146
        %v3371 = vadd.f32 %v2251, %v3147
        %v3372 = vadd.f32 %v2252, %v3148
        %v3373 = vadd.f32 %v2253, %v3149
        %v3374 = vadd.f32 %v2254, %v3150
        %v3375 = vadd.f32 %v2255, %v3151
        %v3376 = vadd.f32 %v2256, %v3152
        %v3377 = vadd.f32 %v2257, %v3153
        %v3378 = vadd.f32 %v2258, %v3154
        %v3379 = vadd.f32 %v2259, %v3155
        %v3380 = vadd.f32 %v2260, %v3156
        %v3381 = vadd.f32 %v2261, %v3157
        %v3382 = vadd.f32 %v2262, %v3158
        %v3383 = vadd.f32 %v2263, %v3159
        %v3384 = vadd.f32 %v2264, %v3160
        %v3385 = vadd.f32 %v2265, %v3161
        %v3386 = vadd.f32 %v2266, %v3162
        %v3387 = vadd.f32 %v2267, %v3163
        %v3388 = vadd.f32 %v2268, %v3164
        %v3389 = vadd.f32 %v2269, %v3165
        %v3390 = vadd.f32 %v2270, %v3166
        %v3391 = vadd.f32 %v2271, %v3167
        %v3392 = vadd.f32 %v2272, %v3168
        %v3393 = vadd.f32 %v2273, %v3169
        %v3394 = vadd.f32 %v2274, %v3170
        %v3395 = vadd.f32 %v2275, %v3171
        %v3396 = vadd.f32 %v2276, %v3172
        %v3397 = vadd.f32 %v2277, %v3173
        %v3398 = vadd.f32 %v2278, %v3174
        %v3399 = vadd.f32 %v2279, %v3175
        %v3400 = vadd.f32 %v2280, %v3176
        %v3401 = vadd.f32 %v2281, %v3177
        %v3402 = vadd.f32 %v2282, %v3178
        %v3403 = vadd.f32 %v2283, %v3179
        %v3404 = vadd.f32 %v2284, %v3180
        %v3405 = vadd.f32 %v1679, %v1685
        %v3406 = vadd.f32 %v1680, %v1686
        %v3407 = vadd.f32 %v1681, %v1687
        %v3408 = vadd.f32 %v1682, %v1688
        %v3409 = vadd.f32 %v1683, %v1689
        %v3410 = vadd.f32 %v1684, %v1690
        %v3411 = vadd.f32 %v1685, %v1691
        %v3412 = vadd.f32 %v1686, %v1692
        %v3413 = vadd.f32 %v1687, %v1693
        %v3414 = vadd.f32 %v1688, %v1694
        %v3415 = vadd.f32 %v1689, %v1695
        %v3416 = vadd.f32 %v1690, %v1696
        %v3417 = vadd.f32 %v1691, %v1697
        %v3418 = vadd.f32 %v1692, %v1698
        %v3419 = vadd.f32 %v1703, %v1709
        %v3420 = vadd.f32 %v1704, %v1710
        %v3421 = vadd.f32 %v1705, %v1711
        %v3422 = vadd.f32 %v1706, %v1712
        %v3423 = vadd.f32 %v1707, %v1713
        %v3424 = vadd.f32 %v1708, %v1714
        %v3425 = vadd.f32 %v1709, %v1715
        %v3426 = vadd.f32 %v1710, %v1716
        %v3427 = vadd.f32 %v1711, %v1717
        %v3428 = vadd.f32 %v1712, %v1718
        %v3429 = vadd.f32 %v1713, %v1719
        %v3430 = vadd.f32 %v1714, %v1720
        %v3431 = vadd.f32 %v1715, %v1721
        %v3432 = vadd.f32 %v1716, %v1722
        %v3433 = vadd.f32 %v1727, %v1733
        %v3434 = vadd.f32 %v1728, %v1734
        %v3435 = vadd.f32 %v1729, %v1735
        %v3436 = vadd.f32 %v1730, %v1736
        %v3437 = vadd.f32 %v1731, %v1737
        %v3438 = vadd.f32 %v1732, %v1738
        %v3439 = vadd.f32 %v1733, %v1739
        %v3440 = vadd.f32 %v1734, %v1740
        %v3441 = vadd.f32 %v1735, %v1741
        %v3442 = vadd.f32 %v1736, %v1742
        %v3443 = vadd.f32 %v1737, %v1743
        %v3444 = vadd.f32 %v1738, %v1744
        %v3445 = vadd.f32 %v1739, %v1745
        %v3446 = vadd.f32 %v1740, %v1746
        %v3447 = vadd.f32 %v1751, %v1757
        %v3448 = vadd.f32 %v1752, %v1758
        %v3449 = vadd.f32 %v1753, %v1759
        %v3450 = vadd.f32 %v1754, %v1760
        %v3451 = vadd.f32 %v1755, %v1761
        %v3452 = vadd.f32 %v1756, %v1762
        %v3453 = vadd.f32 %v1757, %v1763
        %v3454 = vadd.f32 %v1758, %v1764
        %v3455 = vadd.f32 %v1759, %v1765
        %v3456 = vadd.f32 %v1760, %v1766
        %v3457 = vadd.f32 %v1761, %v1767
        %v3458 = vadd.f32 %v1762, %v1768
        %v3459 = vadd.f32 %v1763, %v1769
        %v3460 = vadd.f32 %v1764, %v1770
        %v3461 = vadd.f32 %v1775, %v1781
        %v3462 = vadd.f32 %v1776, %v1782
        %v3463 = vadd.f32 %v1777, %v1783
        %v3464 = vadd.f32 %v1778, %v1784
        %v3465 = vadd.f32 %v1779, %v1785
        %v3466 = vadd.f32 %v1780, %v1786
        %v3467 = vadd.f32 %v1781, %v1787
        %v3468 = vadd.f32 %v1782, %v1788
        %v3469 = vadd.f32 %v1783, %v1789
        %v3470 = vadd.f32 %v1784, %v1790
        %v3471 = vadd.f32 %v1785, %v1791
        %v3472 = vadd.f32 %v1786, %v1792
        %v3473 = vadd.f32 %v1787, %v1793
        %v3474 = vadd.f32 %v1788, %v1794
        %v3475 = vadd.f32 %v1799, %v1805
        %v3476 = vadd.f32 %v1800, %v1806
        %v3477 = vadd.f32 %v1801, %v1807
        %v3478 = vadd.f32 %v1802, %v1808
        %v3479 = vadd.f32 %v1803, %v1809
        %v3480 = vadd.f32 %v1804, %v1810
        %v3481 = vadd.f32 %v1805, %v1811
        %v3482 = vadd.f32 %v1806, %v1812
        %v3483 = vadd.f32 %v1807, %v1813
        %v3484 = vadd.f32 %v1808, %v1814
        %v3485 = vadd.f32 %v1809, %v1815
        %v3486 = vadd.f32 %v1810, %v1816
        %v3487 = vadd.f32 %v1811, %v1817
        %v3488 = vadd.f32 %v1812, %v1818
        %v3489 = vadd.f32 %v1823, %v1829
        %v3490 = vadd.f32 %v1824, %v1830
        %v3491 = vadd.f32 %v1825, %v1831
        %v3492 = vadd.f32 %v1826, %v1832
        %v3493 = vadd.f32 %v1827, %v1833
        %v3494 = vadd.f32 %v1828, %v1834
        %v3495 = vadd.f32 %v1829, %v1835
        %v3496 = vadd.f32 %v1830, %v1836
        %v3497 = vadd.f32 %v1831, %v1837
        %v3498 = vadd.f32 %v1832, %v1838
        %v3499 = vadd.f32 %v1833, %v1839
        %v3500 = vadd.f32 %v1834, %v1840
        %v3501 = vadd.f32 %v1835, %v1841
        %v3502 = vadd.f32 %v1836, %v1842
        %v3503 = vadd.f32 %v1847, %v1853
        %v3504 = vadd.f32 %v1848, %v1854
        %v3505 = vadd.f32 %v1849, %v1855
        %v3506 = vadd.f32 %v1850, %v1856
        %v3507 = vadd.f32 %v1851, %v1857
        %v3508 = vadd.f32 %v1852, %v1858
        %v3509 = vadd.f32 %v1853, %v1859
        %v3510 = vadd.f32 %v1854, %v1860
        %v3511 = vadd.f32 %v1855, %v1861
        %v3512 = vadd.f32 %v1856, %v1862
        %v3513 = vadd.f32 %v1857, %v1863
        %v3514 = vadd.f32 %v1858, %v1864
        %v3515 = vadd.f32 %v1859, %v1865
        %v3516 = vadd.f32 %v1860, %v1866
        %v3517 = vadd.f32 %v1871, %v1877
        %v3518 = vadd.f32 %v1872, %v1878
        %v3519 = vadd.f32 %v1873, %v1879
        %v3520 = vadd.f32 %v1874, %v1880
        %v3521 = vadd.f32 %v1875, %v1881
        %v3522 = vadd.f32 %v1876, %v1882
        %v3523 = vadd.f32 %v1877, %v1883
        %v3524 = vadd.f32 %v1878, %v1884
        %v3525 = vadd.f32 %v1879, %v1885
        %v3526 = vadd.f32 %v1880, %v1886
        %v3527 = vadd.f32 %v1881, %v1887
        %v3528 = vadd.f32 %v1882, %v1888
        %v3529 = vadd.f32 %v1883, %v1889
        %v3530 = vadd.f32 %v1884, %v1890
        %v3531 = vadd.f32 %v1895, %v1901
        %v3532 = vadd.f32 %v1896, %v1902
        %v3533 = vadd.f32 %v1897, %v1903
        %v3534 = vadd.f32 %v1898, %v1904
        %v3535 = vadd.f32 %v1899, %v1905
        %v3536 = vadd.f32 %v1900, %v1906
        %v3537 = vadd.f32 %v1901, %v1907
        %v3538 = vadd.f32 %v1902, %v1908
        %v3539 = vadd.f32 %v1903, %v1909
        %v3540 = vadd.f32 %v1904, %v1910
        %v3541 = vadd.f32 %v1905, %v1911
        %v3542 = vadd.f32 %v1906, %v1912
        %v3543 = vadd.f32 %v1907, %v1913
        %v3544 = vadd.f32 %v1908, %v1914
        %v3545 = vadd.f32 %v1919, %v1925
        %v3546 = vadd.f32 %v1920, %v1926
        %v3547 = vadd.f32 %v1921, %v1927
        %v3548 = vadd.f32 %v1922, %v1928
        %v3549 = vadd.f32 %v1923, %v1929
        %v3550 = vadd.f32 %v1924, %v1930
        %v3551 = vadd.f32 %v1925, %v1931
        %v3552 = vadd.f32 %v1926, %v1932
        %v3553 = vadd.f32 %v1927, %v1933
        %v3554 = vadd.f32 %v1928, %v1934
        %v3555 = vadd.f32 %v1929, %v1935
        %v3556 = vadd.f32 %v1930, %v1936
        %v3557 = vadd.f32 %v1931, %v1937
        %v3558 = vadd.f32 %v1932, %v1938
        %v3559 = vadd.f32 %v1943, %v1949
        %v3560 = vadd.f32 %v1944, %v1950
        %v3561 = vadd.f32 %v1945, %v1951
        %v3562 = vadd.f32 %v1946, %v1952
        %v3563 = vadd.f32 %v1947, %v1953
        %v3564 = vadd.f32 %v1948, %v1954
        %v3565 = vadd.f32 %v1949, %v1955
        %v3566 = vadd.f32 %v1950, %v1956
        %v3567 = vadd.f32 %v1951, %v1957
        %v3568 = vadd.f32 %v1952, %v1958
        %v3569 = vadd.f32 %v1953, %v1959
        %v3570 = vadd.f32 %v1954, %v1960
        %v3571 = vadd.f32 %v1955, %v1961
        %v3572 = vadd.f32 %v1956, %v1962
        %v3573 = vadd.f32 %v1967, %v1973
        %v3574 = vadd.f32 %v1968, %v1974
        %v3575 = vadd.f32 %v1969, %v1975
        %v3576 = vadd.f32 %v1970, %v1976
        %v3577 = vadd.f32 %v1971, %v1977
        %v3578 = vadd.f32 %v1972, %v1978
        %v3579 = vadd.f32 %v1973, %v1979
        %v3580 = vadd.f32 %v1974, %v1980
        %v3581 = vadd.f32 %v1975, %v1981
        %v3582 = vadd.f32 %v1976, %v1982
        %v3583 = vadd.f32 %v1977, %v1983
        %v3584 = vadd.f32 %v1978, %v1984
        %v3585 = vadd.f32 %v1979, %v1985
        %v3586 = vadd.f32 %v1980, %v1986
        %v3587 = vadd.f32 %v1991, %v1997
        %v3588 = vadd.f32 %v1992, %v1998
        %v3589 = vadd.f32 %v1993, %v1999
        %v3590 = vadd.f32 %v1994, %v2000
        %v3591 = vadd.f32 %v1995, %v2001
        %v3592 = vadd.f32 %v1996, %v2002
        %v3593 = vadd.f32 %v1997, %v2003
        %v3594 = vadd.f32 %v1998, %v2004
        %v3595 = vadd.f32 %v1999, %v2005
        %v3596 = vadd.f32 %v2000, %v2006
        %v3597 = vadd.f32 %v2001, %v2007
        %v3598 = vadd.f32 %v2002, %v2008
        %v3599 = vadd.f32 %v2003, %v2009
        %v3600 = vadd.f32 %v2004, %v2010
        %v3601 = vadd.f32 %v2015, %v2021
        %v3602 = vadd.f32 %v2016, %v2022
        %v3603 = vadd.f32 %v2017, %v2023
        %v3604 = vadd.f32 %v2018, %v2024
        %v3605 = vadd.f32 %v2019, %v2025
        %v3606 = vadd.f32 %v2020, %v2026
        %v3607 = vadd.f32 %v2021, %v2027
        %v3608 = vadd.f32 %v2022, %v2028
        %v3609 = vadd.f32 %v2023, %v2029
        %v3610 = vadd.f32 %v2024, %v2030
        %v3611 = vadd.f32 %v2025, %v2031
        %v3612 = vadd.f32 %v2026, %v2032
        %v3613 = vadd.f32 %v2027, %v2033
        %v3614 = vadd.f32 %v2028, %v2034
        %v3615 = vadd.f32 %v2039, %v2045
        %v3616 = vadd.f32 %v2040, %v2046
        %v3617 = vadd.f32 %v2041, %v2047
        %v3618 = vadd.f32 %v2042, %v2048
        %v3619 = vadd.f32 %v2043, %v2049
        %v3620 = vadd.f32 %v2044, %v2050
        %v3621 = vadd.f32 %v2045, %v2051
        %v3622 = vadd.f32 %v2046, %v2052
        %v3623 = vadd.f32 %v2047, %v2053
        %v3624 = vadd.f32 %v2048, %v2054
        %v3625 = vadd.f32 %v2049, %v2055
        %v3626 = vadd.f32 %v2050, %v2056
        %v3627 = vadd.f32 %v2051, %v2057
        %v3628 = vadd.f32 %v2052, %v2058
        %v3629 = vmul.f32 %v3405, 0.04301196
        %v3630 = vmul.f32 %v3406, 0.04301196
        %v3631 = vmul.f32 %v3407, 0.04301196
        %v3632 = vmul.f32 %v3408, 0.04301196
        %v3633 = vmul.f32 %v3409, 0.04301196
        %v3634 = vmul.f32 %v3410, 0.04301196
        %v3635 = vmul.f32 %v3411, 0.04301196
        %v3636 = vmul.f32 %v3412, 0.04301196
        %v3637 = vmul.f32 %v3413, 0.04301196
        %v3638 = vmul.f32 %v3414, 0.04301196
        %v3639 = vmul.f32 %v3415, 0.04301196
        %v3640 = vmul.f32 %v3416, 0.04301196
        %v3641 = vmul.f32 %v3417, 0.04301196
        %v3642 = vmul.f32 %v3418, 0.04301196
        %v3643 = vmul.f32 %v3419, 0.04301196
        %v3644 = vmul.f32 %v3420, 0.04301196
        %v3645 = vmul.f32 %v3421, 0.04301196
        %v3646 = vmul.f32 %v3422, 0.04301196
        %v3647 = vmul.f32 %v3423, 0.04301196
        %v3648 = vmul.f32 %v3424, 0.04301196
        %v3649 = vmul.f32 %v3425, 0.04301196
        %v3650 = vmul.f32 %v3426, 0.04301196
        %v3651 = vmul.f32 %v3427, 0.04301196
        %v3652 = vmul.f32 %v3428, 0.04301196
        %v3653 = vmul.f32 %v3429, 0.04301196
        %v3654 = vmul.f32 %v3430, 0.04301196
        %v3655 = vmul.f32 %v3431, 0.04301196
        %v3656 = vmul.f32 %v3432, 0.04301196
        %v3657 = vmul.f32 %v3433, 0.04301196
        %v3658 = vmul.f32 %v3434, 0.04301196
        %v3659 = vmul.f32 %v3435, 0.04301196
        %v3660 = vmul.f32 %v3436, 0.04301196
        %v3661 = vmul.f32 %v3437, 0.04301196
        %v3662 = vmul.f32 %v3438, 0.04301196
        %v3663 = vmul.f32 %v3439, 0.04301196
        %v3664 = vmul.f32 %v3440, 0.04301196
        %v3665 = vmul.f32 %v3441, 0.04301196
        %v3666 = vmul.f32 %v3442, 0.04301196
        %v3667 = vmul.f32 %v3443, 0.04301196
        %v3668 = vmul.f32 %v3444, 0.04301196
        %v3669 = vmul.f32 %v3445, 0.04301196
        %v3670 = vmul.f32 %v3446, 0.04301196
        %v3671 = vmul.f32 %v3447, 0.04301196
        %v3672 = vmul.f32 %v3448, 0.04301196
        %v3673 = vmul.f32 %v3449, 0.04301196
        %v3674 = vmul.f32 %v3450, 0.04301196
        %v3675 = vmul.f32 %v3451, 0.04301196
        %v3676 = vmul.f32 %v3452, 0.04301196
        %v3677 = vmul.f32 %v3453, 0.04301196
        %v3678 = vmul.f32 %v3454, 0.04301196
        %v3679 = vmul.f32 %v3455, 0.04301196
        %v3680 = vmul.f32 %v3456, 0.04301196
        %v3681 = vmul.f32 %v3457, 0.04301196
        %v3682 = vmul.f32 %v3458, 0.04301196
        %v3683 = vmul.f32 %v3459, 0.04301196
        %v3684 = vmul.f32 %v3460, 0.04301196
        %v3685 = vmul.f32 %v3461, 0.04301196
        %v3686 = vmul.f32 %v3462, 0.04301196
        %v3687 = vmul.f32 %v3463, 0.04301196
        %v3688 = vmul.f32 %v3464, 0.04301196
        %v3689 = vmul.f32 %v3465, 0.04301196
        %v3690 = vmul.f32 %v3466, 0.04301196
        %v3691 = vmul.f32 %v3467, 0.04301196
        %v3692 = vmul.f32 %v3468, 0.04301196
        %v3693 = vmul.f32 %v3469, 0.04301196
        %v3694 = vmul.f32 %v3470, 0.04301196
        %v3695 = vmul.f32 %v3471, 0.04301196
        %v3696 = vmul.f32 %v3472, 0.04301196
        %v3697 = vmul.f32 %v3473, 0.04301196
        %v3698 = vmul.f32 %v3474, 0.04301196
        %v3699 = vmul.f32 %v3475, 0.04301196
        %v3700 = vmul.f32 %v3476, 0.04301196
        %v3701 = vmul.f32 %v3477, 0.04301196
        %v3702 = vmul.f32 %v3478, 0.04301196
        %v3703 = vmul.f32 %v3479, 0.04301196
        %v3704 = vmul.f32 %v3480, 0.04301196
        %v3705 = vmul.f32 %v3481, 0.04301196
        %v3706 = vmul.f32 %v3482, 0.04301196
        %v3707 = vmul.f32 %v3483, 0.04301196
        %v3708 = vmul.f32 %v3484, 0.04301196
        %v3709 = vmul.f32 %v3485, 0.04301196
        %v3710 = vmul.f32 %v3486, 0.04301196
        %v3711 = vmul.f32 %v3487, 0.04301196
        %v3712 = vmul.f32 %v3488, 0.04301196
        %v3713 = vmul.f32 %v3489, 0.04301196
        %v3714 = vmul.f32 %v3490, 0.04301196
        %v3715 = vmul.f32 %v3491, 0.04301196
        %v3716 = vmul.f32 %v3492, 0.04301196
        %v3717 = vmul.f32 %v3493, 0.04301196
        %v3718 = vmul.f32 %v3494, 0.04301196
        %v3719 = vmul.f32 %v3495, 0.04301196
        %v3720 = vmul.f32 %v3496, 0.04301196
        %v3721 = vmul.f32 %v3497, 0.04301196
        %v3722 = vmul.f32 %v3498, 0.04301196
        %v3723 = vmul.f32 %v3499, 0.04301196
        %v3724 = vmul.f32 %v3500, 0.04301196
        %v3725 = vmul.f32 %v3501, 0.04301196
        %v3726 = vmul.f32 %v3502, 0.04301196
        %v3727 = vmul.f32 %v3503, 0.04301196
        %v3728 = vmul.f32 %v3504, 0.04301196
        %v3729 = vmul.f32 %v3505, 0.04301196
        %v3730 = vmul.f32 %v3506, 0.04301196
        %v3731 = vmul.f32 %v3507, 0.04301196
        %v3732 = vmul.f32 %v3508, 0.04301196
        %v3733 = vmul.f32 %v3509, 0.04301196
        %v3734 = vmul.f32 %v3510, 0.04301196
        %v3735 = vmul.f32 %v3511, 0.04301196
        %v3736 = vmul.f32 %v3512, 0.04301196
        %v3737 = vmul.f32 %v3513, 0.04301196
        %v3738 = vmul.f32 %v3514, 0.04301196
        %v3739 = vmul.f32 %v3515, 0.04301196
        %v3740 = vmul.f32 %v3516, 0.04301196
        %v3741 = vmul.f32 %v3517, 0.04301196
        %v3742 = vmul.f32 %v3518, 0.04301196
        %v3743 = vmul.f32 %v3519, 0.04301196
        %v3744 = vmul.f32 %v3520, 0.04301196
        %v3745 = vmul.f32 %v3521, 0.04301196
        %v3746 = vmul.f32 %v3522, 0.04301196
        %v3747 = vmul.f32 %v3523, 0.04301196
        %v3748 = vmul.f32 %v3524, 0.04301196
        %v3749 = vmul.f32 %v3525, 0.04301196
        %v3750 = vmul.f32 %v3526, 0.04301196
        %v3751 = vmul.f32 %v3527, 0.04301196
        %v3752 = vmul.f32 %v3528, 0.04301196
        %v3753 = vmul.f32 %v3529, 0.04301196
        %v3754 = vmul.f32 %v3530, 0.04301196
        %v3755 = vmul.f32 %v3531, 0.04301196
        %v3756 = vmul.f32 %v3532, 0.04301196
        %v3757 = vmul.f32 %v3533, 0.04301196
        %v3758 = vmul.f32 %v3534, 0.04301196
        %v3759 = vmul.f32 %v3535, 0.04301196
        %v3760 = vmul.f32 %v3536, 0.04301196
        %v3761 = vmul.f32 %v3537, 0.04301196
        %v3762 = vmul.f32 %v3538, 0.04301196
        %v3763 = vmul.f32 %v3539, 0.04301196
        %v3764 = vmul.f32 %v3540, 0.04301196
        %v3765 = vmul.f32 %v3541, 0.04301196
        %v3766 = vmul.f32 %v3542, 0.04301196
        %v3767 = vmul.f32 %v3543, 0.04301196
        %v3768 = vmul.f32 %v3544, 0.04301196
        %v3769 = vmul.f32 %v3545, 0.04301196
        %v3770 = vmul.f32 %v3546, 0.04301196
        %v3771 = vmul.f32 %v3547, 0.04301196
        %v3772 = vmul.f32 %v3548, 0.04301196
        %v3773 = vmul.f32 %v3549, 0.04301196
        %v3774 = vmul.f32 %v3550, 0.04301196
        %v3775 = vmul.f32 %v3551, 0.04301196
        %v3776 = vmul.f32 %v3552, 0.04301196
        %v3777 = vmul.f32 %v3553, 0.04301196
        %v3778 = vmul.f32 %v3554, 0.04301196
        %v3779 = vmul.f32 %v3555, 0.04301196
        %v3780 = vmul.f32 %v3556, 0.04301196
        %v3781 = vmul.f32 %v3557, 0.04301196
        %v3782 = vmul.f32 %v3558, 0.04301196
        %v3783 = vmul.f32 %v3559, 0.04301196
        %v3784 = vmul.f32 %v3560, 0.04301196
        %v3785 = vmul.f32 %v3561, 0.04301196
        %v3786 = vmul.f32 %v3562, 0.04301196
        %v3787 = vmul.f32 %v3563, 0.04301196
        %v3788 = vmul.f32 %v3564, 0.04301196
        %v3789 = vmul.f32 %v3565, 0.04301196
        %v3790 = vmul.f32 %v3566, 0.04301196
        %v3791 = vmul.f32 %v3567, 0.04301196
        %v3792 = vmul.f32 %v3568, 0.04301196
        %v3793 = vmul.f32 %v3569, 0.04301196
        %v3794 = vmul.f32 %v3570, 0.04301196
        %v3795 = vmul.f32 %v3571, 0.04301196
        %v3796 = vmul.f32 %v3572, 0.04301196
        %v3797 = vmul.f32 %v3573, 0.04301196
        %v3798 = vmul.f32 %v3574, 0.04301196
        %v3799 = vmul.f32 %v3575, 0.04301196
        %v3800 = vmul.f32 %v3576, 0.04301196
        %v3801 = vmul.f32 %v3577, 0.04301196
        %v3802 = vmul.f32 %v3578, 0.04301196
        %v3803 = vmul.f32 %v3579, 0.04301196
        %v3804 = vmul.f32 %v3580, 0.04301196
        %v3805 = vmul.f32 %v3581, 0.04301196
        %v3806 = vmul.f32 %v3582, 0.04301196
        %v3807 = vmul.f32 %v3583, 0.04301196
        %v3808 = vmul.f32 %v3584, 0.04301196
        %v3809 = vmul.f32 %v3585, 0.04301196
        %v3810 = vmul.f32 %v3586, 0.04301196
        %v3811 = vmul.f32 %v3587, 0.04301196
        %v3812 = vmul.f32 %v3588, 0.04301196
        %v3813 = vmul.f32 %v3589, 0.04301196
        %v3814 = vmul.f32 %v3590, 0.04301196
        %v3815 = vmul.f32 %v3591, 0.04301196
        %v3816 = vmul.f32 %v3592, 0.04301196
        %v3817 = vmul.f32 %v3593, 0.04301196
        %v3818 = vmul.f32 %v3594, 0.04301196
        %v3819 = vmul.f32 %v3595, 0.04301196
        %v3820 = vmul.f32 %v3596, 0.04301196
        %v3821 = vmul.f32 %v3597, 0.04301196
        %v3822 = vmul.f32 %v3598, 0.04301196
        %v3823 = vmul.f32 %v3599, 0.04301196
        %v3824 = vmul.f32 %v3600, 0.04301196
        %v3825 = vmul.f32 %v3601, 0.04301196
        %v3826 = vmul.f32 %v3602, 0.04301196
        %v3827 = vmul.f32 %v3603, 0.04301196
        %v3828 = vmul.f32 %v3604, 0.04301196
        %v3829 = vmul.f32 %v3605, 0.04301196
        %v3830 = vmul.f32 %v3606, 0.04301196
        %v3831 = vmul.f32 %v3607, 0.04301196
        %v3832 = vmul.f32 %v3608, 0.04301196
        %v3833 = vmul.f32 %v3609, 0.04301196
        %v3834 = vmul.f32 %v3610, 0.04301196
        %v3835 = vmul.f32 %v3611, 0.04301196
        %v3836 = vmul.f32 %v3612, 0.04301196
        %v3837 = vmul.f32 %v3613, 0.04301196
        %v3838 = vmul.f32 %v3614, 0.04301196
        %v3839 = vmul.f32 %v3615, 0.04301196
        %v3840 = vmul.f32 %v3616, 0.04301196
        %v3841 = vmul.f32 %v3617, 0.04301196
        %v3842 = vmul.f32 %v3618, 0.04301196
        %v3843 = vmul.f32 %v3619, 0.04301196
        %v3844 = vmul.f32 %v3620, 0.04301196
        %v3845 = vmul.f32 %v3621, 0.04301196
        %v3846 = vmul.f32 %v3622, 0.04301196
        %v3847 = vmul.f32 %v3623, 0.04301196
        %v3848 = vmul.f32 %v3624, 0.04301196
        %v3849 = vmul.f32 %v3625, 0.04301196
        %v3850 = vmul.f32 %v3626, 0.04301196
        %v3851 = vmul.f32 %v3627, 0.04301196
        %v3852 = vmul.f32 %v3628, 0.04301196
        %v3853 = vadd.f32 %v2509, %v3629
        %v3854 = vadd.f32 %v2510, %v3630
        %v3855 = vadd.f32 %v2511, %v3631
        %v3856 = vadd.f32 %v2512, %v3632
        %v3857 = vadd.f32 %v2513, %v3633
        %v3858 = vadd.f32 %v2514, %v3634
        %v3859 = vadd.f32 %v2515, %v3635
        %v3860 = vadd.f32 %v2516, %v3636
        %v3861 = vadd.f32 %v2517, %v3637
        %v3862 = vadd.f32 %v2518, %v3638
        %v3863 = vadd.f32 %v2519, %v3639
        %v3864 = vadd.f32 %v2520, %v3640
        %v3865 = vadd.f32 %v2521, %v3641
        %v3866 = vadd.f32 %v2522, %v3642
        %v3867 = vadd.f32 %v2523, %v3643
        %v3868 = vadd.f32 %v2524, %v3644
        %v3869 = vadd.f32 %v2525, %v3645
        %v3870 = vadd.f32 %v2526, %v3646
        %v3871 = vadd.f32 %v2527, %v3647
        %v3872 = vadd.f32 %v2528, %v3648
        %v3873 = vadd.f32 %v2529, %v3649
        %v3874 = vadd.f32 %v2530, %v3650
        %v3875 = vadd.f32 %v2531, %v3651
        %v3876 = vadd.f32 %v2532, %v3652
        %v3877 = vadd.f32 %v2533, %v3653
        %v3878 = vadd.f32 %v2534, %v3654
        %v3879 = vadd.f32 %v2535, %v3655
        %v3880 = vadd.f32 %v2536, %v3656
        %v3881 = vadd.f32 %v2537, %v3657
        %v3882 = vadd.f32 %v2538, %v3658
        %v3883 = vadd.f32 %v2539, %v3659
        %v3884 = vadd.f32 %v2540, %v3660
        %v3885 = vadd.f32 %v2541, %v3661
        %v3886 = vadd.f32 %v2542, %v3662
        %v3887 = vadd.f32 %v2543, %v3663
        %v3888 = vadd.f32 %v2544, %v3664
        %v3889 = vadd.f32 %v2545, %v3665
        %v3890 = vadd.f32 %v2546, %v3666
        %v3891 = vadd.f32 %v2547, %v3667
        %v3892 = vadd.f32 %v2548, %v3668
        %v3893 = vadd.f32 %v2549, %v3669
        %v3894 = vadd.f32 %v2550, %v3670
        %v3895 = vadd.f32 %v2551, %v3671
        %v3896 = vadd.f32 %v2552, %v3672
        %v3897 = vadd.f32 %v2553, %v3673
        %v3898 = vadd.f32 %v2554, %v3674
        %v3899 = vadd.f32 %v2555, %v3675
        %v3900 = vadd.f32 %v2556, %v3676
        %v3901 = vadd.f32 %v2557, %v3677
        %v3902 = vadd.f32 %v2558, %v3678
        %v3903 = vadd.f32 %v2559, %v3679
        %v3904 = vadd.f32 %v2560, %v3680
        %v3905 = vadd.f32 %v2561, %v3681
        %v3906 = vadd.f32 %v2562, %v3682
        %v3907 = vadd.f32 %v2563, %v3683
        %v3908 = vadd.f32 %v2564, %v3684
        %v3909 = vadd.f32 %v2565, %v3685
        %v3910 = vadd.f32 %v2566, %v3686
        %v3911 = vadd.f32 %v2567, %v3687
        %v3912 = vadd.f32 %v2568, %v3688
        %v3913 = vadd.f32 %v2569, %v3689
        %v3914 = vadd.f32 %v2570, %v3690
        %v3915 = vadd.f32 %v2571, %v3691
        %v3916 = vadd.f32 %v2572, %v3692
        %v3917 = vadd.f32 %v2573, %v3693
        %v3918 = vadd.f32 %v2574, %v3694
        %v3919 = vadd.f32 %v2575, %v3695
        %v3920 = vadd.f32 %v2576, %v3696
        %v3921 = vadd.f32 %v2577, %v3697
        %v3922 = vadd.f32 %v2578, %v3698
        %v3923 = vadd.f32 %v2579, %v3699
        %v3924 = vadd.f32 %v2580, %v3700
        %v3925 = vadd.f32 %v2581, %v3701
        %v3926 = vadd.f32 %v2582, %v3702
        %v3927 = vadd.f32 %v2583, %v3703
        %v3928 = vadd.f32 %v2584, %v3704
        %v3929 = vadd.f32 %v2585, %v3705
        %v3930 = vadd.f32 %v2586, %v3706
        %v3931 = vadd.f32 %v2587, %v3707
        %v3932 = vadd.f32 %v2588, %v3708
        %v3933 = vadd.f32 %v2589, %v3709
        %v3934 = vadd.f32 %v2590, %v3710
        %v3935 = vadd.f32 %v2591, %v3711
        %v3936 = vadd.f32 %v2592, %v3712
        %v3937 = vadd.f32 %v2593, %v3713
        %v3938 = vadd.f32 %v2594, %v3714
        %v3939 = vadd.f32 %v2595, %v3715
        %v3940 = vadd.f32 %v2596, %v3716
        %v3941 = vadd.f32 %v2597, %v3717
        %v3942 = vadd.f32 %v2598, %v3718
        %v3943 = vadd.f32 %v2599, %v3719
        %v3944 = vadd.f32 %v2600, %v3720
        %v3945 = vadd.f32 %v2601, %v3721
        %v3946 = vadd.f32 %v2602, %v3722
        %v3947 = vadd.f32 %v2603, %v3723
        %v3948 = vadd.f32 %v2604, %v3724
        %v3949 = vadd.f32 %v2605, %v3725
        %v3950 = vadd.f32 %v2606, %v3726
        %v3951 = vadd.f32 %v2607, %v3727
        %v3952 = vadd.f32 %v2608, %v3728
        %v3953 = vadd.f32 %v2609, %v3729
        %v3954 = vadd.f32 %v2610, %v3730
        %v3955 = vadd.f32 %v2611, %v3731
        %v3956 = vadd.f32 %v2612, %v3732
        %v3957 = vadd.f32 %v2613, %v3733
        %v3958 = vadd.f32 %v2614, %v3734
        %v3959 = vadd.f32 %v2615, %v3735
        %v3960 = vadd.f32 %v2616, %v3736
        %v3961 = vadd.f32 %v2617, %v3737
        %v3962 = vadd.f32 %v2618, %v3738
        %v3963 = vadd.f32 %v2619, %v3739
        %v3964 = vadd.f32 %v2620, %v3740
        %v3965 = vadd.f32 %v2621, %v3741
        %v3966 = vadd.f32 %v2622, %v3742
        %v3967 = vadd.f32 %v2623, %v3743
        %v3968 = vadd.f32 %v2624, %v3744
        %v3969 = vadd.f32 %v2625, %v3745
        %v3970 = vadd.f32 %v2626, %v3746
        %v3971 = vadd.f32 %v2627, %v3747
        %v3972 = vadd.f32 %v2628, %v3748
        %v3973 = vadd.f32 %v2629, %v3749
        %v3974 = vadd.f32 %v2630, %v3750
        %v3975 = vadd.f32 %v2631, %v3751
        %v3976 = vadd.f32 %v2632, %v3752
        %v3977 = vadd.f32 %v2633, %v3753
        %v3978 = vadd.f32 %v2634, %v3754
        %v3979 = vadd.f32 %v2635, %v3755
        %v3980 = vadd.f32 %v2636, %v3756
        %v3981 = vadd.f32 %v2637, %v3757
        %v3982 = vadd.f32 %v2638, %v3758
        %v3983 = vadd.f32 %v2639, %v3759
        %v3984 = vadd.f32 %v2640, %v3760
        %v3985 = vadd.f32 %v2641, %v3761
        %v3986 = vadd.f32 %v2642, %v3762
        %v3987 = vadd.f32 %v2643, %v3763
        %v3988 = vadd.f32 %v2644, %v3764
        %v3989 = vadd.f32 %v2645, %v3765
        %v3990 = vadd.f32 %v2646, %v3766
        %v3991 = vadd.f32 %v2647, %v3767
        %v3992 = vadd.f32 %v2648, %v3768
        %v3993 = vadd.f32 %v2649, %v3769
        %v3994 = vadd.f32 %v2650, %v3770
        %v3995 = vadd.f32 %v2651, %v3771
        %v3996 = vadd.f32 %v2652, %v3772
        %v3997 = vadd.f32 %v2653, %v3773
        %v3998 = vadd.f32 %v2654, %v3774
        %v3999 = vadd.f32 %v2655, %v3775
        %v4000 = vadd.f32 %v2656, %v3776
        %v4001 = vadd.f32 %v2657, %v3777
        %v4002 = vadd.f32 %v2658, %v3778
        %v4003 = vadd.f32 %v2659, %v3779
        %v4004 = vadd.f32 %v2660, %v3780
        %v4005 = vadd.f32 %v2661, %v3781
        %v4006 = vadd.f32 %v2662, %v3782
        %v4007 = vadd.f32 %v2663, %v3783
        %v4008 = vadd.f32 %v2664, %v3784
        %v4009 = vadd.f32 %v2665, %v3785
        %v4010 = vadd.f32 %v2666, %v3786
        %v4011 = vadd.f32 %v2667, %v3787
        %v4012 = vadd.f32 %v2668, %v3788
        %v4013 = vadd.f32 %v2669, %v3789
        %v4014 = vadd.f32 %v2670, %v3790
        %v4015 = vadd.f32 %v2671, %v3791
        %v4016 = vadd.f32 %v2672, %v3792
        %v4017 = vadd.f32 %v2673, %v3793
        %v4018 = vadd.f32 %v2674, %v3794
        %v4019 = vadd.f32 %v2675, %v3795
        %v4020 = vadd.f32 %v2676, %v3796
        %v4021 = vadd.f32 %v2677, %v3797
        %v4022 = vadd.f32 %v2678, %v3798
        %v4023 = vadd.f32 %v2679, %v3799
        %v4024 = vadd.f32 %v2680, %v3800
        %v4025 = vadd.f32 %v2681, %v3801
        %v4026 = vadd.f32 %v2682, %v3802
        %v4027 = vadd.f32 %v2683, %v3803
        %v4028 = vadd.f32 %v2684, %v3804
        %v4029 = vadd.f32 %v2685, %v3805
        %v4030 = vadd.f32 %v2686, %v3806
        %v4031 = vadd.f32 %v2687, %v3807
        %v4032 = vadd.f32 %v2688, %v3808
        %v4033 = vadd.f32 %v2689, %v3809
        %v4034 = vadd.f32 %v2690, %v3810
        %v4035 = vadd.f32 %v2691, %v3811
        %v4036 = vadd.f32 %v2692, %v3812
        %v4037 = vadd.f32 %v2693, %v3813
        %v4038 = vadd.f32 %v2694, %v3814
        %v4039 = vadd.f32 %v2695, %v3815
        %v4040 = vadd.f32 %v2696, %v3816
        %v4041 = vadd.f32 %v2697, %v3817
        %v4042 = vadd.f32 %v2698, %v3818
        %v4043 = vadd.f32 %v2699, %v3819
        %v4044 = vadd.f32 %v2700, %v3820
        %v4045 = vadd.f32 %v2701, %v3821
        %v4046 = vadd.f32 %v2702, %v3822
        %v4047 = vadd.f32 %v2703, %v3823
        %v4048 = vadd.f32 %v2704, %v3824
        %v4049 = vadd.f32 %v2705, %v3825
        %v4050 = vadd.f32 %v2706, %v3826
        %v4051 = vadd.f32 %v2707, %v3827
        %v4052 = vadd.f32 %v2708, %v3828
        %v4053 = vadd.f32 %v2709, %v3829
        %v4054 = vadd.f32 %v2710, %v3830
        %v4055 = vadd.f32 %v2711, %v3831
        %v4056 = vadd.f32 %v2712, %v3832
        %v4057 = vadd.f32 %v2713, %v3833
        %v4058 = vadd.f32 %v2714, %v3834
        %v4059 = vadd.f32 %v2715, %v3835
        %v4060 = vadd.f32 %v2716, %v3836
        %v4061 = vadd.f32 %v2717, %v3837
        %v4062 = vadd.f32 %v2718, %v3838
        %v4063 = vadd.f32 %v2719, %v3839
        %v4064 = vadd.f32 %v2720, %v3840
        %v4065 = vadd.f32 %v2721, %v3841
        %v4066 = vadd.f32 %v2722, %v3842
        %v4067 = vadd.f32 %v2723, %v3843
        %v4068 = vadd.f32 %v2724, %v3844
        %v4069 = vadd.f32 %v2725, %v3845
        %v4070 = vadd.f32 %v2726, %v3846
        %v4071 = vadd.f32 %v2727, %v3847
        %v4072 = vadd.f32 %v2728, %v3848
        %v4073 = vadd.f32 %v2729, %v3849
        %v4074 = vadd.f32 %v2730, %v3850
        %v4075 = vadd.f32 %v2731, %v3851
        %v4076 = vadd.f32 %v2732, %v3852
        %v4077 = vadd.f32 %v1680, %v1684
        %v4078 = vadd.f32 %v1681, %v1685
        %v4079 = vadd.f32 %v1682, %v1686
        %v4080 = vadd.f32 %v1683, %v1687
        %v4081 = vadd.f32 %v1684, %v1688
        %v4082 = vadd.f32 %v1685, %v1689
        %v4083 = vadd.f32 %v1686, %v1690
        %v4084 = vadd.f32 %v1687, %v1691
        %v4085 = vadd.f32 %v1688, %v1692
        %v4086 = vadd.f32 %v1689, %v1693
        %v4087 = vadd.f32 %v1690, %v1694
        %v4088 = vadd.f32 %v1691, %v1695
        %v4089 = vadd.f32 %v1692, %v1696
        %v4090 = vadd.f32 %v1693, %v1697
        %v4091 = vadd.f32 %v1704, %v1708
        %v4092 = vadd.f32 %v1705, %v1709
        %v4093 = vadd.f32 %v1706, %v1710
        %v4094 = vadd.f32 %v1707, %v1711
        %v4095 = vadd.f32 %v1708, %v1712
        %v4096 = vadd.f32 %v1709, %v1713
        %v4097 = vadd.f32 %v1710, %v1714
        %v4098 = vadd.f32 %v1711, %v1715
        %v4099 = vadd.f32 %v1712, %v1716
        %v4100 = vadd.f32 %v1713, %v1717
        %v4101 = vadd.f32 %v1714, %v1718
        %v4102 = vadd.f32 %v1715, %v1719
        %v4103 = vadd.f32 %v1716, %v1720
        %v4104 = vadd.f32 %v1717, %v1721
        %v4105 = vadd.f32 %v1728, %v1732
        %v4106 = vadd.f32 %v1729, %v1733
        %v4107 = vadd.f32 %v1730, %v1734
        %v4108 = vadd.f32 %v1731, %v1735
        %v4109 = vadd.f32 %v1732, %v1736
        %v4110 = vadd.f32 %v1733, %v1737
        %v4111 = vadd.f32 %v1734, %v1738
        %v4112 = vadd.f32 %v1735, %v1739
        %v4113 = vadd.f32 %v1736, %v1740
        %v4114 = vadd.f32 %v1737, %v1741
        %v4115 = vadd.f32 %v1738, %v1742
        %v4116 = vadd.f32 %v1739, %v1743
        %v4117 = vadd.f32 %v1740, %v1744
        %v4118 = vadd.f32 %v1741, %v1745
        %v4119 = vadd.f32 %v1752, %v1756
        %v4120 = vadd.f32 %v1753, %v1757
        %v4121 = vadd.f32 %v1754, %v1758
        %v4122 = vadd.f32 %v1755, %v1759
        %v4123 = vadd.f32 %v1756, %v1760
        %v4124 = vadd.f32 %v1757, %v1761
        %v4125 = vadd.f32 %v1758, %v1762
        %v4126 = vadd.f32 %v1759, %v1763
        %v4127 = vadd.f32 %v1760, %v1764
        %v4128 = vadd.f32 %v1761, %v1765
        %v4129 = vadd.f32 %v1762, %v1766
        %v4130 = vadd.f32 %v1763, %v1767
        %v4131 = vadd.f32 %v1764, %v1768
        %v4132 = vadd.f32 %v1765, %v1769
        %v4133 = vadd.f32 %v1776, %v1780
        %v4134 = vadd.f32 %v1777, %v1781
        %v4135 = vadd.f32 %v1778, %v1782
        %v4136 = vadd.f32 %v1779, %v1783
        %v4137 = vadd.f32 %v1780, %v1784
        %v4138 = vadd.f32 %v1781, %v1785
        %v4139 = vadd.f32 %v1782, %v1786
        %v4140 = vadd.f32 %v1783, %v1787
        %v4141 = vadd.f32 %v1784, %v1788
        %v4142 = vadd.f32 %v1785, %v1789
        %v4143 = vadd.f32 %v1786, %v1790
        %v4144 = vadd.f32 %v1787, %v1791
        %v4145 = vadd.f32 %v1788, %v1792
        %v4146 = vadd.f32 %v1789, %v1793
        %v4147 = vadd.f32 %v1800, %v1804
        %v4148 = vadd.f32 %v1801, %v1805
        %v4149 = vadd.f32 %v1802, %v1806
        %v4150 = vadd.f32 %v1803, %v1807
        %v4151 = vadd.f32 %v1804, %v1808
        %v4152 = vadd.f32 %v1805, %v1809
        %v4153 = vadd.f32 %v1806, %v1810
        %v4154 = vadd.f32 %v1807, %v1811
        %v4155 = vadd.f32 %v1808, %v1812
        %v4156 = vadd.f32 %v1809, %v1813
        %v4157 = vadd.f32 %v1810, %v1814
        %v4158 = vadd.f32 %v1811, %v1815
        %v4159 = vadd.f32 %v1812, %v1816
        %v4160 = vadd.f32 %v1813, %v1817
        %v4161 = vadd.f32 %v1824, %v1828
        %v4162 = vadd.f32 %v1825, %v1829
        %v4163 = vadd.f32 %v1826, %v1830
        %v4164 = vadd.f32 %v1827, %v1831
        %v4165 = vadd.f32 %v1828, %v1832
        %v4166 = vadd.f32 %v1829, %v1833
        %v4167 = vadd.f32 %v1830, %v1834
        %v4168 = vadd.f32 %v1831, %v1835
        %v4169 = vadd.f32 %v1832, %v1836
        %v4170 = vadd.f32 %v1833, %v1837
        %v4171 = vadd.f32 %v1834, %v1838
        %v4172 = vadd.f32 %v1835, %v1839
        %v4173 = vadd.f32 %v1836, %v1840
        %v4174 = vadd.f32 %v1837, %v1841
        %v4175 = vadd.f32 %v1848, %v1852
        %v4176 = vadd.f32 %v1849, %v1853
        %v4177 = vadd.f32 %v1850, %v1854
        %v4178 = vadd.f32 %v1851, %v1855
        %v4179 = vadd.f32 %v1852, %v1856
        %v4180 = vadd.f32 %v1853, %v1857
        %v4181 = vadd.f32 %v1854, %v1858
        %v4182 = vadd.f32 %v1855, %v1859
        %v4183 = vadd.f32 %v1856, %v1860
        %v4184 = vadd.f32 %v1857, %v1861
        %v4185 = vadd.f32 %v1858, %v1862
        %v4186 = vadd.f32 %v1859, %v1863
        %v4187 = vadd.f32 %v1860, %v1864
        %v4188 = vadd.f32 %v1861, %v1865
        %v4189 = vadd.f32 %v1872, %v1876
        %v4190 = vadd.f32 %v1873, %v1877
        %v4191 = vadd.f32 %v1874, %v1878
        %v4192 = vadd.f32 %v1875, %v1879
        %v4193 = vadd.f32 %v1876, %v1880
        %v4194 = vadd.f32 %v1877, %v1881
        %v4195 = vadd.f32 %v1878, %v1882
        %v4196 = vadd.f32 %v1879, %v1883
        %v4197 = vadd.f32 %v1880, %v1884
        %v4198 = vadd.f32 %v1881, %v1885
        %v4199 = vadd.f32 %v1882, %v1886
        %v4200 = vadd.f32 %v1883, %v1887
        %v4201 = vadd.f32 %v1884, %v1888
        %v4202 = vadd.f32 %v1885, %v1889
        %v4203 = vadd.f32 %v1896, %v1900
        %v4204 = vadd.f32 %v1897, %v1901
        %v4205 = vadd.f32 %v1898, %v1902
        %v4206 = vadd.f32 %v1899, %v1903
        %v4207 = vadd.f32 %v1900, %v1904
        %v4208 = vadd.f32 %v1901, %v1905
        %v4209 = vadd.f32 %v1902, %v1906
        %v4210 = vadd.f32 %v1903, %v1907
        %v4211 = vadd.f32 %v1904, %v1908
        %v4212 = vadd.f32 %v1905, %v1909
        %v4213 = vadd.f32 %v1906, %v1910
        %v4214 = vadd.f32 %v1907, %v1911
        %v4215 = vadd.f32 %v1908, %v1912
        %v4216 = vadd.f32 %v1909, %v1913
        %v4217 = vadd.f32 %v1920, %v1924
        %v4218 = vadd.f32 %v1921, %v1925
        %v4219 = vadd.f32 %v1922, %v1926
        %v4220 = vadd.f32 %v1923, %v1927
        %v4221 = vadd.f32 %v1924, %v1928
        %v4222 = vadd.f32 %v1925, %v1929
        %v4223 = vadd.f32 %v1926, %v1930
        %v4224 = vadd.f32 %v1927, %v1931
        %v4225 = vadd.f32 %v1928, %v1932
        %v4226 = vadd.f32 %v1929, %v1933
        %v4227 = vadd.f32 %v1930, %v1934
        %v4228 = vadd.f32 %v1931, %v1935
        %v4229 = vadd.f32 %v1932, %v1936
        %v4230 = vadd.f32 %v1933, %v1937
        %v4231 = vadd.f32 %v1944, %v1948
        %v4232 = vadd.f32 %v1945, %v1949
        %v4233 = vadd.f32 %v1946, %v1950
        %v4234 = vadd.f32 %v1947, %v1951
        %v4235 = vadd.f32 %v1948, %v1952
        %v4236 = vadd.f32 %v1949, %v1953
        %v4237 = vadd.f32 %v1950, %v1954
        %v4238 = vadd.f32 %v1951, %v1955
        %v4239 = vadd.f32 %v1952, %v1956
        %v4240 = vadd.f32 %v1953, %v1957
        %v4241 = vadd.f32 %v1954, %v1958
        %v4242 = vadd.f32 %v1955, %v1959
        %v4243 = vadd.f32 %v1956, %v1960
        %v4244 = vadd.f32 %v1957, %v1961
        %v4245 = vadd.f32 %v1968, %v1972
        %v4246 = vadd.f32 %v1969, %v1973
        %v4247 = vadd.f32 %v1970, %v1974
        %v4248 = vadd.f32 %v1971, %v1975
        %v4249 = vadd.f32 %v1972, %v1976
        %v4250 = vadd.f32 %v1973, %v1977
        %v4251 = vadd.f32 %v1974, %v1978
        %v4252 = vadd.f32 %v1975, %v1979
        %v4253 = vadd.f32 %v1976, %v1980
        %v4254 = vadd.f32 %v1977, %v1981
        %v4255 = vadd.f32 %v1978, %v1982
        %v4256 = vadd.f32 %v1979, %v1983
        %v4257 = vadd.f32 %v1980, %v1984
        %v4258 = vadd.f32 %v1981, %v1985
        %v4259 = vadd.f32 %v1992, %v1996
        %v4260 = vadd.f32 %v1993, %v1997
        %v4261 = vadd.f32 %v1994, %v1998
        %v4262 = vadd.f32 %v1995, %v1999
        %v4263 = vadd.f32 %v1996, %v2000
        %v4264 = vadd.f32 %v1997, %v2001
        %v4265 = vadd.f32 %v1998, %v2002
        %v4266 = vadd.f32 %v1999, %v2003
        %v4267 = vadd.f32 %v2000, %v2004
        %v4268 = vadd.f32 %v2001, %v2005
        %v4269 = vadd.f32 %v2002, %v2006
        %v4270 = vadd.f32 %v2003, %v2007
        %v4271 = vadd.f32 %v2004, %v2008
        %v4272 = vadd.f32 %v2005, %v2009
        %v4273 = vadd.f32 %v2016, %v2020
        %v4274 = vadd.f32 %v2017, %v2021
        %v4275 = vadd.f32 %v2018, %v2022
        %v4276 = vadd.f32 %v2019, %v2023
        %v4277 = vadd.f32 %v2020, %v2024
        %v4278 = vadd.f32 %v2021, %v2025
        %v4279 = vadd.f32 %v2022, %v2026
        %v4280 = vadd.f32 %v2023, %v2027
        %v4281 = vadd.f32 %v2024, %v2028
        %v4282 = vadd.f32 %v2025, %v2029
        %v4283 = vadd.f32 %v2026, %v2030
        %v4284 = vadd.f32 %v2027, %v2031
        %v4285 = vadd.f32 %v2028, %v2032
        %v4286 = vadd.f32 %v2029, %v2033
        %v4287 = vadd.f32 %v2040, %v2044
        %v4288 = vadd.f32 %v2041, %v2045
        %v4289 = vadd.f32 %v2042, %v2046
        %v4290 = vadd.f32 %v2043, %v2047
        %v4291 = vadd.f32 %v2044, %v2048
        %v4292 = vadd.f32 %v2045, %v2049
        %v4293 = vadd.f32 %v2046, %v2050
        %v4294 = vadd.f32 %v2047, %v2051
        %v4295 = vadd.f32 %v2048, %v2052
        %v4296 = vadd.f32 %v2049, %v2053
        %v4297 = vadd.f32 %v2050, %v2054
        %v4298 = vadd.f32 %v2051, %v2055
        %v4299 = vadd.f32 %v2052, %v2056
        %v4300 = vadd.f32 %v2053, %v2057
        %v4301 = vmul.f32 %v4077, 0.11421021
        %v4302 = vmul.f32 %v4078, 0.11421021
        %v4303 = vmul.f32 %v4079, 0.11421021
        %v4304 = vmul.f32 %v4080, 0.11421021
        %v4305 = vmul.f32 %v4081, 0.11421021
        %v4306 = vmul.f32 %v4082, 0.11421021
        %v4307 = vmul.f32 %v4083, 0.11421021
        %v4308 = vmul.f32 %v4084, 0.11421021
        %v4309 = vmul.f32 %v4085, 0.11421021
        %v4310 = vmul.f32 %v4086, 0.11421021
        %v4311 = vmul.f32 %v4087, 0.11421021
        %v4312 = vmul.f32 %v4088, 0.11421021
        %v4313 = vmul.f32 %v4089, 0.11421021
        %v4314 = vmul.f32 %v4090, 0.11421021
        %v4315 = vmul.f32 %v4091, 0.11421021
        %v4316 = vmul.f32 %v4092, 0.11421021
        %v4317 = vmul.f32 %v4093, 0.11421021
        %v4318 = vmul.f32 %v4094, 0.11421021
        %v4319 = vmul.f32 %v4095, 0.11421021
        %v4320 = vmul.f32 %v4096, 0.11421021
        %v4321 = vmul.f32 %v4097, 0.11421021
        %v4322 = vmul.f32 %v4098, 0.11421021
        %v4323 = vmul.f32 %v4099, 0.11421021
        %v4324 = vmul.f32 %v4100, 0.11421021
        %v4325 = vmul.f32 %v4101, 0.11421021
        %v4326 = vmul.f32 %v4102, 0.11421021
        %v4327 = vmul.f32 %v4103, 0.11421021
        %v4328 = vmul.f32 %v4104, 0.11421021
        %v4329 = vmul.f32 %v4105, 0.11421021
        %v4330 = vmul.f32 %v4106, 0.11421021
        %v4331 = vmul.f32 %v4107, 0.11421021
        %v4332 = vmul.f32 %v4108, 0.11421021
        %v4333 = vmul.f32 %v4109, 0.11421021
        %v4334 = vmul.f32 %v4110, 0.11421021
        %v4335 = vmul.f32 %v4111, 0.11421021
        %v4336 = vmul.f32 %v4112, 0.11421021
        %v4337 = vmul.f32 %v4113, 0.11421021
        %v4338 = vmul.f32 %v4114, 0.11421021
        %v4339 = vmul.f32 %v4115, 0.11421021
        %v4340 = vmul.f32 %v4116, 0.11421021
        %v4341 = vmul.f32 %v4117, 0.11421021
        %v4342 = vmul.f32 %v4118, 0.11421021
        %v4343 = vmul.f32 %v4119, 0.11421021
        %v4344 = vmul.f32 %v4120, 0.11421021
        %v4345 = vmul.f32 %v4121, 0.11421021
        %v4346 = vmul.f32 %v4122, 0.11421021
        %v4347 = vmul.f32 %v4123, 0.11421021
        %v4348 = vmul.f32 %v4124, 0.11421021
        %v4349 = vmul.f32 %v4125, 0.11421021
        %v4350 = vmul.f32 %v4126, 0.11421021
        %v4351 = vmul.f32 %v4127, 0.11421021
        %v4352 = vmul.f32 %v4128, 0.11421021
        %v4353 = vmul.f32 %v4129, 0.11421021
        %v4354 = vmul.f32 %v4130, 0.11421021
        %v4355 = vmul.f32 %v4131, 0.11421021
        %v4356 = vmul.f32 %v4132, 0.11421021
        %v4357 = vmul.f32 %v4133, 0.11421021
        %v4358 = vmul.f32 %v4134, 0.11421021
        %v4359 = vmul.f32 %v4135, 0.11421021
        %v4360 = vmul.f32 %v4136, 0.11421021
        %v4361 = vmul.f32 %v4137, 0.11421021
        %v4362 = vmul.f32 %v4138, 0.11421021
        %v4363 = vmul.f32 %v4139, 0.11421021
        %v4364 = vmul.f32 %v4140, 0.11421021
        %v4365 = vmul.f32 %v4141, 0.11421021
        %v4366 = vmul.f32 %v4142, 0.11421021
        %v4367 = vmul.f32 %v4143, 0.11421021
        %v4368 = vmul.f32 %v4144, 0.11421021
        %v4369 = vmul.f32 %v4145, 0.11421021
        %v4370 = vmul.f32 %v4146, 0.11421021
        %v4371 = vmul.f32 %v4147, 0.11421021
        %v4372 = vmul.f32 %v4148, 0.11421021
        %v4373 = vmul.f32 %v4149, 0.11421021
        %v4374 = vmul.f32 %v4150, 0.11421021
        %v4375 = vmul.f32 %v4151, 0.11421021
        %v4376 = vmul.f32 %v4152, 0.11421021
        %v4377 = vmul.f32 %v4153, 0.11421021
        %v4378 = vmul.f32 %v4154, 0.11421021
        %v4379 = vmul.f32 %v4155, 0.11421021
        %v4380 = vmul.f32 %v4156, 0.11421021
        %v4381 = vmul.f32 %v4157, 0.11421021
        %v4382 = vmul.f32 %v4158, 0.11421021
        %v4383 = vmul.f32 %v4159, 0.11421021
        %v4384 = vmul.f32 %v4160, 0.11421021
        %v4385 = vmul.f32 %v4161, 0.11421021
        %v4386 = vmul.f32 %v4162, 0.11421021
        %v4387 = vmul.f32 %v4163, 0.11421021
        %v4388 = vmul.f32 %v4164, 0.11421021
        %v4389 = vmul.f32 %v4165, 0.11421021
        %v4390 = vmul.f32 %v4166, 0.11421021
        %v4391 = vmul.f32 %v4167, 0.11421021
        %v4392 = vmul.f32 %v4168, 0.11421021
        %v4393 = vmul.f32 %v4169, 0.11421021
        %v4394 = vmul.f32 %v4170, 0.11421021
        %v4395 = vmul.f32 %v4171, 0.11421021
        %v4396 = vmul.f32 %v4172, 0.11421021
        %v4397 = vmul.f32 %v4173, 0.11421021
        %v4398 = vmul.f32 %v4174, 0.11421021
        %v4399 = vmul.f32 %v4175, 0.11421021
        %v4400 = vmul.f32 %v4176, 0.11421021
        %v4401 = vmul.f32 %v4177, 0.11421021
        %v4402 = vmul.f32 %v4178, 0.11421021
        %v4403 = vmul.f32 %v4179, 0.11421021
        %v4404 = vmul.f32 %v4180, 0.11421021
        %v4405 = vmul.f32 %v4181, 0.11421021
        %v4406 = vmul.f32 %v4182, 0.11421021
        %v4407 = vmul.f32 %v4183, 0.11421021
        %v4408 = vmul.f32 %v4184, 0.11421021
        %v4409 = vmul.f32 %v4185, 0.11421021
        %v4410 = vmul.f32 %v4186, 0.11421021
        %v4411 = vmul.f32 %v4187, 0.11421021
        %v4412 = vmul.f32 %v4188, 0.11421021
        %v4413 = vmul.f32 %v4189, 0.11421021
        %v4414 = vmul.f32 %v4190, 0.11421021
        %v4415 = vmul.f32 %v4191, 0.11421021
        %v4416 = vmul.f32 %v4192, 0.11421021
        %v4417 = vmul.f32 %v4193, 0.11421021
        %v4418 = vmul.f32 %v4194, 0.11421021
        %v4419 = vmul.f32 %v4195, 0.11421021
        %v4420 = vmul.f32 %v4196, 0.11421021
        %v4421 = vmul.f32 %v4197, 0.11421021
        %v4422 = vmul.f32 %v4198, 0.11421021
        %v4423 = vmul.f32 %v4199, 0.11421021
        %v4424 = vmul.f32 %v4200, 0.11421021
        %v4425 = vmul.f32 %v4201, 0.11421021
        %v4426 = vmul.f32 %v4202, 0.11421021
        %v4427 = vmul.f32 %v4203, 0.11421021
        %v4428 = vmul.f32 %v4204, 0.11421021
        %v4429 = vmul.f32 %v4205, 0.11421021
        %v4430 = vmul.f32 %v4206, 0.11421021
        %v4431 = vmul.f32 %v4207, 0.11421021
        %v4432 = vmul.f32 %v4208, 0.11421021
        %v4433 = vmul.f32 %v4209, 0.11421021
        %v4434 = vmul.f32 %v4210, 0.11421021
        %v4435 = vmul.f32 %v4211, 0.11421021
        %v4436 = vmul.f32 %v4212, 0.11421021
        %v4437 = vmul.f32 %v4213, 0.11421021
        %v4438 = vmul.f32 %v4214, 0.11421021
        %v4439 = vmul.f32 %v4215, 0.11421021
        %v4440 = vmul.f32 %v4216, 0.11421021
        %v4441 = vmul.f32 %v4217, 0.11421021
        %v4442 = vmul.f32 %v4218, 0.11421021
        %v4443 = vmul.f32 %v4219, 0.11421021
        %v4444 = vmul.f32 %v4220, 0.11421021
        %v4445 = vmul.f32 %v4221, 0.11421021
        %v4446 = vmul.f32 %v4222, 0.11421021
        %v4447 = vmul.f32 %v4223, 0.11421021
        %v4448 = vmul.f32 %v4224, 0.11421021
        %v4449 = vmul.f32 %v4225, 0.11421021
        %v4450 = vmul.f32 %v4226, 0.11421021
        %v4451 = vmul.f32 %v4227, 0.11421021
        %v4452 = vmul.f32 %v4228, 0.11421021
        %v4453 = vmul.f32 %v4229, 0.11421021
        %v4454 = vmul.f32 %v4230, 0.11421021
        %v4455 = vmul.f32 %v4231, 0.11421021
        %v4456 = vmul.f32 %v4232, 0.11421021
        %v4457 = vmul.f32 %v4233, 0.11421021
        %v4458 = vmul.f32 %v4234, 0.11421021
        %v4459 = vmul.f32 %v4235, 0.11421021
        %v4460 = vmul.f32 %v4236, 0.11421021
        %v4461 = vmul.f32 %v4237, 0.11421021
        %v4462 = vmul.f32 %v4238, 0.11421021
        %v4463 = vmul.f32 %v4239, 0.11421021
        %v4464 = vmul.f32 %v4240, 0.11421021
        %v4465 = vmul.f32 %v4241, 0.11421021
        %v4466 = vmul.f32 %v4242, 0.11421021
        %v4467 = vmul.f32 %v4243, 0.11421021
        %v4468 = vmul.f32 %v4244, 0.11421021
        %v4469 = vmul.f32 %v4245, 0.11421021
        %v4470 = vmul.f32 %v4246, 0.11421021
        %v4471 = vmul.f32 %v4247, 0.11421021
        %v4472 = vmul.f32 %v4248, 0.11421021
        %v4473 = vmul.f32 %v4249, 0.11421021
        %v4474 = vmul.f32 %v4250, 0.11421021
        %v4475 = vmul.f32 %v4251, 0.11421021
        %v4476 = vmul.f32 %v4252, 0.11421021
        %v4477 = vmul.f32 %v4253, 0.11421021
        %v4478 = vmul.f32 %v4254, 0.11421021
        %v4479 = vmul.f32 %v4255, 0.11421021
        %v4480 = vmul.f32 %v4256, 0.11421021
        %v4481 = vmul.f32 %v4257, 0.11421021
        %v4482 = vmul.f32 %v4258, 0.11421021
        %v4483 = vmul.f32 %v4259, 0.11421021
        %v4484 = vmul.f32 %v4260, 0.11421021
        %v4485 = vmul.f32 %v4261, 0.11421021
        %v4486 = vmul.f32 %v4262, 0.11421021
        %v4487 = vmul.f32 %v4263, 0.11421021
        %v4488 = vmul.f32 %v4264, 0.11421021
        %v4489 = vmul.f32 %v4265, 0.11421021
        %v4490 = vmul.f32 %v4266, 0.11421021
        %v4491 = vmul.f32 %v4267, 0.11421021
        %v4492 = vmul.f32 %v4268, 0.11421021
        %v4493 = vmul.f32 %v4269, 0.11421021
        %v4494 = vmul.f32 %v4270, 0.11421021
        %v4495 = vmul.f32 %v4271, 0.11421021
        %v4496 = vmul.f32 %v4272, 0.11421021
        %v4497 = vmul.f32 %v4273, 0.11421021
        %v4498 = vmul.f32 %v4274, 0.11421021
        %v4499 = vmul.f32 %v4275, 0.11421021
        %v4500 = vmul.f32 %v4276, 0.11421021
        %v4501 = vmul.f32 %v4277, 0.11421021
        %v4502 = vmul.f32 %v4278, 0.11421021
        %v4503 = vmul.f32 %v4279, 0.11421021
        %v4504 = vmul.f32 %v4280, 0.11421021
        %v4505 = vmul.f32 %v4281, 0.11421021
        %v4506 = vmul.f32 %v4282, 0.11421021
        %v4507 = vmul.f32 %v4283, 0.11421021
        %v4508 = vmul.f32 %v4284, 0.11421021
        %v4509 = vmul.f32 %v4285, 0.11421021
        %v4510 = vmul.f32 %v4286, 0.11421021
        %v4511 = vmul.f32 %v4287, 0.11421021
        %v4512 = vmul.f32 %v4288, 0.11421021
        %v4513 = vmul.f32 %v4289, 0.11421021
        %v4514 = vmul.f32 %v4290, 0.11421021
        %v4515 = vmul.f32 %v4291, 0.11421021
        %v4516 = vmul.f32 %v4292, 0.11421021
        %v4517 = vmul.f32 %v4293, 0.11421021
        %v4518 = vmul.f32 %v4294, 0.11421021
        %v4519 = vmul.f32 %v4295, 0.11421021
        %v4520 = vmul.f32 %v4296, 0.11421021
        %v4521 = vmul.f32 %v4297, 0.11421021
        %v4522 = vmul.f32 %v4298, 0.11421021
        %v4523 = vmul.f32 %v4299, 0.11421021
        %v4524 = vmul.f32 %v4300, 0.11421021
        %v4525 = vadd.f32 %v3181, %v4301
        %v4526 = vadd.f32 %v3182, %v4302
        %v4527 = vadd.f32 %v3183, %v4303
        %v4528 = vadd.f32 %v3184, %v4304
        %v4529 = vadd.f32 %v3185, %v4305
        %v4530 = vadd.f32 %v3186, %v4306
        %v4531 = vadd.f32 %v3187, %v4307
        %v4532 = vadd.f32 %v3188, %v4308
        %v4533 = vadd.f32 %v3189, %v4309
        %v4534 = vadd.f32 %v3190, %v4310
        %v4535 = vadd.f32 %v3191, %v4311
        %v4536 = vadd.f32 %v3192, %v4312
        %v4537 = vadd.f32 %v3193, %v4313
        %v4538 = vadd.f32 %v3194, %v4314
        %v4539 = vadd.f32 %v3195, %v4315
        %v4540 = vadd.f32 %v3196, %v4316
        %v4541 = vadd.f32 %v3197, %v4317
        %v4542 = vadd.f32 %v3198, %v4318
        %v4543 = vadd.f32 %v3199, %v4319
        %v4544 = vadd.f32 %v3200, %v4320
        %v4545 = vadd.f32 %v3201, %v4321
        %v4546 = vadd.f32 %v3202, %v4322
        %v4547 = vadd.f32 %v3203, %v4323
        %v4548 = vadd.f32 %v3204, %v4324
        %v4549 = vadd.f32 %v3205, %v4325
        %v4550 = vadd.f32 %v3206, %v4326
        %v4551 = vadd.f32 %v3207, %v4327
        %v4552 = vadd.f32 %v3208, %v4328
        %v4553 = vadd.f32 %v3209, %v4329
        %v4554 = vadd.f32 %v3210, %v4330
        %v4555 = vadd.f32 %v3211, %v4331
        %v4556 = vadd.f32 %v3212, %v4332
        %v4557 = vadd.f32 %v3213, %v4333
        %v4558 = vadd.f32 %v3214, %v4334
        %v4559 = vadd.f32 %v3215, %v4335
        %v4560 = vadd.f32 %v3216, %v4336
        %v4561 = vadd.f32 %v3217, %v4337
        %v4562 = vadd.f32 %v3218, %v4338
        %v4563 = vadd.f32 %v3219, %v4339
        %v4564 = vadd.f32 %v3220, %v4340
        %v4565 = vadd.f32 %v3221, %v4341
        %v4566 = vadd.f32 %v3222, %v4342
        %v4567 = vadd.f32 %v3223, %v4343
        %v4568 = vadd.f32 %v3224, %v4344
        %v4569 = vadd.f32 %v3225, %v4345
        %v4570 = vadd.f32 %v3226, %v4346
        %v4571 = vadd.f32 %v3227, %v4347
        %v4572 = vadd.f32 %v3228, %v4348
        %v4573 = vadd.f32 %v3229, %v4349
        %v4574 = vadd.f32 %v3230, %v4350
        %v4575 = vadd.f32 %v3231, %v4351
        %v4576 = vadd.f32 %v3232, %v4352
        %v4577 = vadd.f32 %v3233, %v4353
        %v4578 = vadd.f32 %v3234, %v4354
        %v4579 = vadd.f32 %v3235, %v4355
        %v4580 = vadd.f32 %v3236, %v4356
        %v4581 = vadd.f32 %v3237, %v4357
        %v4582 = vadd.f32 %v3238, %v4358
        %v4583 = vadd.f32 %v3239, %v4359
        %v4584 = vadd.f32 %v3240, %v4360
        %v4585 = vadd.f32 %v3241, %v4361
        %v4586 = vadd.f32 %v3242, %v4362
        %v4587 = vadd.f32 %v3243, %v4363
        %v4588 = vadd.f32 %v3244, %v4364
        %v4589 = vadd.f32 %v3245, %v4365
        %v4590 = vadd.f32 %v3246, %v4366
        %v4591 = vadd.f32 %v3247, %v4367
        %v4592 = vadd.f32 %v3248, %v4368
        %v4593 = vadd.f32 %v3249, %v4369
        %v4594 = vadd.f32 %v3250, %v4370
        %v4595 = vadd.f32 %v3251, %v4371
        %v4596 = vadd.f32 %v3252, %v4372
        %v4597 = vadd.f32 %v3253, %v4373
        %v4598 = vadd.f32 %v3254, %v4374
        %v4599 = vadd.f32 %v3255, %v4375
        %v4600 = vadd.f32 %v3256, %v4376
        %v4601 = vadd.f32 %v3257, %v4377
        %v4602 = vadd.f32 %v3258, %v4378
        %v4603 = vadd.f32 %v3259, %v4379
        %v4604 = vadd.f32 %v3260, %v4380
        %v4605 = vadd.f32 %v3261, %v4381
        %v4606 = vadd.f32 %v3262, %v4382
        %v4607 = vadd.f32 %v3263, %v4383
        %v4608 = vadd.f32 %v3264, %v4384
        %v4609 = vadd.f32 %v3265, %v4385
        %v4610 = vadd.f32 %v3266, %v4386
        %v4611 = vadd.f32 %v3267, %v4387
        %v4612 = vadd.f32 %v3268, %v4388
        %v4613 = vadd.f32 %v3269, %v4389
        %v4614 = vadd.f32 %v3270, %v4390
        %v4615 = vadd.f32 %v3271, %v4391
        %v4616 = vadd.f32 %v3272, %v4392
        %v4617 = vadd.f32 %v3273, %v4393
        %v4618 = vadd.f32 %v3274, %v4394
        %v4619 = vadd.f32 %v3275, %v4395
        %v4620 = vadd.f32 %v3276, %v4396
        %v4621 = vadd.f32 %v3277, %v4397
        %v4622 = vadd.f32 %v3278, %v4398
        %v4623 = vadd.f32 %v3279, %v4399
        %v4624 = vadd.f32 %v3280, %v4400
        %v4625 = vadd.f32 %v3281, %v4401
        %v4626 = vadd.f32 %v3282, %v4402
        %v4627 = vadd.f32 %v3283, %v4403
        %v4628 = vadd.f32 %v3284, %v4404
        %v4629 = vadd.f32 %v3285, %v4405
        %v4630 = vadd.f32 %v3286, %v4406
        %v4631 = vadd.f32 %v3287, %v4407
        %v4632 = vadd.f32 %v3288, %v4408
        %v4633 = vadd.f32 %v3289, %v4409
        %v4634 = vadd.f32 %v3290, %v4410
        %v4635 = vadd.f32 %v3291, %v4411
        %v4636 = vadd.f32 %v3292, %v4412
        %v4637 = vadd.f32 %v3293, %v4413
        %v4638 = vadd.f32 %v3294, %v4414
        %v4639 = vadd.f32 %v3295, %v4415
        %v4640 = vadd.f32 %v3296, %v4416
        %v4641 = vadd.f32 %v3297, %v4417
        %v4642 = vadd.f32 %v3298, %v4418
        %v4643 = vadd.f32 %v3299, %v4419
        %v4644 = vadd.f32 %v3300, %v4420
        %v4645 = vadd.f32 %v3301, %v4421
        %v4646 = vadd.f32 %v3302, %v4422
        %v4647 = vadd.f32 %v3303, %v4423
        %v4648 = vadd.f32 %v3304, %v4424
        %v4649 = vadd.f32 %v3305, %v4425
        %v4650 = vadd.f32 %v3306, %v4426
        %v4651 = vadd.f32 %v3307, %v4427
        %v4652 = vadd.f32 %v3308, %v4428
        %v4653 = vadd.f32 %v3309, %v4429
        %v4654 = vadd.f32 %v3310, %v4430
        %v4655 = vadd.f32 %v3311, %v4431
        %v4656 = vadd.f32 %v3312, %v4432
        %v4657 = vadd.f32 %v3313, %v4433
        %v4658 = vadd.f32 %v3314, %v4434
        %v4659 = vadd.f32 %v3315, %v4435
        %v4660 = vadd.f32 %v3316, %v4436
        %v4661 = vadd.f32 %v3317, %v4437
        %v4662 = vadd.f32 %v3318, %v4438
        %v4663 = vadd.f32 %v3319, %v4439
        %v4664 = vadd.f32 %v3320, %v4440
        %v4665 = vadd.f32 %v3321, %v4441
        %v4666 = vadd.f32 %v3322, %v4442
        %v4667 = vadd.f32 %v3323, %v4443
        %v4668 = vadd.f32 %v3324, %v4444
        %v4669 = vadd.f32 %v3325, %v4445
        %v4670 = vadd.f32 %v3326, %v4446
        %v4671 = vadd.f32 %v3327, %v4447
        %v4672 = vadd.f32 %v3328, %v4448
        %v4673 = vadd.f32 %v3329, %v4449
        %v4674 = vadd.f32 %v3330, %v4450
        %v4675 = vadd.f32 %v3331, %v4451
        %v4676 = vadd.f32 %v3332, %v4452
        %v4677 = vadd.f32 %v3333, %v4453
        %v4678 = vadd.f32 %v3334, %v4454
        %v4679 = vadd.f32 %v3335, %v4455
        %v4680 = vadd.f32 %v3336, %v4456
        %v4681 = vadd.f32 %v3337, %v4457
        %v4682 = vadd.f32 %v3338, %v4458
        %v4683 = vadd.f32 %v3339, %v4459
        %v4684 = vadd.f32 %v3340, %v4460
        %v4685 = vadd.f32 %v3341, %v4461
        %v4686 = vadd.f32 %v3342, %v4462
        %v4687 = vadd.f32 %v3343, %v4463
        %v4688 = vadd.f32 %v3344, %v4464
        %v4689 = vadd.f32 %v3345, %v4465
        %v4690 = vadd.f32 %v3346, %v4466
        %v4691 = vadd.f32 %v3347, %v4467
        %v4692 = vadd.f32 %v3348, %v4468
        %v4693 = vadd.f32 %v3349, %v4469
        %v4694 = vadd.f32 %v3350, %v4470
        %v4695 = vadd.f32 %v3351, %v4471
        %v4696 = vadd.f32 %v3352, %v4472
        %v4697 = vadd.f32 %v3353, %v4473
        %v4698 = vadd.f32 %v3354, %v4474
        %v4699 = vadd.f32 %v3355, %v4475
        %v4700 = vadd.f32 %v3356, %v4476
        %v4701 = vadd.f32 %v3357, %v4477
        %v4702 = vadd.f32 %v3358, %v4478
        %v4703 = vadd.f32 %v3359, %v4479
        %v4704 = vadd.f32 %v3360, %v4480
        %v4705 = vadd.f32 %v3361, %v4481
        %v4706 = vadd.f32 %v3362, %v4482
        %v4707 = vadd.f32 %v3363, %v4483
        %v4708 = vadd.f32 %v3364, %v4484
        %v4709 = vadd.f32 %v3365, %v4485
        %v4710 = vadd.f32 %v3366, %v4486
        %v4711 = vadd.f32 %v3367, %v4487
        %v4712 = vadd.f32 %v3368, %v4488
        %v4713 = vadd.f32 %v3369, %v4489
        %v4714 = vadd.f32 %v3370, %v4490
        %v4715 = vadd.f32 %v3371, %v4491
        %v4716 = vadd.f32 %v3372, %v4492
        %v4717 = vadd.f32 %v3373, %v4493
        %v4718 = vadd.f32 %v3374, %v4494
        %v4719 = vadd.f32 %v3375, %v4495
        %v4720 = vadd.f32 %v3376, %v4496
        %v4721 = vadd.f32 %v3377, %v4497
        %v4722 = vadd.f32 %v3378, %v4498
        %v4723 = vadd.f32 %v3379, %v4499
        %v4724 = vadd.f32 %v3380, %v4500
        %v4725 = vadd.f32 %v3381, %v4501
        %v4726 = vadd.f32 %v3382, %v4502
        %v4727 = vadd.f32 %v3383, %v4503
        %v4728 = vadd.f32 %v3384, %v4504
        %v4729 = vadd.f32 %v3385, %v4505
        %v4730 = vadd.f32 %v3386, %v4506
        %v4731 = vadd.f32 %v3387, %v4507
        %v4732 = vadd.f32 %v3388, %v4508
        %v4733 = vadd.f32 %v3389, %v4509
        %v4734 = vadd.f32 %v3390, %v4510
        %v4735 = vadd.f32 %v3391, %v4511
        %v4736 = vadd.f32 %v3392, %v4512
        %v4737 = vadd.f32 %v3393, %v4513
        %v4738 = vadd.f32 %v3394, %v4514
        %v4739 = vadd.f32 %v3395, %v4515
        %v4740 = vadd.f32 %v3396, %v4516
        %v4741 = vadd.f32 %v3397, %v4517
        %v4742 = vadd.f32 %v3398, %v4518
        %v4743 = vadd.f32 %v3399, %v4519
        %v4744 = vadd.f32 %v3400, %v4520
        %v4745 = vadd.f32 %v3401, %v4521
        %v4746 = vadd.f32 %v3402, %v4522
        %v4747 = vadd.f32 %v3403, %v4523
        %v4748 = vadd.f32 %v3404, %v4524
        %v4749 = vadd.f32 %v1681, %v1683
        %v4750 = vadd.f32 %v1682, %v1684
        %v4751 = vadd.f32 %v1683, %v1685
        %v4752 = vadd.f32 %v1684, %v1686
        %v4753 = vadd.f32 %v1685, %v1687
        %v4754 = vadd.f32 %v1686, %v1688
        %v4755 = vadd.f32 %v1687, %v1689
        %v4756 = vadd.f32 %v1688, %v1690
        %v4757 = vadd.f32 %v1689, %v1691
        %v4758 = vadd.f32 %v1690, %v1692
        %v4759 = vadd.f32 %v1691, %v1693
        %v4760 = vadd.f32 %v1692, %v1694
        %v4761 = vadd.f32 %v1693, %v1695
        %v4762 = vadd.f32 %v1694, %v1696
        %v4763 = vadd.f32 %v1705, %v1707
        %v4764 = vadd.f32 %v1706, %v1708
        %v4765 = vadd.f32 %v1707, %v1709
        %v4766 = vadd.f32 %v1708, %v1710
        %v4767 = vadd.f32 %v1709, %v1711
        %v4768 = vadd.f32 %v1710, %v1712
        %v4769 = vadd.f32 %v1711, %v1713
        %v4770 = vadd.f32 %v1712, %v1714
        %v4771 = vadd.f32 %v1713, %v1715
        %v4772 = vadd.f32 %v1714, %v1716
        %v4773 = vadd.f32 %v1715, %v1717
        %v4774 = vadd.f32 %v1716, %v1718
        %v4775 = vadd.f32 %v1717, %v1719
        %v4776 = vadd.f32 %v1718, %v1720
        %v4777 = vadd.f32 %v1729, %v1731
        %v4778 = vadd.f32 %v1730, %v1732
        %v4779 = vadd.f32 %v1731, %v1733
        %v4780 = vadd.f32 %v1732, %v1734
        %v4781 = vadd.f32 %v1733, %v1735
        %v4782 = vadd.f32 %v1734, %v1736
        %v4783 = vadd.f32 %v1735, %v1737
        %v4784 = vadd.f32 %v1736, %v1738
        %v4785 = vadd.f32 %v1737, %v1739
        %v4786 = vadd.f32 %v1738, %v1740
        %v4787 = vadd.f32 %v1739, %v1741
        %v4788 = vadd.f32 %v1740, %v1742
        %v4789 = vadd.f32 %v1741, %v1743
        %v4790 = vadd.f32 %v1742, %v1744
        %v4791 = vadd.f32 %v1753, %v1755
        %v4792 = vadd.f32 %v1754, %v1756
        %v4793 = vadd.f32 %v1755, %v1757
        %v4794 = vadd.f32 %v1756, %v1758
        %v4795 = vadd.f32 %v1757, %v1759
        %v4796 = vadd.f32 %v1758, %v1760
        %v4797 = vadd.f32 %v1759, %v1761
        %v4798 = vadd.f32 %v1760, %v1762
        %v4799 = vadd.f32 %v1761, %v1763
        %v4800 = vadd.f32 %v1762, %v1764
        %v4801 = vadd.f32 %v1763, %v1765
        %v4802 = vadd.f32 %v1764, %v1766
        %v4803 = vadd.f32 %v1765, %v1767
        %v4804 = vadd.f32 %v1766, %v1768
        %v4805 = vadd.f32 %v1777, %v1779
        %v4806 = vadd.f32 %v1778, %v1780
        %v4807 = vadd.f32 %v1779, %v1781
        %v4808 = vadd.f32 %v1780, %v1782
        %v4809 = vadd.f32 %v1781, %v1783
        %v4810 = vadd.f32 %v1782, %v1784
        %v4811 = vadd.f32 %v1783, %v1785
        %v4812 = vadd.f32 %v1784, %v1786
        %v4813 = vadd.f32 %v1785, %v1787
        %v4814 = vadd.f32 %v1786, %v1788
        %v4815 = vadd.f32 %v1787, %v1789
        %v4816 = vadd.f32 %v1788, %v1790
        %v4817 = vadd.f32 %v1789, %v1791
        %v4818 = vadd.f32 %v1790, %v1792
        %v4819 = vadd.f32 %v1801, %v1803
        %v4820 = vadd.f32 %v1802, %v1804
        %v4821 = vadd.f32 %v1803, %v1805
        %v4822 = vadd.f32 %v1804, %v1806
        %v4823 = vadd.f32 %v1805, %v1807
        %v4824 = vadd.f32 %v1806, %v1808
        %v4825 = vadd.f32 %v1807, %v1809
        %v4826 = vadd.f32 %v1808, %v1810
        %v4827 = vadd.f32 %v1809, %v1811
        %v4828 = vadd.f32 %v1810, %v1812
        %v4829 = vadd.f32 %v1811, %v1813
        %v4830 = vadd.f32 %v1812, %v1814
        %v4831 = vadd.f32 %v1813, %v1815
        %v4832 = vadd.f32 %v1814, %v1816
        %v4833 = vadd.f32 %v1825, %v1827
        %v4834 = vadd.f32 %v1826, %v1828
        %v4835 = vadd.f32 %v1827, %v1829
        %v4836 = vadd.f32 %v1828, %v1830
        %v4837 = vadd.f32 %v1829, %v1831
        %v4838 = vadd.f32 %v1830, %v1832
        %v4839 = vadd.f32 %v1831, %v1833
        %v4840 = vadd.f32 %v1832, %v1834
        %v4841 = vadd.f32 %v1833, %v1835
        %v4842 = vadd.f32 %v1834, %v1836
        %v4843 = vadd.f32 %v1835, %v1837
        %v4844 = vadd.f32 %v1836, %v1838
        %v4845 = vadd.f32 %v1837, %v1839
        %v4846 = vadd.f32 %v1838, %v1840
        %v4847 = vadd.f32 %v1849, %v1851
        %v4848 = vadd.f32 %v1850, %v1852
        %v4849 = vadd.f32 %v1851, %v1853
        %v4850 = vadd.f32 %v1852, %v1854
        %v4851 = vadd.f32 %v1853, %v1855
        %v4852 = vadd.f32 %v1854, %v1856
        %v4853 = vadd.f32 %v1855, %v1857
        %v4854 = vadd.f32 %v1856, %v1858
        %v4855 = vadd.f32 %v1857, %v1859
        %v4856 = vadd.f32 %v1858, %v1860
        %v4857 = vadd.f32 %v1859, %v1861
        %v4858 = vadd.f32 %v1860, %v1862
        %v4859 = vadd.f32 %v1861, %v1863
        %v4860 = vadd.f32 %v1862, %v1864
        %v4861 = vadd.f32 %v1873, %v1875
        %v4862 = vadd.f32 %v1874, %v1876
        %v4863 = vadd.f32 %v1875, %v1877
        %v4864 = vadd.f32 %v1876, %v1878
        %v4865 = vadd.f32 %v1877, %v1879
        %v4866 = vadd.f32 %v1878, %v1880
        %v4867 = vadd.f32 %v1879, %v1881
        %v4868 = vadd.f32 %v1880, %v1882
        %v4869 = vadd.f32 %v1881, %v1883
        %v4870 = vadd.f32 %v1882, %v1884
        %v4871 = vadd.f32 %v1883, %v1885
        %v4872 = vadd.f32 %v1884, %v1886
        %v4873 = vadd.f32 %v1885, %v1887
        %v4874 = vadd.f32 %v1886, %v1888
        %v4875 = vadd.f32 %v1897, %v1899
        %v4876 = vadd.f32 %v1898, %v1900
        %v4877 = vadd.f32 %v1899, %v1901
        %v4878 = vadd.f32 %v1900, %v1902
        %v4879 = vadd.f32 %v1901, %v1903
        %v4880 = vadd.f32 %v1902, %v1904
        %v4881 = vadd.f32 %v1903, %v1905
        %v4882 = vadd.f32 %v1904, %v1906
        %v4883 = vadd.f32 %v1905, %v1907
        %v4884 = vadd.f32 %v1906, %v1908
        %v4885 = vadd.f32 %v1907, %v1909
        %v4886 = vadd.f32 %v1908, %v1910
        %v4887 = vadd.f32 %v1909, %v1911
        %v4888 = vadd.f32 %v1910, %v1912
        %v4889 = vadd.f32 %v1921, %v1923
        %v4890 = vadd.f32 %v1922, %v1924
        %v4891 = vadd.f32 %v1923, %v1925
        %v4892 = vadd.f32 %v1924, %v1926
        %v4893 = vadd.f32 %v1925, %v1927
        %v4894 = vadd.f32 %v1926, %v1928
        %v4895 = vadd.f32 %v1927, %v1929
        %v4896 = vadd.f32 %v1928, %v1930
        %v4897 = vadd.f32 %v1929, %v1931
        %v4898 = vadd.f32 %v1930, %v1932
        %v4899 = vadd.f32 %v1931, %v1933
        %v4900 = vadd.f32 %v1932, %v1934
        %v4901 = vadd.f32 %v1933, %v1935
        %v4902 = vadd.f32 %v1934, %v1936
        %v4903 = vadd.f32 %v1945, %v1947
        %v4904 = vadd.f32 %v1946, %v1948
        %v4905 = vadd.f32 %v1947, %v1949
        %v4906 = vadd.f32 %v1948, %v1950
        %v4907 = vadd.f32 %v1949, %v1951
        %v4908 = vadd.f32 %v1950, %v1952
        %v4909 = vadd.f32 %v1951, %v1953
        %v4910 = vadd.f32 %v1952, %v1954
        %v4911 = vadd.f32 %v1953, %v1955
        %v4912 = vadd.f32 %v1954, %v1956
        %v4913 = vadd.f32 %v1955, %v1957
        %v4914 = vadd.f32 %v1956, %v1958
        %v4915 = vadd.f32 %v1957, %v1959
        %v4916 = vadd.f32 %v1958, %v1960
        %v4917 = vadd.f32 %v1969, %v1971
        %v4918 = vadd.f32 %v1970, %v1972
        %v4919 = vadd.f32 %v1971, %v1973
        %v4920 = vadd.f32 %v1972, %v1974
        %v4921 = vadd.f32 %v1973, %v1975
        %v4922 = vadd.f32 %v1974, %v1976
        %v4923 = vadd.f32 %v1975, %v1977
        %v4924 = vadd.f32 %v1976, %v1978
        %v4925 = vadd.f32 %v1977, %v1979
        %v4926 = vadd.f32 %v1978, %v1980
        %v4927 = vadd.f32 %v1979, %v1981
        %v4928 = vadd.f32 %v1980, %v1982
        %v4929 = vadd.f32 %v1981, %v1983
        %v4930 = vadd.f32 %v1982, %v1984
        %v4931 = vadd.f32 %v1993, %v1995
        %v4932 = vadd.f32 %v1994, %v1996
        %v4933 = vadd.f32 %v1995, %v1997
        %v4934 = vadd.f32 %v1996, %v1998
        %v4935 = vadd.f32 %v1997, %v1999
        %v4936 = vadd.f32 %v1998, %v2000
        %v4937 = vadd.f32 %v1999, %v2001
        %v4938 = vadd.f32 %v2000, %v2002
        %v4939 = vadd.f32 %v2001, %v2003
        %v4940 = vadd.f32 %v2002, %v2004
        %v4941 = vadd.f32 %v2003, %v2005
        %v4942 = vadd.f32 %v2004, %v2006
        %v4943 = vadd.f32 %v2005, %v2007
        %v4944 = vadd.f32 %v2006, %v2008
        %v4945 = vadd.f32 %v2017, %v2019
        %v4946 = vadd.f32 %v2018, %v2020
        %v4947 = vadd.f32 %v2019, %v2021
        %v4948 = vadd.f32 %v2020, %v2022
        %v4949 = vadd.f32 %v2021, %v2023
        %v4950 = vadd.f32 %v2022, %v2024
        %v4951 = vadd.f32 %v2023, %v2025
        %v4952 = vadd.f32 %v2024, %v2026
        %v4953 = vadd.f32 %v2025, %v2027
        %v4954 = vadd.f32 %v2026, %v2028
        %v4955 = vadd.f32 %v2027, %v2029
        %v4956 = vadd.f32 %v2028, %v2030
        %v4957 = vadd.f32 %v2029, %v2031
        %v4958 = vadd.f32 %v2030, %v2032
        %v4959 = vadd.f32 %v2041, %v2043
        %v4960 = vadd.f32 %v2042, %v2044
        %v4961 = vadd.f32 %v2043, %v2045
        %v4962 = vadd.f32 %v2044, %v2046
        %v4963 = vadd.f32 %v2045, %v2047
        %v4964 = vadd.f32 %v2046, %v2048
        %v4965 = vadd.f32 %v2047, %v2049
        %v4966 = vadd.f32 %v2048, %v2050
        %v4967 = vadd.f32 %v2049, %v2051
        %v4968 = vadd.f32 %v2050, %v2052
        %v4969 = vadd.f32 %v2051, %v2053
        %v4970 = vadd.f32 %v2052, %v2054
        %v4971 = vadd.f32 %v2053, %v2055
        %v4972 = vadd.f32 %v2054, %v2056
        %v4973 = vmul.f32 %v4749, 0.20519859
        %v4974 = vmul.f32 %v4750, 0.20519859
        %v4975 = vmul.f32 %v4751, 0.20519859
        %v4976 = vmul.f32 %v4752, 0.20519859
        %v4977 = vmul.f32 %v4753, 0.20519859
        %v4978 = vmul.f32 %v4754, 0.20519859
        %v4979 = vmul.f32 %v4755, 0.20519859
        %v4980 = vmul.f32 %v4756, 0.20519859
        %v4981 = vmul.f32 %v4757, 0.20519859
        %v4982 = vmul.f32 %v4758, 0.20519859
        %v4983 = vmul.f32 %v4759, 0.20519859
        %v4984 = vmul.f32 %v4760, 0.20519859
        %v4985 = vmul.f32 %v4761, 0.20519859
        %v4986 = vmul.f32 %v4762, 0.20519859
        %v4987 = vmul.f32 %v4763, 0.20519859
        %v4988 = vmul.f32 %v4764, 0.20519859
        %v4989 = vmul.f32 %v4765, 0.20519859
        %v4990 = vmul.f32 %v4766, 0.20519859
        %v4991 = vmul.f32 %v4767, 0.20519859
        %v4992 = vmul.f32 %v4768, 0.20519859
        %v4993 = vmul.f32 %v4769, 0.20519859
        %v4994 = vmul.f32 %v4770, 0.20519859
        %v4995 = vmul.f32 %v4771, 0.20519859
        %v4996 = vmul.f32 %v4772, 0.20519859
        %v4997 = vmul.f32 %v4773, 0.20519859
        %v4998 = vmul.f32 %v4774, 0.20519859
        %v4999 = vmul.f32 %v4775, 0.20519859
        %v5000 = vmul.f32 %v4776, 0.20519859
        %v5001 = vmul.f32 %v4777, 0.20519859
        %v5002 = vmul.f32 %v4778, 0.20519859
        %v5003 = vmul.f32 %v4779, 0.20519859
        %v5004 = vmul.f32 %v4780, 0.20519859
        %v5005 = vmul.f32 %v4781, 0.20519859
        %v5006 = vmul.f32 %v4782, 0.20519859
        %v5007 = vmul.f32 %v4783, 0.20519859
        %v5008 = vmul.f32 %v4784, 0.20519859
        %v5009 = vmul.f32 %v4785, 0.20519859
        %v5010 = vmul.f32 %v4786, 0.20519859
        %v5011 = vmul.f32 %v4787, 0.20519859
        %v5012 = vmul.f32 %v4788, 0.20519859
        %v5013 = vmul.f32 %v4789, 0.20519859
        %v5014 = vmul.f32 %v4790, 0.20519859
        %v5015 = vmul.f32 %v4791, 0.20519859
        %v5016 = vmul.f32 %v4792, 0.20519859
        %v5017 = vmul.f32 %v4793, 0.20519859
        %v5018 = vmul.f32 %v4794, 0.20519859
        %v5019 = vmul.f32 %v4795, 0.20519859
        %v5020 = vmul.f32 %v4796, 0.20519859
        %v5021 = vmul.f32 %v4797, 0.20519859
        %v5022 = vmul.f32 %v4798, 0.20519859
        %v5023 = vmul.f32 %v4799, 0.20519859
        %v5024 = vmul.f32 %v4800, 0.20519859
        %v5025 = vmul.f32 %v4801, 0.20519859
        %v5026 = vmul.f32 %v4802, 0.20519859
        %v5027 = vmul.f32 %v4803, 0.20519859
        %v5028 = vmul.f32 %v4804, 0.20519859
        %v5029 = vmul.f32 %v4805, 0.20519859
        %v5030 = vmul.f32 %v4806, 0.20519859
        %v5031 = vmul.f32 %v4807, 0.20519859
        %v5032 = vmul.f32 %v4808, 0.20519859
        %v5033 = vmul.f32 %v4809, 0.20519859
        %v5034 = vmul.f32 %v4810, 0.20519859
        %v5035 = vmul.f32 %v4811, 0.20519859
        %v5036 = vmul.f32 %v4812, 0.20519859
        %v5037 = vmul.f32 %v4813, 0.20519859
        %v5038 = vmul.f32 %v4814, 0.20519859
        %v5039 = vmul.f32 %v4815, 0.20519859
        %v5040 = vmul.f32 %v4816, 0.20519859
        %v5041 = vmul.f32 %v4817, 0.20519859
        %v5042 = vmul.f32 %v4818, 0.20519859
        %v5043 = vmul.f32 %v4819, 0.20519859
        %v5044 = vmul.f32 %v4820, 0.20519859
        %v5045 = vmul.f32 %v4821, 0.20519859
        %v5046 = vmul.f32 %v4822, 0.20519859
        %v5047 = vmul.f32 %v4823, 0.20519859
        %v5048 = vmul.f32 %v4824, 0.20519859
        %v5049 = vmul.f32 %v4825, 0.20519859
        %v5050 = vmul.f32 %v4826, 0.20519859
        %v5051 = vmul.f32 %v4827, 0.20519859
        %v5052 = vmul.f32 %v4828, 0.20519859
        %v5053 = vmul.f32 %v4829, 0.20519859
        %v5054 = vmul.f32 %v4830, 0.20519859
        %v5055 = vmul.f32 %v4831, 0.20519859
        %v5056 = vmul.f32 %v4832, 0.20519859
        %v5057 = vmul.f32 %v4833, 0.20519859
        %v5058 = vmul.f32 %v4834, 0.20519859
        %v5059 = vmul.f32 %v4835, 0.20519859
        %v5060 = vmul.f32 %v4836, 0.20519859
        %v5061 = vmul.f32 %v4837, 0.20519859
        %v5062 = vmul.f32 %v4838, 0.20519859
        %v5063 = vmul.f32 %v4839, 0.20519859
        %v5064 = vmul.f32 %v4840, 0.20519859
        %v5065 = vmul.f32 %v4841, 0.20519859
        %v5066 = vmul.f32 %v4842, 0.20519859
        %v5067 = vmul.f32 %v4843, 0.20519859
        %v5068 = vmul.f32 %v4844, 0.20519859
        %v5069 = vmul.f32 %v4845, 0.20519859
        %v5070 = vmul.f32 %v4846, 0.20519859
        %v5071 = vmul.f32 %v4847, 0.20519859
        %v5072 = vmul.f32 %v4848, 0.20519859
        %v5073 = vmul.f32 %v4849, 0.20519859
        %v5074 = vmul.f32 %v4850, 0.20519859
        %v5075 = vmul.f32 %v4851, 0.20519859
        %v5076 = vmul.f32 %v4852, 0.20519859
        %v5077 = vmul.f32 %v4853, 0.20519859
        %v5078 = vmul.f32 %v4854, 0.20519859
        %v5079 = vmul.f32 %v4855, 0.20519859
        %v5080 = vmul.f32 %v4856, 0.20519859
        %v5081 = vmul.f32 %v4857, 0.20519859
        %v5082 = vmul.f32 %v4858, 0.20519859
        %v5083 = vmul.f32 %v4859, 0.20519859
        %v5084 = vmul.f32 %v4860, 0.20519859
        %v5085 = vmul.f32 %v4861, 0.20519859
        %v5086 = vmul.f32 %v4862, 0.20519859
        %v5087 = vmul.f32 %v4863, 0.20519859
        %v5088 = vmul.f32 %v4864, 0.20519859
        %v5089 = vmul.f32 %v4865, 0.20519859
        %v5090 = vmul.f32 %v4866, 0.20519859
        %v5091 = vmul.f32 %v4867, 0.20519859
        %v5092 = vmul.f32 %v4868, 0.20519859
        %v5093 = vmul.f32 %v4869, 0.20519859
        %v5094 = vmul.f32 %v4870, 0.20519859
        %v5095 = vmul.f32 %v4871, 0.20519859
        %v5096 = vmul.f32 %v4872, 0.20519859
        %v5097 = vmul.f32 %v4873, 0.20519859
        %v5098 = vmul.f32 %v4874, 0.20519859
        %v5099 = vmul.f32 %v4875, 0.20519859
        %v5100 = vmul.f32 %v4876, 0.20519859
        %v5101 = vmul.f32 %v4877, 0.20519859
        %v5102 = vmul.f32 %v4878, 0.20519859
        %v5103 = vmul.f32 %v4879, 0.20519859
        %v5104 = vmul.f32 %v4880, 0.20519859
        %v5105 = vmul.f32 %v4881, 0.20519859
        %v5106 = vmul.f32 %v4882, 0.20519859
        %v5107 = vmul.f32 %v4883, 0.20519859
        %v5108 = vmul.f32 %v4884, 0.20519859
        %v5109 = vmul.f32 %v4885, 0.20519859
        %v5110 = vmul.f32 %v4886, 0.20519859
        %v5111 = vmul.f32 %v4887, 0.20519859
        %v5112 = vmul.f32 %v4888, 0.20519859
        %v5113 = vmul.f32 %v4889, 0.20519859
        %v5114 = vmul.f32 %v4890, 0.20519859
        %v5115 = vmul.f32 %v4891, 0.20519859
        %v5116 = vmul.f32 %v4892, 0.20519859
        %v5117 = vmul.f32 %v4893, 0.20519859
        %v5118 = vmul.f32 %v4894, 0.20519859
        %v5119 = vmul.f32 %v4895, 0.20519859
        %v5120 = vmul.f32 %v4896, 0.20519859
        %v5121 = vmul.f32 %v4897, 0.20519859
        %v5122 = vmul.f32 %v4898, 0.20519859
        %v5123 = vmul.f32 %v4899, 0.20519859
        %v5124 = vmul.f32 %v4900, 0.20519859
        %v5125 = vmul.f32 %v4901, 0.20519859
        %v5126 = vmul.f32 %v4902, 0.20519859
        %v5127 = vmul.f32 %v4903, 0.20519859
        %v5128 = vmul.f32 %v4904, 0.20519859
        %v5129 = vmul.f32 %v4905, 0.20519859
        %v5130 = vmul.f32 %v4906, 0.20519859
        %v5131 = vmul.f32 %v4907, 0.20519859
        %v5132 = vmul.f32 %v4908, 0.20519859
        %v5133 = vmul.f32 %v4909, 0.20519859
        %v5134 = vmul.f32 %v4910, 0.20519859
        %v5135 = vmul.f32 %v4911, 0.20519859
        %v5136 = vmul.f32 %v4912, 0.20519859
        %v5137 = vmul.f32 %v4913, 0.20519859
        %v5138 = vmul.f32 %v4914, 0.20519859
        %v5139 = vmul.f32 %v4915, 0.20519859
        %v5140 = vmul.f32 %v4916, 0.20519859
        %v5141 = vmul.f32 %v4917, 0.20519859
        %v5142 = vmul.f32 %v4918, 0.20519859
        %v5143 = vmul.f32 %v4919, 0.20519859
        %v5144 = vmul.f32 %v4920, 0.20519859
        %v5145 = vmul.f32 %v4921, 0.20519859
        %v5146 = vmul.f32 %v4922, 0.20519859
        %v5147 = vmul.f32 %v4923, 0.20519859
        %v5148 = vmul.f32 %v4924, 0.20519859
        %v5149 = vmul.f32 %v4925, 0.20519859
        %v5150 = vmul.f32 %v4926, 0.20519859
        %v5151 = vmul.f32 %v4927, 0.20519859
        %v5152 = vmul.f32 %v4928, 0.20519859
        %v5153 = vmul.f32 %v4929, 0.20519859
        %v5154 = vmul.f32 %v4930, 0.20519859
        %v5155 = vmul.f32 %v4931, 0.20519859
        %v5156 = vmul.f32 %v4932, 0.20519859
        %v5157 = vmul.f32 %v4933, 0.20519859
        %v5158 = vmul.f32 %v4934, 0.20519859
        %v5159 = vmul.f32 %v4935, 0.20519859
        %v5160 = vmul.f32 %v4936, 0.20519859
        %v5161 = vmul.f32 %v4937, 0.20519859
        %v5162 = vmul.f32 %v4938, 0.20519859
        %v5163 = vmul.f32 %v4939, 0.20519859
        %v5164 = vmul.f32 %v4940, 0.20519859
        %v5165 = vmul.f32 %v4941, 0.20519859
        %v5166 = vmul.f32 %v4942, 0.20519859
        %v5167 = vmul.f32 %v4943, 0.20519859
        %v5168 = vmul.f32 %v4944, 0.20519859
        %v5169 = vmul.f32 %v4945, 0.20519859
        %v5170 = vmul.f32 %v4946, 0.20519859
        %v5171 = vmul.f32 %v4947, 0.20519859
        %v5172 = vmul.f32 %v4948, 0.20519859
        %v5173 = vmul.f32 %v4949, 0.20519859
        %v5174 = vmul.f32 %v4950, 0.20519859
        %v5175 = vmul.f32 %v4951, 0.20519859
        %v5176 = vmul.f32 %v4952, 0.20519859
        %v5177 = vmul.f32 %v4953, 0.20519859
        %v5178 = vmul.f32 %v4954, 0.20519859
        %v5179 = vmul.f32 %v4955, 0.20519859
        %v5180 = vmul.f32 %v4956, 0.20519859
        %v5181 = vmul.f32 %v4957, 0.20519859
        %v5182 = vmul.f32 %v4958, 0.20519859
        %v5183 = vmul.f32 %v4959, 0.20519859
        %v5184 = vmul.f32 %v4960, 0.20519859
        %v5185 = vmul.f32 %v4961, 0.20519859
        %v5186 = vmul.f32 %v4962, 0.20519859
        %v5187 = vmul.f32 %v4963, 0.20519859
        %v5188 = vmul.f32 %v4964, 0.20519859
        %v5189 = vmul.f32 %v4965, 0.20519859
        %v5190 = vmul.f32 %v4966, 0.20519859
        %v5191 = vmul.f32 %v4967, 0.20519859
        %v5192 = vmul.f32 %v4968, 0.20519859
        %v5193 = vmul.f32 %v4969, 0.20519859
        %v5194 = vmul.f32 %v4970, 0.20519859
        %v5195 = vmul.f32 %v4971, 0.20519859
        %v5196 = vmul.f32 %v4972, 0.20519859
        %v5197 = vadd.f32 %v3853, %v4973
        %v5198 = vadd.f32 %v3854, %v4974
        %v5199 = vadd.f32 %v3855, %v4975
        %v5200 = vadd.f32 %v3856, %v4976
        %v5201 = vadd.f32 %v3857, %v4977
        %v5202 = vadd.f32 %v3858, %v4978
        %v5203 = vadd.f32 %v3859, %v4979
        %v5204 = vadd.f32 %v3860, %v4980
        %v5205 = vadd.f32 %v3861, %v4981
        %v5206 = vadd.f32 %v3862, %v4982
        %v5207 = vadd.f32 %v3863, %v4983
        %v5208 = vadd.f32 %v3864, %v4984
        %v5209 = vadd.f32 %v3865, %v4985
        %v5210 = vadd.f32 %v3866, %v4986
        %v5211 = vadd.f32 %v3867, %v4987
        %v5212 = vadd.f32 %v3868, %v4988
        %v5213 = vadd.f32 %v3869, %v4989
        %v5214 = vadd.f32 %v3870, %v4990
        %v5215 = vadd.f32 %v3871, %v4991
        %v5216 = vadd.f32 %v3872, %v4992
        %v5217 = vadd.f32 %v3873, %v4993
        %v5218 = vadd.f32 %v3874, %v4994
        %v5219 = vadd.f32 %v3875, %v4995
        %v5220 = vadd.f32 %v3876, %v4996
        %v5221 = vadd.f32 %v3877, %v4997
        %v5222 = vadd.f32 %v3878, %v4998
        %v5223 = vadd.f32 %v3879, %v4999
        %v5224 = vadd.f32 %v3880, %v5000
        %v5225 = vadd.f32 %v3881, %v5001
        %v5226 = vadd.f32 %v3882, %v5002
        %v5227 = vadd.f32 %v3883, %v5003
        %v5228 = vadd.f32 %v3884, %v5004
        %v5229 = vadd.f32 %v3885, %v5005
        %v5230 = vadd.f32 %v3886, %v5006
        %v5231 = vadd.f32 %v3887, %v5007
        %v5232 = vadd.f32 %v3888, %v5008
        %v5233 = vadd.f32 %v3889, %v5009
        %v5234 = vadd.f32 %v3890, %v5010
        %v5235 = vadd.f32 %v3891, %v5011
        %v5236 = vadd.f32 %v3892, %v5012
        %v5237 = vadd.f32 %v3893, %v5013
        %v5238 = vadd.f32 %v3894, %v5014
        %v5239 = vadd.f32 %v3895, %v5015
        %v5240 = vadd.f32 %v3896, %v5016
        %v5241 = vadd.f32 %v3897, %v5017
        %v5242 = vadd.f32 %v3898, %v5018
        %v5243 = vadd.f32 %v3899, %v5019
        %v5244 = vadd.f32 %v3900, %v5020
        %v5245 = vadd.f32 %v3901, %v5021
        %v5246 = vadd.f32 %v3902, %v5022
        %v5247 = vadd.f32 %v3903, %v5023
        %v5248 = vadd.f32 %v3904, %v5024
        %v5249 = vadd.f32 %v3905, %v5025
        %v5250 = vadd.f32 %v3906, %v5026
        %v5251 = vadd.f32 %v3907, %v5027
        %v5252 = vadd.f32 %v3908, %v5028
        %v5253 = vadd.f32 %v3909, %v5029
        %v5254 = vadd.f32 %v3910, %v5030
        %v5255 = vadd.f32 %v3911, %v5031
        %v5256 = vadd.f32 %v3912, %v5032
        %v5257 = vadd.f32 %v3913, %v5033
        %v5258 = vadd.f32 %v3914, %v5034
        %v5259 = vadd.f32 %v3915, %v5035
        %v5260 = vadd.f32 %v3916, %v5036
        %v5261 = vadd.f32 %v3917, %v5037
        %v5262 = vadd.f32 %v3918, %v5038
        %v5263 = vadd.f32 %v3919, %v5039
        %v5264 = vadd.f32 %v3920, %v5040
        %v5265 = vadd.f32 %v3921, %v5041
        %v5266 = vadd.f32 %v3922, %v5042
        %v5267 = vadd.f32 %v3923, %v5043
        %v5268 = vadd.f32 %v3924, %v5044
        %v5269 = vadd.f32 %v3925, %v5045
        %v5270 = vadd.f32 %v3926, %v5046
        %v5271 = vadd.f32 %v3927, %v5047
        %v5272 = vadd.f32 %v3928, %v5048
        %v5273 = vadd.f32 %v3929, %v5049
        %v5274 = vadd.f32 %v3930, %v5050
        %v5275 = vadd.f32 %v3931, %v5051
        %v5276 = vadd.f32 %v3932, %v5052
        %v5277 = vadd.f32 %v3933, %v5053
        %v5278 = vadd.f32 %v3934, %v5054
        %v5279 = vadd.f32 %v3935, %v5055
        %v5280 = vadd.f32 %v3936, %v5056
        %v5281 = vadd.f32 %v3937, %v5057
        %v5282 = vadd.f32 %v3938, %v5058
        %v5283 = vadd.f32 %v3939, %v5059
        %v5284 = vadd.f32 %v3940, %v5060
        %v5285 = vadd.f32 %v3941, %v5061
        %v5286 = vadd.f32 %v3942, %v5062
        %v5287 = vadd.f32 %v3943, %v5063
        %v5288 = vadd.f32 %v3944, %v5064
        %v5289 = vadd.f32 %v3945, %v5065
        %v5290 = vadd.f32 %v3946, %v5066
        %v5291 = vadd.f32 %v3947, %v5067
        %v5292 = vadd.f32 %v3948, %v5068
        %v5293 = vadd.f32 %v3949, %v5069
        %v5294 = vadd.f32 %v3950, %v5070
        %v5295 = vadd.f32 %v3951, %v5071
        %v5296 = vadd.f32 %v3952, %v5072
        %v5297 = vadd.f32 %v3953, %v5073
        %v5298 = vadd.f32 %v3954, %v5074
        %v5299 = vadd.f32 %v3955, %v5075
        %v5300 = vadd.f32 %v3956, %v5076
        %v5301 = vadd.f32 %v3957, %v5077
        %v5302 = vadd.f32 %v3958, %v5078
        %v5303 = vadd.f32 %v3959, %v5079
        %v5304 = vadd.f32 %v3960, %v5080
        %v5305 = vadd.f32 %v3961, %v5081
        %v5306 = vadd.f32 %v3962, %v5082
        %v5307 = vadd.f32 %v3963, %v5083
        %v5308 = vadd.f32 %v3964, %v5084
        %v5309 = vadd.f32 %v3965, %v5085
        %v5310 = vadd.f32 %v3966, %v5086
        %v5311 = vadd.f32 %v3967, %v5087
        %v5312 = vadd.f32 %v3968, %v5088
        %v5313 = vadd.f32 %v3969, %v5089
        %v5314 = vadd.f32 %v3970, %v5090
        %v5315 = vadd.f32 %v3971, %v5091
        %v5316 = vadd.f32 %v3972, %v5092
        %v5317 = vadd.f32 %v3973, %v5093
        %v5318 = vadd.f32 %v3974, %v5094
        %v5319 = vadd.f32 %v3975, %v5095
        %v5320 = vadd.f32 %v3976, %v5096
        %v5321 = vadd.f32 %v3977, %v5097
        %v5322 = vadd.f32 %v3978, %v5098
        %v5323 = vadd.f32 %v3979, %v5099
        %v5324 = vadd.f32 %v3980, %v5100
        %v5325 = vadd.f32 %v3981, %v5101
        %v5326 = vadd.f32 %v3982, %v5102
        %v5327 = vadd.f32 %v3983, %v5103
        %v5328 = vadd.f32 %v3984, %v5104
        %v5329 = vadd.f32 %v3985, %v5105
        %v5330 = vadd.f32 %v3986, %v5106
        %v5331 = vadd.f32 %v3987, %v5107
        %v5332 = vadd.f32 %v3988, %v5108
        %v5333 = vadd.f32 %v3989, %v5109
        %v5334 = vadd.f32 %v3990, %v5110
        %v5335 = vadd.f32 %v3991, %v5111
        %v5336 = vadd.f32 %v3992, %v5112
        %v5337 = vadd.f32 %v3993, %v5113
        %v5338 = vadd.f32 %v3994, %v5114
        %v5339 = vadd.f32 %v3995, %v5115
        %v5340 = vadd.f32 %v3996, %v5116
        %v5341 = vadd.f32 %v3997, %v5117
        %v5342 = vadd.f32 %v3998, %v5118
        %v5343 = vadd.f32 %v3999, %v5119
        %v5344 = vadd.f32 %v4000, %v5120
        %v5345 = vadd.f32 %v4001, %v5121
        %v5346 = vadd.f32 %v4002, %v5122
        %v5347 = vadd.f32 %v4003, %v5123
        %v5348 = vadd.f32 %v4004, %v5124
        %v5349 = vadd.f32 %v4005, %v5125
        %v5350 = vadd.f32 %v4006, %v5126
        %v5351 = vadd.f32 %v4007, %v5127
        %v5352 = vadd.f32 %v4008, %v5128
        %v5353 = vadd.f32 %v4009, %v5129
        %v5354 = vadd.f32 %v4010, %v5130
        %v5355 = vadd.f32 %v4011, %v5131
        %v5356 = vadd.f32 %v4012, %v5132
        %v5357 = vadd.f32 %v4013, %v5133
        %v5358 = vadd.f32 %v4014, %v5134
        %v5359 = vadd.f32 %v4015, %v5135
        %v5360 = vadd.f32 %v4016, %v5136
        %v5361 = vadd.f32 %v4017, %v5137
        %v5362 = vadd.f32 %v4018, %v5138
        %v5363 = vadd.f32 %v4019, %v5139
        %v5364 = vadd.f32 %v4020, %v5140
        %v5365 = vadd.f32 %v4021, %v5141
        %v5366 = vadd.f32 %v4022, %v5142
        %v5367 = vadd.f32 %v4023, %v5143
        %v5368 = vadd.f32 %v4024, %v5144
        %v5369 = vadd.f32 %v4025, %v5145
        %v5370 = vadd.f32 %v4026, %v5146
        %v5371 = vadd.f32 %v4027, %v5147
        %v5372 = vadd.f32 %v4028, %v5148
        %v5373 = vadd.f32 %v4029, %v5149
        %v5374 = vadd.f32 %v4030, %v5150
        %v5375 = vadd.f32 %v4031, %v5151
        %v5376 = vadd.f32 %v4032, %v5152
        %v5377 = vadd.f32 %v4033, %v5153
        %v5378 = vadd.f32 %v4034, %v5154
        %v5379 = vadd.f32 %v4035, %v5155
        %v5380 = vadd.f32 %v4036, %v5156
        %v5381 = vadd.f32 %v4037, %v5157
        %v5382 = vadd.f32 %v4038, %v5158
        %v5383 = vadd.f32 %v4039, %v5159
        %v5384 = vadd.f32 %v4040, %v5160
        %v5385 = vadd.f32 %v4041, %v5161
        %v5386 = vadd.f32 %v4042, %v5162
        %v5387 = vadd.f32 %v4043, %v5163
        %v5388 = vadd.f32 %v4044, %v5164
        %v5389 = vadd.f32 %v4045, %v5165
        %v5390 = vadd.f32 %v4046, %v5166
        %v5391 = vadd.f32 %v4047, %v5167
        %v5392 = vadd.f32 %v4048, %v5168
        %v5393 = vadd.f32 %v4049, %v5169
        %v5394 = vadd.f32 %v4050, %v5170
        %v5395 = vadd.f32 %v4051, %v5171
        %v5396 = vadd.f32 %v4052, %v5172
        %v5397 = vadd.f32 %v4053, %v5173
        %v5398 = vadd.f32 %v4054, %v5174
        %v5399 = vadd.f32 %v4055, %v5175
        %v5400 = vadd.f32 %v4056, %v5176
        %v5401 = vadd.f32 %v4057, %v5177
        %v5402 = vadd.f32 %v4058, %v5178
        %v5403 = vadd.f32 %v4059, %v5179
        %v5404 = vadd.f32 %v4060, %v5180
        %v5405 = vadd.f32 %v4061, %v5181
        %v5406 = vadd.f32 %v4062, %v5182
        %v5407 = vadd.f32 %v4063, %v5183
        %v5408 = vadd.f32 %v4064, %v5184
        %v5409 = vadd.f32 %v4065, %v5185
        %v5410 = vadd.f32 %v4066, %v5186
        %v5411 = vadd.f32 %v4067, %v5187
        %v5412 = vadd.f32 %v4068, %v5188
        %v5413 = vadd.f32 %v4069, %v5189
        %v5414 = vadd.f32 %v4070, %v5190
        %v5415 = vadd.f32 %v4071, %v5191
        %v5416 = vadd.f32 %v4072, %v5192
        %v5417 = vadd.f32 %v4073, %v5193
        %v5418 = vadd.f32 %v4074, %v5194
        %v5419 = vadd.f32 %v4075, %v5195
        %v5420 = vadd.f32 %v4076, %v5196
        %v5421 = vadd.f32 %v4525, %v5197
        %v5422 = vadd.f32 %v4526, %v5198
        %v5423 = vadd.f32 %v4527, %v5199
        %v5424 = vadd.f32 %v4528, %v5200
        %v5425 = vadd.f32 %v4529, %v5201
        %v5426 = vadd.f32 %v4530, %v5202
        %v5427 = vadd.f32 %v4531, %v5203
        %v5428 = vadd.f32 %v4532, %v5204
        %v5429 = vadd.f32 %v4533, %v5205
        %v5430 = vadd.f32 %v4534, %v5206
        %v5431 = vadd.f32 %v4535, %v5207
        %v5432 = vadd.f32 %v4536, %v5208
        %v5433 = vadd.f32 %v4537, %v5209
        %v5434 = vadd.f32 %v4538, %v5210
        %v5435 = vadd.f32 %v4539, %v5211
        %v5436 = vadd.f32 %v4540, %v5212
        %v5437 = vadd.f32 %v4541, %v5213
        %v5438 = vadd.f32 %v4542, %v5214
        %v5439 = vadd.f32 %v4543, %v5215
        %v5440 = vadd.f32 %v4544, %v5216
        %v5441 = vadd.f32 %v4545, %v5217
        %v5442 = vadd.f32 %v4546, %v5218
        %v5443 = vadd.f32 %v4547, %v5219
        %v5444 = vadd.f32 %v4548, %v5220
        %v5445 = vadd.f32 %v4549, %v5221
        %v5446 = vadd.f32 %v4550, %v5222
        %v5447 = vadd.f32 %v4551, %v5223
        %v5448 = vadd.f32 %v4552, %v5224
        %v5449 = vadd.f32 %v4553, %v5225
        %v5450 = vadd.f32 %v4554, %v5226
        %v5451 = vadd.f32 %v4555, %v5227
        %v5452 = vadd.f32 %v4556, %v5228
        %v5453 = vadd.f32 %v4557, %v5229
        %v5454 = vadd.f32 %v4558, %v5230
        %v5455 = vadd.f32 %v4559, %v5231
        %v5456 = vadd.f32 %v4560, %v5232
        %v5457 = vadd.f32 %v4561, %v5233
        %v5458 = vadd.f32 %v4562, %v5234
        %v5459 = vadd.f32 %v4563, %v5235
        %v5460 = vadd.f32 %v4564, %v5236
        %v5461 = vadd.f32 %v4565, %v5237
        %v5462 = vadd.f32 %v4566, %v5238
        %v5463 = vadd.f32 %v4567, %v5239
        %v5464 = vadd.f32 %v4568, %v5240
        %v5465 = vadd.f32 %v4569, %v5241
        %v5466 = vadd.f32 %v4570, %v5242
        %v5467 = vadd.f32 %v4571, %v5243
        %v5468 = vadd.f32 %v4572, %v5244
        %v5469 = vadd.f32 %v4573, %v5245
        %v5470 = vadd.f32 %v4574, %v5246
        %v5471 = vadd.f32 %v4575, %v5247
        %v5472 = vadd.f32 %v4576, %v5248
        %v5473 = vadd.f32 %v4577, %v5249
        %v5474 = vadd.f32 %v4578, %v5250
        %v5475 = vadd.f32 %v4579, %v5251
        %v5476 = vadd.f32 %v4580, %v5252
        %v5477 = vadd.f32 %v4581, %v5253
        %v5478 = vadd.f32 %v4582, %v5254
        %v5479 = vadd.f32 %v4583, %v5255
        %v5480 = vadd.f32 %v4584, %v5256
        %v5481 = vadd.f32 %v4585, %v5257
        %v5482 = vadd.f32 %v4586, %v5258
        %v5483 = vadd.f32 %v4587, %v5259
        %v5484 = vadd.f32 %v4588, %v5260
        %v5485 = vadd.f32 %v4589, %v5261
        %v5486 = vadd.f32 %v4590, %v5262
        %v5487 = vadd.f32 %v4591, %v5263
        %v5488 = vadd.f32 %v4592, %v5264
        %v5489 = vadd.f32 %v4593, %v5265
        %v5490 = vadd.f32 %v4594, %v5266
        %v5491 = vadd.f32 %v4595, %v5267
        %v5492 = vadd.f32 %v4596, %v5268
        %v5493 = vadd.f32 %v4597, %v5269
        %v5494 = vadd.f32 %v4598, %v5270
        %v5495 = vadd.f32 %v4599, %v5271
        %v5496 = vadd.f32 %v4600, %v5272
        %v5497 = vadd.f32 %v4601, %v5273
        %v5498 = vadd.f32 %v4602, %v5274
        %v5499 = vadd.f32 %v4603, %v5275
        %v5500 = vadd.f32 %v4604, %v5276
        %v5501 = vadd.f32 %v4605, %v5277
        %v5502 = vadd.f32 %v4606, %v5278
        %v5503 = vadd.f32 %v4607, %v5279
        %v5504 = vadd.f32 %v4608, %v5280
        %v5505 = vadd.f32 %v4609, %v5281
        %v5506 = vadd.f32 %v4610, %v5282
        %v5507 = vadd.f32 %v4611, %v5283
        %v5508 = vadd.f32 %v4612, %v5284
        %v5509 = vadd.f32 %v4613, %v5285
        %v5510 = vadd.f32 %v4614, %v5286
        %v5511 = vadd.f32 %v4615, %v5287
        %v5512 = vadd.f32 %v4616, %v5288
        %v5513 = vadd.f32 %v4617, %v5289
        %v5514 = vadd.f32 %v4618, %v5290
        %v5515 = vadd.f32 %v4619, %v5291
        %v5516 = vadd.f32 %v4620, %v5292
        %v5517 = vadd.f32 %v4621, %v5293
        %v5518 = vadd.f32 %v4622, %v5294
        %v5519 = vadd.f32 %v4623, %v5295
        %v5520 = vadd.f32 %v4624, %v5296
        %v5521 = vadd.f32 %v4625, %v5297
        %v5522 = vadd.f32 %v4626, %v5298
        %v5523 = vadd.f32 %v4627, %v5299
        %v5524 = vadd.f32 %v4628, %v5300
        %v5525 = vadd.f32 %v4629, %v5301
        %v5526 = vadd.f32 %v4630, %v5302
        %v5527 = vadd.f32 %v4631, %v5303
        %v5528 = vadd.f32 %v4632, %v5304
        %v5529 = vadd.f32 %v4633, %v5305
        %v5530 = vadd.f32 %v4634, %v5306
        %v5531 = vadd.f32 %v4635, %v5307
        %v5532 = vadd.f32 %v4636, %v5308
        %v5533 = vadd.f32 %v4637, %v5309
        %v5534 = vadd.f32 %v4638, %v5310
        %v5535 = vadd.f32 %v4639, %v5311
        %v5536 = vadd.f32 %v4640, %v5312
        %v5537 = vadd.f32 %v4641, %v5313
        %v5538 = vadd.f32 %v4642, %v5314
        %v5539 = vadd.f32 %v4643, %v5315
        %v5540 = vadd.f32 %v4644, %v5316
        %v5541 = vadd.f32 %v4645, %v5317
        %v5542 = vadd.f32 %v4646, %v5318
        %v5543 = vadd.f32 %v4647, %v5319
        %v5544 = vadd.f32 %v4648, %v5320
        %v5545 = vadd.f32 %v4649, %v5321
        %v5546 = vadd.f32 %v4650, %v5322
        %v5547 = vadd.f32 %v4651, %v5323
        %v5548 = vadd.f32 %v4652, %v5324
        %v5549 = vadd.f32 %v4653, %v5325
        %v5550 = vadd.f32 %v4654, %v5326
        %v5551 = vadd.f32 %v4655, %v5327
        %v5552 = vadd.f32 %v4656, %v5328
        %v5553 = vadd.f32 %v4657, %v5329
        %v5554 = vadd.f32 %v4658, %v5330
        %v5555 = vadd.f32 %v4659, %v5331
        %v5556 = vadd.f32 %v4660, %v5332
        %v5557 = vadd.f32 %v4661, %v5333
        %v5558 = vadd.f32 %v4662, %v5334
        %v5559 = vadd.f32 %v4663, %v5335
        %v5560 = vadd.f32 %v4664, %v5336
        %v5561 = vadd.f32 %v4665, %v5337
        %v5562 = vadd.f32 %v4666, %v5338
        %v5563 = vadd.f32 %v4667, %v5339
        %v5564 = vadd.f32 %v4668, %v5340
        %v5565 = vadd.f32 %v4669, %v5341
        %v5566 = vadd.f32 %v4670, %v5342
        %v5567 = vadd.f32 %v4671, %v5343
        %v5568 = vadd.f32 %v4672, %v5344
        %v5569 = vadd.f32 %v4673, %v5345
        %v5570 = vadd.f32 %v4674, %v5346
        %v5571 = vadd.f32 %v4675, %v5347
        %v5572 = vadd.f32 %v4676, %v5348
        %v5573 = vadd.f32 %v4677, %v5349
        %v5574 = vadd.f32 %v4678, %v5350
        %v5575 = vadd.f32 %v4679, %v5351
        %v5576 = vadd.f32 %v4680, %v5352
        %v5577 = vadd.f32 %v4681, %v5353
        %v5578 = vadd.f32 %v4682, %v5354
        %v5579 = vadd.f32 %v4683, %v5355
        %v5580 = vadd.f32 %v4684, %v5356
        %v5581 = vadd.f32 %v4685, %v5357
        %v5582 = vadd.f32 %v4686, %v5358
        %v5583 = vadd.f32 %v4687, %v5359
        %v5584 = vadd.f32 %v4688, %v5360
        %v5585 = vadd.f32 %v4689, %v5361
        %v5586 = vadd.f32 %v4690, %v5362
        %v5587 = vadd.f32 %v4691, %v5363
        %v5588 = vadd.f32 %v4692, %v5364
        %v5589 = vadd.f32 %v4693, %v5365
        %v5590 = vadd.f32 %v4694, %v5366
        %v5591 = vadd.f32 %v4695, %v5367
        %v5592 = vadd.f32 %v4696, %v5368
        %v5593 = vadd.f32 %v4697, %v5369
        %v5594 = vadd.f32 %v4698, %v5370
        %v5595 = vadd.f32 %v4699, %v5371
        %v5596 = vadd.f32 %v4700, %v5372
        %v5597 = vadd.f32 %v4701, %v5373
        %v5598 = vadd.f32 %v4702, %v5374
        %v5599 = vadd.f32 %v4703, %v5375
        %v5600 = vadd.f32 %v4704, %v5376
        %v5601 = vadd.f32 %v4705, %v5377
        %v5602 = vadd.f32 %v4706, %v5378
        %v5603 = vadd.f32 %v4707, %v5379
        %v5604 = vadd.f32 %v4708, %v5380
        %v5605 = vadd.f32 %v4709, %v5381
        %v5606 = vadd.f32 %v4710, %v5382
        %v5607 = vadd.f32 %v4711, %v5383
        %v5608 = vadd.f32 %v4712, %v5384
        %v5609 = vadd.f32 %v4713, %v5385
        %v5610 = vadd.f32 %v4714, %v5386
        %v5611 = vadd.f32 %v4715, %v5387
        %v5612 = vadd.f32 %v4716, %v5388
        %v5613 = vadd.f32 %v4717, %v5389
        %v5614 = vadd.f32 %v4718, %v5390
        %v5615 = vadd.f32 %v4719, %v5391
        %v5616 = vadd.f32 %v4720, %v5392
        %v5617 = vadd.f32 %v4721, %v5393
        %v5618 = vadd.f32 %v4722, %v5394
        %v5619 = vadd.f32 %v4723, %v5395
        %v5620 = vadd.f32 %v4724, %v5396
        %v5621 = vadd.f32 %v4725, %v5397
        %v5622 = vadd.f32 %v4726, %v5398
        %v5623 = vadd.f32 %v4727, %v5399
        %v5624 = vadd.f32 %v4728, %v5400
        %v5625 = vadd.f32 %v4729, %v5401
        %v5626 = vadd.f32 %v4730, %v5402
        %v5627 = vadd.f32 %v4731, %v5403
        %v5628 = vadd.f32 %v4732, %v5404
        %v5629 = vadd.f32 %v4733, %v5405
        %v5630 = vadd.f32 %v4734, %v5406
        %v5631 = vadd.f32 %v4735, %v5407
        %v5632 = vadd.f32 %v4736, %v5408
        %v5633 = vadd.f32 %v4737, %v5409
        %v5634 = vadd.f32 %v4738, %v5410
        %v5635 = vadd.f32 %v4739, %v5411
        %v5636 = vadd.f32 %v4740, %v5412
        %v5637 = vadd.f32 %v4741, %v5413
        %v5638 = vadd.f32 %v4742, %v5414
        %v5639 = vadd.f32 %v4743, %v5415
        %v5640 = vadd.f32 %v4744, %v5416
        %v5641 = vadd.f32 %v4745, %v5417
        %v5642 = vadd.f32 %v4746, %v5418
        %v5643 = vadd.f32 %v4747, %v5419
        %v5644 = vadd.f32 %v4748, %v5420
        %v5645 = vmul.f32 %v5491, 0.2545812
        %v5646 = vmul.f32 %v5492, 0.2545812
        %v5647 = vmul.f32 %v5493, 0.2545812
        %v5648 = vmul.f32 %v5494, 0.2545812
        %v5649 = vmul.f32 %v5495, 0.2545812
        %v5650 = vmul.f32 %v5496, 0.2545812
        %v5651 = vmul.f32 %v5497, 0.2545812
        %v5652 = vmul.f32 %v5498, 0.2545812
        %v5653 = vmul.f32 %v5499, 0.2545812
        %v5654 = vmul.f32 %v5500, 0.2545812
        %v5655 = vmul.f32 %v5501, 0.2545812
        %v5656 = vmul.f32 %v5502, 0.2545812
        %v5657 = vmul.f32 %v5503, 0.2545812
        %v5658 = vmul.f32 %v5504, 0.2545812
        %v5659 = vmul.f32 %v5505, 0.2545812
        %v5660 = vmul.f32 %v5506, 0.2545812
        %v5661 = vmul.f32 %v5507, 0.2545812
        %v5662 = vmul.f32 %v5508, 0.2545812
        %v5663 = vmul.f32 %v5509, 0.2545812
        %v5664 = vmul.f32 %v5510, 0.2545812
        %v5665 = vmul.f32 %v5511, 0.2545812
        %v5666 = vmul.f32 %v5512, 0.2545812
        %v5667 = vmul.f32 %v5513, 0.2545812
        %v5668 = vmul.f32 %v5514, 0.2545812
        %v5669 = vmul.f32 %v5515, 0.2545812
        %v5670 = vmul.f32 %v5516, 0.2545812
        %v5671 = vmul.f32 %v5517, 0.2545812
        %v5672 = vmul.f32 %v5518, 0.2545812
        %v5673 = vmul.f32 %v5519, 0.2545812
        %v5674 = vmul.f32 %v5520, 0.2545812
        %v5675 = vmul.f32 %v5521, 0.2545812
        %v5676 = vmul.f32 %v5522, 0.2545812
        %v5677 = vmul.f32 %v5523, 0.2545812
        %v5678 = vmul.f32 %v5524, 0.2545812
        %v5679 = vmul.f32 %v5525, 0.2545812
        %v5680 = vmul.f32 %v5526, 0.2545812
        %v5681 = vmul.f32 %v5527, 0.2545812
        %v5682 = vmul.f32 %v5528, 0.2545812
        %v5683 = vmul.f32 %v5529, 0.2545812
        %v5684 = vmul.f32 %v5530, 0.2545812
        %v5685 = vmul.f32 %v5531, 0.2545812
        %v5686 = vmul.f32 %v5532, 0.2545812
        %v5687 = vmul.f32 %v5533, 0.2545812
        %v5688 = vmul.f32 %v5534, 0.2545812
        %v5689 = vmul.f32 %v5535, 0.2545812
        %v5690 = vmul.f32 %v5536, 0.2545812
        %v5691 = vmul.f32 %v5537, 0.2545812
        %v5692 = vmul.f32 %v5538, 0.2545812
        %v5693 = vmul.f32 %v5539, 0.2545812
        %v5694 = vmul.f32 %v5540, 0.2545812
        %v5695 = vmul.f32 %v5541, 0.2545812
        %v5696 = vmul.f32 %v5542, 0.2545812
        %v5697 = vmul.f32 %v5543, 0.2545812
        %v5698 = vmul.f32 %v5544, 0.2545812
        %v5699 = vmul.f32 %v5545, 0.2545812
        %v5700 = vmul.f32 %v5546, 0.2545812
        %v5701 = vmul.f32 %v5547, 0.2545812
        %v5702 = vmul.f32 %v5548, 0.2545812
        %v5703 = vmul.f32 %v5549, 0.2545812
        %v5704 = vmul.f32 %v5550, 0.2545812
        %v5705 = vmul.f32 %v5551, 0.2545812
        %v5706 = vmul.f32 %v5552, 0.2545812
        %v5707 = vmul.f32 %v5553, 0.2545812
        %v5708 = vmul.f32 %v5554, 0.2545812
        %v5709 = vmul.f32 %v5555, 0.2545812
        %v5710 = vmul.f32 %v5556, 0.2545812
        %v5711 = vmul.f32 %v5557, 0.2545812
        %v5712 = vmul.f32 %v5558, 0.2545812
        %v5713 = vmul.f32 %v5559, 0.2545812
        %v5714 = vmul.f32 %v5560, 0.2545812
        %v5715 = vmul.f32 %v5561, 0.2545812
        %v5716 = vmul.f32 %v5562, 0.2545812
        %v5717 = vmul.f32 %v5563, 0.2545812
        %v5718 = vmul.f32 %v5564, 0.2545812
        %v5719 = vmul.f32 %v5565, 0.2545812
        %v5720 = vmul.f32 %v5566, 0.2545812
        %v5721 = vmul.f32 %v5567, 0.2545812
        %v5722 = vmul.f32 %v5568, 0.2545812
        %v5723 = vmul.f32 %v5569, 0.2545812
        %v5724 = vmul.f32 %v5570, 0.2545812
        %v5725 = vmul.f32 %v5571, 0.2545812
        %v5726 = vmul.f32 %v5572, 0.2545812
        %v5727 = vmul.f32 %v5573, 0.2545812
        %v5728 = vmul.f32 %v5574, 0.2545812
        %v5729 = vadd.f32 %v5421, %v5561
        %v5730 = vadd.f32 %v5422, %v5562
        %v5731 = vadd.f32 %v5423, %v5563
        %v5732 = vadd.f32 %v5424, %v5564
        %v5733 = vadd.f32 %v5425, %v5565
        %v5734 = vadd.f32 %v5426, %v5566
        %v5735 = vadd.f32 %v5427, %v5567
        %v5736 = vadd.f32 %v5428, %v5568
        %v5737 = vadd.f32 %v5429, %v5569
        %v5738 = vadd.f32 %v5430, %v5570
        %v5739 = vadd.f32 %v5431, %v5571
        %v5740 = vadd.f32 %v5432, %v5572
        %v5741 = vadd.f32 %v5433, %v5573
        %v5742 = vadd.f32 %v5434, %v5574
        %v5743 = vadd.f32 %v5435, %v5575
        %v5744 = vadd.f32 %v5436, %v5576
        %v5745 = vadd.f32 %v5437, %v5577
        %v5746 = vadd.f32 %v5438, %v5578
        %v5747 = vadd.f32 %v5439, %v5579
        %v5748 = vadd.f32 %v5440, %v5580
        %v5749 = vadd.f32 %v5441, %v5581
        %v5750 = vadd.f32 %v5442, %v5582
        %v5751 = vadd.f32 %v5443, %v5583
        %v5752 = vadd.f32 %v5444, %v5584
        %v5753 = vadd.f32 %v5445, %v5585
        %v5754 = vadd.f32 %v5446, %v5586
        %v5755 = vadd.f32 %v5447, %v5587
        %v5756 = vadd.f32 %v5448, %v5588
        %v5757 = vadd.f32 %v5449, %v5589
        %v5758 = vadd.f32 %v5450, %v5590
        %v5759 = vadd.f32 %v5451, %v5591
        %v5760 = vadd.f32 %v5452, %v5592
        %v5761 = vadd.f32 %v5453, %v5593
        %v5762 = vadd.f32 %v5454, %v5594
        %v5763 = vadd.f32 %v5455, %v5595
        %v5764 = vadd.f32 %v5456, %v5596
        %v5765 = vadd.f32 %v5457, %v5597
        %v5766 = vadd.f32 %v5458, %v5598
        %v5767 = vadd.f32 %v5459, %v5599
        %v5768 = vadd.f32 %v5460, %v5600
        %v5769 = vadd.f32 %v5461, %v5601
        %v5770 = vadd.f32 %v5462, %v5602
        %v5771 = vadd.f32 %v5463, %v5603
        %v5772 = vadd.f32 %v5464, %v5604
        %v5773 = vadd.f32 %v5465, %v5605
        %v5774 = vadd.f32 %v5466, %v5606
        %v5775 = vadd.f32 %v5467, %v5607
        %v5776 = vadd.f32 %v5468, %v5608
        %v5777 = vadd.f32 %v5469, %v5609
        %v5778 = vadd.f32 %v5470, %v5610
        %v5779 = vadd.f32 %v5471, %v5611
        %v5780 = vadd.f32 %v5472, %v5612
        %v5781 = vadd.f32 %v5473, %v5613
        %v5782 = vadd.f32 %v5474, %v5614
        %v5783 = vadd.f32 %v5475, %v5615
        %v5784 = vadd.f32 %v5476, %v5616
        %v5785 = vadd.f32 %v5477, %v5617
        %v5786 = vadd.f32 %v5478, %v5618
        %v5787 = vadd.f32 %v5479, %v5619
        %v5788 = vadd.f32 %v5480, %v5620
        %v5789 = vadd.f32 %v5481, %v5621
        %v5790 = vadd.f32 %v5482, %v5622
        %v5791 = vadd.f32 %v5483, %v5623
        %v5792 = vadd.f32 %v5484, %v5624
        %v5793 = vadd.f32 %v5485, %v5625
        %v5794 = vadd.f32 %v5486, %v5626
        %v5795 = vadd.f32 %v5487, %v5627
        %v5796 = vadd.f32 %v5488, %v5628
        %v5797 = vadd.f32 %v5489, %v5629
        %v5798 = vadd.f32 %v5490, %v5630
        %v5799 = vadd.f32 %v5491, %v5631
        %v5800 = vadd.f32 %v5492, %v5632
        %v5801 = vadd.f32 %v5493, %v5633
        %v5802 = vadd.f32 %v5494, %v5634
        %v5803 = vadd.f32 %v5495, %v5635
        %v5804 = vadd.f32 %v5496, %v5636
        %v5805 = vadd.f32 %v5497, %v5637
        %v5806 = vadd.f32 %v5498, %v5638
        %v5807 = vadd.f32 %v5499, %v5639
        %v5808 = vadd.f32 %v5500, %v5640
        %v5809 = vadd.f32 %v5501, %v5641
        %v5810 = vadd.f32 %v5502, %v5642
        %v5811 = vadd.f32 %v5503, %v5643
        %v5812 = vadd.f32 %v5504, %v5644
        %v5813 = vmul.f32 %v5729, 0.0019286216
        %v5814 = vmul.f32 %v5730, 0.0019286216
        %v5815 = vmul.f32 %v5731, 0.0019286216
        %v5816 = vmul.f32 %v5732, 0.0019286216
        %v5817 = vmul.f32 %v5733, 0.0019286216
        %v5818 = vmul.f32 %v5734, 0.0019286216
        %v5819 = vmul.f32 %v5735, 0.0019286216
        %v5820 = vmul.f32 %v5736, 0.0019286216
        %v5821 = vmul.f32 %v5737, 0.0019286216
        %v5822 = vmul.f32 %v5738, 0.0019286216
        %v5823 = vmul.f32 %v5739, 0.0019286216
        %v5824 = vmul.f32 %v5740, 0.0019286216
        %v5825 = vmul.f32 %v5741, 0.0019286216
        %v5826 = vmul.f32 %v5742, 0.0019286216
        %v5827 = vmul.f32 %v5743, 0.0019286216
        %v5828 = vmul.f32 %v5744, 0.0019286216
        %v5829 = vmul.f32 %v5745, 0.0019286216
        %v5830 = vmul.f32 %v5746, 0.0019286216
        %v5831 = vmul.f32 %v5747, 0.0019286216
        %v5832 = vmul.f32 %v5748, 0.0019286216
        %v5833 = vmul.f32 %v5749, 0.0019286216
        %v5834 = vmul.f32 %v5750, 0.0019286216
        %v5835 = vmul.f32 %v5751, 0.0019286216
        %v5836 = vmul.f32 %v5752, 0.0019286216
        %v5837 = vmul.f32 %v5753, 0.0019286216
        %v5838 = vmul.f32 %v5754, 0.0019286216
        %v5839 = vmul.f32 %v5755, 0.0019286216
        %v5840 = vmul.f32 %v5756, 0.0019286216
        %v5841 = vmul.f32 %v5757, 0.0019286216
        %v5842 = vmul.f32 %v5758, 0.0019286216
        %v5843 = vmul.f32 %v5759, 0.0019286216
        %v5844 = vmul.f32 %v5760, 0.0019286216
        %v5845 = vmul.f32 %v5761, 0.0019286216
        %v5846 = vmul.f32 %v5762, 0.0019286216
        %v5847 = vmul.f32 %v5763, 0.0019286216
        %v5848 = vmul.f32 %v5764, 0.0019286216
        %v5849 = vmul.f32 %v5765, 0.0019286216
        %v5850 = vmul.f32 %v5766, 0.0019286216
        %v5851 = vmul.f32 %v5767, 0.0019286216
        %v5852 = vmul.f32 %v5768, 0.0019286216
        %v5853 = vmul.f32 %v5769, 0.0019286216
        %v5854 = vmul.f32 %v5770, 0.0019286216
        %v5855 = vmul.f32 %v5771, 0.0019286216
        %v5856 = vmul.f32 %v5772, 0.0019286216
        %v5857 = vmul.f32 %v5773, 0.0019286216
        %v5858 = vmul.f32 %v5774, 0.0019286216
        %v5859 = vmul.f32 %v5775, 0.0019286216
        %v5860 = vmul.f32 %v5776, 0.0019286216
        %v5861 = vmul.f32 %v5777, 0.0019286216
        %v5862 = vmul.f32 %v5778, 0.0019286216
        %v5863 = vmul.f32 %v5779, 0.0019286216
        %v5864 = vmul.f32 %v5780, 0.0019286216
        %v5865 = vmul.f32 %v5781, 0.0019286216
        %v5866 = vmul.f32 %v5782, 0.0019286216
        %v5867 = vmul.f32 %v5783, 0.0019286216
        %v5868 = vmul.f32 %v5784, 0.0019286216
        %v5869 = vmul.f32 %v5785, 0.0019286216
        %v5870 = vmul.f32 %v5786, 0.0019286216
        %v5871 = vmul.f32 %v5787, 0.0019286216
        %v5872 = vmul.f32 %v5788, 0.0019286216
        %v5873 = vmul.f32 %v5789, 0.0019286216
        %v5874 = vmul.f32 %v5790, 0.0019286216
        %v5875 = vmul.f32 %v5791, 0.0019286216
        %v5876 = vmul.f32 %v5792, 0.0019286216
        %v5877 = vmul.f32 %v5793, 0.0019286216
        %v5878 = vmul.f32 %v5794, 0.0019286216
        %v5879 = vmul.f32 %v5795, 0.0019286216
        %v5880 = vmul.f32 %v5796, 0.0019286216
        %v5881 = vmul.f32 %v5797, 0.0019286216
        %v5882 = vmul.f32 %v5798, 0.0019286216
        %v5883 = vmul.f32 %v5799, 0.0019286216
        %v5884 = vmul.f32 %v5800, 0.0019286216
        %v5885 = vmul.f32 %v5801, 0.0019286216
        %v5886 = vmul.f32 %v5802, 0.0019286216
        %v5887 = vmul.f32 %v5803, 0.0019286216
        %v5888 = vmul.f32 %v5804, 0.0019286216
        %v5889 = vmul.f32 %v5805, 0.0019286216
        %v5890 = vmul.f32 %v5806, 0.0019286216
        %v5891 = vmul.f32 %v5807, 0.0019286216
        %v5892 = vmul.f32 %v5808, 0.0019286216
        %v5893 = vmul.f32 %v5809, 0.0019286216
        %v5894 = vmul.f32 %v5810, 0.0019286216
        %v5895 = vmul.f32 %v5811, 0.0019286216
        %v5896 = vmul.f32 %v5812, 0.0019286216
        %v5897 = vadd.f32 %v5435, %v5547
        %v5898 = vadd.f32 %v5436, %v5548
        %v5899 = vadd.f32 %v5437, %v5549
        %v5900 = vadd.f32 %v5438, %v5550
        %v5901 = vadd.f32 %v5439, %v5551
        %v5902 = vadd.f32 %v5440, %v5552
        %v5903 = vadd.f32 %v5441, %v5553
        %v5904 = vadd.f32 %v5442, %v5554
        %v5905 = vadd.f32 %v5443, %v5555
        %v5906 = vadd.f32 %v5444, %v5556
        %v5907 = vadd.f32 %v5445, %v5557
        %v5908 = vadd.f32 %v5446, %v5558
        %v5909 = vadd.f32 %v5447, %v5559
        %v5910 = vadd.f32 %v5448, %v5560
        %v5911 = vadd.f32 %v5449, %v5561
        %v5912 = vadd.f32 %v5450, %v5562
        %v5913 = vadd.f32 %v5451, %v5563
        %v5914 = vadd.f32 %v5452, %v5564
        %v5915 = vadd.f32 %v5453, %v5565
        %v5916 = vadd.f32 %v5454, %v5566
        %v5917 = vadd.f32 %v5455, %v5567
        %v5918 = vadd.f32 %v5456, %v5568
        %v5919 = vadd.f32 %v5457, %v5569
        %v5920 = vadd.f32 %v5458, %v5570
        %v5921 = vadd.f32 %v5459, %v5571
        %v5922 = vadd.f32 %v5460, %v5572
        %v5923 = vadd.f32 %v5461, %v5573
        %v5924 = vadd.f32 %v5462, %v5574
        %v5925 = vadd.f32 %v5463, %v5575
        %v5926 = vadd.f32 %v5464, %v5576
        %v5927 = vadd.f32 %v5465, %v5577
        %v5928 = vadd.f32 %v5466, %v5578
        %v5929 = vadd.f32 %v5467, %v5579
        %v5930 = vadd.f32 %v5468, %v5580
        %v5931 = vadd.f32 %v5469, %v5581
        %v5932 = vadd.f32 %v5470, %v5582
        %v5933 = vadd.f32 %v5471, %v5583
        %v5934 = vadd.f32 %v5472, %v5584
        %v5935 = vadd.f32 %v5473, %v5585
        %v5936 = vadd.f32 %v5474, %v5586
        %v5937 = vadd.f32 %v5475, %v5587
        %v5938 = vadd.f32 %v5476, %v5588
        %v5939 = vadd.f32 %v5477, %v5589
        %v5940 = vadd.f32 %v5478, %v5590
        %v5941 = vadd.f32 %v5479, %v5591
        %v5942 = vadd.f32 %v5480, %v5592
        %v5943 = vadd.f32 %v5481, %v5593
        %v5944 = vadd.f32 %v5482, %v5594
        %v5945 = vadd.f32 %v5483, %v5595
        %v5946 = vadd.f32 %v5484, %v5596
        %v5947 = vadd.f32 %v5485, %v5597
        %v5948 = vadd.f32 %v5486, %v5598
        %v5949 = vadd.f32 %v5487, %v5599
        %v5950 = vadd.f32 %v5488, %v5600
        %v5951 = vadd.f32 %v5489, %v5601
        %v5952 = vadd.f32 %v5490, %v5602
        %v5953 = vadd.f32 %v5491, %v5603
        %v5954 = vadd.f32 %v5492, %v5604
        %v5955 = vadd.f32 %v5493, %v5605
        %v5956 = vadd.f32 %v5494, %v5606
        %v5957 = vadd.f32 %v5495, %v5607
        %v5958 = vadd.f32 %v5496, %v5608
        %v5959 = vadd.f32 %v5497, %v5609
        %v5960 = vadd.f32 %v5498, %v5610
        %v5961 = vadd.f32 %v5499, %v5611
        %v5962 = vadd.f32 %v5500, %v5612
        %v5963 = vadd.f32 %v5501, %v5613
        %v5964 = vadd.f32 %v5502, %v5614
        %v5965 = vadd.f32 %v5503, %v5615
        %v5966 = vadd.f32 %v5504, %v5616
        %v5967 = vadd.f32 %v5505, %v5617
        %v5968 = vadd.f32 %v5506, %v5618
        %v5969 = vadd.f32 %v5507, %v5619
        %v5970 = vadd.f32 %v5508, %v5620
        %v5971 = vadd.f32 %v5509, %v5621
        %v5972 = vadd.f32 %v5510, %v5622
        %v5973 = vadd.f32 %v5511, %v5623
        %v5974 = vadd.f32 %v5512, %v5624
        %v5975 = vadd.f32 %v5513, %v5625
        %v5976 = vadd.f32 %v5514, %v5626
        %v5977 = vadd.f32 %v5515, %v5627
        %v5978 = vadd.f32 %v5516, %v5628
        %v5979 = vadd.f32 %v5517, %v5629
        %v5980 = vadd.f32 %v5518, %v5630
        %v5981 = vmul.f32 %v5897, 0.011185518
        %v5982 = vmul.f32 %v5898, 0.011185518
        %v5983 = vmul.f32 %v5899, 0.011185518
        %v5984 = vmul.f32 %v5900, 0.011185518
        %v5985 = vmul.f32 %v5901, 0.011185518
        %v5986 = vmul.f32 %v5902, 0.011185518
        %v5987 = vmul.f32 %v5903, 0.011185518
        %v5988 = vmul.f32 %v5904, 0.011185518
        %v5989 = vmul.f32 %v5905, 0.011185518
        %v5990 = vmul.f32 %v5906, 0.011185518
        %v5991 = vmul.f32 %v5907, 0.011185518
        %v5992 = vmul.f32 %v5908, 0.011185518
        %v5993 = vmul.f32 %v5909, 0.011185518
        %v5994 = vmul.f32 %v5910, 0.011185518
        %v5995 = vmul.f32 %v5911, 0.011185518
        %v5996 = vmul.f32 %v5912, 0.011185518
        %v5997 = vmul.f32 %v5913, 0.011185518
        %v5998 = vmul.f32 %v5914, 0.011185518
        %v5999 = vmul.f32 %v5915, 0.011185518
        %v6000 = vmul.f32 %v5916, 0.011185518
        %v6001 = vmul.f32 %v5917, 0.011185518
        %v6002 = vmul.f32 %v5918, 0.011185518
        %v6003 = vmul.f32 %v5919, 0.011185518
        %v6004 = vmul.f32 %v5920, 0.011185518
        %v6005 = vmul.f32 %v5921, 0.011185518
        %v6006 = vmul.f32 %v5922, 0.011185518
        %v6007 = vmul.f32 %v5923, 0.011185518
        %v6008 = vmul.f32 %v5924, 0.011185518
        %v6009 = vmul.f32 %v5925, 0.011185518
        %v6010 = vmul.f32 %v5926, 0.011185518
        %v6011 = vmul.f32 %v5927, 0.011185518
        %v6012 = vmul.f32 %v5928, 0.011185518
        %v6013 = vmul.f32 %v5929, 0.011185518
        %v6014 = vmul.f32 %v5930, 0.011185518
        %v6015 = vmul.f32 %v5931, 0.011185518
        %v6016 = vmul.f32 %v5932, 0.011185518
        %v6017 = vmul.f32 %v5933, 0.011185518
        %v6018 = vmul.f32 %v5934, 0.011185518
        %v6019 = vmul.f32 %v5935, 0.011185518
        %v6020 = vmul.f32 %v5936, 0.011185518
        %v6021 = vmul.f32 %v5937, 0.011185518
        %v6022 = vmul.f32 %v5938, 0.011185518
        %v6023 = vmul.f32 %v5939, 0.011185518
        %v6024 = vmul.f32 %v5940, 0.011185518
        %v6025 = vmul.f32 %v5941, 0.011185518
        %v6026 = vmul.f32 %v5942, 0.011185518
        %v6027 = vmul.f32 %v5943, 0.011185518
        %v6028 = vmul.f32 %v5944, 0.011185518
        %v6029 = vmul.f32 %v5945, 0.011185518
        %v6030 = vmul.f32 %v5946, 0.011185518
        %v6031 = vmul.f32 %v5947, 0.011185518
        %v6032 = vmul.f32 %v5948, 0.011185518
        %v6033 = vmul.f32 %v5949, 0.011185518
        %v6034 = vmul.f32 %v5950, 0.011185518
        %v6035 = vmul.f32 %v5951, 0.011185518
        %v6036 = vmul.f32 %v5952, 0.011185518
        %v6037 = vmul.f32 %v5953, 0.011185518
        %v6038 = vmul.f32 %v5954, 0.011185518
        %v6039 = vmul.f32 %v5955, 0.011185518
        %v6040 = vmul.f32 %v5956, 0.011185518
        %v6041 = vmul.f32 %v5957, 0.011185518
        %v6042 = vmul.f32 %v5958, 0.011185518
        %v6043 = vmul.f32 %v5959, 0.011185518
        %v6044 = vmul.f32 %v5960, 0.011185518
        %v6045 = vmul.f32 %v5961, 0.011185518
        %v6046 = vmul.f32 %v5962, 0.011185518
        %v6047 = vmul.f32 %v5963, 0.011185518
        %v6048 = vmul.f32 %v5964, 0.011185518
        %v6049 = vmul.f32 %v5965, 0.011185518
        %v6050 = vmul.f32 %v5966, 0.011185518
        %v6051 = vmul.f32 %v5967, 0.011185518
        %v6052 = vmul.f32 %v5968, 0.011185518
        %v6053 = vmul.f32 %v5969, 0.011185518
        %v6054 = vmul.f32 %v5970, 0.011185518
        %v6055 = vmul.f32 %v5971, 0.011185518
        %v6056 = vmul.f32 %v5972, 0.011185518
        %v6057 = vmul.f32 %v5973, 0.011185518
        %v6058 = vmul.f32 %v5974, 0.011185518
        %v6059 = vmul.f32 %v5975, 0.011185518
        %v6060 = vmul.f32 %v5976, 0.011185518
        %v6061 = vmul.f32 %v5977, 0.011185518
        %v6062 = vmul.f32 %v5978, 0.011185518
        %v6063 = vmul.f32 %v5979, 0.011185518
        %v6064 = vmul.f32 %v5980, 0.011185518
        %v6065 = vadd.f32 %v5645, %v5981
        %v6066 = vadd.f32 %v5646, %v5982
        %v6067 = vadd.f32 %v5647, %v5983
        %v6068 = vadd.f32 %v5648, %v5984
        %v6069 = vadd.f32 %v5649, %v5985
        %v6070 = vadd.f32 %v5650, %v5986
        %v6071 = vadd.f32 %v5651, %v5987
        %v6072 = vadd.f32 %v5652, %v5988
        %v6073 = vadd.f32 %v5653, %v5989
        %v6074 = vadd.f32 %v5654, %v5990
        %v6075 = vadd.f32 %v5655, %v5991
        %v6076 = vadd.f32 %v5656, %v5992
        %v6077 = vadd.f32 %v5657, %v5993
        %v6078 = vadd.f32 %v5658, %v5994
        %v6079 = vadd.f32 %v5659, %v5995
        %v6080 = vadd.f32 %v5660, %v5996
        %v6081 = vadd.f32 %v5661, %v5997
        %v6082 = vadd.f32 %v5662, %v5998
        %v6083 = vadd.f32 %v5663, %v5999
        %v6084 = vadd.f32 %v5664, %v6000
        %v6085 = vadd.f32 %v5665, %v6001
        %v6086 = vadd.f32 %v5666, %v6002
        %v6087 = vadd.f32 %v5667, %v6003
        %v6088 = vadd.f32 %v5668, %v6004
        %v6089 = vadd.f32 %v5669, %v6005
        %v6090 = vadd.f32 %v5670, %v6006
        %v6091 = vadd.f32 %v5671, %v6007
        %v6092 = vadd.f32 %v5672, %v6008
        %v6093 = vadd.f32 %v5673, %v6009
        %v6094 = vadd.f32 %v5674, %v6010
        %v6095 = vadd.f32 %v5675, %v6011
        %v6096 = vadd.f32 %v5676, %v6012
        %v6097 = vadd.f32 %v5677, %v6013
        %v6098 = vadd.f32 %v5678, %v6014
        %v6099 = vadd.f32 %v5679, %v6015
        %v6100 = vadd.f32 %v5680, %v6016
        %v6101 = vadd.f32 %v5681, %v6017
        %v6102 = vadd.f32 %v5682, %v6018
        %v6103 = vadd.f32 %v5683, %v6019
        %v6104 = vadd.f32 %v5684, %v6020
        %v6105 = vadd.f32 %v5685, %v6021
        %v6106 = vadd.f32 %v5686, %v6022
        %v6107 = vadd.f32 %v5687, %v6023
        %v6108 = vadd.f32 %v5688, %v6024
        %v6109 = vadd.f32 %v5689, %v6025
        %v6110 = vadd.f32 %v5690, %v6026
        %v6111 = vadd.f32 %v5691, %v6027
        %v6112 = vadd.f32 %v5692, %v6028
        %v6113 = vadd.f32 %v5693, %v6029
        %v6114 = vadd.f32 %v5694, %v6030
        %v6115 = vadd.f32 %v5695, %v6031
        %v6116 = vadd.f32 %v5696, %v6032
        %v6117 = vadd.f32 %v5697, %v6033
        %v6118 = vadd.f32 %v5698, %v6034
        %v6119 = vadd.f32 %v5699, %v6035
        %v6120 = vadd.f32 %v5700, %v6036
        %v6121 = vadd.f32 %v5701, %v6037
        %v6122 = vadd.f32 %v5702, %v6038
        %v6123 = vadd.f32 %v5703, %v6039
        %v6124 = vadd.f32 %v5704, %v6040
        %v6125 = vadd.f32 %v5705, %v6041
        %v6126 = vadd.f32 %v5706, %v6042
        %v6127 = vadd.f32 %v5707, %v6043
        %v6128 = vadd.f32 %v5708, %v6044
        %v6129 = vadd.f32 %v5709, %v6045
        %v6130 = vadd.f32 %v5710, %v6046
        %v6131 = vadd.f32 %v5711, %v6047
        %v6132 = vadd.f32 %v5712, %v6048
        %v6133 = vadd.f32 %v5713, %v6049
        %v6134 = vadd.f32 %v5714, %v6050
        %v6135 = vadd.f32 %v5715, %v6051
        %v6136 = vadd.f32 %v5716, %v6052
        %v6137 = vadd.f32 %v5717, %v6053
        %v6138 = vadd.f32 %v5718, %v6054
        %v6139 = vadd.f32 %v5719, %v6055
        %v6140 = vadd.f32 %v5720, %v6056
        %v6141 = vadd.f32 %v5721, %v6057
        %v6142 = vadd.f32 %v5722, %v6058
        %v6143 = vadd.f32 %v5723, %v6059
        %v6144 = vadd.f32 %v5724, %v6060
        %v6145 = vadd.f32 %v5725, %v6061
        %v6146 = vadd.f32 %v5726, %v6062
        %v6147 = vadd.f32 %v5727, %v6063
        %v6148 = vadd.f32 %v5728, %v6064
        %v6149 = vadd.f32 %v5449, %v5533
        %v6150 = vadd.f32 %v5450, %v5534
        %v6151 = vadd.f32 %v5451, %v5535
        %v6152 = vadd.f32 %v5452, %v5536
        %v6153 = vadd.f32 %v5453, %v5537
        %v6154 = vadd.f32 %v5454, %v5538
        %v6155 = vadd.f32 %v5455, %v5539
        %v6156 = vadd.f32 %v5456, %v5540
        %v6157 = vadd.f32 %v5457, %v5541
        %v6158 = vadd.f32 %v5458, %v5542
        %v6159 = vadd.f32 %v5459, %v5543
        %v6160 = vadd.f32 %v5460, %v5544
        %v6161 = vadd.f32 %v5461, %v5545
        %v6162 = vadd.f32 %v5462, %v5546
        %v6163 = vadd.f32 %v5463, %v5547
        %v6164 = vadd.f32 %v5464, %v5548
        %v6165 = vadd.f32 %v5465, %v5549
        %v6166 = vadd.f32 %v5466, %v5550
        %v6167 = vadd.f32 %v5467, %v5551
        %v6168 = vadd.f32 %v5468, %v5552
        %v6169 = vadd.f32 %v5469, %v5553
        %v6170 = vadd.f32 %v5470, %v5554
        %v6171 = vadd.f32 %v5471, %v5555
        %v6172 = vadd.f32 %v5472, %v5556
        %v6173 = vadd.f32 %v5473, %v5557
        %v6174 = vadd.f32 %v5474, %v5558
        %v6175 = vadd.f32 %v5475, %v5559
        %v6176 = vadd.f32 %v5476, %v5560
        %v6177 = vadd.f32 %v5477, %v5561
        %v6178 = vadd.f32 %v5478, %v5562
        %v6179 = vadd.f32 %v5479, %v5563
        %v6180 = vadd.f32 %v5480, %v5564
        %v6181 = vadd.f32 %v5481, %v5565
        %v6182 = vadd.f32 %v5482, %v5566
        %v6183 = vadd.f32 %v5483, %v5567
        %v6184 = vadd.f32 %v5484, %v5568
        %v6185 = vadd.f32 %v5485, %v5569
        %v6186 = vadd.f32 %v5486, %v5570
        %v6187 = vadd.f32 %v5487, %v5571
        %v6188 = vadd.f32 %v5488, %v5572
        %v6189 = vadd.f32 %v5489, %v5573
        %v6190 = vadd.f32 %v5490, %v5574
        %v6191 = vadd.f32 %v5491, %v5575
        %v6192 = vadd.f32 %v5492, %v5576
        %v6193 = vadd.f32 %v5493, %v5577
        %v6194 = vadd.f32 %v5494, %v5578
        %v6195 = vadd.f32 %v5495, %v5579
        %v6196 = vadd.f32 %v5496, %v5580
        %v6197 = vadd.f32 %v5497, %v5581
        %v6198 = vadd.f32 %v5498, %v5582
        %v6199 = vadd.f32 %v5499, %v5583
        %v6200 = vadd.f32 %v5500, %v5584
        %v6201 = vadd.f32 %v5501, %v5585
        %v6202 = vadd.f32 %v5502, %v5586
        %v6203 = vadd.f32 %v5503, %v5587
        %v6204 = vadd.f32 %v5504, %v5588
        %v6205 = vadd.f32 %v5505, %v5589
        %v6206 = vadd.f32 %v5506, %v5590
        %v6207 = vadd.f32 %v5507, %v5591
        %v6208 = vadd.f32 %v5508, %v5592
        %v6209 = vadd.f32 %v5509, %v5593
        %v6210 = vadd.f32 %v5510, %v5594
        %v6211 = vadd.f32 %v5511, %v5595
        %v6212 = vadd.f32 %v5512, %v5596
        %v6213 = vadd.f32 %v5513, %v5597
        %v6214 = vadd.f32 %v5514, %v5598
        %v6215 = vadd.f32 %v5515, %v5599
        %v6216 = vadd.f32 %v5516, %v5600
        %v6217 = vadd.f32 %v5517, %v5601
        %v6218 = vadd.f32 %v5518, %v5602
        %v6219 = vadd.f32 %v5519, %v5603
        %v6220 = vadd.f32 %v5520, %v5604
        %v6221 = vadd.f32 %v5521, %v5605
        %v6222 = vadd.f32 %v5522, %v5606
        %v6223 = vadd.f32 %v5523, %v5607
        %v6224 = vadd.f32 %v5524, %v5608
        %v6225 = vadd.f32 %v5525, %v5609
        %v6226 = vadd.f32 %v5526, %v5610
        %v6227 = vadd.f32 %v5527, %v5611
        %v6228 = vadd.f32 %v5528, %v5612
        %v6229 = vadd.f32 %v5529, %v5613
        %v6230 = vadd.f32 %v5530, %v5614
        %v6231 = vadd.f32 %v5531, %v5615
        %v6232 = vadd.f32 %v5532, %v5616
        %v6233 = vmul.f32 %v6149, 0.043895308
        %v6234 = vmul.f32 %v6150, 0.043895308
        %v6235 = vmul.f32 %v6151, 0.043895308
        %v6236 = vmul.f32 %v6152, 0.043895308
        %v6237 = vmul.f32 %v6153, 0.043895308
        %v6238 = vmul.f32 %v6154, 0.043895308
        %v6239 = vmul.f32 %v6155, 0.043895308
        %v6240 = vmul.f32 %v6156, 0.043895308
        %v6241 = vmul.f32 %v6157, 0.043895308
        %v6242 = vmul.f32 %v6158, 0.043895308
        %v6243 = vmul.f32 %v6159, 0.043895308
        %v6244 = vmul.f32 %v6160, 0.043895308
        %v6245 = vmul.f32 %v6161, 0.043895308
        %v6246 = vmul.f32 %v6162, 0.043895308
        %v6247 = vmul.f32 %v6163, 0.043895308
        %v6248 = vmul.f32 %v6164, 0.043895308
        %v6249 = vmul.f32 %v6165, 0.043895308
        %v6250 = vmul.f32 %v6166, 0.043895308
        %v6251 = vmul.f32 %v6167, 0.043895308
        %v6252 = vmul.f32 %v6168, 0.043895308
        %v6253 = vmul.f32 %v6169, 0.043895308
        %v6254 = vmul.f32 %v6170, 0.043895308
        %v6255 = vmul.f32 %v6171, 0.043895308
        %v6256 = vmul.f32 %v6172, 0.043895308
        %v6257 = vmul.f32 %v6173, 0.043895308
        %v6258 = vmul.f32 %v6174, 0.043895308
        %v6259 = vmul.f32 %v6175, 0.043895308
        %v6260 = vmul.f32 %v6176, 0.043895308
        %v6261 = vmul.f32 %v6177, 0.043895308
        %v6262 = vmul.f32 %v6178, 0.043895308
        %v6263 = vmul.f32 %v6179, 0.043895308
        %v6264 = vmul.f32 %v6180, 0.043895308
        %v6265 = vmul.f32 %v6181, 0.043895308
        %v6266 = vmul.f32 %v6182, 0.043895308
        %v6267 = vmul.f32 %v6183, 0.043895308
        %v6268 = vmul.f32 %v6184, 0.043895308
        %v6269 = vmul.f32 %v6185, 0.043895308
        %v6270 = vmul.f32 %v6186, 0.043895308
        %v6271 = vmul.f32 %v6187, 0.043895308
        %v6272 = vmul.f32 %v6188, 0.043895308
        %v6273 = vmul.f32 %v6189, 0.043895308
        %v6274 = vmul.f32 %v6190, 0.043895308
        %v6275 = vmul.f32 %v6191, 0.043895308
        %v6276 = vmul.f32 %v6192, 0.043895308
        %v6277 = vmul.f32 %v6193, 0.043895308
        %v6278 = vmul.f32 %v6194, 0.043895308
        %v6279 = vmul.f32 %v6195, 0.043895308
        %v6280 = vmul.f32 %v6196, 0.043895308
        %v6281 = vmul.f32 %v6197, 0.043895308
        %v6282 = vmul.f32 %v6198, 0.043895308
        %v6283 = vmul.f32 %v6199, 0.043895308
        %v6284 = vmul.f32 %v6200, 0.043895308
        %v6285 = vmul.f32 %v6201, 0.043895308
        %v6286 = vmul.f32 %v6202, 0.043895308
        %v6287 = vmul.f32 %v6203, 0.043895308
        %v6288 = vmul.f32 %v6204, 0.043895308
        %v6289 = vmul.f32 %v6205, 0.043895308
        %v6290 = vmul.f32 %v6206, 0.043895308
        %v6291 = vmul.f32 %v6207, 0.043895308
        %v6292 = vmul.f32 %v6208, 0.043895308
        %v6293 = vmul.f32 %v6209, 0.043895308
        %v6294 = vmul.f32 %v6210, 0.043895308
        %v6295 = vmul.f32 %v6211, 0.043895308
        %v6296 = vmul.f32 %v6212, 0.043895308
        %v6297 = vmul.f32 %v6213, 0.043895308
        %v6298 = vmul.f32 %v6214, 0.043895308
        %v6299 = vmul.f32 %v6215, 0.043895308
        %v6300 = vmul.f32 %v6216, 0.043895308
        %v6301 = vmul.f32 %v6217, 0.043895308
        %v6302 = vmul.f32 %v6218, 0.043895308
        %v6303 = vmul.f32 %v6219, 0.043895308
        %v6304 = vmul.f32 %v6220, 0.043895308
        %v6305 = vmul.f32 %v6221, 0.043895308
        %v6306 = vmul.f32 %v6222, 0.043895308
        %v6307 = vmul.f32 %v6223, 0.043895308
        %v6308 = vmul.f32 %v6224, 0.043895308
        %v6309 = vmul.f32 %v6225, 0.043895308
        %v6310 = vmul.f32 %v6226, 0.043895308
        %v6311 = vmul.f32 %v6227, 0.043895308
        %v6312 = vmul.f32 %v6228, 0.043895308
        %v6313 = vmul.f32 %v6229, 0.043895308
        %v6314 = vmul.f32 %v6230, 0.043895308
        %v6315 = vmul.f32 %v6231, 0.043895308
        %v6316 = vmul.f32 %v6232, 0.043895308
        %v6317 = vadd.f32 %v5813, %v6233
        %v6318 = vadd.f32 %v5814, %v6234
        %v6319 = vadd.f32 %v5815, %v6235
        %v6320 = vadd.f32 %v5816, %v6236
        %v6321 = vadd.f32 %v5817, %v6237
        %v6322 = vadd.f32 %v5818, %v6238
        %v6323 = vadd.f32 %v5819, %v6239
        %v6324 = vadd.f32 %v5820, %v6240
        %v6325 = vadd.f32 %v5821, %v6241
        %v6326 = vadd.f32 %v5822, %v6242
        %v6327 = vadd.f32 %v5823, %v6243
        %v6328 = vadd.f32 %v5824, %v6244
        %v6329 = vadd.f32 %v5825, %v6245
        %v6330 = vadd.f32 %v5826, %v6246
        %v6331 = vadd.f32 %v5827, %v6247
        %v6332 = vadd.f32 %v5828, %v6248
        %v6333 = vadd.f32 %v5829, %v6249
        %v6334 = vadd.f32 %v5830, %v6250
        %v6335 = vadd.f32 %v5831, %v6251
        %v6336 = vadd.f32 %v5832, %v6252
        %v6337 = vadd.f32 %v5833, %v6253
        %v6338 = vadd.f32 %v5834, %v6254
        %v6339 = vadd.f32 %v5835, %v6255
        %v6340 = vadd.f32 %v5836, %v6256
        %v6341 = vadd.f32 %v5837, %v6257
        %v6342 = vadd.f32 %v5838, %v6258
        %v6343 = vadd.f32 %v5839, %v6259
        %v6344 = vadd.f32 %v5840, %v6260
        %v6345 = vadd.f32 %v5841, %v6261
        %v6346 = vadd.f32 %v5842, %v6262
        %v6347 = vadd.f32 %v5843, %v6263
        %v6348 = vadd.f32 %v5844, %v6264
        %v6349 = vadd.f32 %v5845, %v6265
        %v6350 = vadd.f32 %v5846, %v6266
        %v6351 = vadd.f32 %v5847, %v6267
        %v6352 = vadd.f32 %v5848, %v6268
        %v6353 = vadd.f32 %v5849, %v6269
        %v6354 = vadd.f32 %v5850, %v6270
        %v6355 = vadd.f32 %v5851, %v6271
        %v6356 = vadd.f32 %v5852, %v6272
        %v6357 = vadd.f32 %v5853, %v6273
        %v6358 = vadd.f32 %v5854, %v6274
        %v6359 = vadd.f32 %v5855, %v6275
        %v6360 = vadd.f32 %v5856, %v6276
        %v6361 = vadd.f32 %v5857, %v6277
        %v6362 = vadd.f32 %v5858, %v6278
        %v6363 = vadd.f32 %v5859, %v6279
        %v6364 = vadd.f32 %v5860, %v6280
        %v6365 = vadd.f32 %v5861, %v6281
        %v6366 = vadd.f32 %v5862, %v6282
        %v6367 = vadd.f32 %v5863, %v6283
        %v6368 = vadd.f32 %v5864, %v6284
        %v6369 = vadd.f32 %v5865, %v6285
        %v6370 = vadd.f32 %v5866, %v6286
        %v6371 = vadd.f32 %v5867, %v6287
        %v6372 = vadd.f32 %v5868, %v6288
        %v6373 = vadd.f32 %v5869, %v6289
        %v6374 = vadd.f32 %v5870, %v6290
        %v6375 = vadd.f32 %v5871, %v6291
        %v6376 = vadd.f32 %v5872, %v6292
        %v6377 = vadd.f32 %v5873, %v6293
        %v6378 = vadd.f32 %v5874, %v6294
        %v6379 = vadd.f32 %v5875, %v6295
        %v6380 = vadd.f32 %v5876, %v6296
        %v6381 = vadd.f32 %v5877, %v6297
        %v6382 = vadd.f32 %v5878, %v6298
        %v6383 = vadd.f32 %v5879, %v6299
        %v6384 = vadd.f32 %v5880, %v6300
        %v6385 = vadd.f32 %v5881, %v6301
        %v6386 = vadd.f32 %v5882, %v6302
        %v6387 = vadd.f32 %v5883, %v6303
        %v6388 = vadd.f32 %v5884, %v6304
        %v6389 = vadd.f32 %v5885, %v6305
        %v6390 = vadd.f32 %v5886, %v6306
        %v6391 = vadd.f32 %v5887, %v6307
        %v6392 = vadd.f32 %v5888, %v6308
        %v6393 = vadd.f32 %v5889, %v6309
        %v6394 = vadd.f32 %v5890, %v6310
        %v6395 = vadd.f32 %v5891, %v6311
        %v6396 = vadd.f32 %v5892, %v6312
        %v6397 = vadd.f32 %v5893, %v6313
        %v6398 = vadd.f32 %v5894, %v6314
        %v6399 = vadd.f32 %v5895, %v6315
        %v6400 = vadd.f32 %v5896, %v6316
        %v6401 = vadd.f32 %v5463, %v5519
        %v6402 = vadd.f32 %v5464, %v5520
        %v6403 = vadd.f32 %v5465, %v5521
        %v6404 = vadd.f32 %v5466, %v5522
        %v6405 = vadd.f32 %v5467, %v5523
        %v6406 = vadd.f32 %v5468, %v5524
        %v6407 = vadd.f32 %v5469, %v5525
        %v6408 = vadd.f32 %v5470, %v5526
        %v6409 = vadd.f32 %v5471, %v5527
        %v6410 = vadd.f32 %v5472, %v5528
        %v6411 = vadd.f32 %v5473, %v5529
        %v6412 = vadd.f32 %v5474, %v5530
        %v6413 = vadd.f32 %v5475, %v5531
        %v6414 = vadd.f32 %v5476, %v5532
        %v6415 = vadd.f32 %v5477, %v5533
        %v6416 = vadd.f32 %v5478, %v5534
        %v6417 = vadd.f32 %v5479, %v5535
        %v6418 = vadd.f32 %v5480, %v5536
        %v6419 = vadd.f32 %v5481, %v5537
        %v6420 = vadd.f32 %v5482, %v5538
        %v6421 = vadd.f32 %v5483, %v5539
        %v6422 = vadd.f32 %v5484, %v5540
        %v6423 = vadd.f32 %v5485, %v5541
        %v6424 = vadd.f32 %v5486, %v5542
        %v6425 = vadd.f32 %v5487, %v5543
        %v6426 = vadd.f32 %v5488, %v5544
        %v6427 = vadd.f32 %v5489, %v5545
        %v6428 = vadd.f32 %v5490, %v5546
        %v6429 = vadd.f32 %v5491, %v5547
        %v6430 = vadd.f32 %v5492, %v5548
        %v6431 = vadd.f32 %v5493, %v5549
        %v6432 = vadd.f32 %v5494, %v5550
        %v6433 = vadd.f32 %v5495, %v5551
        %v6434 = vadd.f32 %v5496, %v5552
        %v6435 = vadd.f32 %v5497, %v5553
        %v6436 = vadd.f32 %v5498, %v5554
        %v6437 = vadd.f32 %v5499, %v5555
        %v6438 = vadd.f32 %v5500, %v5556
        %v6439 = vadd.f32 %v5501, %v5557
        %v6440 = vadd.f32 %v5502, %v5558
        %v6441 = vadd.f32 %v5503, %v5559
        %v6442 = vadd.f32 %v5504, %v5560
        %v6443 = vadd.f32 %v5505, %v5561
        %v6444 = vadd.f32 %v5506, %v5562
        %v6445 = vadd.f32 %v5507, %v5563
        %v6446 = vadd.f32 %v5508, %v5564
        %v6447 = vadd.f32 %v5509, %v5565
        %v6448 = vadd.f32 %v5510, %v5566
        %v6449 = vadd.f32 %v5511, %v5567
        %v6450 = vadd.f32 %v5512, %v5568
        %v6451 = vadd.f32 %v5513, %v5569
        %v6452 = vadd.f32 %v5514, %v5570
        %v6453 = vadd.f32 %v5515, %v5571
        %v6454 = vadd.f32 %v5516, %v5572
        %v6455 = vadd.f32 %v5517, %v5573
        %v6456 = vadd.f32 %v5518, %v5574
        %v6457 = vadd.f32 %v5519, %v5575
        %v6458 = vadd.f32 %v5520, %v5576
        %v6459 = vadd.f32 %v5521, %v5577
        %v6460 = vadd.f32 %v5522, %v5578
        %v6461 = vadd.f32 %v5523, %v5579
        %v6462 = vadd.f32 %v5524, %v5580
        %v6463 = vadd.f32 %v5525, %v5581
        %v6464 = vadd.f32 %v5526, %v5582
        %v6465 = vadd.f32 %v5527, %v5583
        %v6466 = vadd.f32 %v5528, %v5584
        %v6467 = vadd.f32 %v5529, %v5585
        %v6468 = vadd.f32 %v5530, %v5586
        %v6469 = vadd.f32 %v5531, %v5587
        %v6470 = vadd.f32 %v5532, %v5588
        %v6471 = vadd.f32 %v5533, %v5589
        %v6472 = vadd.f32 %v5534, %v5590
        %v6473 = vadd.f32 %v5535, %v5591
        %v6474 = vadd.f32 %v5536, %v5592
        %v6475 = vadd.f32 %v5537, %v5593
        %v6476 = vadd.f32 %v5538, %v5594
        %v6477 = vadd.f32 %v5539, %v5595
        %v6478 = vadd.f32 %v5540, %v5596
        %v6479 = vadd.f32 %v5541, %v5597
        %v6480 = vadd.f32 %v5542, %v5598
        %v6481 = vadd.f32 %v5543, %v5599
        %v6482 = vadd.f32 %v5544, %v5600
        %v6483 = vadd.f32 %v5545, %v5601
        %v6484 = vadd.f32 %v5546, %v5602
        %v6485 = vmul.f32 %v6401, 0.11655578
        %v6486 = vmul.f32 %v6402, 0.11655578
        %v6487 = vmul.f32 %v6403, 0.11655578
        %v6488 = vmul.f32 %v6404, 0.11655578
        %v6489 = vmul.f32 %v6405, 0.11655578
        %v6490 = vmul.f32 %v6406, 0.11655578
        %v6491 = vmul.f32 %v6407, 0.11655578
        %v6492 = vmul.f32 %v6408, 0.11655578
        %v6493 = vmul.f32 %v6409, 0.11655578
        %v6494 = vmul.f32 %v6410, 0.11655578
        %v6495 = vmul.f32 %v6411, 0.11655578
        %v6496 = vmul.f32 %v6412, 0.11655578
        %v6497 = vmul.f32 %v6413, 0.11655578
        %v6498 = vmul.f32 %v6414, 0.11655578
        %v6499 = vmul.f32 %v6415, 0.11655578
        %v6500 = vmul.f32 %v6416, 0.11655578
        %v6501 = vmul.f32 %v6417, 0.11655578
        %v6502 = vmul.f32 %v6418, 0.11655578
        %v6503 = vmul.f32 %v6419, 0.11655578
        %v6504 = vmul.f32 %v6420, 0.11655578
        %v6505 = vmul.f32 %v6421, 0.11655578
        %v6506 = vmul.f32 %v6422, 0.11655578
        %v6507 = vmul.f32 %v6423, 0.11655578
        %v6508 = vmul.f32 %v6424, 0.11655578
        %v6509 = vmul.f32 %v6425, 0.11655578
        %v6510 = vmul.f32 %v6426, 0.11655578
        %v6511 = vmul.f32 %v6427, 0.11655578
        %v6512 = vmul.f32 %v6428, 0.11655578
        %v6513 = vmul.f32 %v6429, 0.11655578
        %v6514 = vmul.f32 %v6430, 0.11655578
        %v6515 = vmul.f32 %v6431, 0.11655578
        %v6516 = vmul.f32 %v6432, 0.11655578
        %v6517 = vmul.f32 %v6433, 0.11655578
        %v6518 = vmul.f32 %v6434, 0.11655578
        %v6519 = vmul.f32 %v6435, 0.11655578
        %v6520 = vmul.f32 %v6436, 0.11655578
        %v6521 = vmul.f32 %v6437, 0.11655578
        %v6522 = vmul.f32 %v6438, 0.11655578
        %v6523 = vmul.f32 %v6439, 0.11655578
        %v6524 = vmul.f32 %v6440, 0.11655578
        %v6525 = vmul.f32 %v6441, 0.11655578
        %v6526 = vmul.f32 %v6442, 0.11655578
        %v6527 = vmul.f32 %v6443, 0.11655578
        %v6528 = vmul.f32 %v6444, 0.11655578
        %v6529 = vmul.f32 %v6445, 0.11655578
        %v6530 = vmul.f32 %v6446, 0.11655578
        %v6531 = vmul.f32 %v6447, 0.11655578
        %v6532 = vmul.f32 %v6448, 0.11655578
        %v6533 = vmul.f32 %v6449, 0.11655578
        %v6534 = vmul.f32 %v6450, 0.11655578
        %v6535 = vmul.f32 %v6451, 0.11655578
        %v6536 = vmul.f32 %v6452, 0.11655578
        %v6537 = vmul.f32 %v6453, 0.11655578
        %v6538 = vmul.f32 %v6454, 0.11655578
        %v6539 = vmul.f32 %v6455, 0.11655578
        %v6540 = vmul.f32 %v6456, 0.11655578
        %v6541 = vmul.f32 %v6457, 0.11655578
        %v6542 = vmul.f32 %v6458, 0.11655578
        %v6543 = vmul.f32 %v6459, 0.11655578
        %v6544 = vmul.f32 %v6460, 0.11655578
        %v6545 = vmul.f32 %v6461, 0.11655578
        %v6546 = vmul.f32 %v6462, 0.11655578
        %v6547 = vmul.f32 %v6463, 0.11655578
        %v6548 = vmul.f32 %v6464, 0.11655578
        %v6549 = vmul.f32 %v6465, 0.11655578
        %v6550 = vmul.f32 %v6466, 0.11655578
        %v6551 = vmul.f32 %v6467, 0.11655578
        %v6552 = vmul.f32 %v6468, 0.11655578
        %v6553 = vmul.f32 %v6469, 0.11655578
        %v6554 = vmul.f32 %v6470, 0.11655578
        %v6555 = vmul.f32 %v6471, 0.11655578
        %v6556 = vmul.f32 %v6472, 0.11655578
        %v6557 = vmul.f32 %v6473, 0.11655578
        %v6558 = vmul.f32 %v6474, 0.11655578
        %v6559 = vmul.f32 %v6475, 0.11655578
        %v6560 = vmul.f32 %v6476, 0.11655578
        %v6561 = vmul.f32 %v6477, 0.11655578
        %v6562 = vmul.f32 %v6478, 0.11655578
        %v6563 = vmul.f32 %v6479, 0.11655578
        %v6564 = vmul.f32 %v6480, 0.11655578
        %v6565 = vmul.f32 %v6481, 0.11655578
        %v6566 = vmul.f32 %v6482, 0.11655578
        %v6567 = vmul.f32 %v6483, 0.11655578
        %v6568 = vmul.f32 %v6484, 0.11655578
        %v6569 = vadd.f32 %v6065, %v6485
        %v6570 = vadd.f32 %v6066, %v6486
        %v6571 = vadd.f32 %v6067, %v6487
        %v6572 = vadd.f32 %v6068, %v6488
        %v6573 = vadd.f32 %v6069, %v6489
        %v6574 = vadd.f32 %v6070, %v6490
        %v6575 = vadd.f32 %v6071, %v6491
        %v6576 = vadd.f32 %v6072, %v6492
        %v6577 = vadd.f32 %v6073, %v6493
        %v6578 = vadd.f32 %v6074, %v6494
        %v6579 = vadd.f32 %v6075, %v6495
        %v6580 = vadd.f32 %v6076, %v6496
        %v6581 = vadd.f32 %v6077, %v6497
        %v6582 = vadd.f32 %v6078, %v6498
        %v6583 = vadd.f32 %v6079, %v6499
        %v6584 = vadd.f32 %v6080, %v6500
        %v6585 = vadd.f32 %v6081, %v6501
        %v6586 = vadd.f32 %v6082, %v6502
        %v6587 = vadd.f32 %v6083, %v6503
        %v6588 = vadd.f32 %v6084, %v6504
        %v6589 = vadd.f32 %v6085, %v6505
        %v6590 = vadd.f32 %v6086, %v6506
        %v6591 = vadd.f32 %v6087, %v6507
        %v6592 = vadd.f32 %v6088, %v6508
        %v6593 = vadd.f32 %v6089, %v6509
        %v6594 = vadd.f32 %v6090, %v6510
        %v6595 = vadd.f32 %v6091, %v6511
        %v6596 = vadd.f32 %v6092, %v6512
        %v6597 = vadd.f32 %v6093, %v6513
        %v6598 = vadd.f32 %v6094, %v6514
        %v6599 = vadd.f32 %v6095, %v6515
        %v6600 = vadd.f32 %v6096, %v6516
        %v6601 = vadd.f32 %v6097, %v6517
        %v6602 = vadd.f32 %v6098, %v6518
        %v6603 = vadd.f32 %v6099, %v6519
        %v6604 = vadd.f32 %v6100, %v6520
        %v6605 = vadd.f32 %v6101, %v6521
        %v6606 = vadd.f32 %v6102, %v6522
        %v6607 = vadd.f32 %v6103, %v6523
        %v6608 = vadd.f32 %v6104, %v6524
        %v6609 = vadd.f32 %v6105, %v6525
        %v6610 = vadd.f32 %v6106, %v6526
        %v6611 = vadd.f32 %v6107, %v6527
        %v6612 = vadd.f32 %v6108, %v6528
        %v6613 = vadd.f32 %v6109, %v6529
        %v6614 = vadd.f32 %v6110, %v6530
        %v6615 = vadd.f32 %v6111, %v6531
        %v6616 = vadd.f32 %v6112, %v6532
        %v6617 = vadd.f32 %v6113, %v6533
        %v6618 = vadd.f32 %v6114, %v6534
        %v6619 = vadd.f32 %v6115, %v6535
        %v6620 = vadd.f32 %v6116, %v6536
        %v6621 = vadd.f32 %v6117, %v6537
        %v6622 = vadd.f32 %v6118, %v6538
        %v6623 = vadd.f32 %v6119, %v6539
        %v6624 = vadd.f32 %v6120, %v6540
        %v6625 = vadd.f32 %v6121, %v6541
        %v6626 = vadd.f32 %v6122, %v6542
        %v6627 = vadd.f32 %v6123, %v6543
        %v6628 = vadd.f32 %v6124, %v6544
        %v6629 = vadd.f32 %v6125, %v6545
        %v6630 = vadd.f32 %v6126, %v6546
        %v6631 = vadd.f32 %v6127, %v6547
        %v6632 = vadd.f32 %v6128, %v6548
        %v6633 = vadd.f32 %v6129, %v6549
        %v6634 = vadd.f32 %v6130, %v6550
        %v6635 = vadd.f32 %v6131, %v6551
        %v6636 = vadd.f32 %v6132, %v6552
        %v6637 = vadd.f32 %v6133, %v6553
        %v6638 = vadd.f32 %v6134, %v6554
        %v6639 = vadd.f32 %v6135, %v6555
        %v6640 = vadd.f32 %v6136, %v6556
        %v6641 = vadd.f32 %v6137, %v6557
        %v6642 = vadd.f32 %v6138, %v6558
        %v6643 = vadd.f32 %v6139, %v6559
        %v6644 = vadd.f32 %v6140, %v6560
        %v6645 = vadd.f32 %v6141, %v6561
        %v6646 = vadd.f32 %v6142, %v6562
        %v6647 = vadd.f32 %v6143, %v6563
        %v6648 = vadd.f32 %v6144, %v6564
        %v6649 = vadd.f32 %v6145, %v6565
        %v6650 = vadd.f32 %v6146, %v6566
        %v6651 = vadd.f32 %v6147, %v6567
        %v6652 = vadd.f32 %v6148, %v6568
        %v6653 = vadd.f32 %v5477, %v5505
        %v6654 = vadd.f32 %v5478, %v5506
        %v6655 = vadd.f32 %v5479, %v5507
        %v6656 = vadd.f32 %v5480, %v5508
        %v6657 = vadd.f32 %v5481, %v5509
        %v6658 = vadd.f32 %v5482, %v5510
        %v6659 = vadd.f32 %v5483, %v5511
        %v6660 = vadd.f32 %v5484, %v5512
        %v6661 = vadd.f32 %v5485, %v5513
        %v6662 = vadd.f32 %v5486, %v5514
        %v6663 = vadd.f32 %v5487, %v5515
        %v6664 = vadd.f32 %v5488, %v5516
        %v6665 = vadd.f32 %v5489, %v5517
        %v6666 = vadd.f32 %v5490, %v5518
        %v6667 = vadd.f32 %v5491, %v5519
        %v6668 = vadd.f32 %v5492, %v5520
        %v6669 = vadd.f32 %v5493, %v5521
        %v6670 = vadd.f32 %v5494, %v5522
        %v6671 = vadd.f32 %v5495, %v5523
        %v6672 = vadd.f32 %v5496, %v5524
        %v6673 = vadd.f32 %v5497, %v5525
        %v6674 = vadd.f32 %v5498, %v5526
        %v6675 = vadd.f32 %v5499, %v5527
        %v6676 = vadd.f32 %v5500, %v5528
        %v6677 = vadd.f32 %v5501, %v5529
        %v6678 = vadd.f32 %v5502, %v5530
        %v6679 = vadd.f32 %v5503, %v5531
        %v6680 = vadd.f32 %v5504, %v5532
        %v6681 = vadd.f32 %v5505, %v5533
        %v6682 = vadd.f32 %v5506, %v5534
        %v6683 = vadd.f32 %v5507, %v5535
        %v6684 = vadd.f32 %v5508, %v5536
        %v6685 = vadd.f32 %v5509, %v5537
        %v6686 = vadd.f32 %v5510, %v5538
        %v6687 = vadd.f32 %v5511, %v5539
        %v6688 = vadd.f32 %v5512, %v5540
        %v6689 = vadd.f32 %v5513, %v5541
        %v6690 = vadd.f32 %v5514, %v5542
        %v6691 = vadd.f32 %v5515, %v5543
        %v6692 = vadd.f32 %v5516, %v5544
        %v6693 = vadd.f32 %v5517, %v5545
        %v6694 = vadd.f32 %v5518, %v5546
        %v6695 = vadd.f32 %v5519, %v5547
        %v6696 = vadd.f32 %v5520, %v5548
        %v6697 = vadd.f32 %v5521, %v5549
        %v6698 = vadd.f32 %v5522, %v5550
        %v6699 = vadd.f32 %v5523, %v5551
        %v6700 = vadd.f32 %v5524, %v5552
        %v6701 = vadd.f32 %v5525, %v5553
        %v6702 = vadd.f32 %v5526, %v5554
        %v6703 = vadd.f32 %v5527, %v5555
        %v6704 = vadd.f32 %v5528, %v5556
        %v6705 = vadd.f32 %v5529, %v5557
        %v6706 = vadd.f32 %v5530, %v5558
        %v6707 = vadd.f32 %v5531, %v5559
        %v6708 = vadd.f32 %v5532, %v5560
        %v6709 = vadd.f32 %v5533, %v5561
        %v6710 = vadd.f32 %v5534, %v5562
        %v6711 = vadd.f32 %v5535, %v5563
        %v6712 = vadd.f32 %v5536, %v5564
        %v6713 = vadd.f32 %v5537, %v5565
        %v6714 = vadd.f32 %v5538, %v5566
        %v6715 = vadd.f32 %v5539, %v5567
        %v6716 = vadd.f32 %v5540, %v5568
        %v6717 = vadd.f32 %v5541, %v5569
        %v6718 = vadd.f32 %v5542, %v5570
        %v6719 = vadd.f32 %v5543, %v5571
        %v6720 = vadd.f32 %v5544, %v5572
        %v6721 = vadd.f32 %v5545, %v5573
        %v6722 = vadd.f32 %v5546, %v5574
        %v6723 = vadd.f32 %v5547, %v5575
        %v6724 = vadd.f32 %v5548, %v5576
        %v6725 = vadd.f32 %v5549, %v5577
        %v6726 = vadd.f32 %v5550, %v5578
        %v6727 = vadd.f32 %v5551, %v5579
        %v6728 = vadd.f32 %v5552, %v5580
        %v6729 = vadd.f32 %v5553, %v5581
        %v6730 = vadd.f32 %v5554, %v5582
        %v6731 = vadd.f32 %v5555, %v5583
        %v6732 = vadd.f32 %v5556, %v5584
        %v6733 = vadd.f32 %v5557, %v5585
        %v6734 = vadd.f32 %v5558, %v5586
        %v6735 = vadd.f32 %v5559, %v5587
        %v6736 = vadd.f32 %v5560, %v5588
        %v6737 = vmul.f32 %v6653, 0.2094128
        %v6738 = vmul.f32 %v6654, 0.2094128
        %v6739 = vmul.f32 %v6655, 0.2094128
        %v6740 = vmul.f32 %v6656, 0.2094128
        %v6741 = vmul.f32 %v6657, 0.2094128
        %v6742 = vmul.f32 %v6658, 0.2094128
        %v6743 = vmul.f32 %v6659, 0.2094128
        %v6744 = vmul.f32 %v6660, 0.2094128
        %v6745 = vmul.f32 %v6661, 0.2094128
        %v6746 = vmul.f32 %v6662, 0.2094128
        %v6747 = vmul.f32 %v6663, 0.2094128
        %v6748 = vmul.f32 %v6664, 0.2094128
        %v6749 = vmul.f32 %v6665, 0.2094128
        %v6750 = vmul.f32 %v6666, 0.2094128
        %v6751 = vmul.f32 %v6667, 0.2094128
        %v6752 = vmul.f32 %v6668, 0.2094128
        %v6753 = vmul.f32 %v6669, 0.2094128
        %v6754 = vmul.f32 %v6670, 0.2094128
        %v6755 = vmul.f32 %v6671, 0.2094128
        %v6756 = vmul.f32 %v6672, 0.2094128
        %v6757 = vmul.f32 %v6673, 0.2094128
        %v6758 = vmul.f32 %v6674, 0.2094128
        %v6759 = vmul.f32 %v6675, 0.2094128
        %v6760 = vmul.f32 %v6676, 0.2094128
        %v6761 = vmul.f32 %v6677, 0.2094128
        %v6762 = vmul.f32 %v6678, 0.2094128
        %v6763 = vmul.f32 %v6679, 0.2094128
        %v6764 = vmul.f32 %v6680, 0.2094128
        %v6765 = vmul.f32 %v6681, 0.2094128
        %v6766 = vmul.f32 %v6682, 0.2094128
        %v6767 = vmul.f32 %v6683, 0.2094128
        %v6768 = vmul.f32 %v6684, 0.2094128
        %v6769 = vmul.f32 %v6685, 0.2094128
        %v6770 = vmul.f32 %v6686, 0.2094128
        %v6771 = vmul.f32 %v6687, 0.2094128
        %v6772 = vmul.f32 %v6688, 0.2094128
        %v6773 = vmul.f32 %v6689, 0.2094128
        %v6774 = vmul.f32 %v6690, 0.2094128
        %v6775 = vmul.f32 %v6691, 0.2094128
        %v6776 = vmul.f32 %v6692, 0.2094128
        %v6777 = vmul.f32 %v6693, 0.2094128
        %v6778 = vmul.f32 %v6694, 0.2094128
        %v6779 = vmul.f32 %v6695, 0.2094128
        %v6780 = vmul.f32 %v6696, 0.2094128
        %v6781 = vmul.f32 %v6697, 0.2094128
        %v6782 = vmul.f32 %v6698, 0.2094128
        %v6783 = vmul.f32 %v6699, 0.2094128
        %v6784 = vmul.f32 %v6700, 0.2094128
        %v6785 = vmul.f32 %v6701, 0.2094128
        %v6786 = vmul.f32 %v6702, 0.2094128
        %v6787 = vmul.f32 %v6703, 0.2094128
        %v6788 = vmul.f32 %v6704, 0.2094128
        %v6789 = vmul.f32 %v6705, 0.2094128
        %v6790 = vmul.f32 %v6706, 0.2094128
        %v6791 = vmul.f32 %v6707, 0.2094128
        %v6792 = vmul.f32 %v6708, 0.2094128
        %v6793 = vmul.f32 %v6709, 0.2094128
        %v6794 = vmul.f32 %v6710, 0.2094128
        %v6795 = vmul.f32 %v6711, 0.2094128
        %v6796 = vmul.f32 %v6712, 0.2094128
        %v6797 = vmul.f32 %v6713, 0.2094128
        %v6798 = vmul.f32 %v6714, 0.2094128
        %v6799 = vmul.f32 %v6715, 0.2094128
        %v6800 = vmul.f32 %v6716, 0.2094128
        %v6801 = vmul.f32 %v6717, 0.2094128
        %v6802 = vmul.f32 %v6718, 0.2094128
        %v6803 = vmul.f32 %v6719, 0.2094128
        %v6804 = vmul.f32 %v6720, 0.2094128
        %v6805 = vmul.f32 %v6721, 0.2094128
        %v6806 = vmul.f32 %v6722, 0.2094128
        %v6807 = vmul.f32 %v6723, 0.2094128
        %v6808 = vmul.f32 %v6724, 0.2094128
        %v6809 = vmul.f32 %v6725, 0.2094128
        %v6810 = vmul.f32 %v6726, 0.2094128
        %v6811 = vmul.f32 %v6727, 0.2094128
        %v6812 = vmul.f32 %v6728, 0.2094128
        %v6813 = vmul.f32 %v6729, 0.2094128
        %v6814 = vmul.f32 %v6730, 0.2094128
        %v6815 = vmul.f32 %v6731, 0.2094128
        %v6816 = vmul.f32 %v6732, 0.2094128
        %v6817 = vmul.f32 %v6733, 0.2094128
        %v6818 = vmul.f32 %v6734, 0.2094128
        %v6819 = vmul.f32 %v6735, 0.2094128
        %v6820 = vmul.f32 %v6736, 0.2094128
        %v6821 = vadd.f32 %v6317, %v6737
        %v6822 = vadd.f32 %v6318, %v6738
        %v6823 = vadd.f32 %v6319, %v6739
        %v6824 = vadd.f32 %v6320, %v6740
        %v6825 = vadd.f32 %v6321, %v6741
        %v6826 = vadd.f32 %v6322, %v6742
        %v6827 = vadd.f32 %v6323, %v6743
        %v6828 = vadd.f32 %v6324, %v6744
        %v6829 = vadd.f32 %v6325, %v6745
        %v6830 = vadd.f32 %v6326, %v6746
        %v6831 = vadd.f32 %v6327, %v6747
        %v6832 = vadd.f32 %v6328, %v6748
        %v6833 = vadd.f32 %v6329, %v6749
        %v6834 = vadd.f32 %v6330, %v6750
        %v6835 = vadd.f32 %v6331, %v6751
        %v6836 = vadd.f32 %v6332, %v6752
        %v6837 = vadd.f32 %v6333, %v6753
        %v6838 = vadd.f32 %v6334, %v6754
        %v6839 = vadd.f32 %v6335, %v6755
        %v6840 = vadd.f32 %v6336, %v6756
        %v6841 = vadd.f32 %v6337, %v6757
        %v6842 = vadd.f32 %v6338, %v6758
        %v6843 = vadd.f32 %v6339, %v6759
        %v6844 = vadd.f32 %v6340, %v6760
        %v6845 = vadd.f32 %v6341, %v6761
        %v6846 = vadd.f32 %v6342, %v6762
        %v6847 = vadd.f32 %v6343, %v6763
        %v6848 = vadd.f32 %v6344, %v6764
        %v6849 = vadd.f32 %v6345, %v6765
        %v6850 = vadd.f32 %v6346, %v6766
        %v6851 = vadd.f32 %v6347, %v6767
        %v6852 = vadd.f32 %v6348, %v6768
        %v6853 = vadd.f32 %v6349, %v6769
        %v6854 = vadd.f32 %v6350, %v6770
        %v6855 = vadd.f32 %v6351, %v6771
        %v6856 = vadd.f32 %v6352, %v6772
        %v6857 = vadd.f32 %v6353, %v6773
        %v6858 = vadd.f32 %v6354, %v6774
        %v6859 = vadd.f32 %v6355, %v6775
        %v6860 = vadd.f32 %v6356, %v6776
        %v6861 = vadd.f32 %v6357, %v6777
        %v6862 = vadd.f32 %v6358, %v6778
        %v6863 = vadd.f32 %v6359, %v6779
        %v6864 = vadd.f32 %v6360, %v6780
        %v6865 = vadd.f32 %v6361, %v6781
        %v6866 = vadd.f32 %v6362, %v6782
        %v6867 = vadd.f32 %v6363, %v6783
        %v6868 = vadd.f32 %v6364, %v6784
        %v6869 = vadd.f32 %v6365, %v6785
        %v6870 = vadd.f32 %v6366, %v6786
        %v6871 = vadd.f32 %v6367, %v6787
        %v6872 = vadd.f32 %v6368, %v6788
        %v6873 = vadd.f32 %v6369, %v6789
        %v6874 = vadd.f32 %v6370, %v6790
        %v6875 = vadd.f32 %v6371, %v6791
        %v6876 = vadd.f32 %v6372, %v6792
        %v6877 = vadd.f32 %v6373, %v6793
        %v6878 = vadd.f32 %v6374, %v6794
        %v6879 = vadd.f32 %v6375, %v6795
        %v6880 = vadd.f32 %v6376, %v6796
        %v6881 = vadd.f32 %v6377, %v6797
        %v6882 = vadd.f32 %v6378, %v6798
        %v6883 = vadd.f32 %v6379, %v6799
        %v6884 = vadd.f32 %v6380, %v6800
        %v6885 = vadd.f32 %v6381, %v6801
        %v6886 = vadd.f32 %v6382, %v6802
        %v6887 = vadd.f32 %v6383, %v6803
        %v6888 = vadd.f32 %v6384, %v6804
        %v6889 = vadd.f32 %v6385, %v6805
        %v6890 = vadd.f32 %v6386, %v6806
        %v6891 = vadd.f32 %v6387, %v6807
        %v6892 = vadd.f32 %v6388, %v6808
        %v6893 = vadd.f32 %v6389, %v6809
        %v6894 = vadd.f32 %v6390, %v6810
        %v6895 = vadd.f32 %v6391, %v6811
        %v6896 = vadd.f32 %v6392, %v6812
        %v6897 = vadd.f32 %v6393, %v6813
        %v6898 = vadd.f32 %v6394, %v6814
        %v6899 = vadd.f32 %v6395, %v6815
        %v6900 = vadd.f32 %v6396, %v6816
        %v6901 = vadd.f32 %v6397, %v6817
        %v6902 = vadd.f32 %v6398, %v6818
        %v6903 = vadd.f32 %v6399, %v6819
        %v6904 = vadd.f32 %v6400, %v6820
        %v6905 = vadd.f32 %v6569, %v6821
        %v6906 = vadd.f32 %v6570, %v6822
        %v6907 = vadd.f32 %v6571, %v6823
        %v6908 = vadd.f32 %v6572, %v6824
        %v6909 = vadd.f32 %v6573, %v6825
        %v6910 = vadd.f32 %v6574, %v6826
        %v6911 = vadd.f32 %v6575, %v6827
        %v6912 = vadd.f32 %v6576, %v6828
        %v6913 = vadd.f32 %v6577, %v6829
        %v6914 = vadd.f32 %v6578, %v6830
        %v6915 = vadd.f32 %v6579, %v6831
        %v6916 = vadd.f32 %v6580, %v6832
        %v6917 = vadd.f32 %v6581, %v6833
        %v6918 = vadd.f32 %v6582, %v6834
        %v6919 = vadd.f32 %v6583, %v6835
        %v6920 = vadd.f32 %v6584, %v6836
        %v6921 = vadd.f32 %v6585, %v6837
        %v6922 = vadd.f32 %v6586, %v6838
        %v6923 = vadd.f32 %v6587, %v6839
        %v6924 = vadd.f32 %v6588, %v6840
        %v6925 = vadd.f32 %v6589, %v6841
        %v6926 = vadd.f32 %v6590, %v6842
        %v6927 = vadd.f32 %v6591, %v6843
        %v6928 = vadd.f32 %v6592, %v6844
        %v6929 = vadd.f32 %v6593, %v6845
        %v6930 = vadd.f32 %v6594, %v6846
        %v6931 = vadd.f32 %v6595, %v6847
        %v6932 = vadd.f32 %v6596, %v6848
        %v6933 = vadd.f32 %v6597, %v6849
        %v6934 = vadd.f32 %v6598, %v6850
        %v6935 = vadd.f32 %v6599, %v6851
        %v6936 = vadd.f32 %v6600, %v6852
        %v6937 = vadd.f32 %v6601, %v6853
        %v6938 = vadd.f32 %v6602, %v6854
        %v6939 = vadd.f32 %v6603, %v6855
        %v6940 = vadd.f32 %v6604, %v6856
        %v6941 = vadd.f32 %v6605, %v6857
        %v6942 = vadd.f32 %v6606, %v6858
        %v6943 = vadd.f32 %v6607, %v6859
        %v6944 = vadd.f32 %v6608, %v6860
        %v6945 = vadd.f32 %v6609, %v6861
        %v6946 = vadd.f32 %v6610, %v6862
        %v6947 = vadd.f32 %v6611, %v6863
        %v6948 = vadd.f32 %v6612, %v6864
        %v6949 = vadd.f32 %v6613, %v6865
        %v6950 = vadd.f32 %v6614, %v6866
        %v6951 = vadd.f32 %v6615, %v6867
        %v6952 = vadd.f32 %v6616, %v6868
        %v6953 = vadd.f32 %v6617, %v6869
        %v6954 = vadd.f32 %v6618, %v6870
        %v6955 = vadd.f32 %v6619, %v6871
        %v6956 = vadd.f32 %v6620, %v6872
        %v6957 = vadd.f32 %v6621, %v6873
        %v6958 = vadd.f32 %v6622, %v6874
        %v6959 = vadd.f32 %v6623, %v6875
        %v6960 = vadd.f32 %v6624, %v6876
        %v6961 = vadd.f32 %v6625, %v6877
        %v6962 = vadd.f32 %v6626, %v6878
        %v6963 = vadd.f32 %v6627, %v6879
        %v6964 = vadd.f32 %v6628, %v6880
        %v6965 = vadd.f32 %v6629, %v6881
        %v6966 = vadd.f32 %v6630, %v6882
        %v6967 = vadd.f32 %v6631, %v6883
        %v6968 = vadd.f32 %v6632, %v6884
        %v6969 = vadd.f32 %v6633, %v6885
        %v6970 = vadd.f32 %v6634, %v6886
        %v6971 = vadd.f32 %v6635, %v6887
        %v6972 = vadd.f32 %v6636, %v6888
        %v6973 = vadd.f32 %v6637, %v6889
        %v6974 = vadd.f32 %v6638, %v6890
        %v6975 = vadd.f32 %v6639, %v6891
        %v6976 = vadd.f32 %v6640, %v6892
        %v6977 = vadd.f32 %v6641, %v6893
        %v6978 = vadd.f32 %v6642, %v6894
        %v6979 = vadd.f32 %v6643, %v6895
        %v6980 = vadd.f32 %v6644, %v6896
        %v6981 = vadd.f32 %v6645, %v6897
        %v6982 = vadd.f32 %v6646, %v6898
        %v6983 = vadd.f32 %v6647, %v6899
        %v6984 = vadd.f32 %v6648, %v6900
        %v6985 = vadd.f32 %v6649, %v6901
        %v6986 = vadd.f32 %v6650, %v6902
        %v6987 = vadd.f32 %v6651, %v6903
        %v6988 = vadd.f32 %v6652, %v6904
        %6989 = vst [vmem:[%s1676] sm:$0xff] %v6905
        %6990 = vst [vmem:[%s1676 + $0x8] sm:$0xff] %v6906
        %6991 = vst [vmem:[%s1676 + $0x10] sm:$0xff] %v6907
        %6992 = vst [vmem:[%s1676 + $0x18] sm:$0xff] %v6908
        %6993 = vst [vmem:[%s1676 + $0x20] sm:$0xff] %v6909
        %6994 = vst [vmem:[%s1676 + $0x28] sm:$0xff] %v6910
        %6995 = vst [vmem:[%s1676 + $0x30] sm:$0xff] %v6911
        %6996 = vst [vmem:[%s1676 + $0x38] sm:$0xff] %v6912
        %6997 = vst [vmem:[%s1676 + $0x40] sm:$0xff] %v6913
        %6998 = vst [vmem:[%s1676 + $0x48] sm:$0xff] %v6914
        %6999 = vst [vmem:[%s1676 + $0x50] sm:$0xff] %v6915
        %7000 = vst [vmem:[%s1676 + $0x58] sm:$0xff] %v6916
        %7001 = vst [vmem:[%s1676 + $0x60] sm:$0xff] %v6917
        %7002 = vst [vmem:[%s1676 + $0x68] sm:$0xff] %v6918
        %7003 = vst [vmem:[%s1676 + $0x70] sm:$0xff] %v6919
        %7004 = vst [vmem:[%s1676 + $0x78] sm:$0xff] %v6920
        %7005 = vst [vmem:[%s1676 + $0x80] sm:$0xff] %v6921
        %7006 = vst [vmem:[%s1676 + $0x88] sm:$0xff] %v6922
        %7007 = vst [vmem:[%s1676 + $0x90] sm:$0xff] %v6923
        %7008 = vst [vmem:[%s1676 + $0x98] sm:$0xff] %v6924
        %7009 = vst [vmem:[%s1676 + $0xa0] sm:$0xff] %v6925
        %7010 = vst [vmem:[%s1676 + $0xa8] sm:$0xff] %v6926
        %7011 = vst [vmem:[%s1676 + $0xb0] sm:$0xff] %v6927
        %7012 = vst [vmem:[%s1676 + $0xb8] sm:$0xff] %v6928
        %7013 = vst [vmem:[%s1676 + $0xc0] sm:$0xff] %v6929
        %7014 = vst [vmem:[%s1676 + $0xc8] sm:$0xff] %v6930
        %7015 = vst [vmem:[%s1676 + $0xd0] sm:$0xff] %v6931
        %7016 = vst [vmem:[%s1676 + $0xd8] sm:$0xff] %v6932
        %7017 = vst [vmem:[%s1676 + $0xe0] sm:$0xff] %v6933
        %7018 = vst [vmem:[%s1676 + $0xe8] sm:$0xff] %v6934
        %7019 = vst [vmem:[%s1676 + $0xf0] sm:$0xff] %v6935
        %7020 = vst [vmem:[%s1676 + $0xf8] sm:$0xff] %v6936
        %7021 = vst [vmem:[%s1676 + $0x100] sm:$0xff] %v6937
        %7022 = vst [vmem:[%s1676 + $0x108] sm:$0xff] %v6938
        %7023 = vst [vmem:[%s1676 + $0x110] sm:$0xff] %v6939
        %7024 = vst [vmem:[%s1676 + $0x118] sm:$0xff] %v6940
        %7025 = vst [vmem:[%s1676 + $0x120] sm:$0xff] %v6941
        %7026 = vst [vmem:[%s1676 + $0x128] sm:$0xff] %v6942
        %7027 = vst [vmem:[%s1676 + $0x130] sm:$0xff] %v6943
        %7028 = vst [vmem:[%s1676 + $0x138] sm:$0xff] %v6944
        %7029 = vst [vmem:[%s1676 + $0x140] sm:$0xff] %v6945
        %7030 = vst [vmem:[%s1676 + $0x148] sm:$0xff] %v6946
        %7031 = vst [vmem:[%s1676 + $0x150] sm:$0xff] %v6947
        %7032 = vst [vmem:[%s1676 + $0x158] sm:$0xff] %v6948
        %7033 = vst [vmem:[%s1676 + $0x160] sm:$0xff] %v6949
        %7034 = vst [vmem:[%s1676 + $0x168] sm:$0xff] %v6950
        %7035 = vst [vmem:[%s1676 + $0x170] sm:$0xff] %v6951
        %7036 = vst [vmem:[%s1676 + $0x178] sm:$0xff] %v6952
        %7037 = vst [vmem:[%s1676 + $0x180] sm:$0xff] %v6953
        %7038 = vst [vmem:[%s1676 + $0x188] sm:$0xff] %v6954
        %7039 = vst [vmem:[%s1676 + $0x190] sm:$0xff] %v6955
        %7040 = vst [vmem:[%s1676 + $0x198] sm:$0xff] %v6956
        %7041 = vst [vmem:[%s1676 + $0x1a0] sm:$0xff] %v6957
        %7042 = vst [vmem:[%s1676 + $0x1a8] sm:$0xff] %v6958
        %7043 = vst [vmem:[%s1676 + $0x1b0] sm:$0xff] %v6959
        %7044 = vst [vmem:[%s1676 + $0x1b8] sm:$0xff] %v6960
        %7045 = vst [vmem:[%s1676 + $0x1c0] sm:$0xff] %v6961
        %7046 = vst [vmem:[%s1676 + $0x1c8] sm:$0xff] %v6962
        %7047 = vst [vmem:[%s1676 + $0x1d0] sm:$0xff] %v6963
        %7048 = vst [vmem:[%s1676 + $0x1d8] sm:$0xff] %v6964
        %7049 = vst [vmem:[%s1676 + $0x1e0] sm:$0xff] %v6965
        %7050 = vst [vmem:[%s1676 + $0x1e8] sm:$0xff] %v6966
        %7051 = vst [vmem:[%s1676 + $0x1f0] sm:$0xff] %v6967
        %7052 = vst [vmem:[%s1676 + $0x1f8] sm:$0xff] %v6968
        %7053 = vst [vmem:[%s1676 + $0x200] sm:$0xff] %v6969
        %7054 = vst [vmem:[%s1676 + $0x208] sm:$0xff] %v6970
        %7055 = vst [vmem:[%s1676 + $0x210] sm:$0xff] %v6971
        %7056 = vst [vmem:[%s1676 + $0x218] sm:$0xff] %v6972
        %7057 = vst [vmem:[%s1676 + $0x220] sm:$0xff] %v6973
        %7058 = vst [vmem:[%s1676 + $0x228] sm:$0xff] %v6974
        %7059 = vst [vmem:[%s1676 + $0x230] sm:$0xff] %v6975
        %7060 = vst [vmem:[%s1676 + $0x238] sm:$0xff] %v6976
        %7061 = vst [vmem:[%s1676 + $0x240] sm:$0xff] %v6977
        %7062 = vst [vmem:[%s1676 + $0x248] sm:$0xff] %v6978
        %7063 = vst [vmem:[%s1676 + $0x250] sm:$0xff] %v6979
        %7064 = vst [vmem:[%s1676 + $0x258] sm:$0xff] %v6980
        %7065 = vst [vmem:[%s1676 + $0x260] sm:$0xff] %v6981
        %7066 = vst [vmem:[%s1676 + $0x268] sm:$0xff] %v6982
        %7067 = vst [vmem:[%s1676 + $0x270] sm:$0xff] %v6983
        %7068 = vst [vmem:[%s1676 + $0x278] sm:$0xff] %v6984
        %7069 = vst [vmem:[%s1676 + $0x280] sm:$0xff] %v6985
        %7070 = vst [vmem:[%s1676 + $0x288] sm:$0xff] %v6986
        %7071 = vst [vmem:[%s1676 + $0x290] sm:$0xff] %v6987
        %7072 = vst [vmem:[%s1676 + $0x298] sm:$0xff] %v6988
        %s7073 = sand.u32 %s46, 1
        %s7074 = sand.u32 %s46, 1
        %s7075 = smul.addr %s7074, 672
        %s7076 = scalar_lea.vmem [#allocation3], %s7075
        // Predicated region
        $region63: #{_forward_one.1} parent=57 // pred_check
          %p7077 = pneg %p56
        $region64: #{_forward_one.1} parent=57 // pred_check_branch
          %7079 = sbr.rel (%p7077) target = $region66
        $region65: #{_forward_one.1} parent=57 // pred_region
          %s7080 = smul.addr %s12, 8
          %s7081 = scalar_lea.vmem %s1, %s7080
          // Predicated region
          $region67: #{_forward_one.1} parent=65 // pred_check
            _
          $region68: #{_forward_one.1} parent=65 // pred_check_branch
            %7083 = sbr.rel (0) target = $region70
          $region69: #{_forward_one.1} parent=65 // pred_region
            // Predicated region
            $region71: #{_forward_one.1} parent=69 // pred_check
              _
            $region72: #{_forward_one.1} parent=69 // pred_check_branch
              %7085 = sbr.rel (0) target = $region74
            $region73: #{_forward_one.1} parent=69 // pred_region
              // Predicated region
              $region86: #{_forward_one.1} parent=73 // pred_check
                _
              $region87: #{_forward_one.1} parent=73 // pred_check_branch
                %7266 = sbr.rel (0) target = $region89
              $region88: #{_forward_one.1} parent=73 // pred_region
                loop: start=0, step=1, limit=1
                $region90: #{_forward_one.1} parent=88 // loop_pre_header
                  _
                $region91: #{_forward_one.1} parent=88 // loop_header
                  %s7268 = sphi 0, %s7272
                  %p7269 = scmp.ge.s32.totalorder %s7268, 1
                  %s7273 = sphi %s7076, %s7076
                  %s7274 = sphi %s7081, %s7081
                $region92: #{_forward_one.1} parent=88 // loop_header_branch
                  %7271 = sbr.rel (%p7269) target = $region96
                $region93: #{_forward_one.1} parent=88 // loop_body
                  %v7275 = vld [vmem:[%s7273] sm:$0xff]
                  %7276 = vst [vmem:[%s7274] sm:$0xff] %v7275
                  %v7277 = vld [vmem:[%s7273 + $0x8] sm:$0xff]
                  %7278 = vst [vmem:[%s7274 + $0x10] sm:$0xff] %v7277
                  %v7279 = vld [vmem:[%s7273 + $0x10] sm:$0xff]
                  %7280 = vst [vmem:[%s7274 + $0x20] sm:$0xff] %v7279
                  %v7281 = vld [vmem:[%s7273 + $0x18] sm:$0xff]
                  %7282 = vst [vmem:[%s7274 + $0x30] sm:$0xff] %v7281
                  %v7283 = vld [vmem:[%s7273 + $0x20] sm:$0xff]
                  %7284 = vst [vmem:[%s7274 + $0x40] sm:$0xff] %v7283
                  %v7285 = vld [vmem:[%s7273 + $0x28] sm:$0xff]
                  %7286 = vst [vmem:[%s7274 + $0x50] sm:$0xff] %v7285
                  %v7287 = vld [vmem:[%s7273 + $0x30] sm:$0xff]
                  %7288 = vst [vmem:[%s7274 + $0x60] sm:$0xff] %v7287
                  %v7289 = vld [vmem:[%s7273 + $0x38] sm:$0xff]
                  %7290 = vst [vmem:[%s7274 + $0x70] sm:$0xff] %v7289
                  %v7291 = vld [vmem:[%s7273 + $0x40] sm:$0xff]
                  %7292 = vst [vmem:[%s7274 + $0x80] sm:$0xff] %v7291
                  %v7293 = vld [vmem:[%s7273 + $0x48] sm:$0xff]
                  %7294 = vst [vmem:[%s7274 + $0x90] sm:$0xff] %v7293
                  %v7295 = vld [vmem:[%s7273 + $0x50] sm:$0xff]
                  %7296 = vst [vmem:[%s7274 + $0xa0] sm:$0xff] %v7295
                  %v7297 = vld [vmem:[%s7273 + $0x58] sm:$0xff]
                  %7298 = vst [vmem:[%s7274 + $0xb0] sm:$0xff] %v7297
                  %v7299 = vld [vmem:[%s7273 + $0x60] sm:$0xff]
                  %7300 = vst [vmem:[%s7274 + $0xc0] sm:$0xff] %v7299
                  %v7301 = vld [vmem:[%s7273 + $0x68] sm:$0xff]
                  %7302 = vst [vmem:[%s7274 + $0xd0] sm:$0xff] %v7301
                  %v7303 = vld [vmem:[%s7273 + $0x70] sm:$0xff]
                  %7304 = vst [vmem:[%s7274 + $0xe0] sm:$0xff] %v7303
                  %v7305 = vld [vmem:[%s7273 + $0x78] sm:$0xff]
                  %7306 = vst [vmem:[%s7274 + $0xf0] sm:$0xff] %v7305
                  %v7307 = vld [vmem:[%s7273 + $0x80] sm:$0xff]
                  %7308 = vst [vmem:[%s7274 + $0x100] sm:$0xff] %v7307
                  %v7309 = vld [vmem:[%s7273 + $0x88] sm:$0xff]
                  %7310 = vst [vmem:[%s7274 + $0x110] sm:$0xff] %v7309
                  %v7311 = vld [vmem:[%s7273 + $0x90] sm:$0xff]
                  %7312 = vst [vmem:[%s7274 + $0x120] sm:$0xff] %v7311
                  %v7313 = vld [vmem:[%s7273 + $0x98] sm:$0xff]
                  %7314 = vst [vmem:[%s7274 + $0x130] sm:$0xff] %v7313
                  %v7315 = vld [vmem:[%s7273 + $0xa0] sm:$0xff]
                  %7316 = vst [vmem:[%s7274 + $0x140] sm:$0xff] %v7315
                  %v7317 = vld [vmem:[%s7273 + $0xa8] sm:$0xff]
                  %7318 = vst [vmem:[%s7274 + $0x150] sm:$0xff] %v7317
                  %v7319 = vld [vmem:[%s7273 + $0xb0] sm:$0xff]
                  %7320 = vst [vmem:[%s7274 + $0x160] sm:$0xff] %v7319
                  %v7321 = vld [vmem:[%s7273 + $0xb8] sm:$0xff]
                  %7322 = vst [vmem:[%s7274 + $0x170] sm:$0xff] %v7321
                  %v7323 = vld [vmem:[%s7273 + $0xc0] sm:$0xff]
                  %7324 = vst [vmem:[%s7274 + $0x180] sm:$0xff] %v7323
                  %v7325 = vld [vmem:[%s7273 + $0xc8] sm:$0xff]
                  %7326 = vst [vmem:[%s7274 + $0x190] sm:$0xff] %v7325
                  %v7327 = vld [vmem:[%s7273 + $0xd0] sm:$0xff]
                  %7328 = vst [vmem:[%s7274 + $0x1a0] sm:$0xff] %v7327
                  %v7329 = vld [vmem:[%s7273 + $0xd8] sm:$0xff]
                  %7330 = vst [vmem:[%s7274 + $0x1b0] sm:$0xff] %v7329
                  %v7331 = vld [vmem:[%s7273 + $0xe0] sm:$0xff]
                  %7332 = vst [vmem:[%s7274 + $0x1c0] sm:$0xff] %v7331
                  %v7333 = vld [vmem:[%s7273 + $0xe8] sm:$0xff]
                  %7334 = vst [vmem:[%s7274 + $0x1d0] sm:$0xff] %v7333
                  %v7335 = vld [vmem:[%s7273 + $0xf0] sm:$0xff]
                  %7336 = vst [vmem:[%s7274 + $0x1e0] sm:$0xff] %v7335
                  %v7337 = vld [vmem:[%s7273 + $0xf8] sm:$0xff]
                  %7338 = vst [vmem:[%s7274 + $0x1f0] sm:$0xff] %v7337
                  %v7339 = vld [vmem:[%s7273 + $0x100] sm:$0xff]
                  %7340 = vst [vmem:[%s7274 + $0x200] sm:$0xff] %v7339
                  %v7341 = vld [vmem:[%s7273 + $0x108] sm:$0xff]
                  %7342 = vst [vmem:[%s7274 + $0x210] sm:$0xff] %v7341
                  %v7343 = vld [vmem:[%s7273 + $0x110] sm:$0xff]
                  %7344 = vst [vmem:[%s7274 + $0x220] sm:$0xff] %v7343
                  %v7345 = vld [vmem:[%s7273 + $0x118] sm:$0xff]
                  %7346 = vst [vmem:[%s7274 + $0x230] sm:$0xff] %v7345
                  %v7347 = vld [vmem:[%s7273 + $0x120] sm:$0xff]
                  %7348 = vst [vmem:[%s7274 + $0x240] sm:$0xff] %v7347
                  %v7349 = vld [vmem:[%s7273 + $0x128] sm:$0xff]
                  %7350 = vst [vmem:[%s7274 + $0x250] sm:$0xff] %v7349
                  %v7351 = vld [vmem:[%s7273 + $0x130] sm:$0xff]
                  %7352 = vst [vmem:[%s7274 + $0x260] sm:$0xff] %v7351
                  %v7353 = vld [vmem:[%s7273 + $0x138] sm:$0xff]
                  %7354 = vst [vmem:[%s7274 + $0x270] sm:$0xff] %v7353
                  %v7355 = vld [vmem:[%s7273 + $0x140] sm:$0xff]
                  %7356 = vst [vmem:[%s7274 + $0x280] sm:$0xff] %v7355
                  %v7357 = vld [vmem:[%s7273 + $0x148] sm:$0xff]
                  %7358 = vst [vmem:[%s7274 + $0x290] sm:$0xff] %v7357
                  %v7359 = vld [vmem:[%s7273 + $0x150] sm:$0xff]
                  %7360 = vst [vmem:[%s7274 + $0x2a0] sm:$0xff] %v7359
                  %v7361 = vld [vmem:[%s7273 + $0x158] sm:$0xff]
                  %7362 = vst [vmem:[%s7274 + $0x2b0] sm:$0xff] %v7361
                  %v7363 = vld [vmem:[%s7273 + $0x160] sm:$0xff]
                  %7364 = vst [vmem:[%s7274 + $0x2c0] sm:$0xff] %v7363
                  %v7365 = vld [vmem:[%s7273 + $0x168] sm:$0xff]
                  %7366 = vst [vmem:[%s7274 + $0x2d0] sm:$0xff] %v7365
                  %v7367 = vld [vmem:[%s7273 + $0x170] sm:$0xff]
                  %7368 = vst [vmem:[%s7274 + $0x2e0] sm:$0xff] %v7367
                  %v7369 = vld [vmem:[%s7273 + $0x178] sm:$0xff]
                  %7370 = vst [vmem:[%s7274 + $0x2f0] sm:$0xff] %v7369
                  %v7371 = vld [vmem:[%s7273 + $0x180] sm:$0xff]
                  %7372 = vst [vmem:[%s7274 + $0x300] sm:$0xff] %v7371
                  %v7373 = vld [vmem:[%s7273 + $0x188] sm:$0xff]
                  %7374 = vst [vmem:[%s7274 + $0x310] sm:$0xff] %v7373
                  %v7375 = vld [vmem:[%s7273 + $0x190] sm:$0xff]
                  %7376 = vst [vmem:[%s7274 + $0x320] sm:$0xff] %v7375
                  %v7377 = vld [vmem:[%s7273 + $0x198] sm:$0xff]
                  %7378 = vst [vmem:[%s7274 + $0x330] sm:$0xff] %v7377
                  %v7379 = vld [vmem:[%s7273 + $0x1a0] sm:$0xff]
                  %7380 = vst [vmem:[%s7274 + $0x340] sm:$0xff] %v7379
                  %v7381 = vld [vmem:[%s7273 + $0x1a8] sm:$0xff]
                  %7382 = vst [vmem:[%s7274 + $0x350] sm:$0xff] %v7381
                  %v7383 = vld [vmem:[%s7273 + $0x1b0] sm:$0xff]
                  %7384 = vst [vmem:[%s7274 + $0x360] sm:$0xff] %v7383
                  %v7385 = vld [vmem:[%s7273 + $0x1b8] sm:$0xff]
                  %7386 = vst [vmem:[%s7274 + $0x370] sm:$0xff] %v7385
                  %v7387 = vld [vmem:[%s7273 + $0x1c0] sm:$0xff]
                  %7388 = vst [vmem:[%s7274 + $0x380] sm:$0xff] %v7387
                  %v7389 = vld [vmem:[%s7273 + $0x1c8] sm:$0xff]
                  %7390 = vst [vmem:[%s7274 + $0x390] sm:$0xff] %v7389
                  %v7391 = vld [vmem:[%s7273 + $0x1d0] sm:$0xff]
                  %7392 = vst [vmem:[%s7274 + $0x3a0] sm:$0xff] %v7391
                  %v7393 = vld [vmem:[%s7273 + $0x1d8] sm:$0xff]
                  %7394 = vst [vmem:[%s7274 + $0x3b0] sm:$0xff] %v7393
                  %v7395 = vld [vmem:[%s7273 + $0x1e0] sm:$0xff]
                  %7396 = vst [vmem:[%s7274 + $0x3c0] sm:$0xff] %v7395
                  %v7397 = vld [vmem:[%s7273 + $0x1e8] sm:$0xff]
                  %7398 = vst [vmem:[%s7274 + $0x3d0] sm:$0xff] %v7397
                  %v7399 = vld [vmem:[%s7273 + $0x1f0] sm:$0xff]
                  %7400 = vst [vmem:[%s7274 + $0x3e0] sm:$0xff] %v7399
                  %v7401 = vld [vmem:[%s7273 + $0x1f8] sm:$0xff]
                  %7402 = vst [vmem:[%s7274 + $0x3f0] sm:$0xff] %v7401
                  %v7403 = vld [vmem:[%s7273 + $0x200] sm:$0xff]
                  %7404 = vst [vmem:[%s7274 + $0x400] sm:$0xff] %v7403
                  %v7405 = vld [vmem:[%s7273 + $0x208] sm:$0xff]
                  %7406 = vst [vmem:[%s7274 + $0x410] sm:$0xff] %v7405
                  %v7407 = vld [vmem:[%s7273 + $0x210] sm:$0xff]
                  %7408 = vst [vmem:[%s7274 + $0x420] sm:$0xff] %v7407
                  %v7409 = vld [vmem:[%s7273 + $0x218] sm:$0xff]
                  %7410 = vst [vmem:[%s7274 + $0x430] sm:$0xff] %v7409
                  %v7411 = vld [vmem:[%s7273 + $0x220] sm:$0xff]
                  %7412 = vst [vmem:[%s7274 + $0x440] sm:$0xff] %v7411
                  %v7413 = vld [vmem:[%s7273 + $0x228] sm:$0xff]
                  %7414 = vst [vmem:[%s7274 + $0x450] sm:$0xff] %v7413
                  %v7415 = vld [vmem:[%s7273 + $0x230] sm:$0xff]
                  %7416 = vst [vmem:[%s7274 + $0x460] sm:$0xff] %v7415
                  %v7417 = vld [vmem:[%s7273 + $0x238] sm:$0xff]
                  %7418 = vst [vmem:[%s7274 + $0x470] sm:$0xff] %v7417
                  %v7419 = vld [vmem:[%s7273 + $0x240] sm:$0xff]
                  %7420 = vst [vmem:[%s7274 + $0x480] sm:$0xff] %v7419
                  %v7421 = vld [vmem:[%s7273 + $0x248] sm:$0xff]
                  %7422 = vst [vmem:[%s7274 + $0x490] sm:$0xff] %v7421
                  %v7423 = vld [vmem:[%s7273 + $0x250] sm:$0xff]
                  %7424 = vst [vmem:[%s7274 + $0x4a0] sm:$0xff] %v7423
                  %v7425 = vld [vmem:[%s7273 + $0x258] sm:$0xff]
                  %7426 = vst [vmem:[%s7274 + $0x4b0] sm:$0xff] %v7425
                  %v7427 = vld [vmem:[%s7273 + $0x260] sm:$0xff]
                  %7428 = vst [vmem:[%s7274 + $0x4c0] sm:$0xff] %v7427
                  %v7429 = vld [vmem:[%s7273 + $0x268] sm:$0xff]
                  %7430 = vst [vmem:[%s7274 + $0x4d0] sm:$0xff] %v7429
                  %v7431 = vld [vmem:[%s7273 + $0x270] sm:$0xff]
                  %7432 = vst [vmem:[%s7274 + $0x4e0] sm:$0xff] %v7431
                  %v7433 = vld [vmem:[%s7273 + $0x278] sm:$0xff]
                  %7434 = vst [vmem:[%s7274 + $0x4f0] sm:$0xff] %v7433
                  %v7435 = vld [vmem:[%s7273 + $0x280] sm:$0xff]
                  %7436 = vst [vmem:[%s7274 + $0x500] sm:$0xff] %v7435
                  %v7437 = vld [vmem:[%s7273 + $0x288] sm:$0xff]
                  %7438 = vst [vmem:[%s7274 + $0x510] sm:$0xff] %v7437
                  %v7439 = vld [vmem:[%s7273 + $0x290] sm:$0xff]
                  %7440 = vst [vmem:[%s7274 + $0x520] sm:$0xff] %v7439
                  %v7441 = vld [vmem:[%s7273 + $0x298] sm:$0xff]
                  %7442 = vst [vmem:[%s7274 + $0x530] sm:$0xff] %v7441
                $region94: #{_forward_one.1} parent=88 // loop_footer
                  %s7272 = sadd.s32 1, %s7268
                $region95: #{_forward_one.1} parent=88 // loop_footer_branch
                  %7267 = sbr.rel target = $region91
                $region96: #{_forward_one.1} parent=88 // loop_exit
                  _
              $region89: #{_forward_one.1} parent=73 // pred_fallthru
                _
              // Predicated region
              $region97: #{_forward_one.1} parent=73 // pred_check
                _
              $region98: #{_forward_one.1} parent=73 // pred_check_branch
                %7444 = sbr.rel target = $region100
              $region99: #{_forward_one.1} parent=73 // pred_region
                _
              $region100: #{_forward_one.1} parent=73 // pred_fallthru
                _
            $region74: #{_forward_one.1} parent=69 // pred_fallthru
              _
            // Predicated region
            $region75: #{_forward_one.1} parent=69 // pred_check
              _
            $region76: #{_forward_one.1} parent=69 // pred_check_branch
              %7087 = sbr.rel target = $region78
            $region77: #{_forward_one.1} parent=69 // pred_region
              loop: start=0, step=1, limit=1
              $region79: #{_forward_one.1} parent=77 // loop_pre_header
                _
              $region80: #{_forward_one.1} parent=77 // loop_header
                %s7090 = sphi 0, %s7094
                %p7091 = scmp.ge.s32.totalorder %s7090, 1
                %s7095 = sphi %s7076, %s7076
                %s7096 = sphi %s7081, %s7081
              $region81: #{_forward_one.1} parent=77 // loop_header_branch
                %7093 = sbr.rel (%p7091) target = $region85
              $region82: #{_forward_one.1} parent=77 // loop_body
                %v7097 = vld [vmem:[%s7095] sm:$0xff]
                %7098 = vst [vmem:[%s7096] sm:$0xff] %v7097
                %v7099 = vld [vmem:[%s7095 + $0x8] sm:$0xff]
                %7100 = vst [vmem:[%s7096 + $0x10] sm:$0xff] %v7099
                %v7101 = vld [vmem:[%s7095 + $0x10] sm:$0xff]
                %7102 = vst [vmem:[%s7096 + $0x20] sm:$0xff] %v7101
                %v7103 = vld [vmem:[%s7095 + $0x18] sm:$0xff]
                %7104 = vst [vmem:[%s7096 + $0x30] sm:$0xff] %v7103
                %v7105 = vld [vmem:[%s7095 + $0x20] sm:$0xff]
                %7106 = vst [vmem:[%s7096 + $0x40] sm:$0xff] %v7105
                %v7107 = vld [vmem:[%s7095 + $0x28] sm:$0xff]
                %7108 = vst [vmem:[%s7096 + $0x50] sm:$0xff] %v7107
                %v7109 = vld [vmem:[%s7095 + $0x30] sm:$0xff]
                %7110 = vst [vmem:[%s7096 + $0x60] sm:$0xff] %v7109
                %v7111 = vld [vmem:[%s7095 + $0x38] sm:$0xff]
                %7112 = vst [vmem:[%s7096 + $0x70] sm:$0xff] %v7111
                %v7113 = vld [vmem:[%s7095 + $0x40] sm:$0xff]
                %7114 = vst [vmem:[%s7096 + $0x80] sm:$0xff] %v7113
                %v7115 = vld [vmem:[%s7095 + $0x48] sm:$0xff]
                %7116 = vst [vmem:[%s7096 + $0x90] sm:$0xff] %v7115
                %v7117 = vld [vmem:[%s7095 + $0x50] sm:$0xff]
                %7118 = vst [vmem:[%s7096 + $0xa0] sm:$0xff] %v7117
                %v7119 = vld [vmem:[%s7095 + $0x58] sm:$0xff]
                %7120 = vst [vmem:[%s7096 + $0xb0] sm:$0xff] %v7119
                %v7121 = vld [vmem:[%s7095 + $0x60] sm:$0xff]
                %7122 = vst [vmem:[%s7096 + $0xc0] sm:$0xff] %v7121
                %v7123 = vld [vmem:[%s7095 + $0x68] sm:$0xff]
                %7124 = vst [vmem:[%s7096 + $0xd0] sm:$0xff] %v7123
                %v7125 = vld [vmem:[%s7095 + $0x70] sm:$0xff]
                %7126 = vst [vmem:[%s7096 + $0xe0] sm:$0xff] %v7125
                %v7127 = vld [vmem:[%s7095 + $0x78] sm:$0xff]
                %7128 = vst [vmem:[%s7096 + $0xf0] sm:$0xff] %v7127
                %v7129 = vld [vmem:[%s7095 + $0x80] sm:$0xff]
                %7130 = vst [vmem:[%s7096 + $0x100] sm:$0xff] %v7129
                %v7131 = vld [vmem:[%s7095 + $0x88] sm:$0xff]
                %7132 = vst [vmem:[%s7096 + $0x110] sm:$0xff] %v7131
                %v7133 = vld [vmem:[%s7095 + $0x90] sm:$0xff]
                %7134 = vst [vmem:[%s7096 + $0x120] sm:$0xff] %v7133
                %v7135 = vld [vmem:[%s7095 + $0x98] sm:$0xff]
                %7136 = vst [vmem:[%s7096 + $0x130] sm:$0xff] %v7135
                %v7137 = vld [vmem:[%s7095 + $0xa0] sm:$0xff]
                %7138 = vst [vmem:[%s7096 + $0x140] sm:$0xff] %v7137
                %v7139 = vld [vmem:[%s7095 + $0xa8] sm:$0xff]
                %7140 = vst [vmem:[%s7096 + $0x150] sm:$0xff] %v7139
                %v7141 = vld [vmem:[%s7095 + $0xb0] sm:$0xff]
                %7142 = vst [vmem:[%s7096 + $0x160] sm:$0xff] %v7141
                %v7143 = vld [vmem:[%s7095 + $0xb8] sm:$0xff]
                %7144 = vst [vmem:[%s7096 + $0x170] sm:$0xff] %v7143
                %v7145 = vld [vmem:[%s7095 + $0xc0] sm:$0xff]
                %7146 = vst [vmem:[%s7096 + $0x180] sm:$0xff] %v7145
                %v7147 = vld [vmem:[%s7095 + $0xc8] sm:$0xff]
                %7148 = vst [vmem:[%s7096 + $0x190] sm:$0xff] %v7147
                %v7149 = vld [vmem:[%s7095 + $0xd0] sm:$0xff]
                %7150 = vst [vmem:[%s7096 + $0x1a0] sm:$0xff] %v7149
                %v7151 = vld [vmem:[%s7095 + $0xd8] sm:$0xff]
                %7152 = vst [vmem:[%s7096 + $0x1b0] sm:$0xff] %v7151
                %v7153 = vld [vmem:[%s7095 + $0xe0] sm:$0xff]
                %7154 = vst [vmem:[%s7096 + $0x1c0] sm:$0xff] %v7153
                %v7155 = vld [vmem:[%s7095 + $0xe8] sm:$0xff]
                %7156 = vst [vmem:[%s7096 + $0x1d0] sm:$0xff] %v7155
                %v7157 = vld [vmem:[%s7095 + $0xf0] sm:$0xff]
                %7158 = vst [vmem:[%s7096 + $0x1e0] sm:$0xff] %v7157
                %v7159 = vld [vmem:[%s7095 + $0xf8] sm:$0xff]
                %7160 = vst [vmem:[%s7096 + $0x1f0] sm:$0xff] %v7159
                %v7161 = vld [vmem:[%s7095 + $0x100] sm:$0xff]
                %7162 = vst [vmem:[%s7096 + $0x200] sm:$0xff] %v7161
                %v7163 = vld [vmem:[%s7095 + $0x108] sm:$0xff]
                %7164 = vst [vmem:[%s7096 + $0x210] sm:$0xff] %v7163
                %v7165 = vld [vmem:[%s7095 + $0x110] sm:$0xff]
                %7166 = vst [vmem:[%s7096 + $0x220] sm:$0xff] %v7165
                %v7167 = vld [vmem:[%s7095 + $0x118] sm:$0xff]
                %7168 = vst [vmem:[%s7096 + $0x230] sm:$0xff] %v7167
                %v7169 = vld [vmem:[%s7095 + $0x120] sm:$0xff]
                %7170 = vst [vmem:[%s7096 + $0x240] sm:$0xff] %v7169
                %v7171 = vld [vmem:[%s7095 + $0x128] sm:$0xff]
                %7172 = vst [vmem:[%s7096 + $0x250] sm:$0xff] %v7171
                %v7173 = vld [vmem:[%s7095 + $0x130] sm:$0xff]
                %7174 = vst [vmem:[%s7096 + $0x260] sm:$0xff] %v7173
                %v7175 = vld [vmem:[%s7095 + $0x138] sm:$0xff]
                %7176 = vst [vmem:[%s7096 + $0x270] sm:$0xff] %v7175
                %v7177 = vld [vmem:[%s7095 + $0x140] sm:$0xff]
                %7178 = vst [vmem:[%s7096 + $0x280] sm:$0xff] %v7177
                %v7179 = vld [vmem:[%s7095 + $0x148] sm:$0xff]
                %7180 = vst [vmem:[%s7096 + $0x290] sm:$0xff] %v7179
                %v7181 = vld [vmem:[%s7095 + $0x150] sm:$0xff]
                %7182 = vst [vmem:[%s7096 + $0x2a0] sm:$0xff] %v7181
                %v7183 = vld [vmem:[%s7095 + $0x158] sm:$0xff]
                %7184 = vst [vmem:[%s7096 + $0x2b0] sm:$0xff] %v7183
                %v7185 = vld [vmem:[%s7095 + $0x160] sm:$0xff]
                %7186 = vst [vmem:[%s7096 + $0x2c0] sm:$0xff] %v7185
                %v7187 = vld [vmem:[%s7095 + $0x168] sm:$0xff]
                %7188 = vst [vmem:[%s7096 + $0x2d0] sm:$0xff] %v7187
                %v7189 = vld [vmem:[%s7095 + $0x170] sm:$0xff]
                %7190 = vst [vmem:[%s7096 + $0x2e0] sm:$0xff] %v7189
                %v7191 = vld [vmem:[%s7095 + $0x178] sm:$0xff]
                %7192 = vst [vmem:[%s7096 + $0x2f0] sm:$0xff] %v7191
                %v7193 = vld [vmem:[%s7095 + $0x180] sm:$0xff]
                %7194 = vst [vmem:[%s7096 + $0x300] sm:$0xff] %v7193
                %v7195 = vld [vmem:[%s7095 + $0x188] sm:$0xff]
                %7196 = vst [vmem:[%s7096 + $0x310] sm:$0xff] %v7195
                %v7197 = vld [vmem:[%s7095 + $0x190] sm:$0xff]
                %7198 = vst [vmem:[%s7096 + $0x320] sm:$0xff] %v7197
                %v7199 = vld [vmem:[%s7095 + $0x198] sm:$0xff]
                %7200 = vst [vmem:[%s7096 + $0x330] sm:$0xff] %v7199
                %v7201 = vld [vmem:[%s7095 + $0x1a0] sm:$0xff]
                %7202 = vst [vmem:[%s7096 + $0x340] sm:$0xff] %v7201
                %v7203 = vld [vmem:[%s7095 + $0x1a8] sm:$0xff]
                %7204 = vst [vmem:[%s7096 + $0x350] sm:$0xff] %v7203
                %v7205 = vld [vmem:[%s7095 + $0x1b0] sm:$0xff]
                %7206 = vst [vmem:[%s7096 + $0x360] sm:$0xff] %v7205
                %v7207 = vld [vmem:[%s7095 + $0x1b8] sm:$0xff]
                %7208 = vst [vmem:[%s7096 + $0x370] sm:$0xff] %v7207
                %v7209 = vld [vmem:[%s7095 + $0x1c0] sm:$0xff]
                %7210 = vst [vmem:[%s7096 + $0x380] sm:$0xff] %v7209
                %v7211 = vld [vmem:[%s7095 + $0x1c8] sm:$0xff]
                %7212 = vst [vmem:[%s7096 + $0x390] sm:$0xff] %v7211
                %v7213 = vld [vmem:[%s7095 + $0x1d0] sm:$0xff]
                %7214 = vst [vmem:[%s7096 + $0x3a0] sm:$0xff] %v7213
                %v7215 = vld [vmem:[%s7095 + $0x1d8] sm:$0xff]
                %7216 = vst [vmem:[%s7096 + $0x3b0] sm:$0xff] %v7215
                %v7217 = vld [vmem:[%s7095 + $0x1e0] sm:$0xff]
                %7218 = vst [vmem:[%s7096 + $0x3c0] sm:$0xff] %v7217
                %v7219 = vld [vmem:[%s7095 + $0x1e8] sm:$0xff]
                %7220 = vst [vmem:[%s7096 + $0x3d0] sm:$0xff] %v7219
                %v7221 = vld [vmem:[%s7095 + $0x1f0] sm:$0xff]
                %7222 = vst [vmem:[%s7096 + $0x3e0] sm:$0xff] %v7221
                %v7223 = vld [vmem:[%s7095 + $0x1f8] sm:$0xff]
                %7224 = vst [vmem:[%s7096 + $0x3f0] sm:$0xff] %v7223
                %v7225 = vld [vmem:[%s7095 + $0x200] sm:$0xff]
                %7226 = vst [vmem:[%s7096 + $0x400] sm:$0xff] %v7225
                %v7227 = vld [vmem:[%s7095 + $0x208] sm:$0xff]
                %7228 = vst [vmem:[%s7096 + $0x410] sm:$0xff] %v7227
                %v7229 = vld [vmem:[%s7095 + $0x210] sm:$0xff]
                %7230 = vst [vmem:[%s7096 + $0x420] sm:$0xff] %v7229
                %v7231 = vld [vmem:[%s7095 + $0x218] sm:$0xff]
                %7232 = vst [vmem:[%s7096 + $0x430] sm:$0xff] %v7231
                %v7233 = vld [vmem:[%s7095 + $0x220] sm:$0xff]
                %7234 = vst [vmem:[%s7096 + $0x440] sm:$0xff] %v7233
                %v7235 = vld [vmem:[%s7095 + $0x228] sm:$0xff]
                %7236 = vst [vmem:[%s7096 + $0x450] sm:$0xff] %v7235
                %v7237 = vld [vmem:[%s7095 + $0x230] sm:$0xff]
                %7238 = vst [vmem:[%s7096 + $0x460] sm:$0xff] %v7237
                %v7239 = vld [vmem:[%s7095 + $0x238] sm:$0xff]
                %7240 = vst [vmem:[%s7096 + $0x470] sm:$0xff] %v7239
                %v7241 = vld [vmem:[%s7095 + $0x240] sm:$0xff]
                %7242 = vst [vmem:[%s7096 + $0x480] sm:$0xff] %v7241
                %v7243 = vld [vmem:[%s7095 + $0x248] sm:$0xff]
                %7244 = vst [vmem:[%s7096 + $0x490] sm:$0xff] %v7243
                %v7245 = vld [vmem:[%s7095 + $0x250] sm:$0xff]
                %7246 = vst [vmem:[%s7096 + $0x4a0] sm:$0xff] %v7245
                %v7247 = vld [vmem:[%s7095 + $0x258] sm:$0xff]
                %7248 = vst [vmem:[%s7096 + $0x4b0] sm:$0xff] %v7247
                %v7249 = vld [vmem:[%s7095 + $0x260] sm:$0xff]
                %7250 = vst [vmem:[%s7096 + $0x4c0] sm:$0xff] %v7249
                %v7251 = vld [vmem:[%s7095 + $0x268] sm:$0xff]
                %7252 = vst [vmem:[%s7096 + $0x4d0] sm:$0xff] %v7251
                %v7253 = vld [vmem:[%s7095 + $0x270] sm:$0xff]
                %7254 = vst [vmem:[%s7096 + $0x4e0] sm:$0xff] %v7253
                %v7255 = vld [vmem:[%s7095 + $0x278] sm:$0xff]
                %7256 = vst [vmem:[%s7096 + $0x4f0] sm:$0xff] %v7255
                %v7257 = vld [vmem:[%s7095 + $0x280] sm:$0xff]
                %7258 = vst [vmem:[%s7096 + $0x500] sm:$0xff] %v7257
                %v7259 = vld [vmem:[%s7095 + $0x288] sm:$0xff]
                %7260 = vst [vmem:[%s7096 + $0x510] sm:$0xff] %v7259
                %v7261 = vld [vmem:[%s7095 + $0x290] sm:$0xff]
                %7262 = vst [vmem:[%s7096 + $0x520] sm:$0xff] %v7261
                %v7263 = vld [vmem:[%s7095 + $0x298] sm:$0xff]
                %7264 = vst [vmem:[%s7096 + $0x530] sm:$0xff] %v7263
              $region83: #{_forward_one.1} parent=77 // loop_footer
                %s7094 = sadd.s32 1, %s7090
              $region84: #{_forward_one.1} parent=77 // loop_footer_branch
                %7089 = sbr.rel target = $region80
              $region85: #{_forward_one.1} parent=77 // loop_exit
                _
            $region78: #{_forward_one.1} parent=69 // pred_fallthru
              _
          $region70: #{_forward_one.1} parent=65 // pred_fallthru
            _
          %7445 = vnop
        $region66: #{_forward_one.1} parent=57 // pred_fallthru
          _
      $region58: #{_forward_one.1} parent=5 // pred_fallthru
        _
      %p7446 = scmp.le.s32.totalorder 2, %s7
      // Predicated region
      $region101: #{_forward_one.1} parent=5 // pred_check
        %p7447 = pneg %p7446
      $region102: #{_forward_one.1} parent=5 // pred_check_branch
        %7449 = sbr.rel (%p7447) target = $region104
      $region103: #{_forward_one.1} parent=5 // pred_region
        %s7450 = ssub.s32 %s7, 2
        // Predicated region
        $region105: #{_forward_one.1} parent=103 // pred_check
          %p7451 = pneg %p62
        $region106: #{_forward_one.1} parent=103 // pred_check_branch
          %7453 = sbr.rel (%p7451) target = $region108
        $region107: #{_forward_one.1} parent=103 // pred_region
          %s7454 = sand.u32 %s47, 1
          %s7455 = sand.u32 %s47, 1
          %s7456 = smul.addr %s7455, 672
          %s7457 = scalar_lea.vmem [#allocation3], %s7456
        $region108: #{_forward_one.1} parent=103 // pred_fallthru
          _
      $region104: #{_forward_one.1} parent=5 // pred_fallthru
        _
    $region6: #{_forward_one.1} parent=1 // loop_footer
      %s11 = sadd.s32 1, %s7
    $region7: #{_forward_one.1} parent=1 // loop_footer_branch
      %6 = sbr.rel target = $region3
    $region8: #{_forward_one.1} parent=1 // loop_exit
      _

</llo_original>
